<compile_context>
chip_gen: v6e
topology: v6e:2x2x1
jax: 0.10.0
libtpu: 0.0.40
codegen_flags: <defaults>
</compile_context>

<pallas_src>
import jax
import jax.numpy as jnp
from jax import lax
from jax.experimental import pallas as pl
from jax.experimental.pallas import tpu as pltpu

# ----------------------------- configuration -----------------------------
NUM_NODES = 16
INPUT_DIM = 2
RNN_UNITS = 32          # hidden dim
OUTPUT_DIM = 1
HORIZON = 3             # only used by self.end_conv, which is unused in forward
NUM_LAYERS = 2
CHEB_K = 3
EMBED_DIM = 8
BATCH = 2
SEQ_LEN = 8
CONV1_CH = 512

_TN = SEQ_LEN * NUM_NODES        # 128 rows = full MXU height
_DEH = EMBED_DIM * RNN_UNITS     # 256 = one (d, o) column group


def _mix(r, ewide):
    """out[m, o] = sum_d ewide[m, d*H + o] * r[m, d*H + o]   (H = RNN_UNITS).

    One VPU multiply + log2(EMBED_DIM) circular roll-and-add steps (XLU).  All
    roll distances are multiples of RNN_UNITS, so every lane ends up holding
    the sum of its within-block offset over all EMBED_DIM blocks; the only
    slice is at lane offset 0.
    """
    acc = r * ewide
    dist = _DEH // 2
    while dist >= RNN_UNITS:
        acc = acc + pltpu.roll(acc, shift=dist, axis=1)
        dist //= 2
    return acc[:, :RNN_UNITS]


# ----------------------------- fused Pallas kernel -----------------------------
def _astgcrn_kernel(xs_ref, e_ref, ew_ref, ew_tn_ref,
                    pfx0_ref, pgh0_ref, puh0_ref,
                    pfx1_ref, pgh1_ref, puh1_ref,
                    bpz0_ref, bpr0_ref, bpu0_ref,
                    bpz1_ref, bpr1_ref, bpu1_ref,
                    w1_ref, b1_ref, w2_ref, b2_ref,
                    out_ref,
                    xz0_scr, xr0_scr, xu0_scr, henc_scr):
    f32 = jnp.float32
    n = NUM_NODES
    hdim = RNN_UNITS

    # ---- adaptive supports: softmax(relu(E @ E^T), dim=1) + Chebyshev (K=3) ----
    E = e_ref[...]                                                      # (N, De)
    A = lax.dot_general(E, E, (((1,), (1,)), ((), ())),
                        preferred_element_type=f32)                    # E @ E^T
    A = jnp.maximum(A, 0.0)
    A = jnp.exp(A - jnp.max(A, axis=1, keepdims=True))
    A = A / jnp.sum(A, axis=1, keepdims=True)
    row = lax.broadcasted_iota(jnp.int32, (n, n), 0)
    col = lax.broadcasted_iota(jnp.int32, (n, n), 1)
    eye = (row == col).astype(f32)
    A2 = 2.0 * jnp.dot(A, A, preferred_element_type=f32) - eye
    # Both non-identity supports applied with a single stacked matmul.
    bstack = jnp.concatenate([A, A2], axis=0)                           # (2N, N)

    def prop(v):
        """Return (A @ v, A2 @ v) via one (2N, N) matmul; identity support is free."""
        p = jnp.dot(bstack, v, preferred_element_type=f32)              # (2N, C)
        return p[:n], p[n:]

    # ---- adaptive per-node biases: E @ bias_pool (computed once) ----
    bz0 = jnp.dot(E, bpz0_ref[...], preferred_element_type=f32)         # (N, H)
    br0 = jnp.dot(E, bpr0_ref[...], preferred_element_type=f32)
    bu0 = jnp.dot(E, bpu0_ref[...], preferred_element_type=f32)
    bz1 = jnp.dot(E, bpz1_ref[...], preferred_element_type=f32)
    br1 = jnp.dot(E, bpr1_ref[...], preferred_element_type=f32)
    bu1 = jnp.dot(E, bpu1_ref[...], preferred_element_type=f32)

    ew = ew_ref[...]                                                    # (N, De*H)
    ew_tn = ew_tn_ref[...]                                              # (T*N, De*H)

    # ---- layer-0 input path: hoisted out of the recurrence, time-batched ----
    xs = xs_ref[...]                                                    # (T*N, Din)
    a_parts, a2_parts = [], []
    for t in range(SEQ_LEN):                                            # static; tiny matmuls
        av, a2v = prop(xs[t * n:(t + 1) * n, :])
        a_parts.append(av)
        a2_parts.append(a2v)
    axs = jnp.concatenate(a_parts, axis=0)                              # (T*N, Din)
    a2xs = jnp.concatenate(a2_parts, axis=0)
    rx0 = (jnp.dot(xs, pfx0_ref[0], preferred_element_type=f32)
           + jnp.dot(axs, pfx0_ref[1], preferred_element_type=f32)
           + jnp.dot(a2xs, pfx0_ref[2], preferred_element_type=f32))    # (T*N, 3*De*H)
    xz0_scr[...] = _mix(rx0[:, :_DEH], ew_tn)                           # (T*N, H)
    xr0_scr[...] = _mix(rx0[:, _DEH:2 * _DEH], ew_tn)
    xu0_scr[...] = _mix(rx0[:, 2 * _DEH:], ew_tn)

    # ---- serial recurrence over time ----
    def step(t, carry):
        s0, s1 = carry
        start = pl.multiple_of(t * n, n)
        rows = pl.ds(start, n)
        xz0 = xz0_scr[rows, :]
        xr0 = xr0_scr[rows, :]
        xu0 = xu0_scr[rows, :]

        # -- layer 0 cell (its input contribution is hoisted above) --
        a_s0, a2_s0 = prop(s0)
        rg0 = (jnp.dot(s0, pgh0_ref[0], preferred_element_type=f32)
               + jnp.dot(a_s0, pgh0_ref[1], preferred_element_type=f32)
               + jnp.dot(a2_s0, pgh0_ref[2], preferred_element_type=f32))   # (N, 2*De*H)
        z0 = jax.nn.sigmoid(xz0 + _mix(rg0[:, :_DEH], ew) + bz0)
        r0 = jax.nn.sigmoid(xr0 + _mix(rg0[:, _DEH:], ew) + br0)
        c0 = z0 * s0
        a_c0, a2_c0 = prop(c0)
        ru0 = (jnp.dot(c0, puh0_ref[0], preferred_element_type=f32)
               + jnp.dot(a_c0, puh0_ref[1], preferred_element_type=f32)
               + jnp.dot(a2_c0, puh0_ref[2], preferred_element_type=f32))   # (N, De*H)
        hc0 = jnp.tanh(xu0 + _mix(ru0, ew) + bu0)
        s0n = r0 * s0 + (1.0 - r0) * hc0

        # -- layer 1 cell (input = s0n); x-side contraction shared by gate & update --
        a_x1, a2_x1 = prop(s0n)
        rx1 = (jnp.dot(s0n, pfx1_ref[0], preferred_element_type=f32)
               + jnp.dot(a_x1, pfx1_ref[1], preferred_element_type=f32)
               + jnp.dot(a2_x1, pfx1_ref[2], preferred_element_type=f32))   # (N, 3*De*H)
        a_s1, a2_s1 = prop(s1)
        rg1 = (jnp.dot(s1, pgh1_ref[0], preferred_element_type=f32)
               + jnp.dot(a_s1, pgh1_ref[1], preferred_element_type=f32)
               + jnp.dot(a2_s1, pgh1_ref[2], preferred_element_type=f32))   # (N, 2*De*H)
        z1 = jax.nn.sigmoid(_mix(rx1[:, :_DEH] + rg1[:, :_DEH], ew) + bz1)
        r1 = jax.nn.sigmoid(_mix(rx1[:, _DEH:2 * _DEH] + rg1[:, _DEH:], ew) + br1)
        c1 = z1 * s1
        a_c1, a2_c1 = prop(c1)
        ru1 = (jnp.dot(c1, puh1_ref[0], preferred_element_type=f32)
               + jnp.dot(a_c1, puh1_ref[1], preferred_element_type=f32)
               + jnp.dot(a2_c1, puh1_ref[2], preferred_element_type=f32))   # (N, De*H)
        hc1 = jnp.tanh(_mix(rx1[:, 2 * _DEH:] + ru1, ew) + bu1)
        s1n = r1 * s1 + (1.0 - r1) * hc1

        henc_scr[rows, :] = s1n
        return (s0n, s1n)

    zeros = jnp.zeros((n, hdim), f32)                                   # init_hidden_state
    lax.fori_loop(0, SEQ_LEN, step, (zeros, zeros))

    # ---- conv head, time-batched (one M=128 matmul, one store) ----
    # TODO(synk): TransformerLayer (self.att) has no definition in the source
    # module; it is applied as identity, so the 1x1-conv head acts directly on
    # the encoder output.
    y = jnp.maximum(henc_scr[...], 0.0)                                 # F.relu
    h1 = jnp.dot(y, w1_ref[...], preferred_element_type=f32) + b1_ref[...]   # end_conv_1
    h1 = jnp.maximum(h1, 0.0)                                           # F.relu
    out_ref[...] = jnp.sum(h1 * w2_ref[...], axis=1, keepdims=True) + b2_ref[...]  # end_conv_2


# ----------------------------- wrapper -----------------------------
def _flatten_pool(pool, dim_in):
    """(De, K, dim_in+H, dout) -> x-part (K, dim_in, De*dout), h-part (K, H, De*dout).

    Column layout of each slab is (d, o) flattened as d*dout + o (matches _mix).
    """
    de, k, _, dout = pool.shape
    p = jnp.transpose(pool, (1, 2, 0, 3)).reshape(k, dim_in + RNN_UNITS, de * dout)
    return p[:, :dim_in, :], p[:, dim_in:, :]


def _prep_layer(cell_p, dim_in):
    gate_w = cell_p["gate"]["weights_pool"]          # (De, K, dim_in+H, 2H)
    upd_w = cell_p["update"]["weights_pool"]         # (De, K, dim_in+H, H)
    gz_x, gz_h = _flatten_pool(gate_w[..., :RNN_UNITS], dim_in)   # z columns
    gr_x, gr_h = _flatten_pool(gate_w[..., RNN_UNITS:], dim_in)   # r columns
    u_x, u_h = _flatten_pool(upd_w, dim_in)
    pfx = jnp.concatenate([gz_x, gr_x, u_x], axis=2)  # (K, dim_in, 3*De*H) [z|r|u]
    pgh = jnp.concatenate([gz_h, gr_h], axis=2)       # (K, H, 2*De*H)      [z|r]
    puh = u_h                                         # (K, H, De*H)
    gate_b = cell_p["gate"]["bias_pool"]              # (De, 2H)
    upd_b = cell_p["update"]["bias_pool"]             # (De, H)
    return pfx, pgh, puh, gate_b[:, :RNN_UNITS], gate_b[:, RNN_UNITS:], upd_b


def astgcrn_forward(params, source, targets=None, teacher_forcing_ratio=0.5):
    del targets, teacher_forcing_ratio              # unused by the PyTorch forward as well
    b, t, n, din = source.shape
    assert (t, n, din) == (SEQ_LEN, NUM_NODES, INPUT_DIM)
    tn = t * n
    E = params["node_embeddings"]

    pfx0, pgh0, puh0, bz0, br0, bu0 = _prep_layer(params["cells"][0], din)
    pfx1, pgh1, puh1, bz1, br1, bu1 = _prep_layer(params["cells"][1], RNN_UNITS)

    ew = jnp.repeat(E, RNN_UNITS, axis=1)           # (N, De*H)  pre-expanded embedding
    ew_tn = jnp.tile(ew, (t, 1))                    # (T*N, De*H) for the time-batched mix

    xs = source.reshape(b, tn, din)                 # rows stacked as (t, n)

    inputs = [xs, E, ew, ew_tn,
              pfx0, pgh0, puh0, pfx1, pgh1, puh1,
              bz0, br0, bu0, bz1, br1, bu1,
              params["end_conv_1_w"].T,             # (H, 512)
              params["end_conv_1_b"][None, :],      # (1, 512)
              params["end_conv_2_w"],               # (1, 512)
              params["end_conv_2_b"].reshape(1, 1)] # (1, 1)

    in_specs = [pl.BlockSpec((pl.Squeezed(), tn, din), lambda bi: (bi, 0, 0))]
    for x in inputs[1:]:
        nd = x.ndim
        in_specs.append(pl.BlockSpec(x.shape, lambda bi, _nd=nd: (0,) * _nd))

    out = pl.pallas_call(
        _astgcrn_kernel,
        out_shape=jax.ShapeDtypeStruct((b, tn, 1), jnp.float32),
        grid=(b,),
        in_specs=in_specs,
        out_specs=pl.BlockSpec((pl.Squeezed(), tn, 1), lambda bi: (bi, 0, 0)),
        scratch_shapes=[pltpu.VMEM((tn, RNN_UNITS), jnp.float32) for _ in range(4)],
        compiler_params=pltpu.CompilerParams(dimension_semantics=("parallel",)),
    )(*inputs)
    return out.reshape(b, t, n, 1)                  # == output.permute(0, 3, 2, 1)


# ----------------------------- parameters -----------------------------
def init_params(key):
    keys = jax.random.split(key, 2 * NUM_LAYERS * 2 + 5)
    idx = 0
    params = {"node_embeddings": jax.random.normal(keys[idx], (NUM_NODES, EMBED_DIM), jnp.float32)}
    idx += 1
    cells = []
    for layer in range(NUM_LAYERS):
        dim_in = INPUT_DIM if layer == 0 else RNN_UNITS
        c_total = dim_in + RNN_UNITS
        cell = {}
        for name, dout in (("gate", 2 * RNN_UNITS), ("update", RNN_UNITS)):
            kw, kb = jax.random.split(keys[idx]); idx += 1
            cell[name] = {
                "weights_pool": 0.1 * jax.random.normal(kw, (EMBED_DIM, CHEB_K, c_total, dout), jnp.float32),
                "bias_pool": 0.1 * jax.random.normal(kb, (EMBED_DIM, dout), jnp.float32),
            }
        cells.append(cell)
    params["cells"] = cells
    # end_conv_1: Conv2d(rnn_units, 512, kernel=(1,1)) -> stored as (512, H)
    params["end_conv_1_w"] = 0.05 * jax.random.normal(keys[idx], (CONV1_CH, RNN_UNITS), jnp.float32); idx += 1
    params["end_conv_1_b"] = 0.05 * jax.random.normal(keys[idx], (CONV1_CH,), jnp.float32); idx += 1
    # end_conv_2: Conv2d(512, 1, kernel=(1,1)) -> stored as (1, 512)
    params["end_conv_2_w"] = 0.05 * jax.random.normal(keys[idx], (1, CONV1_CH), jnp.float32); idx += 1
    params["end_conv_2_b"] = 0.05 * jax.random.normal(keys[idx], (1,), jnp.float32); idx += 1
    # NOTE: self.alpha and self.end_conv exist in __init__ but are unused in forward -> omitted.
    return params


# ----------------------------- main -----------------------------
if __name__ == "__main__":
    key = jax.random.PRNGKey(0)
    pkey, skey, tkey = jax.random.split(key, 3)
    params = init_params(pkey)
    source = jax.random.normal(skey, (BATCH, SEQ_LEN, NUM_NODES, INPUT_DIM), jnp.float32)
    targets = jax.random.normal(tkey, (BATCH, HORIZON, NUM_NODES, OUTPUT_DIM), jnp.float32)

    out = jax.jit(astgcrn_forward)(params, source, targets)
    out = jax.block_until_ready(out)
    assert out.shape == (BATCH, SEQ_LEN, NUM_NODES, 1), out.shape
    assert bool(jnp.all(jnp.isfinite(out)))
    print("KERNEL_OK")
</pallas_src>

<mosaic_0001>
module attributes {stable_mosaic.version = 11 : i64} {
  func.func @_astgcrn_kernel(%arg0: i32, %arg1: memref<1x128x2xf32, #tpu.memory_space<vmem>>, %arg2: memref<16x8xf32, #tpu.memory_space<vmem>>, %arg3: memref<16x256xf32, #tpu.memory_space<vmem>>, %arg4: memref<128x256xf32, #tpu.memory_space<vmem>>, %arg5: memref<3x2x768xf32, #tpu.memory_space<vmem>>, %arg6: memref<3x32x512xf32, #tpu.memory_space<vmem>>, %arg7: memref<3x32x256xf32, #tpu.memory_space<vmem>>, %arg8: memref<3x32x768xf32, #tpu.memory_space<vmem>>, %arg9: memref<3x32x512xf32, #tpu.memory_space<vmem>>, %arg10: memref<3x32x256xf32, #tpu.memory_space<vmem>>, %arg11: memref<8x32xf32, #tpu.memory_space<vmem>>, %arg12: memref<8x32xf32, #tpu.memory_space<vmem>>, %arg13: memref<8x32xf32, #tpu.memory_space<vmem>>, %arg14: memref<8x32xf32, #tpu.memory_space<vmem>>, %arg15: memref<8x32xf32, #tpu.memory_space<vmem>>, %arg16: memref<8x32xf32, #tpu.memory_space<vmem>>, %arg17: memref<32x512xf32, #tpu.memory_space<vmem>>, %arg18: memref<1x512xf32, #tpu.memory_space<vmem>>, %arg19: memref<1x512xf32, #tpu.memory_space<vmem>>, %arg20: memref<1x1xf32, #tpu.memory_space<vmem>>, %arg21: memref<1x128x1xf32, #tpu.memory_space<vmem>>, %arg22: memref<128x32xf32, #tpu.memory_space<vmem>>, %arg23: memref<128x32xf32, #tpu.memory_space<vmem>>, %arg24: memref<128x32xf32, #tpu.memory_space<vmem>>, %arg25: memref<128x32xf32, #tpu.memory_space<vmem>>) attributes {dimension_semantics = [#tpu.dimension_semantics<parallel>], iteration_bounds = array<i64: 2>, scalar_prefetch = 0 : i64, scratch_operands = 4 : i64, tpu.core_type = #tpu.core_type<tc>, window_params = [{transform_indices = @transform_0, window_bounds = array<i64: 1, 128, 2>}, {pipeline_mode = #tpu.pipeline_mode<synchronous>, transform_indices = @transform_1, window_bounds = array<i64: 16, 8>}, {pipeline_mode = #tpu.pipeline_mode<synchronous>, transform_indices = @transform_2, window_bounds = array<i64: 16, 256>}, {pipeline_mode = #tpu.pipeline_mode<synchronous>, transform_indices = @transform_3, window_bounds = array<i64: 128, 256>}, {pipeline_mode = #tpu.pipeline_mode<synchronous>, transform_indices = @transform_4, window_bounds = array<i64: 3, 2, 768>}, {pipeline_mode = #tpu.pipeline_mode<synchronous>, transform_indices = @transform_5, window_bounds = array<i64: 3, 32, 512>}, {pipeline_mode = #tpu.pipeline_mode<synchronous>, transform_indices = @transform_6, window_bounds = array<i64: 3, 32, 256>}, {pipeline_mode = #tpu.pipeline_mode<synchronous>, transform_indices = @transform_7, window_bounds = array<i64: 3, 32, 768>}, {pipeline_mode = #tpu.pipeline_mode<synchronous>, transform_indices = @transform_8, window_bounds = array<i64: 3, 32, 512>}, {pipeline_mode = #tpu.pipeline_mode<synchronous>, transform_indices = @transform_9, window_bounds = array<i64: 3, 32, 256>}, {pipeline_mode = #tpu.pipeline_mode<synchronous>, transform_indices = @transform_10, window_bounds = array<i64: 8, 32>}, {pipeline_mode = #tpu.pipeline_mode<synchronous>, transform_indices = @transform_11, window_bounds = array<i64: 8, 32>}, {pipeline_mode = #tpu.pipeline_mode<synchronous>, transform_indices = @transform_12, window_bounds = array<i64: 8, 32>}, {pipeline_mode = #tpu.pipeline_mode<synchronous>, transform_indices = @transform_13, window_bounds = array<i64: 8, 32>}, {pipeline_mode = #tpu.pipeline_mode<synchronous>, transform_indices = @transform_14, window_bounds = array<i64: 8, 32>}, {pipeline_mode = #tpu.pipeline_mode<synchronous>, transform_indices = @transform_15, window_bounds = array<i64: 8, 32>}, {pipeline_mode = #tpu.pipeline_mode<synchronous>, transform_indices = @transform_16, window_bounds = array<i64: 32, 512>}, {pipeline_mode = #tpu.pipeline_mode<synchronous>, transform_indices = @transform_17, window_bounds = array<i64: 1, 512>}, {pipeline_mode = #tpu.pipeline_mode<synchronous>, transform_indices = @transform_18, window_bounds = array<i64: 1, 512>}, {pipeline_mode = #tpu.pipeline_mode<synchronous>, transform_indices = @transform_19, window_bounds = array<i64: 1, 1>}, {transform_indices = @transform_20, window_bounds = array<i64: 1, 128, 1>}]} {
    %c0 = arith.constant 0 : index
    %c0_0 = arith.constant 0 : index
    %0 = vector.load %arg2[%c0, %c0_0] : memref<16x8xf32, #tpu.memory_space<vmem>>, vector<16x8xf32>
    %cst = arith.constant dense<0.000000e+00> : vector<16x16xf32>
    %1 = tpu.matmul %0, %0, %cst {dimension_numbers = #tpu.dot_dimension_numbers<[1], [1], [0], [0], [0, 0, 1, 0], [], []>} : vector<16x8xf32>, vector<16x8xf32>, vector<16x16xf32> -> vector<16x16xf32>
    %cst_1 = arith.constant 0.000000e+00 : f32
    %2 = vector.broadcast %cst_1 : f32 to vector<16x16xf32>
    %3 = arith.maximumf %1, %2 : vector<16x16xf32>
    %cst_2 = arith.constant dense<0xFF800000> : vector<16xf32>
    %4 = vector.multi_reduction <maximumf>, %3, %cst_2 [1] : vector<16x16xf32> to vector<16xf32>
    %5 = vector.shape_cast %4 : vector<16xf32> to vector<16x1xf32>
    %6 = vector.broadcast %5 : vector<16x1xf32> to vector<16x16xf32>
    %7 = arith.subf %3, %6 : vector<16x16xf32>
    %8 = math.exp %7 : vector<16x16xf32>
    %cst_3 = arith.constant dense<0.000000e+00> : vector<16xf32>
    %9 = vector.multi_reduction <add>, %8, %cst_3 [1] : vector<16x16xf32> to vector<16xf32>
    %10 = vector.shape_cast %9 : vector<16xf32> to vector<16x1xf32>
    %11 = vector.broadcast %10 : vector<16x1xf32> to vector<16x16xf32>
    %12 = arith.divf %8, %11 : vector<16x16xf32>
    %13 = tpu.iota {dimensions = array<i32: 0>} : vector<16x16xi32>
    %14 = tpu.iota {dimensions = array<i32: 1>} : vector<16x16xi32>
    %15 = arith.cmpi eq, %13, %14 : vector<16x16xi32>
    %16 = arith.extui %15 : vector<16x16xi1> to vector<16x16xi32>
    %17 = arith.sitofp %16 : vector<16x16xi32> to vector<16x16xf32>
    %cst_4 = arith.constant dense<0.000000e+00> : vector<16x16xf32>
    %18 = tpu.matmul %12, %12, %cst_4 {dimension_numbers = #tpu.dot_dimension_numbers<[1], [0], [0], [1], [0, 0, 1, 1], [], []>} : vector<16x16xf32>, vector<16x16xf32>, vector<16x16xf32> -> vector<16x16xf32>
    %cst_5 = arith.constant 2.000000e+00 : f32
    %19 = vector.broadcast %cst_5 : f32 to vector<16x16xf32>
    %20 = arith.mulf %19, %18 : vector<16x16xf32>
    %21 = arith.subf %20, %17 : vector<16x16xf32>
    %22 = tpu.concatenate %12, %21 in 0 : vector<16x16xf32>, vector<16x16xf32> -> vector<32x16xf32>
    %c0_6 = arith.constant 0 : index
    %c0_7 = arith.constant 0 : index
    %23 = vector.load %arg11[%c0_6, %c0_7] : memref<8x32xf32, #tpu.memory_space<vmem>>, vector<8x32xf32>
    %cst_8 = arith.constant dense<0.000000e+00> : vector<16x32xf32>
    %24 = tpu.matmul %0, %23, %cst_8 {dimension_numbers = #tpu.dot_dimension_numbers<[1], [0], [0], [1], [0, 0, 1, 1], [], []>} : vector<16x8xf32>, vector<8x32xf32>, vector<16x32xf32> -> vector<16x32xf32>
    %c0_9 = arith.constant 0 : index
    %c0_10 = arith.constant 0 : index
    %25 = vector.load %arg12[%c0_9, %c0_10] : memref<8x32xf32, #tpu.memory_space<vmem>>, vector<8x32xf32>
    %cst_11 = arith.constant dense<0.000000e+00> : vector<16x32xf32>
    %26 = tpu.matmul %0, %25, %cst_11 {dimension_numbers = #tpu.dot_dimension_numbers<[1], [0], [0], [1], [0, 0, 1, 1], [], []>} : vector<16x8xf32>, vector<8x32xf32>, vector<16x32xf32> -> vector<16x32xf32>
    %c0_12 = arith.constant 0 : index
    %c0_13 = arith.constant 0 : index
    %27 = vector.load %arg13[%c0_12, %c0_13] : memref<8x32xf32, #tpu.memory_space<vmem>>, vector<8x32xf32>
    %cst_14 = arith.constant dense<0.000000e+00> : vector<16x32xf32>
    %28 = tpu.matmul %0, %27, %cst_14 {dimension_numbers = #tpu.dot_dimension_numbers<[1], [0], [0], [1], [0, 0, 1, 1], [], []>} : vector<16x8xf32>, vector<8x32xf32>, vector<16x32xf32> -> vector<16x32xf32>
    %c0_15 = arith.constant 0 : index
    %c0_16 = arith.constant 0 : index
    %29 = vector.load %arg14[%c0_15, %c0_16] : memref<8x32xf32, #tpu.memory_space<vmem>>, vector<8x32xf32>
    %cst_17 = arith.constant dense<0.000000e+00> : vector<16x32xf32>
    %30 = tpu.matmul %0, %29, %cst_17 {dimension_numbers = #tpu.dot_dimension_numbers<[1], [0], [0], [1], [0, 0, 1, 1], [], []>} : vector<16x8xf32>, vector<8x32xf32>, vector<16x32xf32> -> vector<16x32xf32>
    %c0_18 = arith.constant 0 : index
    %c0_19 = arith.constant 0 : index
    %31 = vector.load %arg15[%c0_18, %c0_19] : memref<8x32xf32, #tpu.memory_space<vmem>>, vector<8x32xf32>
    %cst_20 = arith.constant dense<0.000000e+00> : vector<16x32xf32>
    %32 = tpu.matmul %0, %31, %cst_20 {dimension_numbers = #tpu.dot_dimension_numbers<[1], [0], [0], [1], [0, 0, 1, 1], [], []>} : vector<16x8xf32>, vector<8x32xf32>, vector<16x32xf32> -> vector<16x32xf32>
    %c0_21 = arith.constant 0 : index
    %c0_22 = arith.constant 0 : index
    %33 = vector.load %arg16[%c0_21, %c0_22] : memref<8x32xf32, #tpu.memory_space<vmem>>, vector<8x32xf32>
    %cst_23 = arith.constant dense<0.000000e+00> : vector<16x32xf32>
    %34 = tpu.matmul %0, %33, %cst_23 {dimension_numbers = #tpu.dot_dimension_numbers<[1], [0], [0], [1], [0, 0, 1, 1], [], []>} : vector<16x8xf32>, vector<8x32xf32>, vector<16x32xf32> -> vector<16x32xf32>
    %c0_24 = arith.constant 0 : index
    %c0_25 = arith.constant 0 : index
    %35 = vector.load %arg3[%c0_24, %c0_25] : memref<16x256xf32, #tpu.memory_space<vmem>>, vector<16x256xf32>
    %c0_26 = arith.constant 0 : index
    %c0_27 = arith.constant 0 : index
    %36 = vector.load %arg4[%c0_26, %c0_27] : memref<128x256xf32, #tpu.memory_space<vmem>>, vector<128x256xf32>
    %c0_28 = arith.constant 0 : index
    %c0_29 = arith.constant 0 : index
    %c0_30 = arith.constant 0 : index
    %37 = vector.load %arg1[%c0_28, %c0_29, %c0_30] : memref<1x128x2xf32, #tpu.memory_space<vmem>>, vector<1x128x2xf32>
    %38 = vector.shape_cast %37 : vector<1x128x2xf32> to vector<128x2xf32>
    %39 = vector.extract_strided_slice %38 {offsets = [0, 0], sizes = [16, 2], strides = [1, 1]} : vector<128x2xf32> to vector<16x2xf32>
    %cst_31 = arith.constant dense<0.000000e+00> : vector<32x2xf32>
    %40 = tpu.matmul %22, %39, %cst_31 {dimension_numbers = #tpu.dot_dimension_numbers<[1], [0], [0], [1], [0, 0, 1, 1], [], []>} : vector<32x16xf32>, vector<16x2xf32>, vector<32x2xf32> -> vector<32x2xf32>
    %41 = vector.extract_strided_slice %40 {offsets = [0, 0], sizes = [16, 2], strides = [1, 1]} : vector<32x2xf32> to vector<16x2xf32>
    %42 = vector.extract_strided_slice %40 {offsets = [16, 0], sizes = [16, 2], strides = [1, 1]} : vector<32x2xf32> to vector<16x2xf32>
    %43 = vector.extract_strided_slice %38 {offsets = [16, 0], sizes = [16, 2], strides = [1, 1]} : vector<128x2xf32> to vector<16x2xf32>
    %cst_32 = arith.constant dense<0.000000e+00> : vector<32x2xf32>
    %44 = tpu.matmul %22, %43, %cst_32 {dimension_numbers = #tpu.dot_dimension_numbers<[1], [0], [0], [1], [0, 0, 1, 1], [], []>} : vector<32x16xf32>, vector<16x2xf32>, vector<32x2xf32> -> vector<32x2xf32>
    %45 = vector.extract_strided_slice %44 {offsets = [0, 0], sizes = [16, 2], strides = [1, 1]} : vector<32x2xf32> to vector<16x2xf32>
    %46 = vector.extract_strided_slice %44 {offsets = [16, 0], sizes = [16, 2], strides = [1, 1]} : vector<32x2xf32> to vector<16x2xf32>
    %47 = vector.extract_strided_slice %38 {offsets = [32, 0], sizes = [16, 2], strides = [1, 1]} : vector<128x2xf32> to vector<16x2xf32>
    %cst_33 = arith.constant dense<0.000000e+00> : vector<32x2xf32>
    %48 = tpu.matmul %22, %47, %cst_33 {dimension_numbers = #tpu.dot_dimension_numbers<[1], [0], [0], [1], [0, 0, 1, 1], [], []>} : vector<32x16xf32>, vector<16x2xf32>, vector<32x2xf32> -> vector<32x2xf32>
    %49 = vector.extract_strided_slice %48 {offsets = [0, 0], sizes = [16, 2], strides = [1, 1]} : vector<32x2xf32> to vector<16x2xf32>
    %50 = vector.extract_strided_slice %48 {offsets = [16, 0], sizes = [16, 2], strides = [1, 1]} : vector<32x2xf32> to vector<16x2xf32>
    %51 = vector.extract_strided_slice %38 {offsets = [48, 0], sizes = [16, 2], strides = [1, 1]} : vector<128x2xf32> to vector<16x2xf32>
    %cst_34 = arith.constant dense<0.000000e+00> : vector<32x2xf32>
    %52 = tpu.matmul %22, %51, %cst_34 {dimension_numbers = #tpu.dot_dimension_numbers<[1], [0], [0], [1], [0, 0, 1, 1], [], []>} : vector<32x16xf32>, vector<16x2xf32>, vector<32x2xf32> -> vector<32x2xf32>
    %53 = vector.extract_strided_slice %52 {offsets = [0, 0], sizes = [16, 2], strides = [1, 1]} : vector<32x2xf32> to vector<16x2xf32>
    %54 = vector.extract_strided_slice %52 {offsets = [16, 0], sizes = [16, 2], strides = [1, 1]} : vector<32x2xf32> to vector<16x2xf32>
    %55 = vector.extract_strided_slice %38 {offsets = [64, 0], sizes = [16, 2], strides = [1, 1]} : vector<128x2xf32> to vector<16x2xf32>
    %cst_35 = arith.constant dense<0.000000e+00> : vector<32x2xf32>
    %56 = tpu.matmul %22, %55, %cst_35 {dimension_numbers = #tpu.dot_dimension_numbers<[1], [0], [0], [1], [0, 0, 1, 1], [], []>} : vector<32x16xf32>, vector<16x2xf32>, vector<32x2xf32> -> vector<32x2xf32>
    %57 = vector.extract_strided_slice %56 {offsets = [0, 0], sizes = [16, 2], strides = [1, 1]} : vector<32x2xf32> to vector<16x2xf32>
    %58 = vector.extract_strided_slice %56 {offsets = [16, 0], sizes = [16, 2], strides = [1, 1]} : vector<32x2xf32> to vector<16x2xf32>
    %59 = vector.extract_strided_slice %38 {offsets = [80, 0], sizes = [16, 2], strides = [1, 1]} : vector<128x2xf32> to vector<16x2xf32>
    %cst_36 = arith.constant dense<0.000000e+00> : vector<32x2xf32>
    %60 = tpu.matmul %22, %59, %cst_36 {dimension_numbers = #tpu.dot_dimension_numbers<[1], [0], [0], [1], [0, 0, 1, 1], [], []>} : vector<32x16xf32>, vector<16x2xf32>, vector<32x2xf32> -> vector<32x2xf32>
    %61 = vector.extract_strided_slice %60 {offsets = [0, 0], sizes = [16, 2], strides = [1, 1]} : vector<32x2xf32> to vector<16x2xf32>
    %62 = vector.extract_strided_slice %60 {offsets = [16, 0], sizes = [16, 2], strides = [1, 1]} : vector<32x2xf32> to vector<16x2xf32>
    %63 = vector.extract_strided_slice %38 {offsets = [96, 0], sizes = [16, 2], strides = [1, 1]} : vector<128x2xf32> to vector<16x2xf32>
    %cst_37 = arith.constant dense<0.000000e+00> : vector<32x2xf32>
    %64 = tpu.matmul %22, %63, %cst_37 {dimension_numbers = #tpu.dot_dimension_numbers<[1], [0], [0], [1], [0, 0, 1, 1], [], []>} : vector<32x16xf32>, vector<16x2xf32>, vector<32x2xf32> -> vector<32x2xf32>
    %65 = vector.extract_strided_slice %64 {offsets = [0, 0], sizes = [16, 2], strides = [1, 1]} : vector<32x2xf32> to vector<16x2xf32>
    %66 = vector.extract_strided_slice %64 {offsets = [16, 0], sizes = [16, 2], strides = [1, 1]} : vector<32x2xf32> to vector<16x2xf32>
    %67 = vector.extract_strided_slice %38 {offsets = [112, 0], sizes = [16, 2], strides = [1, 1]} : vector<128x2xf32> to vector<16x2xf32>
    %cst_38 = arith.constant dense<0.000000e+00> : vector<32x2xf32>
    %68 = tpu.matmul %22, %67, %cst_38 {dimension_numbers = #tpu.dot_dimension_numbers<[1], [0], [0], [1], [0, 0, 1, 1], [], []>} : vector<32x16xf32>, vector<16x2xf32>, vector<32x2xf32> -> vector<32x2xf32>
    %69 = vector.extract_strided_slice %68 {offsets = [0, 0], sizes = [16, 2], strides = [1, 1]} : vector<32x2xf32> to vector<16x2xf32>
    %70 = vector.extract_strided_slice %68 {offsets = [16, 0], sizes = [16, 2], strides = [1, 1]} : vector<32x2xf32> to vector<16x2xf32>
    %71 = tpu.concatenate %41, %45, %49, %53, %57, %61, %65, %69 in 0 : vector<16x2xf32>, vector<16x2xf32>, vector<16x2xf32>, vector<16x2xf32>, vector<16x2xf32>, vector<16x2xf32>, vector<16x2xf32>, vector<16x2xf32> -> vector<128x2xf32>
    %72 = tpu.concatenate %42, %46, %50, %54, %58, %62, %66, %70 in 0 : vector<16x2xf32>, vector<16x2xf32>, vector<16x2xf32>, vector<16x2xf32>, vector<16x2xf32>, vector<16x2xf32>, vector<16x2xf32>, vector<16x2xf32> -> vector<128x2xf32>
    %c0_39 = arith.constant 0 : index
    %c0_40 = arith.constant 0 : index
    %c0_41 = arith.constant 0 : index
    %73 = vector.load %arg5[%c0_39, %c0_40, %c0_41] : memref<3x2x768xf32, #tpu.memory_space<vmem>>, vector<1x2x768xf32>
    %74 = vector.shape_cast %73 : vector<1x2x768xf32> to vector<2x768xf32>
    %cst_42 = arith.constant dense<0.000000e+00> : vector<128x768xf32>
    %75 = tpu.matmul %38, %74, %cst_42 {dimension_numbers = #tpu.dot_dimension_numbers<[1], [0], [0], [1], [0, 0, 1, 1], [], []>} : vector<128x2xf32>, vector<2x768xf32>, vector<128x768xf32> -> vector<128x768xf32>
    %c1 = arith.constant 1 : index
    %c0_43 = arith.constant 0 : index
    %c0_44 = arith.constant 0 : index
    %76 = vector.load %arg5[%c1, %c0_43, %c0_44] : memref<3x2x768xf32, #tpu.memory_space<vmem>>, vector<1x2x768xf32>
    %77 = vector.shape_cast %76 : vector<1x2x768xf32> to vector<2x768xf32>
    %cst_45 = arith.constant dense<0.000000e+00> : vector<128x768xf32>
    %78 = tpu.matmul %71, %77, %cst_45 {dimension_numbers = #tpu.dot_dimension_numbers<[1], [0], [0], [1], [0, 0, 1, 1], [], []>} : vector<128x2xf32>, vector<2x768xf32>, vector<128x768xf32> -> vector<128x768xf32>
    %79 = arith.addf %75, %78 : vector<128x768xf32>
    %c2 = arith.constant 2 : index
    %c0_46 = arith.constant 0 : index
    %c0_47 = arith.constant 0 : index
    %80 = vector.load %arg5[%c2, %c0_46, %c0_47] : memref<3x2x768xf32, #tpu.memory_space<vmem>>, vector<1x2x768xf32>
    %81 = vector.shape_cast %80 : vector<1x2x768xf32> to vector<2x768xf32>
    %cst_48 = arith.constant dense<0.000000e+00> : vector<128x768xf32>
    %82 = tpu.matmul %72, %81, %cst_48 {dimension_numbers = #tpu.dot_dimension_numbers<[1], [0], [0], [1], [0, 0, 1, 1], [], []>} : vector<128x2xf32>, vector<2x768xf32>, vector<128x768xf32> -> vector<128x768xf32>
    %83 = arith.addf %79, %82 : vector<128x768xf32>
    %84 = vector.extract_strided_slice %83 {offsets = [0, 0], sizes = [128, 256], strides = [1, 1]} : vector<128x768xf32> to vector<128x256xf32>
    %85 = arith.mulf %84, %36 : vector<128x256xf32>
    %c128_i32 = arith.constant 128 : i32
    %86 = tpu.dynamic_rotate %85 by %c128_i32 dim 1 : vector<128x256xf32>, i32 -> vector<128x256xf32>
    %87 = arith.addf %85, %86 : vector<128x256xf32>
    %c64_i32 = arith.constant 64 : i32
    %88 = tpu.dynamic_rotate %87 by %c64_i32 dim 1 : vector<128x256xf32>, i32 -> vector<128x256xf32>
    %89 = arith.addf %87, %88 : vector<128x256xf32>
    %c32_i32 = arith.constant 32 : i32
    %90 = tpu.dynamic_rotate %89 by %c32_i32 dim 1 : vector<128x256xf32>, i32 -> vector<128x256xf32>
    %91 = arith.addf %89, %90 : vector<128x256xf32>
    %92 = vector.extract_strided_slice %91 {offsets = [0, 0], sizes = [128, 32], strides = [1, 1]} : vector<128x256xf32> to vector<128x32xf32>
    %c0_49 = arith.constant 0 : index
    %c0_50 = arith.constant 0 : index
    %93 = vector.load %arg22[%c0_49, %c0_50] : memref<128x32xf32, #tpu.memory_space<vmem>>, vector<128x32xf32>
    tpu.vector_store %arg22[%c0_49, %c0_50], %92 {strides = array<i32>} : memref<128x32xf32, #tpu.memory_space<vmem>>, vector<128x32xf32>,
    %94 = vector.extract_strided_slice %83 {offsets = [0, 256], sizes = [128, 256], strides = [1, 1]} : vector<128x768xf32> to vector<128x256xf32>
    %95 = arith.mulf %94, %36 : vector<128x256xf32>
    %c128_i32_51 = arith.constant 128 : i32
    %96 = tpu.dynamic_rotate %95 by %c128_i32_51 dim 1 : vector<128x256xf32>, i32 -> vector<128x256xf32>
    %97 = arith.addf %95, %96 : vector<128x256xf32>
    %c64_i32_52 = arith.constant 64 : i32
    %98 = tpu.dynamic_rotate %97 by %c64_i32_52 dim 1 : vector<128x256xf32>, i32 -> vector<128x256xf32>
    %99 = arith.addf %97, %98 : vector<128x256xf32>
    %c32_i32_53 = arith.constant 32 : i32
    %100 = tpu.dynamic_rotate %99 by %c32_i32_53 dim 1 : vector<128x256xf32>, i32 -> vector<128x256xf32>
    %101 = arith.addf %99, %100 : vector<128x256xf32>
    %102 = vector.extract_strided_slice %101 {offsets = [0, 0], sizes = [128, 32], strides = [1, 1]} : vector<128x256xf32> to vector<128x32xf32>
    %c0_54 = arith.constant 0 : index
    %c0_55 = arith.constant 0 : index
    %103 = vector.load %arg23[%c0_54, %c0_55] : memref<128x32xf32, #tpu.memory_space<vmem>>, vector<128x32xf32>
    tpu.vector_store %arg23[%c0_54, %c0_55], %102 {strides = array<i32>} : memref<128x32xf32, #tpu.memory_space<vmem>>, vector<128x32xf32>,
    %104 = vector.extract_strided_slice %83 {offsets = [0, 512], sizes = [128, 256], strides = [1, 1]} : vector<128x768xf32> to vector<128x256xf32>
    %105 = arith.mulf %104, %36 : vector<128x256xf32>
    %c128_i32_56 = arith.constant 128 : i32
    %106 = tpu.dynamic_rotate %105 by %c128_i32_56 dim 1 : vector<128x256xf32>, i32 -> vector<128x256xf32>
    %107 = arith.addf %105, %106 : vector<128x256xf32>
    %c64_i32_57 = arith.constant 64 : i32
    %108 = tpu.dynamic_rotate %107 by %c64_i32_57 dim 1 : vector<128x256xf32>, i32 -> vector<128x256xf32>
    %109 = arith.addf %107, %108 : vector<128x256xf32>
    %c32_i32_58 = arith.constant 32 : i32
    %110 = tpu.dynamic_rotate %109 by %c32_i32_58 dim 1 : vector<128x256xf32>, i32 -> vector<128x256xf32>
    %111 = arith.addf %109, %110 : vector<128x256xf32>
    %112 = vector.extract_strided_slice %111 {offsets = [0, 0], sizes = [128, 32], strides = [1, 1]} : vector<128x256xf32> to vector<128x32xf32>
    %c0_59 = arith.constant 0 : index
    %c0_60 = arith.constant 0 : index
    %113 = vector.load %arg24[%c0_59, %c0_60] : memref<128x32xf32, #tpu.memory_space<vmem>>, vector<128x32xf32>
    tpu.vector_store %arg24[%c0_59, %c0_60], %112 {strides = array<i32>} : memref<128x32xf32, #tpu.memory_space<vmem>>, vector<128x32xf32>,
    %cst_61 = arith.constant 0.000000e+00 : f32
    %114 = vector.broadcast %cst_61 : f32 to vector<16x32xf32>
    %c0_i32 = arith.constant 0 : i32
    %c8_i32 = arith.constant 8 : i32
    %115 = arith.addi %c0_i32, %c8_i32 : i32
    %c1_i32 = arith.constant 1 : i32
    %116:2 = scf.for %arg26 = %c0_i32 to %115 step %c1_i32 iter_args(%arg27 = %114, %arg28 = %114) -> (vector<16x32xf32>, vector<16x32xf32>)  : i32 {
      %c16_i32 = arith.constant 16 : i32
      %138 = arith.muli %arg26, %c16_i32 : i32
      %139 = tpu.assume_multiple %138, 16 : i32
      %140 = arith.index_cast %139 : i32 to index
      %c0_80 = arith.constant 0 : index
      %141 = vector.load %arg22[%140, %c0_80] : memref<128x32xf32, #tpu.memory_space<vmem>>, vector<16x32xf32>
      %142 = arith.index_cast %139 : i32 to index
      %c0_81 = arith.constant 0 : index
      %143 = vector.load %arg23[%142, %c0_81] : memref<128x32xf32, #tpu.memory_space<vmem>>, vector<16x32xf32>
      %144 = arith.index_cast %139 : i32 to index
      %c0_82 = arith.constant 0 : index
      %145 = vector.load %arg24[%144, %c0_82] : memref<128x32xf32, #tpu.memory_space<vmem>>, vector<16x32xf32>
      %cst_83 = arith.constant dense<0.000000e+00> : vector<32x32xf32>
      %146 = tpu.matmul %22, %arg27, %cst_83 {dimension_numbers = #tpu.dot_dimension_numbers<[1], [0], [0], [1], [0, 0, 1, 1], [], []>} : vector<32x16xf32>, vector<16x32xf32>, vector<32x32xf32> -> vector<32x32xf32>
      %147 = vector.extract_strided_slice %146 {offsets = [0, 0], sizes = [16, 32], strides = [1, 1]} : vector<32x32xf32> to vector<16x32xf32>
      %148 = vector.extract_strided_slice %146 {offsets = [16, 0], sizes = [16, 32], strides = [1, 1]} : vector<32x32xf32> to vector<16x32xf32>
      %c0_84 = arith.constant 0 : index
      %c0_85 = arith.constant 0 : index
      %c0_86 = arith.constant 0 : index
      %149 = vector.load %arg6[%c0_84, %c0_85, %c0_86] : memref<3x32x512xf32, #tpu.memory_space<vmem>>, vector<1x32x512xf32>
      %150 = vector.shape_cast %149 : vector<1x32x512xf32> to vector<32x512xf32>
      %cst_87 = arith.constant dense<0.000000e+00> : vector<16x512xf32>
      %151 = tpu.matmul %arg27, %150, %cst_87 {dimension_numbers = #tpu.dot_dimension_numbers<[1], [0], [0], [1], [0, 0, 1, 1], [], []>} : vector<16x32xf32>, vector<32x512xf32>, vector<16x512xf32> -> vector<16x512xf32>
      %c1_88 = arith.constant 1 : index
      %c0_89 = arith.constant 0 : index
      %c0_90 = arith.constant 0 : index
      %152 = vector.load %arg6[%c1_88, %c0_89, %c0_90] : memref<3x32x512xf32, #tpu.memory_space<vmem>>, vector<1x32x512xf32>
      %153 = vector.shape_cast %152 : vector<1x32x512xf32> to vector<32x512xf32>
      %cst_91 = arith.constant dense<0.000000e+00> : vector<16x512xf32>
      %154 = tpu.matmul %147, %153, %cst_91 {dimension_numbers = #tpu.dot_dimension_numbers<[1], [0], [0], [1], [0, 0, 1, 1], [], []>} : vector<16x32xf32>, vector<32x512xf32>, vector<16x512xf32> -> vector<16x512xf32>
      %155 = arith.addf %151, %154 : vector<16x512xf32>
      %c2_92 = arith.constant 2 : index
      %c0_93 = arith.constant 0 : index
      %c0_94 = arith.constant 0 : index
      %156 = vector.load %arg6[%c2_92, %c0_93, %c0_94] : memref<3x32x512xf32, #tpu.memory_space<vmem>>, vector<1x32x512xf32>
      %157 = vector.shape_cast %156 : vector<1x32x512xf32> to vector<32x512xf32>
      %cst_95 = arith.constant dense<0.000000e+00> : vector<16x512xf32>
      %158 = tpu.matmul %148, %157, %cst_95 {dimension_numbers = #tpu.dot_dimension_numbers<[1], [0], [0], [1], [0, 0, 1, 1], [], []>} : vector<16x32xf32>, vector<32x512xf32>, vector<16x512xf32> -> vector<16x512xf32>
      %159 = arith.addf %155, %158 : vector<16x512xf32>
      %160 = vector.extract_strided_slice %159 {offsets = [0, 0], sizes = [16, 256], strides = [1, 1]} : vector<16x512xf32> to vector<16x256xf32>
      %161 = arith.mulf %160, %35 : vector<16x256xf32>
      %c128_i32_96 = arith.constant 128 : i32
      %162 = tpu.dynamic_rotate %161 by %c128_i32_96 dim 1 : vector<16x256xf32>, i32 -> vector<16x256xf32>
      %163 = arith.addf %161, %162 : vector<16x256xf32>
      %c64_i32_97 = arith.constant 64 : i32
      %164 = tpu.dynamic_rotate %163 by %c64_i32_97 dim 1 : vector<16x256xf32>, i32 -> vector<16x256xf32>
      %165 = arith.addf %163, %164 : vector<16x256xf32>
      %c32_i32_98 = arith.constant 32 : i32
      %166 = tpu.dynamic_rotate %165 by %c32_i32_98 dim 1 : vector<16x256xf32>, i32 -> vector<16x256xf32>
      %167 = arith.addf %165, %166 : vector<16x256xf32>
      %168 = vector.extract_strided_slice %167 {offsets = [0, 0], sizes = [16, 32], strides = [1, 1]} : vector<16x256xf32> to vector<16x32xf32>
      %169 = arith.addf %141, %168 : vector<16x32xf32>
      %170 = arith.addf %169, %24 : vector<16x32xf32>
      %171 = arith.negf %170 : vector<16x32xf32>
      %172 = math.exp %171 : vector<16x32xf32>
      %cst_99 = arith.constant 1.000000e+00 : f32
      %173 = vector.broadcast %cst_99 : f32 to vector<16x32xf32>
      %174 = arith.addf %173, %172 : vector<16x32xf32>
      %175 = arith.divf %173, %174 : vector<16x32xf32>
      %176 = vector.extract_strided_slice %159 {offsets = [0, 256], sizes = [16, 256], strides = [1, 1]} : vector<16x512xf32> to vector<16x256xf32>
      %177 = arith.mulf %176, %35 : vector<16x256xf32>
      %c128_i32_100 = arith.constant 128 : i32
      %178 = tpu.dynamic_rotate %177 by %c128_i32_100 dim 1 : vector<16x256xf32>, i32 -> vector<16x256xf32>
      %179 = arith.addf %177, %178 : vector<16x256xf32>
      %c64_i32_101 = arith.constant 64 : i32
      %180 = tpu.dynamic_rotate %179 by %c64_i32_101 dim 1 : vector<16x256xf32>, i32 -> vector<16x256xf32>
      %181 = arith.addf %179, %180 : vector<16x256xf32>
      %c32_i32_102 = arith.constant 32 : i32
      %182 = tpu.dynamic_rotate %181 by %c32_i32_102 dim 1 : vector<16x256xf32>, i32 -> vector<16x256xf32>
      %183 = arith.addf %181, %182 : vector<16x256xf32>
      %184 = vector.extract_strided_slice %183 {offsets = [0, 0], sizes = [16, 32], strides = [1, 1]} : vector<16x256xf32> to vector<16x32xf32>
      %185 = arith.addf %143, %184 : vector<16x32xf32>
      %186 = arith.addf %185, %26 : vector<16x32xf32>
      %187 = arith.negf %186 : vector<16x32xf32>
      %188 = math.exp %187 : vector<16x32xf32>
      %cst_103 = arith.constant 1.000000e+00 : f32
      %189 = vector.broadcast %cst_103 : f32 to vector<16x32xf32>
      %190 = arith.addf %189, %188 : vector<16x32xf32>
      %191 = arith.divf %189, %190 : vector<16x32xf32>
      %192 = arith.mulf %175, %arg27 : vector<16x32xf32>
      %cst_104 = arith.constant dense<0.000000e+00> : vector<32x32xf32>
      %193 = tpu.matmul %22, %192, %cst_104 {dimension_numbers = #tpu.dot_dimension_numbers<[1], [0], [0], [1], [0, 0, 1, 1], [], []>} : vector<32x16xf32>, vector<16x32xf32>, vector<32x32xf32> -> vector<32x32xf32>
      %194 = vector.extract_strided_slice %193 {offsets = [0, 0], sizes = [16, 32], strides = [1, 1]} : vector<32x32xf32> to vector<16x32xf32>
      %195 = vector.extract_strided_slice %193 {offsets = [16, 0], sizes = [16, 32], strides = [1, 1]} : vector<32x32xf32> to vector<16x32xf32>
      %c0_105 = arith.constant 0 : index
      %c0_106 = arith.constant 0 : index
      %c0_107 = arith.constant 0 : index
      %196 = vector.load %arg7[%c0_105, %c0_106, %c0_107] : memref<3x32x256xf32, #tpu.memory_space<vmem>>, vector<1x32x256xf32>
      %197 = vector.shape_cast %196 : vector<1x32x256xf32> to vector<32x256xf32>
      %cst_108 = arith.constant dense<0.000000e+00> : vector<16x256xf32>
      %198 = tpu.matmul %192, %197, %cst_108 {dimension_numbers = #tpu.dot_dimension_numbers<[1], [0], [0], [1], [0, 0, 1, 1], [], []>} : vector<16x32xf32>, vector<32x256xf32>, vector<16x256xf32> -> vector<16x256xf32>
      %c1_109 = arith.constant 1 : index
      %c0_110 = arith.constant 0 : index
      %c0_111 = arith.constant 0 : index
      %199 = vector.load %arg7[%c1_109, %c0_110, %c0_111] : memref<3x32x256xf32, #tpu.memory_space<vmem>>, vector<1x32x256xf32>
      %200 = vector.shape_cast %199 : vector<1x32x256xf32> to vector<32x256xf32>
      %cst_112 = arith.constant dense<0.000000e+00> : vector<16x256xf32>
      %201 = tpu.matmul %194, %200, %cst_112 {dimension_numbers = #tpu.dot_dimension_numbers<[1], [0], [0], [1], [0, 0, 1, 1], [], []>} : vector<16x32xf32>, vector<32x256xf32>, vector<16x256xf32> -> vector<16x256xf32>
      %202 = arith.addf %198, %201 : vector<16x256xf32>
      %c2_113 = arith.constant 2 : index
      %c0_114 = arith.constant 0 : index
      %c0_115 = arith.constant 0 : index
      %203 = vector.load %arg7[%c2_113, %c0_114, %c0_115] : memref<3x32x256xf32, #tpu.memory_space<vmem>>, vector<1x32x256xf32>
      %204 = vector.shape_cast %203 : vector<1x32x256xf32> to vector<32x256xf32>
      %cst_116 = arith.constant dense<0.000000e+00> : vector<16x256xf32>
      %205 = tpu.matmul %195, %204, %cst_116 {dimension_numbers = #tpu.dot_dimension_numbers<[1], [0], [0], [1], [0, 0, 1, 1], [], []>} : vector<16x32xf32>, vector<32x256xf32>, vector<16x256xf32> -> vector<16x256xf32>
      %206 = arith.addf %202, %205 : vector<16x256xf32>
      %207 = arith.mulf %206, %35 : vector<16x256xf32>
      %c128_i32_117 = arith.constant 128 : i32
      %208 = tpu.dynamic_rotate %207 by %c128_i32_117 dim 1 : vector<16x256xf32>, i32 -> vector<16x256xf32>
      %209 = arith.addf %207, %208 : vector<16x256xf32>
      %c64_i32_118 = arith.constant 64 : i32
      %210 = tpu.dynamic_rotate %209 by %c64_i32_118 dim 1 : vector<16x256xf32>, i32 -> vector<16x256xf32>
      %211 = arith.addf %209, %210 : vector<16x256xf32>
      %c32_i32_119 = arith.constant 32 : i32
      %212 = tpu.dynamic_rotate %211 by %c32_i32_119 dim 1 : vector<16x256xf32>, i32 -> vector<16x256xf32>
      %213 = arith.addf %211, %212 : vector<16x256xf32>
      %214 = vector.extract_strided_slice %213 {offsets = [0, 0], sizes = [16, 32], strides = [1, 1]} : vector<16x256xf32> to vector<16x32xf32>
      %215 = arith.addf %145, %214 : vector<16x32xf32>
      %216 = arith.addf %215, %28 : vector<16x32xf32>
      %217 = math.tanh %216 : vector<16x32xf32>
      %218 = arith.mulf %191, %arg27 : vector<16x32xf32>
      %cst_120 = arith.constant 1.000000e+00 : f32
      %219 = vector.broadcast %cst_120 : f32 to vector<16x32xf32>
      %220 = arith.subf %219, %191 : vector<16x32xf32>
      %221 = arith.mulf %220, %217 : vector<16x32xf32>
      %222 = arith.addf %218, %221 : vector<16x32xf32>
      %cst_121 = arith.constant dense<0.000000e+00> : vector<32x32xf32>
      %223 = tpu.matmul %22, %222, %cst_121 {dimension_numbers = #tpu.dot_dimension_numbers<[1], [0], [0], [1], [0, 0, 1, 1], [], []>} : vector<32x16xf32>, vector<16x32xf32>, vector<32x32xf32> -> vector<32x32xf32>
      %224 = vector.extract_strided_slice %223 {offsets = [0, 0], sizes = [16, 32], strides = [1, 1]} : vector<32x32xf32> to vector<16x32xf32>
      %225 = vector.extract_strided_slice %223 {offsets = [16, 0], sizes = [16, 32], strides = [1, 1]} : vector<32x32xf32> to vector<16x32xf32>
      %c0_122 = arith.constant 0 : index
      %c0_123 = arith.constant 0 : index
      %c0_124 = arith.constant 0 : index
      %226 = vector.load %arg8[%c0_122, %c0_123, %c0_124] : memref<3x32x768xf32, #tpu.memory_space<vmem>>, vector<1x32x768xf32>
      %227 = vector.shape_cast %226 : vector<1x32x768xf32> to vector<32x768xf32>
      %cst_125 = arith.constant dense<0.000000e+00> : vector<16x768xf32>
      %228 = tpu.matmul %222, %227, %cst_125 {dimension_numbers = #tpu.dot_dimension_numbers<[1], [0], [0], [1], [0, 0, 1, 1], [], []>} : vector<16x32xf32>, vector<32x768xf32>, vector<16x768xf32> -> vector<16x768xf32>
      %c1_126 = arith.constant 1 : index
      %c0_127 = arith.constant 0 : index
      %c0_128 = arith.constant 0 : index
      %229 = vector.load %arg8[%c1_126, %c0_127, %c0_128] : memref<3x32x768xf32, #tpu.memory_space<vmem>>, vector<1x32x768xf32>
      %230 = vector.shape_cast %229 : vector<1x32x768xf32> to vector<32x768xf32>
      %cst_129 = arith.constant dense<0.000000e+00> : vector<16x768xf32>
      %231 = tpu.matmul %224, %230, %cst_129 {dimension_numbers = #tpu.dot_dimension_numbers<[1], [0], [0], [1], [0, 0, 1, 1], [], []>} : vector<16x32xf32>, vector<32x768xf32>, vector<16x768xf32> -> vector<16x768xf32>
      %232 = arith.addf %228, %231 : vector<16x768xf32>
      %c2_130 = arith.constant 2 : index
      %c0_131 = arith.constant 0 : index
      %c0_132 = arith.constant 0 : index
      %233 = vector.load %arg8[%c2_130, %c0_131, %c0_132] : memref<3x32x768xf32, #tpu.memory_space<vmem>>, vector<1x32x768xf32>
      %234 = vector.shape_cast %233 : vector<1x32x768xf32> to vector<32x768xf32>
      %cst_133 = arith.constant dense<0.000000e+00> : vector<16x768xf32>
      %235 = tpu.matmul %225, %234, %cst_133 {dimension_numbers = #tpu.dot_dimension_numbers<[1], [0], [0], [1], [0, 0, 1, 1], [], []>} : vector<16x32xf32>, vector<32x768xf32>, vector<16x768xf32> -> vector<16x768xf32>
      %236 = arith.addf %232, %235 : vector<16x768xf32>
      %cst_134 = arith.constant dense<0.000000e+00> : vector<32x32xf32>
      %237 = tpu.matmul %22, %arg28, %cst_134 {dimension_numbers = #tpu.dot_dimension_numbers<[1], [0], [0], [1], [0, 0, 1, 1], [], []>} : vector<32x16xf32>, vector<16x32xf32>, vector<32x32xf32> -> vector<32x32xf32>
      %238 = vector.extract_strided_slice %237 {offsets = [0, 0], sizes = [16, 32], strides = [1, 1]} : vector<32x32xf32> to vector<16x32xf32>
      %239 = vector.extract_strided_slice %237 {offsets = [16, 0], sizes = [16, 32], strides = [1, 1]} : vector<32x32xf32> to vector<16x32xf32>
      %c0_135 = arith.constant 0 : index
      %c0_136 = arith.constant 0 : index
      %c0_137 = arith.constant 0 : index
      %240 = vector.load %arg9[%c0_135, %c0_136, %c0_137] : memref<3x32x512xf32, #tpu.memory_space<vmem>>, vector<1x32x512xf32>
      %241 = vector.shape_cast %240 : vector<1x32x512xf32> to vector<32x512xf32>
      %cst_138 = arith.constant dense<0.000000e+00> : vector<16x512xf32>
      %242 = tpu.matmul %arg28, %241, %cst_138 {dimension_numbers = #tpu.dot_dimension_numbers<[1], [0], [0], [1], [0, 0, 1, 1], [], []>} : vector<16x32xf32>, vector<32x512xf32>, vector<16x512xf32> -> vector<16x512xf32>
      %c1_139 = arith.constant 1 : index
      %c0_140 = arith.constant 0 : index
      %c0_141 = arith.constant 0 : index
      %243 = vector.load %arg9[%c1_139, %c0_140, %c0_141] : memref<3x32x512xf32, #tpu.memory_space<vmem>>, vector<1x32x512xf32>
      %244 = vector.shape_cast %243 : vector<1x32x512xf32> to vector<32x512xf32>
      %cst_142 = arith.constant dense<0.000000e+00> : vector<16x512xf32>
      %245 = tpu.matmul %238, %244, %cst_142 {dimension_numbers = #tpu.dot_dimension_numbers<[1], [0], [0], [1], [0, 0, 1, 1], [], []>} : vector<16x32xf32>, vector<32x512xf32>, vector<16x512xf32> -> vector<16x512xf32>
      %246 = arith.addf %242, %245 : vector<16x512xf32>
      %c2_143 = arith.constant 2 : index
      %c0_144 = arith.constant 0 : index
      %c0_145 = arith.constant 0 : index
      %247 = vector.load %arg9[%c2_143, %c0_144, %c0_145] : memref<3x32x512xf32, #tpu.memory_space<vmem>>, vector<1x32x512xf32>
      %248 = vector.shape_cast %247 : vector<1x32x512xf32> to vector<32x512xf32>
      %cst_146 = arith.constant dense<0.000000e+00> : vector<16x512xf32>
      %249 = tpu.matmul %239, %248, %cst_146 {dimension_numbers = #tpu.dot_dimension_numbers<[1], [0], [0], [1], [0, 0, 1, 1], [], []>} : vector<16x32xf32>, vector<32x512xf32>, vector<16x512xf32> -> vector<16x512xf32>
      %250 = arith.addf %246, %249 : vector<16x512xf32>
      %251 = vector.extract_strided_slice %236 {offsets = [0, 0], sizes = [16, 256], strides = [1, 1]} : vector<16x768xf32> to vector<16x256xf32>
      %252 = vector.extract_strided_slice %250 {offsets = [0, 0], sizes = [16, 256], strides = [1, 1]} : vector<16x512xf32> to vector<16x256xf32>
      %253 = arith.addf %251, %252 : vector<16x256xf32>
      %254 = arith.mulf %253, %35 : vector<16x256xf32>
      %c128_i32_147 = arith.constant 128 : i32
      %255 = tpu.dynamic_rotate %254 by %c128_i32_147 dim 1 : vector<16x256xf32>, i32 -> vector<16x256xf32>
      %256 = arith.addf %254, %255 : vector<16x256xf32>
      %c64_i32_148 = arith.constant 64 : i32
      %257 = tpu.dynamic_rotate %256 by %c64_i32_148 dim 1 : vector<16x256xf32>, i32 -> vector<16x256xf32>
      %258 = arith.addf %256, %257 : vector<16x256xf32>
      %c32_i32_149 = arith.constant 32 : i32
      %259 = tpu.dynamic_rotate %258 by %c32_i32_149 dim 1 : vector<16x256xf32>, i32 -> vector<16x256xf32>
      %260 = arith.addf %258, %259 : vector<16x256xf32>
      %261 = vector.extract_strided_slice %260 {offsets = [0, 0], sizes = [16, 32], strides = [1, 1]} : vector<16x256xf32> to vector<16x32xf32>
      %262 = arith.addf %261, %30 : vector<16x32xf32>
      %263 = arith.negf %262 : vector<16x32xf32>
      %264 = math.exp %263 : vector<16x32xf32>
      %cst_150 = arith.constant 1.000000e+00 : f32
      %265 = vector.broadcast %cst_150 : f32 to vector<16x32xf32>
      %266 = arith.addf %265, %264 : vector<16x32xf32>
      %267 = arith.divf %265, %266 : vector<16x32xf32>
      %268 = vector.extract_strided_slice %236 {offsets = [0, 256], sizes = [16, 256], strides = [1, 1]} : vector<16x768xf32> to vector<16x256xf32>
      %269 = vector.extract_strided_slice %250 {offsets = [0, 256], sizes = [16, 256], strides = [1, 1]} : vector<16x512xf32> to vector<16x256xf32>
      %270 = arith.addf %268, %269 : vector<16x256xf32>
      %271 = arith.mulf %270, %35 : vector<16x256xf32>
      %c128_i32_151 = arith.constant 128 : i32
      %272 = tpu.dynamic_rotate %271 by %c128_i32_151 dim 1 : vector<16x256xf32>, i32 -> vector<16x256xf32>
      %273 = arith.addf %271, %272 : vector<16x256xf32>
      %c64_i32_152 = arith.constant 64 : i32
      %274 = tpu.dynamic_rotate %273 by %c64_i32_152 dim 1 : vector<16x256xf32>, i32 -> vector<16x256xf32>
      %275 = arith.addf %273, %274 : vector<16x256xf32>
      %c32_i32_153 = arith.constant 32 : i32
      %276 = tpu.dynamic_rotate %275 by %c32_i32_153 dim 1 : vector<16x256xf32>, i32 -> vector<16x256xf32>
      %277 = arith.addf %275, %276 : vector<16x256xf32>
      %278 = vector.extract_strided_slice %277 {offsets = [0, 0], sizes = [16, 32], strides = [1, 1]} : vector<16x256xf32> to vector<16x32xf32>
      %279 = arith.addf %278, %32 : vector<16x32xf32>
      %280 = arith.negf %279 : vector<16x32xf32>
      %281 = math.exp %280 : vector<16x32xf32>
      %cst_154 = arith.constant 1.000000e+00 : f32
      %282 = vector.broadcast %cst_154 : f32 to vector<16x32xf32>
      %283 = arith.addf %282, %281 : vector<16x32xf32>
      %284 = arith.divf %282, %283 : vector<16x32xf32>
      %285 = arith.mulf %267, %arg28 : vector<16x32xf32>
      %cst_155 = arith.constant dense<0.000000e+00> : vector<32x32xf32>
      %286 = tpu.matmul %22, %285, %cst_155 {dimension_numbers = #tpu.dot_dimension_numbers<[1], [0], [0], [1], [0, 0, 1, 1], [], []>} : vector<32x16xf32>, vector<16x32xf32>, vector<32x32xf32> -> vector<32x32xf32>
      %287 = vector.extract_strided_slice %286 {offsets = [0, 0], sizes = [16, 32], strides = [1, 1]} : vector<32x32xf32> to vector<16x32xf32>
      %288 = vector.extract_strided_slice %286 {offsets = [16, 0], sizes = [16, 32], strides = [1, 1]} : vector<32x32xf32> to vector<16x32xf32>
      %c0_156 = arith.constant 0 : index
      %c0_157 = arith.constant 0 : index
      %c0_158 = arith.constant 0 : index
      %289 = vector.load %arg10[%c0_156, %c0_157, %c0_158] : memref<3x32x256xf32, #tpu.memory_space<vmem>>, vector<1x32x256xf32>
      %290 = vector.shape_cast %289 : vector<1x32x256xf32> to vector<32x256xf32>
      %cst_159 = arith.constant dense<0.000000e+00> : vector<16x256xf32>
      %291 = tpu.matmul %285, %290, %cst_159 {dimension_numbers = #tpu.dot_dimension_numbers<[1], [0], [0], [1], [0, 0, 1, 1], [], []>} : vector<16x32xf32>, vector<32x256xf32>, vector<16x256xf32> -> vector<16x256xf32>
      %c1_160 = arith.constant 1 : index
      %c0_161 = arith.constant 0 : index
      %c0_162 = arith.constant 0 : index
      %292 = vector.load %arg10[%c1_160, %c0_161, %c0_162] : memref<3x32x256xf32, #tpu.memory_space<vmem>>, vector<1x32x256xf32>
      %293 = vector.shape_cast %292 : vector<1x32x256xf32> to vector<32x256xf32>
      %cst_163 = arith.constant dense<0.000000e+00> : vector<16x256xf32>
      %294 = tpu.matmul %287, %293, %cst_163 {dimension_numbers = #tpu.dot_dimension_numbers<[1], [0], [0], [1], [0, 0, 1, 1], [], []>} : vector<16x32xf32>, vector<32x256xf32>, vector<16x256xf32> -> vector<16x256xf32>
      %295 = arith.addf %291, %294 : vector<16x256xf32>
      %c2_164 = arith.constant 2 : index
      %c0_165 = arith.constant 0 : index
      %c0_166 = arith.constant 0 : index
      %296 = vector.load %arg10[%c2_164, %c0_165, %c0_166] : memref<3x32x256xf32, #tpu.memory_space<vmem>>, vector<1x32x256xf32>
      %297 = vector.shape_cast %296 : vector<1x32x256xf32> to vector<32x256xf32>
      %cst_167 = arith.constant dense<0.000000e+00> : vector<16x256xf32>
      %298 = tpu.matmul %288, %297, %cst_167 {dimension_numbers = #tpu.dot_dimension_numbers<[1], [0], [0], [1], [0, 0, 1, 1], [], []>} : vector<16x32xf32>, vector<32x256xf32>, vector<16x256xf32> -> vector<16x256xf32>
      %299 = arith.addf %295, %298 : vector<16x256xf32>
      %300 = vector.extract_strided_slice %236 {offsets = [0, 512], sizes = [16, 256], strides = [1, 1]} : vector<16x768xf32> to vector<16x256xf32>
      %301 = arith.addf %300, %299 : vector<16x256xf32>
      %302 = arith.mulf %301, %35 : vector<16x256xf32>
      %c128_i32_168 = arith.constant 128 : i32
      %303 = tpu.dynamic_rotate %302 by %c128_i32_168 dim 1 : vector<16x256xf32>, i32 -> vector<16x256xf32>
      %304 = arith.addf %302, %303 : vector<16x256xf32>
      %c64_i32_169 = arith.constant 64 : i32
      %305 = tpu.dynamic_rotate %304 by %c64_i32_169 dim 1 : vector<16x256xf32>, i32 -> vector<16x256xf32>
      %306 = arith.addf %304, %305 : vector<16x256xf32>
      %c32_i32_170 = arith.constant 32 : i32
      %307 = tpu.dynamic_rotate %306 by %c32_i32_170 dim 1 : vector<16x256xf32>, i32 -> vector<16x256xf32>
      %308 = arith.addf %306, %307 : vector<16x256xf32>
      %309 = vector.extract_strided_slice %308 {offsets = [0, 0], sizes = [16, 32], strides = [1, 1]} : vector<16x256xf32> to vector<16x32xf32>
      %310 = arith.addf %309, %34 : vector<16x32xf32>
      %311 = math.tanh %310 : vector<16x32xf32>
      %312 = arith.mulf %284, %arg28 : vector<16x32xf32>
      %cst_171 = arith.constant 1.000000e+00 : f32
      %313 = vector.broadcast %cst_171 : f32 to vector<16x32xf32>
      %314 = arith.subf %313, %284 : vector<16x32xf32>
      %315 = arith.mulf %314, %311 : vector<16x32xf32>
      %316 = arith.addf %312, %315 : vector<16x32xf32>
      %317 = arith.index_cast %139 : i32 to index
      %c0_172 = arith.constant 0 : index
      %318 = vector.load %arg25[%317, %c0_172] : memref<128x32xf32, #tpu.memory_space<vmem>>, vector<16x32xf32>
      tpu.vector_store %arg25[%317, %c0_172], %316 {strides = array<i32>} : memref<128x32xf32, #tpu.memory_space<vmem>>, vector<16x32xf32>,
      scf.yield %222, %316 : vector<16x32xf32>, vector<16x32xf32>
    }
    %c8_i32_62 = arith.constant 8 : i32
    %c0_63 = arith.constant 0 : index
    %c0_64 = arith.constant 0 : index
    %117 = vector.load %arg25[%c0_63, %c0_64] : memref<128x32xf32, #tpu.memory_space<vmem>>, vector<128x32xf32>
    %cst_65 = arith.constant 0.000000e+00 : f32
    %118 = vector.broadcast %cst_65 : f32 to vector<128x32xf32>
    %119 = arith.maximumf %117, %118 : vector<128x32xf32>
    %c0_66 = arith.constant 0 : index
    %c0_67 = arith.constant 0 : index
    %120 = vector.load %arg17[%c0_66, %c0_67] : memref<32x512xf32, #tpu.memory_space<vmem>>, vector<32x512xf32>
    %cst_68 = arith.constant dense<0.000000e+00> : vector<128x512xf32>
    %121 = tpu.matmul %119, %120, %cst_68 {dimension_numbers = #tpu.dot_dimension_numbers<[1], [0], [0], [1], [0, 0, 1, 1], [], []>} : vector<128x32xf32>, vector<32x512xf32>, vector<128x512xf32> -> vector<128x512xf32>
    %c0_69 = arith.constant 0 : index
    %c0_70 = arith.constant 0 : index
    %122 = vector.load %arg18[%c0_69, %c0_70] : memref<1x512xf32, #tpu.memory_space<vmem>>, vector<1x512xf32>
    %123 = vector.broadcast %122 : vector<1x512xf32> to vector<128x512xf32>
    %124 = arith.addf %121, %123 : vector<128x512xf32>
    %cst_71 = arith.constant 0.000000e+00 : f32
    %125 = vector.broadcast %cst_71 : f32 to vector<128x512xf32>
    %126 = arith.maximumf %124, %125 : vector<128x512xf32>
    %c0_72 = arith.constant 0 : index
    %c0_73 = arith.constant 0 : index
    %127 = vector.load %arg19[%c0_72, %c0_73] : memref<1x512xf32, #tpu.memory_space<vmem>>, vector<1x512xf32>
    %128 = vector.broadcast %127 : vector<1x512xf32> to vector<128x512xf32>
    %129 = arith.mulf %126, %128 : vector<128x512xf32>
    %cst_74 = arith.constant dense<0.000000e+00> : vector<128xf32>
    %130 = vector.multi_reduction <add>, %129, %cst_74 [1] : vector<128x512xf32> to vector<128xf32>
    %131 = vector.shape_cast %130 : vector<128xf32> to vector<128x1xf32>
    %c0_75 = arith.constant 0 : index
    %c0_76 = arith.constant 0 : index
    %132 = vector.load %arg20[%c0_75, %c0_76] : memref<1x1xf32, #tpu.memory_space<vmem>>, vector<1x1xf32>
    %133 = vector.broadcast %132 : vector<1x1xf32> to vector<128x1xf32>
    %134 = arith.addf %131, %133 : vector<128x1xf32>
    %c0_77 = arith.constant 0 : index
    %c0_78 = arith.constant 0 : index
    %c0_79 = arith.constant 0 : index
    %135 = vector.load %arg21[%c0_77, %c0_78, %c0_79] : memref<1x128x1xf32, #tpu.memory_space<vmem>>, vector<1x128x1xf32>
    %136 = vector.shape_cast %135 : vector<1x128x1xf32> to vector<128x1xf32>
    %137 = vector.shape_cast %134 : vector<128x1xf32> to vector<1x128x1xf32>
    tpu.vector_store %arg21[%c0_77, %c0_78, %c0_79], %137 {strides = array<i32>} : memref<1x128x1xf32, #tpu.memory_space<vmem>>, vector<1x128x1xf32>,
    return
  }
  func.func @transform_0(%arg0: i32) -> (i32, i32, i32) {
    %c0_i32 = arith.constant 0 : i32
    %c0_i32_0 = arith.constant 0 : i32
    %c0_i32_1 = arith.constant 0 : i32
    return %arg0, %c0_i32, %c0_i32_0 : i32, i32, i32
  }
  func.func @transform_1(%arg0: i32) -> (i32, i32) {
    %c0_i32 = arith.constant 0 : i32
    %c0_i32_0 = arith.constant 0 : i32
    %c0_i32_1 = arith.constant 0 : i32
    return %c0_i32, %c0_i32_0 : i32, i32
  }
  func.func @transform_2(%arg0: i32) -> (i32, i32) {
    %c0_i32 = arith.constant 0 : i32
    %c0_i32_0 = arith.constant 0 : i32
    %c0_i32_1 = arith.constant 0 : i32
    return %c0_i32, %c0_i32_0 : i32, i32
  }
  func.func @transform_3(%arg0: i32) -> (i32, i32) {
    %c0_i32 = arith.constant 0 : i32
    %c0_i32_0 = arith.constant 0 : i32
    %c0_i32_1 = arith.constant 0 : i32
    return %c0_i32, %c0_i32_0 : i32, i32
  }
  func.func @transform_4(%arg0: i32) -> (i32, i32, i32) {
    %c0_i32 = arith.constant 0 : i32
    %c0_i32_0 = arith.constant 0 : i32
    %c0_i32_1 = arith.constant 0 : i32
    %c0_i32_2 = arith.constant 0 : i32
    return %c0_i32, %c0_i32_0, %c0_i32_1 : i32, i32, i32
  }
  func.func @transform_5(%arg0: i32) -> (i32, i32, i32) {
    %c0_i32 = arith.constant 0 : i32
    %c0_i32_0 = arith.constant 0 : i32
    %c0_i32_1 = arith.constant 0 : i32
    %c0_i32_2 = arith.constant 0 : i32
    return %c0_i32, %c0_i32_0, %c0_i32_1 : i32, i32, i32
  }
  func.func @transform_6(%arg0: i32) -> (i32, i32, i32) {
    %c0_i32 = arith.constant 0 : i32
    %c0_i32_0 = arith.constant 0 : i32
    %c0_i32_1 = arith.constant 0 : i32
    %c0_i32_2 = arith.constant 0 : i32
    return %c0_i32, %c0_i32_0, %c0_i32_1 : i32, i32, i32
  }
  func.func @transform_7(%arg0: i32) -> (i32, i32, i32) {
    %c0_i32 = arith.constant 0 : i32
    %c0_i32_0 = arith.constant 0 : i32
    %c0_i32_1 = arith.constant 0 : i32
    %c0_i32_2 = arith.constant 0 : i32
    return %c0_i32, %c0_i32_0, %c0_i32_1 : i32, i32, i32
  }
  func.func @transform_8(%arg0: i32) -> (i32, i32, i32) {
    %c0_i32 = arith.constant 0 : i32
    %c0_i32_0 = arith.constant 0 : i32
    %c0_i32_1 = arith.constant 0 : i32
    %c0_i32_2 = arith.constant 0 : i32
    return %c0_i32, %c0_i32_0, %c0_i32_1 : i32, i32, i32
  }
  func.func @transform_9(%arg0: i32) -> (i32, i32, i32) {
    %c0_i32 = arith.constant 0 : i32
    %c0_i32_0 = arith.constant 0 : i32
    %c0_i32_1 = arith.constant 0 : i32
    %c0_i32_2 = arith.constant 0 : i32
    return %c0_i32, %c0_i32_0, %c0_i32_1 : i32, i32, i32
  }
  func.func @transform_10(%arg0: i32) -> (i32, i32) {
    %c0_i32 = arith.constant 0 : i32
    %c0_i32_0 = arith.constant 0 : i32
    %c0_i32_1 = arith.constant 0 : i32
    return %c0_i32, %c0_i32_0 : i32, i32
  }
  func.func @transform_11(%arg0: i32) -> (i32, i32) {
    %c0_i32 = arith.constant 0 : i32
    %c0_i32_0 = arith.constant 0 : i32
    %c0_i32_1 = arith.constant 0 : i32
    return %c0_i32, %c0_i32_0 : i32, i32
  }
  func.func @transform_12(%arg0: i32) -> (i32, i32) {
    %c0_i32 = arith.constant 0 : i32
    %c0_i32_0 = arith.constant 0 : i32
    %c0_i32_1 = arith.constant 0 : i32
    return %c0_i32, %c0_i32_0 : i32, i32
  }
  func.func @transform_13(%arg0: i32) -> (i32, i32) {
    %c0_i32 = arith.constant 0 : i32
    %c0_i32_0 = arith.constant 0 : i32
    %c0_i32_1 = arith.constant 0 : i32
    return %c0_i32, %c0_i32_0 : i32, i32
  }
  func.func @transform_14(%arg0: i32) -> (i32, i32) {
    %c0_i32 = arith.constant 0 : i32
    %c0_i32_0 = arith.constant 0 : i32
    %c0_i32_1 = arith.constant 0 : i32
    return %c0_i32, %c0_i32_0 : i32, i32
  }
  func.func @transform_15(%arg0: i32) -> (i32, i32) {
    %c0_i32 = arith.constant 0 : i32
    %c0_i32_0 = arith.constant 0 : i32
    %c0_i32_1 = arith.constant 0 : i32
    return %c0_i32, %c0_i32_0 : i32, i32
  }
  func.func @transform_16(%arg0: i32) -> (i32, i32) {
    %c0_i32 = arith.constant 0 : i32
    %c0_i32_0 = arith.constant 0 : i32
    %c0_i32_1 = arith.constant 0 : i32
    return %c0_i32, %c0_i32_0 : i32, i32
  }
  func.func @transform_17(%arg0: i32) -> (i32, i32) {
    %c0_i32 = arith.constant 0 : i32
    %c0_i32_0 = arith.constant 0 : i32
    %c0_i32_1 = arith.constant 0 : i32
    return %c0_i32, %c0_i32_0 : i32, i32
  }
  func.func @transform_18(%arg0: i32) -> (i32, i32) {
    %c0_i32 = arith.constant 0 : i32
    %c0_i32_0 = arith.constant 0 : i32
    %c0_i32_1 = arith.constant 0 : i32
    return %c0_i32, %c0_i32_0 : i32, i32
  }
  func.func @transform_19(%arg0: i32) -> (i32, i32) {
    %c0_i32 = arith.constant 0 : i32
    %c0_i32_0 = arith.constant 0 : i32
    %c0_i32_1 = arith.constant 0 : i32
    return %c0_i32, %c0_i32_0 : i32, i32
  }
  func.func @transform_20(%arg0: i32) -> (i32, i32, i32) {
    %c0_i32 = arith.constant 0 : i32
    %c0_i32_0 = arith.constant 0 : i32
    %c0_i32_1 = arith.constant 0 : i32
    return %arg0, %c0_i32, %c0_i32_0 : i32, i32, i32
  }
}

</mosaic_0001>

<llo_original>
// kernel: astgcrn_forward.1
$region0: #{astgcrn_forward.1}
  #allocation0 [shape = 'u32[]', space=smem, size = 0x4, offset = 0x4, fixed_abs, tag = 'smem constant byte address 0x4 - core index']
  #allocation1 [shape = 'u32[144,128]{1,0:T(1,128)}', space=vmem, size = 0x12000, scoped, tag = 'internal scratch']
  #allocation2 [shape = 'f32[128,32]{1,0:T(8,128)}', space=vmem, size = 0x10000, scoped, tag = 'scratch operand']
  #allocation3 [shape = 'f32[128,32]{1,0:T(8,128)}', space=vmem, size = 0x10000, scoped, tag = 'scratch operand']
  #allocation4 [shape = 'f32[128,32]{1,0:T(8,128)}', space=vmem, size = 0x10000, scoped, tag = 'scratch operand']
  #allocation5 [shape = 'f32[128,32]{1,0:T(8,128)}', space=vmem, size = 0x10000, scoped, tag = 'scratch operand']
  #allocation6 [shape = 'f32[1,1]{1,0:T(1,128)S(1)}', space=vmem, size = 0x200, scoped, tag = 'scoped memory for astgcrn_forward.1']
  %s0 = inlined_call_operand.vmem [shape: f32[2,128,2], index: 0, kind: input, shape index: {}]
  %s1 = inlined_call_operand.vmem [shape: f32[16,8], index: 1, kind: input, shape index: {}]
  %s2 = inlined_call_operand.vmem [shape: f32[16,256], index: 2, kind: input, shape index: {}]
  %s3 = inlined_call_operand.vmem [shape: f32[128,256], index: 3, kind: input, shape index: {}]
  %s4 = inlined_call_operand.vmem [shape: f32[3,2,768], index: 4, kind: input, shape index: {}]
  %s5 = inlined_call_operand.vmem [shape: f32[3,32,512], index: 5, kind: input, shape index: {}]
  %s6 = inlined_call_operand.vmem [shape: f32[3,32,256], index: 6, kind: input, shape index: {}]
  %s7 = inlined_call_operand.vmem [shape: f32[3,32,768], index: 7, kind: input, shape index: {}]
  %s8 = inlined_call_operand.vmem [shape: f32[3,32,512], index: 8, kind: input, shape index: {}]
  %s9 = inlined_call_operand.vmem [shape: f32[3,32,256], index: 9, kind: input, shape index: {}]
  %s10 = inlined_call_operand.vmem [shape: f32[8,32], index: 10, kind: input, shape index: {}]
  %s11 = inlined_call_operand.vmem [shape: f32[8,32], index: 11, kind: input, shape index: {}]
  %s12 = inlined_call_operand.vmem [shape: f32[8,32], index: 12, kind: input, shape index: {}]
  %s13 = inlined_call_operand.vmem [shape: f32[8,32], index: 13, kind: input, shape index: {}]
  %s14 = inlined_call_operand.vmem [shape: f32[8,32], index: 14, kind: input, shape index: {}]
  %s15 = inlined_call_operand.vmem [shape: f32[8,32], index: 15, kind: input, shape index: {}]
  %s16 = inlined_call_operand.vmem [shape: f32[32,512], index: 16, kind: input, shape index: {}]
  %s17 = inlined_call_operand.vmem [shape: f32[1,512], index: 17, kind: input, shape index: {}]
  %s18 = inlined_call_operand.vmem [shape: f32[1,512], index: 18, kind: input, shape index: {}]
  %s19 = inlined_call_operand.<no memory space> [shape: f32[1,1], index: 19, kind: input, shape index: {}]
  %s20 = inlined_call_operand.vmem [shape: f32[2,128,1], index: 20, kind: output, shape index: {}]
  %s21 = sld [smem:[#allocation0]]
  $region120: #{astgcrn_forward.1} parent=0
    _
  %s23 = ssub.s32 1, %s21
  %s24 = scalar_select 0, %s23, %s21
  %v25 = vstv %s19
  %26 = vst [vmem:[#allocation6] sm:$0x1] %v25
  loop: start=0, step=1, limit=4
  $region2: #{astgcrn_forward.1} parent=0 // loop_pre_header
    _
  $region3: #{astgcrn_forward.1} parent=0 // loop_header
    %s28 = sphi 0, %s32
    %p29 = scmp.ge.s32.totalorder %s28, 4
    %s38 = sphi 0, %s40
    %s41 = sphi 0, %s38
    %s42 = sphi 0, %s41
    %s58 = sphi 0, %s42
    %s62 = sphi 0, %s62
    %s64 = sphi 0, %s62
    %s65 = sphi 0, %s64
    %s79 = sphi 0, %s65
    %s83 = sphi 0, %s83
    %s85 = sphi 0, %s83
    %s86 = sphi 0, %s85
    %s100 = sphi 0, %s86
    %s104 = sphi 0, %s104
    %s106 = sphi 0, %s104
    %s107 = sphi 0, %s106
    %s121 = sphi 0, %s107
    %s125 = sphi 0, %s125
    %s127 = sphi 0, %s125
    %s128 = sphi 0, %s127
    %s142 = sphi 0, %s128
    %s146 = sphi 0, %s146
    %s148 = sphi 0, %s146
    %s149 = sphi 0, %s148
    %s163 = sphi 0, %s149
    %s167 = sphi 0, %s167
    %s169 = sphi 0, %s167
    %s170 = sphi 0, %s169
    %s184 = sphi 0, %s170
    %s188 = sphi 0, %s188
    %s190 = sphi 0, %s188
    %s191 = sphi 0, %s190
    %s205 = sphi 0, %s191
    %s209 = sphi 0, %s209
    %s211 = sphi 0, %s209
    %s212 = sphi 0, %s211
    %s226 = sphi 0, %s212
    %s230 = sphi 0, %s230
    %s232 = sphi 0, %s230
    %s233 = sphi 0, %s232
    %s247 = sphi 0, %s233
    %s251 = sphi 0, %s251
    %s253 = sphi 0, %s251
    %s254 = sphi 0, %s253
    %s268 = sphi 0, %s254
    %s272 = sphi 0, %s272
    %s274 = sphi 0, %s272
    %s275 = sphi 0, %s274
    %s289 = sphi 0, %s275
    %s293 = sphi 0, %s293
    %s295 = sphi 0, %s293
    %s296 = sphi 0, %s295
    %s310 = sphi 0, %s296
    %s314 = sphi 0, %s314
    %s316 = sphi 0, %s314
    %s317 = sphi 0, %s316
    %s331 = sphi 0, %s317
    %s335 = sphi 0, %s335
    %s337 = sphi 0, %s335
    %s338 = sphi 0, %s337
    %s352 = sphi 0, %s338
    %s356 = sphi 0, %s356
    %s358 = sphi 0, %s356
    %s359 = sphi 0, %s358
    %s373 = sphi 0, %s359
    %s377 = sphi 0, %s377
    %s379 = sphi 0, %s377
    %s380 = sphi 0, %s379
    %s394 = sphi 0, %s380
    %s398 = sphi 0, %s398
    %s400 = sphi 0, %s398
    %s401 = sphi 0, %s400
    %s415 = sphi 0, %s401
    %s419 = sphi 0, %s419
    %s421 = sphi 0, %s419
    %s422 = sphi 0, %s421
    %s436 = sphi 0, %s422
    %s440 = sphi 0, %s440
    %s442 = sphi 0, %s440
    %s443 = sphi 0, %s442
    %s457 = sphi 0, %s443
    %s463 = sphi 0, %s465
    %s466 = sphi 0, %s463
    %s467 = sphi 0, %s466
    %s483 = sphi 0, %s467
  $region4: #{astgcrn_forward.1} parent=0 // loop_header_branch
    %31 = sbr.rel (%p29) target = $region8
  $region5: #{astgcrn_forward.1} parent=0 // loop_body
    %s33 = ssub.s32 %s28, 1
    %s34 = ssub.s32 %s28, 2
    %s35 = sadd.s32 %s28, 1
    %s36 = ssub.s32 %s28, %s35
    %p37 = scmp.eq.s32.totalorder %s36, 0
    %s39 = sadd.s32 %s38, 1
    %s40 = scalar_select %p37, %s38, %s39
    %p43 = pneg %p37
    %p44 = scmp.eq.s32.totalorder %s28, 1
    %p45 = por %p43, %p44
    %p46 = scmp.ne.s32.totalorder %s38, %s41
    %p47 = scmp.eq.s32.totalorder %s28, 0
    %p48 = por %p46, %p47
    %p49 = scmp.ne.s32.totalorder %s38, %s41
    %p50 = scmp.eq.s32.totalorder %s33, 1
    %p51 = por %p49, %p50
    %p52 = scmp.ne.s32.totalorder %s41, %s42
    %p53 = scmp.eq.s32.totalorder %s33, 0
    %p54 = por %p52, %p53
    %p55 = scmp.ne.s32.totalorder %s41, %s42
    %p56 = scmp.eq.s32.totalorder %s34, 1
    %p57 = por %p55, %p56
    %p59 = scmp.ne.s32.totalorder %s42, %s58
    %p60 = scmp.eq.s32.totalorder %s34, 0
    %p61 = por %p59, %p60
    %s63 = sadd.s32 %s62, 1
    %p66 = scmp.eq.s32.totalorder %s28, 1
    %p67 = scmp.ne.s32.totalorder %s62, %s64
    %p68 = scmp.eq.s32.totalorder %s28, 0
    %p69 = por %p67, %p68
    %p70 = scmp.ne.s32.totalorder %s62, %s64
    %p71 = scmp.eq.s32.totalorder %s33, 1
    %p72 = por %p70, %p71
    %p73 = scmp.ne.s32.totalorder %s64, %s65
    %p74 = scmp.eq.s32.totalorder %s33, 0
    %p75 = por %p73, %p74
    %p76 = scmp.ne.s32.totalorder %s64, %s65
    %p77 = scmp.eq.s32.totalorder %s34, 1
    %p78 = por %p76, %p77
    %p80 = scmp.ne.s32.totalorder %s65, %s79
    %p81 = scmp.eq.s32.totalorder %s34, 0
    %p82 = por %p80, %p81
    %s84 = sadd.s32 %s83, 1
    %p87 = scmp.eq.s32.totalorder %s28, 1
    %p88 = scmp.ne.s32.totalorder %s83, %s85
    %p89 = scmp.eq.s32.totalorder %s28, 0
    %p90 = por %p88, %p89
    %p91 = scmp.ne.s32.totalorder %s83, %s85
    %p92 = scmp.eq.s32.totalorder %s33, 1
    %p93 = por %p91, %p92
    %p94 = scmp.ne.s32.totalorder %s85, %s86
    %p95 = scmp.eq.s32.totalorder %s33, 0
    %p96 = por %p94, %p95
    %p97 = scmp.ne.s32.totalorder %s85, %s86
    %p98 = scmp.eq.s32.totalorder %s34, 1
    %p99 = por %p97, %p98
    %p101 = scmp.ne.s32.totalorder %s86, %s100
    %p102 = scmp.eq.s32.totalorder %s34, 0
    %p103 = por %p101, %p102
    %s105 = sadd.s32 %s104, 1
    %p108 = scmp.eq.s32.totalorder %s28, 1
    %p109 = scmp.ne.s32.totalorder %s104, %s106
    %p110 = scmp.eq.s32.totalorder %s28, 0
    %p111 = por %p109, %p110
    %p112 = scmp.ne.s32.totalorder %s104, %s106
    %p113 = scmp.eq.s32.totalorder %s33, 1
    %p114 = por %p112, %p113
    %p115 = scmp.ne.s32.totalorder %s106, %s107
    %p116 = scmp.eq.s32.totalorder %s33, 0
    %p117 = por %p115, %p116
    %p118 = scmp.ne.s32.totalorder %s106, %s107
    %p119 = scmp.eq.s32.totalorder %s34, 1
    %p120 = por %p118, %p119
    %p122 = scmp.ne.s32.totalorder %s107, %s121
    %p123 = scmp.eq.s32.totalorder %s34, 0
    %p124 = por %p122, %p123
    %s126 = sadd.s32 %s125, 1
    %p129 = scmp.eq.s32.totalorder %s28, 1
    %p130 = scmp.ne.s32.totalorder %s125, %s127
    %p131 = scmp.eq.s32.totalorder %s28, 0
    %p132 = por %p130, %p131
    %p133 = scmp.ne.s32.totalorder %s125, %s127
    %p134 = scmp.eq.s32.totalorder %s33, 1
    %p135 = por %p133, %p134
    %p136 = scmp.ne.s32.totalorder %s127, %s128
    %p137 = scmp.eq.s32.totalorder %s33, 0
    %p138 = por %p136, %p137
    %p139 = scmp.ne.s32.totalorder %s127, %s128
    %p140 = scmp.eq.s32.totalorder %s34, 1
    %p141 = por %p139, %p140
    %p143 = scmp.ne.s32.totalorder %s128, %s142
    %p144 = scmp.eq.s32.totalorder %s34, 0
    %p145 = por %p143, %p144
    %s147 = sadd.s32 %s146, 1
    %p150 = scmp.eq.s32.totalorder %s28, 1
    %p151 = scmp.ne.s32.totalorder %s146, %s148
    %p152 = scmp.eq.s32.totalorder %s28, 0
    %p153 = por %p151, %p152
    %p154 = scmp.ne.s32.totalorder %s146, %s148
    %p155 = scmp.eq.s32.totalorder %s33, 1
    %p156 = por %p154, %p155
    %p157 = scmp.ne.s32.totalorder %s148, %s149
    %p158 = scmp.eq.s32.totalorder %s33, 0
    %p159 = por %p157, %p158
    %p160 = scmp.ne.s32.totalorder %s148, %s149
    %p161 = scmp.eq.s32.totalorder %s34, 1
    %p162 = por %p160, %p161
    %p164 = scmp.ne.s32.totalorder %s149, %s163
    %p165 = scmp.eq.s32.totalorder %s34, 0
    %p166 = por %p164, %p165
    %s168 = sadd.s32 %s167, 1
    %p171 = scmp.eq.s32.totalorder %s28, 1
    %p172 = scmp.ne.s32.totalorder %s167, %s169
    %p173 = scmp.eq.s32.totalorder %s28, 0
    %p174 = por %p172, %p173
    %p175 = scmp.ne.s32.totalorder %s167, %s169
    %p176 = scmp.eq.s32.totalorder %s33, 1
    %p177 = por %p175, %p176
    %p178 = scmp.ne.s32.totalorder %s169, %s170
    %p179 = scmp.eq.s32.totalorder %s33, 0
    %p180 = por %p178, %p179
    %p181 = scmp.ne.s32.totalorder %s169, %s170
    %p182 = scmp.eq.s32.totalorder %s34, 1
    %p183 = por %p181, %p182
    %p185 = scmp.ne.s32.totalorder %s170, %s184
    %p186 = scmp.eq.s32.totalorder %s34, 0
    %p187 = por %p185, %p186
    %s189 = sadd.s32 %s188, 1
    %p192 = scmp.eq.s32.totalorder %s28, 1
    %p193 = scmp.ne.s32.totalorder %s188, %s190
    %p194 = scmp.eq.s32.totalorder %s28, 0
    %p195 = por %p193, %p194
    %p196 = scmp.ne.s32.totalorder %s188, %s190
    %p197 = scmp.eq.s32.totalorder %s33, 1
    %p198 = por %p196, %p197
    %p199 = scmp.ne.s32.totalorder %s190, %s191
    %p200 = scmp.eq.s32.totalorder %s33, 0
    %p201 = por %p199, %p200
    %p202 = scmp.ne.s32.totalorder %s190, %s191
    %p203 = scmp.eq.s32.totalorder %s34, 1
    %p204 = por %p202, %p203
    %p206 = scmp.ne.s32.totalorder %s191, %s205
    %p207 = scmp.eq.s32.totalorder %s34, 0
    %p208 = por %p206, %p207
    %s210 = sadd.s32 %s209, 1
    %p213 = scmp.eq.s32.totalorder %s28, 1
    %p214 = scmp.ne.s32.totalorder %s209, %s211
    %p215 = scmp.eq.s32.totalorder %s28, 0
    %p216 = por %p214, %p215
    %p217 = scmp.ne.s32.totalorder %s209, %s211
    %p218 = scmp.eq.s32.totalorder %s33, 1
    %p219 = por %p217, %p218
    %p220 = scmp.ne.s32.totalorder %s211, %s212
    %p221 = scmp.eq.s32.totalorder %s33, 0
    %p222 = por %p220, %p221
    %p223 = scmp.ne.s32.totalorder %s211, %s212
    %p224 = scmp.eq.s32.totalorder %s34, 1
    %p225 = por %p223, %p224
    %p227 = scmp.ne.s32.totalorder %s212, %s226
    %p228 = scmp.eq.s32.totalorder %s34, 0
    %p229 = por %p227, %p228
    %s231 = sadd.s32 %s230, 1
    %p234 = scmp.eq.s32.totalorder %s28, 1
    %p235 = scmp.ne.s32.totalorder %s230, %s232
    %p236 = scmp.eq.s32.totalorder %s28, 0
    %p237 = por %p235, %p236
    %p238 = scmp.ne.s32.totalorder %s230, %s232
    %p239 = scmp.eq.s32.totalorder %s33, 1
    %p240 = por %p238, %p239
    %p241 = scmp.ne.s32.totalorder %s232, %s233
    %p242 = scmp.eq.s32.totalorder %s33, 0
    %p243 = por %p241, %p242
    %p244 = scmp.ne.s32.totalorder %s232, %s233
    %p245 = scmp.eq.s32.totalorder %s34, 1
    %p246 = por %p244, %p245
    %p248 = scmp.ne.s32.totalorder %s233, %s247
    %p249 = scmp.eq.s32.totalorder %s34, 0
    %p250 = por %p248, %p249
    %s252 = sadd.s32 %s251, 1
    %p255 = scmp.eq.s32.totalorder %s28, 1
    %p256 = scmp.ne.s32.totalorder %s251, %s253
    %p257 = scmp.eq.s32.totalorder %s28, 0
    %p258 = por %p256, %p257
    %p259 = scmp.ne.s32.totalorder %s251, %s253
    %p260 = scmp.eq.s32.totalorder %s33, 1
    %p261 = por %p259, %p260
    %p262 = scmp.ne.s32.totalorder %s253, %s254
    %p263 = scmp.eq.s32.totalorder %s33, 0
    %p264 = por %p262, %p263
    %p265 = scmp.ne.s32.totalorder %s253, %s254
    %p266 = scmp.eq.s32.totalorder %s34, 1
    %p267 = por %p265, %p266
    %p269 = scmp.ne.s32.totalorder %s254, %s268
    %p270 = scmp.eq.s32.totalorder %s34, 0
    %p271 = por %p269, %p270
    %s273 = sadd.s32 %s272, 1
    %p276 = scmp.eq.s32.totalorder %s28, 1
    %p277 = scmp.ne.s32.totalorder %s272, %s274
    %p278 = scmp.eq.s32.totalorder %s28, 0
    %p279 = por %p277, %p278
    %p280 = scmp.ne.s32.totalorder %s272, %s274
    %p281 = scmp.eq.s32.totalorder %s33, 1
    %p282 = por %p280, %p281
    %p283 = scmp.ne.s32.totalorder %s274, %s275
    %p284 = scmp.eq.s32.totalorder %s33, 0
    %p285 = por %p283, %p284
    %p286 = scmp.ne.s32.totalorder %s274, %s275
    %p287 = scmp.eq.s32.totalorder %s34, 1
    %p288 = por %p286, %p287
    %p290 = scmp.ne.s32.totalorder %s275, %s289
    %p291 = scmp.eq.s32.totalorder %s34, 0
    %p292 = por %p290, %p291
    %s294 = sadd.s32 %s293, 1
    %p297 = scmp.eq.s32.totalorder %s28, 1
    %p298 = scmp.ne.s32.totalorder %s293, %s295
    %p299 = scmp.eq.s32.totalorder %s28, 0
    %p300 = por %p298, %p299
    %p301 = scmp.ne.s32.totalorder %s293, %s295
    %p302 = scmp.eq.s32.totalorder %s33, 1
    %p303 = por %p301, %p302
    %p304 = scmp.ne.s32.totalorder %s295, %s296
    %p305 = scmp.eq.s32.totalorder %s33, 0
    %p306 = por %p304, %p305
    %p307 = scmp.ne.s32.totalorder %s295, %s296
    %p308 = scmp.eq.s32.totalorder %s34, 1
    %p309 = por %p307, %p308
    %p311 = scmp.ne.s32.totalorder %s296, %s310
    %p312 = scmp.eq.s32.totalorder %s34, 0
    %p313 = por %p311, %p312
    %s315 = sadd.s32 %s314, 1
    %p318 = scmp.eq.s32.totalorder %s28, 1
    %p319 = scmp.ne.s32.totalorder %s314, %s316
    %p320 = scmp.eq.s32.totalorder %s28, 0
    %p321 = por %p319, %p320
    %p322 = scmp.ne.s32.totalorder %s314, %s316
    %p323 = scmp.eq.s32.totalorder %s33, 1
    %p324 = por %p322, %p323
    %p325 = scmp.ne.s32.totalorder %s316, %s317
    %p326 = scmp.eq.s32.totalorder %s33, 0
    %p327 = por %p325, %p326
    %p328 = scmp.ne.s32.totalorder %s316, %s317
    %p329 = scmp.eq.s32.totalorder %s34, 1
    %p330 = por %p328, %p329
    %p332 = scmp.ne.s32.totalorder %s317, %s331
    %p333 = scmp.eq.s32.totalorder %s34, 0
    %p334 = por %p332, %p333
    %s336 = sadd.s32 %s335, 1
    %p339 = scmp.eq.s32.totalorder %s28, 1
    %p340 = scmp.ne.s32.totalorder %s335, %s337
    %p341 = scmp.eq.s32.totalorder %s28, 0
    %p342 = por %p340, %p341
    %p343 = scmp.ne.s32.totalorder %s335, %s337
    %p344 = scmp.eq.s32.totalorder %s33, 1
    %p345 = por %p343, %p344
    %p346 = scmp.ne.s32.totalorder %s337, %s338
    %p347 = scmp.eq.s32.totalorder %s33, 0
    %p348 = por %p346, %p347
    %p349 = scmp.ne.s32.totalorder %s337, %s338
    %p350 = scmp.eq.s32.totalorder %s34, 1
    %p351 = por %p349, %p350
    %p353 = scmp.ne.s32.totalorder %s338, %s352
    %p354 = scmp.eq.s32.totalorder %s34, 0
    %p355 = por %p353, %p354
    %s357 = sadd.s32 %s356, 1
    %p360 = scmp.eq.s32.totalorder %s28, 1
    %p361 = scmp.ne.s32.totalorder %s356, %s358
    %p362 = scmp.eq.s32.totalorder %s28, 0
    %p363 = por %p361, %p362
    %p364 = scmp.ne.s32.totalorder %s356, %s358
    %p365 = scmp.eq.s32.totalorder %s33, 1
    %p366 = por %p364, %p365
    %p367 = scmp.ne.s32.totalorder %s358, %s359
    %p368 = scmp.eq.s32.totalorder %s33, 0
    %p369 = por %p367, %p368
    %p370 = scmp.ne.s32.totalorder %s358, %s359
    %p371 = scmp.eq.s32.totalorder %s34, 1
    %p372 = por %p370, %p371
    %p374 = scmp.ne.s32.totalorder %s359, %s373
    %p375 = scmp.eq.s32.totalorder %s34, 0
    %p376 = por %p374, %p375
    %s378 = sadd.s32 %s377, 1
    %p381 = scmp.eq.s32.totalorder %s28, 1
    %p382 = scmp.ne.s32.totalorder %s377, %s379
    %p383 = scmp.eq.s32.totalorder %s28, 0
    %p384 = por %p382, %p383
    %p385 = scmp.ne.s32.totalorder %s377, %s379
    %p386 = scmp.eq.s32.totalorder %s33, 1
    %p387 = por %p385, %p386
    %p388 = scmp.ne.s32.totalorder %s379, %s380
    %p389 = scmp.eq.s32.totalorder %s33, 0
    %p390 = por %p388, %p389
    %p391 = scmp.ne.s32.totalorder %s379, %s380
    %p392 = scmp.eq.s32.totalorder %s34, 1
    %p393 = por %p391, %p392
    %p395 = scmp.ne.s32.totalorder %s380, %s394
    %p396 = scmp.eq.s32.totalorder %s34, 0
    %p397 = por %p395, %p396
    %s399 = sadd.s32 %s398, 1
    %p402 = scmp.eq.s32.totalorder %s28, 1
    %p403 = scmp.ne.s32.totalorder %s398, %s400
    %p404 = scmp.eq.s32.totalorder %s28, 0
    %p405 = por %p403, %p404
    %p406 = scmp.ne.s32.totalorder %s398, %s400
    %p407 = scmp.eq.s32.totalorder %s33, 1
    %p408 = por %p406, %p407
    %p409 = scmp.ne.s32.totalorder %s400, %s401
    %p410 = scmp.eq.s32.totalorder %s33, 0
    %p411 = por %p409, %p410
    %p412 = scmp.ne.s32.totalorder %s400, %s401
    %p413 = scmp.eq.s32.totalorder %s34, 1
    %p414 = por %p412, %p413
    %p416 = scmp.ne.s32.totalorder %s401, %s415
    %p417 = scmp.eq.s32.totalorder %s34, 0
    %p418 = por %p416, %p417
    %s420 = sadd.s32 %s419, 1
    %p423 = scmp.eq.s32.totalorder %s28, 1
    %p424 = scmp.ne.s32.totalorder %s419, %s421
    %p425 = scmp.eq.s32.totalorder %s28, 0
    %p426 = por %p424, %p425
    %p427 = scmp.ne.s32.totalorder %s419, %s421
    %p428 = scmp.eq.s32.totalorder %s33, 1
    %p429 = por %p427, %p428
    %p430 = scmp.ne.s32.totalorder %s421, %s422
    %p431 = scmp.eq.s32.totalorder %s33, 0
    %p432 = por %p430, %p431
    %p433 = scmp.ne.s32.totalorder %s421, %s422
    %p434 = scmp.eq.s32.totalorder %s34, 1
    %p435 = por %p433, %p434
    %p437 = scmp.ne.s32.totalorder %s422, %s436
    %p438 = scmp.eq.s32.totalorder %s34, 0
    %p439 = por %p437, %p438
    %s441 = sadd.s32 %s440, 1
    %p444 = scmp.eq.s32.totalorder %s28, 1
    %p445 = scmp.ne.s32.totalorder %s440, %s442
    %p446 = scmp.eq.s32.totalorder %s28, 0
    %p447 = por %p445, %p446
    %p448 = scmp.ne.s32.totalorder %s440, %s442
    %p449 = scmp.eq.s32.totalorder %s33, 1
    %p450 = por %p448, %p449
    %p451 = scmp.ne.s32.totalorder %s442, %s443
    %p452 = scmp.eq.s32.totalorder %s33, 0
    %p453 = por %p451, %p452
    %p454 = scmp.ne.s32.totalorder %s442, %s443
    %p455 = scmp.eq.s32.totalorder %s34, 1
    %p456 = por %p454, %p455
    %p458 = scmp.ne.s32.totalorder %s443, %s457
    %p459 = scmp.eq.s32.totalorder %s34, 0
    %p460 = por %p458, %p459
    %s461 = ssub.s32 %s28, %s35
    %p462 = scmp.eq.s32.totalorder %s461, 0
    %s464 = sadd.s32 %s463, 1
    %s465 = scalar_select %p462, %s463, %s464
    %p468 = pneg %p462
    %p469 = scmp.eq.s32.totalorder %s28, 1
    %p470 = por %p468, %p469
    %p471 = scmp.ne.s32.totalorder %s463, %s466
    %p472 = scmp.eq.s32.totalorder %s28, 0
    %p473 = por %p471, %p472
    %p474 = scmp.ne.s32.totalorder %s463, %s466
    %p475 = scmp.eq.s32.totalorder %s33, 1
    %p476 = por %p474, %p475
    %p477 = scmp.ne.s32.totalorder %s466, %s467
    %p478 = scmp.eq.s32.totalorder %s33, 0
    %p479 = por %p477, %p478
    %p480 = scmp.ne.s32.totalorder %s466, %s467
    %p481 = scmp.eq.s32.totalorder %s34, 1
    %p482 = por %p480, %p481
    %p484 = scmp.ne.s32.totalorder %s467, %s483
    %p485 = scmp.eq.s32.totalorder %s34, 0
    %p486 = por %p484, %p485
    %p487 = scmp.le.s32.totalorder 1, %s28
    %p488 = scmp.lt.s32.totalorder %s28, 3
    %p489 = pnand %p487, %p488
    %p490 = pneg %p489
    // Predicated region
    $region9: #{astgcrn_forward.1} parent=5 // pred_check
      _
    $region10: #{astgcrn_forward.1} parent=5 // pred_check_branch
      %492 = sbr.rel (%p489) target = $region12
    $region11: #{astgcrn_forward.1} parent=5 // pred_region
      %s493 = ssub.s32 %s28, 1
      // Predicated region
      $region13: #{astgcrn_forward.1} parent=11 // pred_check
        %p494 = pneg %p75
      $region14: #{astgcrn_forward.1} parent=11 // pred_check_branch
        %496 = sbr.rel (%p494) target = $region16
      $region15: #{astgcrn_forward.1} parent=11 // pred_region
        _
      $region16: #{astgcrn_forward.1} parent=11 // pred_fallthru
        _
      // Predicated region
      $region17: #{astgcrn_forward.1} parent=11 // pred_check
        %p497 = pneg %p96
      $region18: #{astgcrn_forward.1} parent=11 // pred_check_branch
        %499 = sbr.rel (%p497) target = $region20
      $region19: #{astgcrn_forward.1} parent=11 // pred_region
        _
      $region20: #{astgcrn_forward.1} parent=11 // pred_fallthru
        _
      // Predicated region
      $region21: #{astgcrn_forward.1} parent=11 // pred_check
        %p500 = pneg %p117
      $region22: #{astgcrn_forward.1} parent=11 // pred_check_branch
        %502 = sbr.rel (%p500) target = $region24
      $region23: #{astgcrn_forward.1} parent=11 // pred_region
        _
      $region24: #{astgcrn_forward.1} parent=11 // pred_fallthru
        _
      // Predicated region
      $region25: #{astgcrn_forward.1} parent=11 // pred_check
        %p503 = pneg %p138
      $region26: #{astgcrn_forward.1} parent=11 // pred_check_branch
        %505 = sbr.rel (%p503) target = $region28
      $region27: #{astgcrn_forward.1} parent=11 // pred_region
        _
      $region28: #{astgcrn_forward.1} parent=11 // pred_fallthru
        _
      // Predicated region
      $region29: #{astgcrn_forward.1} parent=11 // pred_check
        %p506 = pneg %p159
      $region30: #{astgcrn_forward.1} parent=11 // pred_check_branch
        %508 = sbr.rel (%p506) target = $region32
      $region31: #{astgcrn_forward.1} parent=11 // pred_region
        _
      $region32: #{astgcrn_forward.1} parent=11 // pred_fallthru
        _
      // Predicated region
      $region33: #{astgcrn_forward.1} parent=11 // pred_check
        %p509 = pneg %p180
      $region34: #{astgcrn_forward.1} parent=11 // pred_check_branch
        %511 = sbr.rel (%p509) target = $region36
      $region35: #{astgcrn_forward.1} parent=11 // pred_region
        _
      $region36: #{astgcrn_forward.1} parent=11 // pred_fallthru
        _
      // Predicated region
      $region37: #{astgcrn_forward.1} parent=11 // pred_check
        %p512 = pneg %p201
      $region38: #{astgcrn_forward.1} parent=11 // pred_check_branch
        %514 = sbr.rel (%p512) target = $region40
      $region39: #{astgcrn_forward.1} parent=11 // pred_region
        _
      $region40: #{astgcrn_forward.1} parent=11 // pred_fallthru
        _
      // Predicated region
      $region41: #{astgcrn_forward.1} parent=11 // pred_check
        %p515 = pneg %p222
      $region42: #{astgcrn_forward.1} parent=11 // pred_check_branch
        %517 = sbr.rel (%p515) target = $region44
      $region43: #{astgcrn_forward.1} parent=11 // pred_region
        _
      $region44: #{astgcrn_forward.1} parent=11 // pred_fallthru
        _
      // Predicated region
      $region45: #{astgcrn_forward.1} parent=11 // pred_check
        %p518 = pneg %p243
      $region46: #{astgcrn_forward.1} parent=11 // pred_check_branch
        %520 = sbr.rel (%p518) target = $region48
      $region47: #{astgcrn_forward.1} parent=11 // pred_region
        _
      $region48: #{astgcrn_forward.1} parent=11 // pred_fallthru
        _
      // Predicated region
      $region49: #{astgcrn_forward.1} parent=11 // pred_check
        %p521 = pneg %p264
      $region50: #{astgcrn_forward.1} parent=11 // pred_check_branch
        %523 = sbr.rel (%p521) target = $region52
      $region51: #{astgcrn_forward.1} parent=11 // pred_region
        _
      $region52: #{astgcrn_forward.1} parent=11 // pred_fallthru
        _
      // Predicated region
      $region53: #{astgcrn_forward.1} parent=11 // pred_check
        %p524 = pneg %p285
      $region54: #{astgcrn_forward.1} parent=11 // pred_check_branch
        %526 = sbr.rel (%p524) target = $region56
      $region55: #{astgcrn_forward.1} parent=11 // pred_region
        _
      $region56: #{astgcrn_forward.1} parent=11 // pred_fallthru
        _
      // Predicated region
      $region57: #{astgcrn_forward.1} parent=11 // pred_check
        %p527 = pneg %p306
      $region58: #{astgcrn_forward.1} parent=11 // pred_check_branch
        %529 = sbr.rel (%p527) target = $region60
      $region59: #{astgcrn_forward.1} parent=11 // pred_region
        _
      $region60: #{astgcrn_forward.1} parent=11 // pred_fallthru
        _
      // Predicated region
      $region61: #{astgcrn_forward.1} parent=11 // pred_check
        %p530 = pneg %p327
      $region62: #{astgcrn_forward.1} parent=11 // pred_check_branch
        %532 = sbr.rel (%p530) target = $region64
      $region63: #{astgcrn_forward.1} parent=11 // pred_region
        _
      $region64: #{astgcrn_forward.1} parent=11 // pred_fallthru
        _
      // Predicated region
      $region65: #{astgcrn_forward.1} parent=11 // pred_check
        %p533 = pneg %p348
      $region66: #{astgcrn_forward.1} parent=11 // pred_check_branch
        %535 = sbr.rel (%p533) target = $region68
      $region67: #{astgcrn_forward.1} parent=11 // pred_region
        _
      $region68: #{astgcrn_forward.1} parent=11 // pred_fallthru
        _
      // Predicated region
      $region69: #{astgcrn_forward.1} parent=11 // pred_check
        %p536 = pneg %p369
      $region70: #{astgcrn_forward.1} parent=11 // pred_check_branch
        %538 = sbr.rel (%p536) target = $region72
      $region71: #{astgcrn_forward.1} parent=11 // pred_region
        _
      $region72: #{astgcrn_forward.1} parent=11 // pred_fallthru
        _
      // Predicated region
      $region73: #{astgcrn_forward.1} parent=11 // pred_check
        %p539 = pneg %p390
      $region74: #{astgcrn_forward.1} parent=11 // pred_check_branch
        %541 = sbr.rel (%p539) target = $region76
      $region75: #{astgcrn_forward.1} parent=11 // pred_region
        _
      $region76: #{astgcrn_forward.1} parent=11 // pred_fallthru
        _
      // Predicated region
      $region77: #{astgcrn_forward.1} parent=11 // pred_check
        %p542 = pneg %p411
      $region78: #{astgcrn_forward.1} parent=11 // pred_check_branch
        %544 = sbr.rel (%p542) target = $region80
      $region79: #{astgcrn_forward.1} parent=11 // pred_region
        _
      $region80: #{astgcrn_forward.1} parent=11 // pred_fallthru
        _
      // Predicated region
      $region81: #{astgcrn_forward.1} parent=11 // pred_check
        %p545 = pneg %p432
      $region82: #{astgcrn_forward.1} parent=11 // pred_check_branch
        %547 = sbr.rel (%p545) target = $region84
      $region83: #{astgcrn_forward.1} parent=11 // pred_region
        _
      $region84: #{astgcrn_forward.1} parent=11 // pred_fallthru
        _
      // Predicated region
      $region85: #{astgcrn_forward.1} parent=11 // pred_check
        %p548 = pneg %p453
      $region86: #{astgcrn_forward.1} parent=11 // pred_check_branch
        %550 = sbr.rel (%p548) target = $region88
      $region87: #{astgcrn_forward.1} parent=11 // pred_region
        _
      $region88: #{astgcrn_forward.1} parent=11 // pred_fallthru
        _
    $region12: #{astgcrn_forward.1} parent=5 // pred_fallthru
      _
    %p551 = scmp.lt.s32.totalorder %s28, 2
    // Predicated region
    $region89: #{astgcrn_forward.1} parent=5 // pred_check
      %p552 = pneg %p551
    $region90: #{astgcrn_forward.1} parent=5 // pred_check_branch
      %554 = sbr.rel (%p552) target = $region92
    $region91: #{astgcrn_forward.1} parent=5 // pred_region
      // Predicated region
      $region93: #{astgcrn_forward.1} parent=91 // pred_check
        %p555 = pneg %p48
      $region94: #{astgcrn_forward.1} parent=91 // pred_check_branch
        %557 = sbr.rel (%p555) target = $region96
      $region95: #{astgcrn_forward.1} parent=91 // pred_region
        %p558 = scmp.lt.s32.totalorder %s28, 1
        %s559 = scalar_select %p558, %s28, 1
        %s560 = smul.addr %s559, 16
        %s561 = smul.addr %s560, 8
        %s562 = scalar_lea.vmem %s0, %s561
      $region96: #{astgcrn_forward.1} parent=91 // pred_fallthru
        _
    $region92: #{astgcrn_forward.1} parent=5 // pred_fallthru
      _
    %p563 = scmp.le.s32.totalorder 1, %s28
    %p564 = scmp.lt.s32.totalorder %s28, 3
    %p565 = pnand %p563, %p564
    %p566 = pneg %p565
    // Predicated region
    $region97: #{astgcrn_forward.1} parent=5 // pred_check
      _
    $region98: #{astgcrn_forward.1} parent=5 // pred_check_branch
      %568 = sbr.rel (%p565) target = $region100
    $region99: #{astgcrn_forward.1} parent=5 // pred_region
      %s569 = ssub.s32 %s28, 1
      %p570 = scmp.lt.s32.totalorder %s33, 1
      %s571 = scalar_select %p570, %s33, 1
      %s572 = smul.addr %s571, 16
      %s573 = smul.addr %s572, 8
      %s574 = scalar_lea.vmem %s0, %s573
      %p575 = pneg %p54
      %p576 = pneg %p51
      %p577 = pneg %p75
      %p578 = pneg %p72
      %p579 = pneg %p96
      %p580 = pneg %p93
      %p581 = pneg %p117
      %p582 = pneg %p114
      %p583 = pneg %p138
      %p584 = pneg %p135
      %p585 = pneg %p159
      %p586 = pneg %p156
      %p587 = pneg %p180
      %p588 = pneg %p177
      %p589 = pneg %p201
      %p590 = pneg %p198
      %p591 = pneg %p222
      %p592 = pneg %p219
      %p593 = pneg %p243
      %p594 = pneg %p240
      %p595 = pneg %p264
      %p596 = pneg %p261
      %p597 = pneg %p285
      %p598 = pneg %p282
      %p599 = pneg %p306
      %p600 = pneg %p303
      %p601 = pneg %p327
      %p602 = pneg %p324
      %p603 = pneg %p348
      %p604 = pneg %p345
      %p605 = pneg %p369
      %p606 = pneg %p366
      %p607 = pneg %p390
      %p608 = pneg %p387
      %p609 = pneg %p411
      %p610 = pneg %p408
      %p611 = pneg %p432
      %p612 = pneg %p429
      %p613 = pneg %p453
      %p614 = pneg %p450
      %p615 = pneg %p479
      %p616 = pneg %p476
      %p617 = scmp.lt.s32.totalorder %s33, 1
      %s618 = scalar_select %p617, %s33, 1
      %s619 = smul.addr %s618, 16
      %s620 = smul.addr %s619, 8
      %s621 = scalar_lea.vmem %s20, %s620
      %p622 = scmp.lt.s32.totalorder %s33, 1
      %s623 = scalar_select %p622, %s33, 1
      %s624 = smul.addr %s623, 16
      %s625 = smul.addr %s624, 8
      %s626 = scalar_lea.vmem %s0, %s625
      %p627 = scmp.lt.s32.totalorder %s33, 1
      %s628 = scalar_select %p627, %s33, 1
      %s629 = smul.addr %s628, 16
      %s630 = smul.addr %s629, 8
      %s631 = scalar_lea.vmem %s20, %s630
      %v632 = vld [vmem:[%s1] sm:$0xff]
      %v633 = vld [vmem:[%s1 + $0x8] sm:$0xff]
      %vm634 = vcmask 64512
      %v636 = vsel %vm634, %v632, 0
      %v639 = vsel %vm634, %v633, 0
      %641 = vmatprep.subr.mxu0 0.0
      %642 = vmatpush1.xpose.msra.mxu0 0.0
      %643 = vmatprep.subr.mxu0 0.0
      %644 = vmatpush1.xpose.msra.mxu0 0.0
      %645 = vmatprep.subr.mxu0 0.0
      %646 = vmatpush1.xpose.msra.mxu0 0.0
      %647 = vmatprep.subr.mxu0 0.0
      %648 = vmatpush1.xpose.msra.mxu0 0.0
      %649 = vmatprep.subr.mxu0 0.0
      %650 = vmatpush1.xpose.msra.mxu0 0.0
      %651 = vmatprep.subr.mxu0 0.0
      %652 = vmatpush1.xpose.msra.mxu0 0.0
      %653 = vmatprep.subr.mxu0 0.0
      %654 = vmatpush1.xpose.msra.mxu0 0.0
      %655 = vmatprep.subr.mxu0 0.0
      %656 = vmatpush1.xpose.msra.mxu0 0.0
      %657 = vmatprep.subr.mxu0 0.0
      %658 = vmatpush1.xpose.msra.mxu0 0.0
      %659 = vmatprep.subr.mxu0 0.0
      %660 = vmatpush1.xpose.msra.mxu0 0.0
      %661 = vmatprep.subr.mxu0 0.0
      %662 = vmatpush1.xpose.msra.mxu0 0.0
      %663 = vmatprep.subr.mxu0 0.0
      %664 = vmatpush1.xpose.msra.mxu0 0.0
      %665 = vmatprep.subr.mxu0 0.0
      %666 = vmatpush1.xpose.msra.mxu0 0.0
      %667 = vmatprep.subr.mxu0 0.0
      %668 = vmatpush1.xpose.msra.mxu0 0.0
      %669 = vmatprep.subr.mxu0 0.0
      %670 = vmatpush1.xpose.msra.mxu0 %v639
      %671 = vmatprep.subr.mxu0 0.0
      %672 = vmatpush1.xpose.msra.mxu0 %v636
      %673 = vmatprep.subr.mxu0 0.0
      %674 = vmatpush2.xpose.msra.mxu0 0.0
      %675 = vmatprep.subr.mxu0 0.0
      %676 = vmatpush2.xpose.msra.mxu0 0.0
      %677 = vmatprep.subr.mxu0 0.0
      %678 = vmatpush2.xpose.msra.mxu0 0.0
      %679 = vmatprep.subr.mxu0 0.0
      %680 = vmatpush2.xpose.msra.mxu0 0.0
      %681 = vmatprep.subr.mxu0 0.0
      %682 = vmatpush2.xpose.msra.mxu0 0.0
      %683 = vmatprep.subr.mxu0 0.0
      %684 = vmatpush2.xpose.msra.mxu0 0.0
      %685 = vmatprep.subr.mxu0 0.0
      %686 = vmatpush2.xpose.msra.mxu0 0.0
      %687 = vmatprep.subr.mxu0 0.0
      %688 = vmatpush2.xpose.msra.mxu0 0.0
      %689 = vmatprep.subr.mxu0 0.0
      %690 = vmatpush2.xpose.msra.mxu0 0.0
      %691 = vmatprep.subr.mxu0 0.0
      %692 = vmatpush2.xpose.msra.mxu0 0.0
      %693 = vmatprep.subr.mxu0 0.0
      %694 = vmatpush2.xpose.msra.mxu0 0.0
      %695 = vmatprep.subr.mxu0 0.0
      %696 = vmatpush2.xpose.msra.mxu0 0.0
      %697 = vmatprep.subr.mxu0 0.0
      %698 = vmatpush2.xpose.msra.mxu0 0.0
      %699 = vmatprep.subr.mxu0 0.0
      %700 = vmatpush2.xpose.msra.mxu0 0.0
      %701 = vmatprep.subr.mxu0 0.0
      %702 = vmatpush2.xpose.msra.mxu0 0.0
      %703 = vmatprep.subr.mxu0 0.0
      %704 = vmatpush2.xpose.msra.mxu0 0.0
      %705 = vmatprep.mubr.f32.mxu0 0.0
      %706 = vmatmul.mubr.f32.gmra.mxu0 %v636
      %v707 = vpop.f32.mrf.mxu0
      %v708 = vadd.f32 0.0, %v707
      %v709 = vpop.f32.mrf.mxu0
      %710 = vmatprep.mubr.f32.mxu0 0.0
      %711 = vmatmul.mubr.f32.gmra.mxu0 %v639
      %v712 = vpop.f32.mrf.mxu0
      %v713 = vadd.f32 0.0, %v712
      %v714 = vpop.f32.mrf.mxu0
      %715 = vdwg.mxu0
      %v716 = vmax.f32 %v708, 0.0
      %v717 = vmax.f32 %v713, 0.0
      %vm718 = vcmask 130048
      %v719 = vsel %vm718, %v716, -inf
      %720 = vmax.xlane.f32.xlu0 %v719
      %v721 = vpop.xlane.xlu0 %720
      %v722 = vsel %vm718, %v717, -inf
      %723 = vmax.xlane.f32.xlu0 %v722
      %v724 = vpop.xlane.xlu0 %723
      %v725 = vsub.f32 %v716, %v721
      %v726 = vsub.f32 %v717, %v724
      %v727 = vmul.f32 %v725, 1.442695
      %v728 = vpow.pop %v727
      %v729 = vmul.f32 %v726, 1.442695
      %v730 = vpow.pop %v729
      %v731 = vsel %vm718, %v728, 0.0
      %732 = vadd.xlane.f32.xlu0 %v731
      %v733 = vpop.xlane.xlu0 %732
      %v734 = vsel %vm718, %v730, 0.0
      %735 = vadd.xlane.f32.xlu0 %v734
      %v736 = vpop.xlane.xlu0 %735
      %v737 = vrcp.pop %v733
      %v738 = vmul.f32 %v728, %v737
      %v739 = vrcp.pop %v736
      %v740 = vmul.f32 %v730, %v739
      %v741 = vlaneseq
      %v742 = vshrl.u32 %v741, 7
      %v743 = vadd.s32 %v742, 8
      %v744 = vlaneseq
      %v745 = vand.u32 %v744, 127
      %vm746 = vcmp.eq.s32.totalorder %v742, %v745
      %vm747 = vcmp.eq.s32.totalorder %v743, %v745
      %v748 = vsel %vm746, 1, 0
      %v749 = vsel %vm747, 1, 0
      %v750 = vcvt.s32.f32 %v748
      %v751 = vcvt.s32.f32 %v749
      %v753 = vsel %vm718, %v738, 0
      %v756 = vsel %vm718, %v740, 0
      %758 = vmatprep.subr.mxu0 0.0
      %759 = vmatpush1.msra.mxu0 0.0
      %760 = vmatprep.subr.mxu0 0.0
      %761 = vmatpush1.msra.mxu0 0.0
      %762 = vmatprep.subr.mxu0 0.0
      %763 = vmatpush1.msra.mxu0 0.0
      %764 = vmatprep.subr.mxu0 0.0
      %765 = vmatpush1.msra.mxu0 0.0
      %766 = vmatprep.subr.mxu0 0.0
      %767 = vmatpush1.msra.mxu0 0.0
      %768 = vmatprep.subr.mxu0 0.0
      %769 = vmatpush1.msra.mxu0 0.0
      %770 = vmatprep.subr.mxu0 0.0
      %771 = vmatpush1.msra.mxu0 0.0
      %772 = vmatprep.subr.mxu0 0.0
      %773 = vmatpush1.msra.mxu0 0.0
      %774 = vmatprep.subr.mxu0 0.0
      %775 = vmatpush1.msra.mxu0 0.0
      %776 = vmatprep.subr.mxu0 0.0
      %777 = vmatpush1.msra.mxu0 0.0
      %778 = vmatprep.subr.mxu0 0.0
      %779 = vmatpush1.msra.mxu0 0.0
      %780 = vmatprep.subr.mxu0 0.0
      %781 = vmatpush1.msra.mxu0 0.0
      %782 = vmatprep.subr.mxu0 0.0
      %783 = vmatpush1.msra.mxu0 0.0
      %784 = vmatprep.subr.mxu0 0.0
      %785 = vmatpush1.msra.mxu0 0.0
      %786 = vmatprep.subr.mxu0 0.0
      %787 = vmatpush1.msra.mxu0 %v740
      %788 = vmatprep.subr.mxu0 0.0
      %789 = vmatpush1.msra.mxu0 %v738
      %790 = vmatprep.subr.mxu0 0.0
      %791 = vmatpush2.msra.mxu0 0.0
      %792 = vmatprep.subr.mxu0 0.0
      %793 = vmatpush2.msra.mxu0 0.0
      %794 = vmatprep.subr.mxu0 0.0
      %795 = vmatpush2.msra.mxu0 0.0
      %796 = vmatprep.subr.mxu0 0.0
      %797 = vmatpush2.msra.mxu0 0.0
      %798 = vmatprep.subr.mxu0 0.0
      %799 = vmatpush2.msra.mxu0 0.0
      %800 = vmatprep.subr.mxu0 0.0
      %801 = vmatpush2.msra.mxu0 0.0
      %802 = vmatprep.subr.mxu0 0.0
      %803 = vmatpush2.msra.mxu0 0.0
      %804 = vmatprep.subr.mxu0 0.0
      %805 = vmatpush2.msra.mxu0 0.0
      %806 = vmatprep.subr.mxu0 0.0
      %807 = vmatpush2.msra.mxu0 0.0
      %808 = vmatprep.subr.mxu0 0.0
      %809 = vmatpush2.msra.mxu0 0.0
      %810 = vmatprep.subr.mxu0 0.0
      %811 = vmatpush2.msra.mxu0 0.0
      %812 = vmatprep.subr.mxu0 0.0
      %813 = vmatpush2.msra.mxu0 0.0
      %814 = vmatprep.subr.mxu0 0.0
      %815 = vmatpush2.msra.mxu0 0.0
      %816 = vmatprep.subr.mxu0 0.0
      %817 = vmatpush2.msra.mxu0 0.0
      %818 = vmatprep.subr.mxu0 0.0
      %819 = vmatpush2.msra.mxu0 0.0
      %820 = vmatprep.subr.mxu0 0.0
      %821 = vmatpush2.msra.mxu0 0.0
      %822 = vmatprep.mubr.f32.mxu0 0.0
      %823 = vmatmul.mubr.f32.gmra.mxu0 %v753
      %v824 = vpop.f32.mrf.mxu0
      %v825 = vadd.f32 0.0, %v824
      %v826 = vpop.f32.mrf.mxu0
      %827 = vmatprep.mubr.f32.mxu0 0.0
      %828 = vmatmul.mubr.f32.gmra.mxu0 %v756
      %v829 = vpop.f32.mrf.mxu0
      %v830 = vadd.f32 0.0, %v829
      %v831 = vpop.f32.mrf.mxu0
      %832 = vdwg.mxu0
      %v833 = vmul.f32 %v825, 2.0
      %v834 = vmul.f32 %v830, 2.0
      %v835 = vsub.f32 %v833, %v750
      %v836 = vsub.f32 %v834, %v751
      %v837 = vld [vmem:[%s10] sm:$0xff]
      %838 = vmatprep.subr.mxu0 0.0
      %839 = vmatpush1.msra.mxu0 0.0
      %840 = vmatprep.subr.mxu0 0.0
      %841 = vmatpush1.msra.mxu0 0.0
      %842 = vmatprep.subr.mxu0 0.0
      %843 = vmatpush1.msra.mxu0 0.0
      %844 = vmatprep.subr.mxu0 0.0
      %845 = vmatpush1.msra.mxu0 0.0
      %846 = vmatprep.subr.mxu0 0.0
      %847 = vmatpush1.msra.mxu0 0.0
      %848 = vmatprep.subr.mxu0 0.0
      %849 = vmatpush1.msra.mxu0 0.0
      %850 = vmatprep.subr.mxu0 0.0
      %851 = vmatpush1.msra.mxu0 0.0
      %852 = vmatprep.subr.mxu0 0.0
      %853 = vmatpush1.msra.mxu0 0.0
      %854 = vmatprep.subr.mxu0 0.0
      %855 = vmatpush1.msra.mxu0 0.0
      %856 = vmatprep.subr.mxu0 0.0
      %857 = vmatpush1.msra.mxu0 0.0
      %858 = vmatprep.subr.mxu0 0.0
      %859 = vmatpush1.msra.mxu0 0.0
      %860 = vmatprep.subr.mxu0 0.0
      %861 = vmatpush1.msra.mxu0 0.0
      %862 = vmatprep.subr.mxu0 0.0
      %863 = vmatpush1.msra.mxu0 0.0
      %864 = vmatprep.subr.mxu0 0.0
      %865 = vmatpush1.msra.mxu0 0.0
      %866 = vmatprep.subr.mxu0 0.0
      %867 = vmatpush1.msra.mxu0 0.0
      %868 = vmatprep.subr.mxu0 0.0
      %869 = vmatpush1.msra.mxu0 %v837
      %870 = vmatprep.subr.mxu0 0.0
      %871 = vmatpush2.msra.mxu0 0.0
      %872 = vmatprep.subr.mxu0 0.0
      %873 = vmatpush2.msra.mxu0 0.0
      %874 = vmatprep.subr.mxu0 0.0
      %875 = vmatpush2.msra.mxu0 0.0
      %876 = vmatprep.subr.mxu0 0.0
      %877 = vmatpush2.msra.mxu0 0.0
      %878 = vmatprep.subr.mxu0 0.0
      %879 = vmatpush2.msra.mxu0 0.0
      %880 = vmatprep.subr.mxu0 0.0
      %881 = vmatpush2.msra.mxu0 0.0
      %882 = vmatprep.subr.mxu0 0.0
      %883 = vmatpush2.msra.mxu0 0.0
      %884 = vmatprep.subr.mxu0 0.0
      %885 = vmatpush2.msra.mxu0 0.0
      %886 = vmatprep.subr.mxu0 0.0
      %887 = vmatpush2.msra.mxu0 0.0
      %888 = vmatprep.subr.mxu0 0.0
      %889 = vmatpush2.msra.mxu0 0.0
      %890 = vmatprep.subr.mxu0 0.0
      %891 = vmatpush2.msra.mxu0 0.0
      %892 = vmatprep.subr.mxu0 0.0
      %893 = vmatpush2.msra.mxu0 0.0
      %894 = vmatprep.subr.mxu0 0.0
      %895 = vmatpush2.msra.mxu0 0.0
      %896 = vmatprep.subr.mxu0 0.0
      %897 = vmatpush2.msra.mxu0 0.0
      %898 = vmatprep.subr.mxu0 0.0
      %899 = vmatpush2.msra.mxu0 0.0
      %900 = vmatprep.subr.mxu0 0.0
      %901 = vmatpush2.msra.mxu0 0.0
      %902 = vmatprep.mubr.f32.mxu0 0.0
      %903 = vmatmul.mubr.f32.gmra.mxu0 %v636
      %v904 = vpop.f32.mrf.mxu0
      %v905 = vadd.f32 0.0, %v904
      %v906 = vpop.f32.mrf.mxu0
      %907 = vmatprep.mubr.f32.mxu0 0.0
      %908 = vmatmul.mubr.f32.gmra.mxu0 %v639
      %v909 = vpop.f32.mrf.mxu0
      %v910 = vadd.f32 0.0, %v909
      %v911 = vpop.f32.mrf.mxu0
      %912 = vdwg.mxu0
      %v913 = vld [vmem:[%s11] sm:$0xff]
      %914 = vmatprep.subr.mxu0 0.0
      %915 = vmatpush1.msra.mxu0 0.0
      %916 = vmatprep.subr.mxu0 0.0
      %917 = vmatpush1.msra.mxu0 0.0
      %918 = vmatprep.subr.mxu0 0.0
      %919 = vmatpush1.msra.mxu0 0.0
      %920 = vmatprep.subr.mxu0 0.0
      %921 = vmatpush1.msra.mxu0 0.0
      %922 = vmatprep.subr.mxu0 0.0
      %923 = vmatpush1.msra.mxu0 0.0
      %924 = vmatprep.subr.mxu0 0.0
      %925 = vmatpush1.msra.mxu0 0.0
      %926 = vmatprep.subr.mxu0 0.0
      %927 = vmatpush1.msra.mxu0 0.0
      %928 = vmatprep.subr.mxu0 0.0
      %929 = vmatpush1.msra.mxu0 0.0
      %930 = vmatprep.subr.mxu0 0.0
      %931 = vmatpush1.msra.mxu0 0.0
      %932 = vmatprep.subr.mxu0 0.0
      %933 = vmatpush1.msra.mxu0 0.0
      %934 = vmatprep.subr.mxu0 0.0
      %935 = vmatpush1.msra.mxu0 0.0
      %936 = vmatprep.subr.mxu0 0.0
      %937 = vmatpush1.msra.mxu0 0.0
      %938 = vmatprep.subr.mxu0 0.0
      %939 = vmatpush1.msra.mxu0 0.0
      %940 = vmatprep.subr.mxu0 0.0
      %941 = vmatpush1.msra.mxu0 0.0
      %942 = vmatprep.subr.mxu0 0.0
      %943 = vmatpush1.msra.mxu0 0.0
      %944 = vmatprep.subr.mxu0 0.0
      %945 = vmatpush1.msra.mxu0 %v913
      %946 = vmatprep.subr.mxu0 0.0
      %947 = vmatpush2.msra.mxu0 0.0
      %948 = vmatprep.subr.mxu0 0.0
      %949 = vmatpush2.msra.mxu0 0.0
      %950 = vmatprep.subr.mxu0 0.0
      %951 = vmatpush2.msra.mxu0 0.0
      %952 = vmatprep.subr.mxu0 0.0
      %953 = vmatpush2.msra.mxu0 0.0
      %954 = vmatprep.subr.mxu0 0.0
      %955 = vmatpush2.msra.mxu0 0.0
      %956 = vmatprep.subr.mxu0 0.0
      %957 = vmatpush2.msra.mxu0 0.0
      %958 = vmatprep.subr.mxu0 0.0
      %959 = vmatpush2.msra.mxu0 0.0
      %960 = vmatprep.subr.mxu0 0.0
      %961 = vmatpush2.msra.mxu0 0.0
      %962 = vmatprep.subr.mxu0 0.0
      %963 = vmatpush2.msra.mxu0 0.0
      %964 = vmatprep.subr.mxu0 0.0
      %965 = vmatpush2.msra.mxu0 0.0
      %966 = vmatprep.subr.mxu0 0.0
      %967 = vmatpush2.msra.mxu0 0.0
      %968 = vmatprep.subr.mxu0 0.0
      %969 = vmatpush2.msra.mxu0 0.0
      %970 = vmatprep.subr.mxu0 0.0
      %971 = vmatpush2.msra.mxu0 0.0
      %972 = vmatprep.subr.mxu0 0.0
      %973 = vmatpush2.msra.mxu0 0.0
      %974 = vmatprep.subr.mxu0 0.0
      %975 = vmatpush2.msra.mxu0 0.0
      %976 = vmatprep.subr.mxu0 0.0
      %977 = vmatpush2.msra.mxu0 0.0
      %978 = vmatprep.mubr.f32.mxu0 0.0
      %979 = vmatmul.mubr.f32.gmra.mxu0 %v636
      %v980 = vpop.f32.mrf.mxu0
      %v981 = vadd.f32 0.0, %v980
      %v982 = vpop.f32.mrf.mxu0
      %983 = vmatprep.mubr.f32.mxu0 0.0
      %984 = vmatmul.mubr.f32.gmra.mxu0 %v639
      %v985 = vpop.f32.mrf.mxu0
      %v986 = vadd.f32 0.0, %v985
      %v987 = vpop.f32.mrf.mxu0
      %988 = vdwg.mxu0
      %v989 = vld [vmem:[%s12] sm:$0xff]
      %990 = vmatprep.subr.mxu0 0.0
      %991 = vmatpush1.msra.mxu0 0.0
      %992 = vmatprep.subr.mxu0 0.0
      %993 = vmatpush1.msra.mxu0 0.0
      %994 = vmatprep.subr.mxu0 0.0
      %995 = vmatpush1.msra.mxu0 0.0
      %996 = vmatprep.subr.mxu0 0.0
      %997 = vmatpush1.msra.mxu0 0.0
      %998 = vmatprep.subr.mxu0 0.0
      %999 = vmatpush1.msra.mxu0 0.0
      %1000 = vmatprep.subr.mxu0 0.0
      %1001 = vmatpush1.msra.mxu0 0.0
      %1002 = vmatprep.subr.mxu0 0.0
      %1003 = vmatpush1.msra.mxu0 0.0
      %1004 = vmatprep.subr.mxu0 0.0
      %1005 = vmatpush1.msra.mxu0 0.0
      %1006 = vmatprep.subr.mxu0 0.0
      %1007 = vmatpush1.msra.mxu0 0.0
      %1008 = vmatprep.subr.mxu0 0.0
      %1009 = vmatpush1.msra.mxu0 0.0
      %1010 = vmatprep.subr.mxu0 0.0
      %1011 = vmatpush1.msra.mxu0 0.0
      %1012 = vmatprep.subr.mxu0 0.0
      %1013 = vmatpush1.msra.mxu0 0.0
      %1014 = vmatprep.subr.mxu0 0.0
      %1015 = vmatpush1.msra.mxu0 0.0
      %1016 = vmatprep.subr.mxu0 0.0
      %1017 = vmatpush1.msra.mxu0 0.0
      %1018 = vmatprep.subr.mxu0 0.0
      %1019 = vmatpush1.msra.mxu0 0.0
      %1020 = vmatprep.subr.mxu0 0.0
      %1021 = vmatpush1.msra.mxu0 %v989
      %1022 = vmatprep.subr.mxu0 0.0
      %1023 = vmatpush2.msra.mxu0 0.0
      %1024 = vmatprep.subr.mxu0 0.0
      %1025 = vmatpush2.msra.mxu0 0.0
      %1026 = vmatprep.subr.mxu0 0.0
      %1027 = vmatpush2.msra.mxu0 0.0
      %1028 = vmatprep.subr.mxu0 0.0
      %1029 = vmatpush2.msra.mxu0 0.0
      %1030 = vmatprep.subr.mxu0 0.0
      %1031 = vmatpush2.msra.mxu0 0.0
      %1032 = vmatprep.subr.mxu0 0.0
      %1033 = vmatpush2.msra.mxu0 0.0
      %1034 = vmatprep.subr.mxu0 0.0
      %1035 = vmatpush2.msra.mxu0 0.0
      %1036 = vmatprep.subr.mxu0 0.0
      %1037 = vmatpush2.msra.mxu0 0.0
      %1038 = vmatprep.subr.mxu0 0.0
      %1039 = vmatpush2.msra.mxu0 0.0
      %1040 = vmatprep.subr.mxu0 0.0
      %1041 = vmatpush2.msra.mxu0 0.0
      %1042 = vmatprep.subr.mxu0 0.0
      %1043 = vmatpush2.msra.mxu0 0.0
      %1044 = vmatprep.subr.mxu0 0.0
      %1045 = vmatpush2.msra.mxu0 0.0
      %1046 = vmatprep.subr.mxu0 0.0
      %1047 = vmatpush2.msra.mxu0 0.0
      %1048 = vmatprep.subr.mxu0 0.0
      %1049 = vmatpush2.msra.mxu0 0.0
      %1050 = vmatprep.subr.mxu0 0.0
      %1051 = vmatpush2.msra.mxu0 0.0
      %1052 = vmatprep.subr.mxu0 0.0
      %1053 = vmatpush2.msra.mxu0 0.0
      %1054 = vmatprep.mubr.f32.mxu0 0.0
      %1055 = vmatmul.mubr.f32.gmra.mxu0 %v636
      %v1056 = vpop.f32.mrf.mxu0
      %v1057 = vadd.f32 0.0, %v1056
      %v1058 = vpop.f32.mrf.mxu0
      %1059 = vmatprep.mubr.f32.mxu0 0.0
      %1060 = vmatmul.mubr.f32.gmra.mxu0 %v639
      %v1061 = vpop.f32.mrf.mxu0
      %v1062 = vadd.f32 0.0, %v1061
      %v1063 = vpop.f32.mrf.mxu0
      %1064 = vdwg.mxu0
      %v1065 = vld [vmem:[%s13] sm:$0xff]
      %1066 = vmatprep.subr.mxu0 0.0
      %1067 = vmatpush1.msra.mxu0 0.0
      %1068 = vmatprep.subr.mxu0 0.0
      %1069 = vmatpush1.msra.mxu0 0.0
      %1070 = vmatprep.subr.mxu0 0.0
      %1071 = vmatpush1.msra.mxu0 0.0
      %1072 = vmatprep.subr.mxu0 0.0
      %1073 = vmatpush1.msra.mxu0 0.0
      %1074 = vmatprep.subr.mxu0 0.0
      %1075 = vmatpush1.msra.mxu0 0.0
      %1076 = vmatprep.subr.mxu0 0.0
      %1077 = vmatpush1.msra.mxu0 0.0
      %1078 = vmatprep.subr.mxu0 0.0
      %1079 = vmatpush1.msra.mxu0 0.0
      %1080 = vmatprep.subr.mxu0 0.0
      %1081 = vmatpush1.msra.mxu0 0.0
      %1082 = vmatprep.subr.mxu0 0.0
      %1083 = vmatpush1.msra.mxu0 0.0
      %1084 = vmatprep.subr.mxu0 0.0
      %1085 = vmatpush1.msra.mxu0 0.0
      %1086 = vmatprep.subr.mxu0 0.0
      %1087 = vmatpush1.msra.mxu0 0.0
      %1088 = vmatprep.subr.mxu0 0.0
      %1089 = vmatpush1.msra.mxu0 0.0
      %1090 = vmatprep.subr.mxu0 0.0
      %1091 = vmatpush1.msra.mxu0 0.0
      %1092 = vmatprep.subr.mxu0 0.0
      %1093 = vmatpush1.msra.mxu0 0.0
      %1094 = vmatprep.subr.mxu0 0.0
      %1095 = vmatpush1.msra.mxu0 0.0
      %1096 = vmatprep.subr.mxu0 0.0
      %1097 = vmatpush1.msra.mxu0 %v1065
      %1098 = vmatprep.subr.mxu0 0.0
      %1099 = vmatpush2.msra.mxu0 0.0
      %1100 = vmatprep.subr.mxu0 0.0
      %1101 = vmatpush2.msra.mxu0 0.0
      %1102 = vmatprep.subr.mxu0 0.0
      %1103 = vmatpush2.msra.mxu0 0.0
      %1104 = vmatprep.subr.mxu0 0.0
      %1105 = vmatpush2.msra.mxu0 0.0
      %1106 = vmatprep.subr.mxu0 0.0
      %1107 = vmatpush2.msra.mxu0 0.0
      %1108 = vmatprep.subr.mxu0 0.0
      %1109 = vmatpush2.msra.mxu0 0.0
      %1110 = vmatprep.subr.mxu0 0.0
      %1111 = vmatpush2.msra.mxu0 0.0
      %1112 = vmatprep.subr.mxu0 0.0
      %1113 = vmatpush2.msra.mxu0 0.0
      %1114 = vmatprep.subr.mxu0 0.0
      %1115 = vmatpush2.msra.mxu0 0.0
      %1116 = vmatprep.subr.mxu0 0.0
      %1117 = vmatpush2.msra.mxu0 0.0
      %1118 = vmatprep.subr.mxu0 0.0
      %1119 = vmatpush2.msra.mxu0 0.0
      %1120 = vmatprep.subr.mxu0 0.0
      %1121 = vmatpush2.msra.mxu0 0.0
      %1122 = vmatprep.subr.mxu0 0.0
      %1123 = vmatpush2.msra.mxu0 0.0
      %1124 = vmatprep.subr.mxu0 0.0
      %1125 = vmatpush2.msra.mxu0 0.0
      %1126 = vmatprep.subr.mxu0 0.0
      %1127 = vmatpush2.msra.mxu0 0.0
      %1128 = vmatprep.subr.mxu0 0.0
      %1129 = vmatpush2.msra.mxu0 0.0
      %1130 = vmatprep.mubr.f32.mxu0 0.0
      %1131 = vmatmul.mubr.f32.gmra.mxu0 %v636
      %v1132 = vpop.f32.mrf.mxu0
      %v1133 = vadd.f32 0.0, %v1132
      %v1134 = vpop.f32.mrf.mxu0
      %1135 = vmatprep.mubr.f32.mxu0 0.0
      %1136 = vmatmul.mubr.f32.gmra.mxu0 %v639
      %v1137 = vpop.f32.mrf.mxu0
      %v1138 = vadd.f32 0.0, %v1137
      %v1139 = vpop.f32.mrf.mxu0
      %1140 = vdwg.mxu0
      %v1141 = vld [vmem:[%s14] sm:$0xff]
      %1142 = vmatprep.subr.mxu0 0.0
      %1143 = vmatpush1.msra.mxu0 0.0
      %1144 = vmatprep.subr.mxu0 0.0
      %1145 = vmatpush1.msra.mxu0 0.0
      %1146 = vmatprep.subr.mxu0 0.0
      %1147 = vmatpush1.msra.mxu0 0.0
      %1148 = vmatprep.subr.mxu0 0.0
      %1149 = vmatpush1.msra.mxu0 0.0
      %1150 = vmatprep.subr.mxu0 0.0
      %1151 = vmatpush1.msra.mxu0 0.0
      %1152 = vmatprep.subr.mxu0 0.0
      %1153 = vmatpush1.msra.mxu0 0.0
      %1154 = vmatprep.subr.mxu0 0.0
      %1155 = vmatpush1.msra.mxu0 0.0
      %1156 = vmatprep.subr.mxu0 0.0
      %1157 = vmatpush1.msra.mxu0 0.0
      %1158 = vmatprep.subr.mxu0 0.0
      %1159 = vmatpush1.msra.mxu0 0.0
      %1160 = vmatprep.subr.mxu0 0.0
      %1161 = vmatpush1.msra.mxu0 0.0
      %1162 = vmatprep.subr.mxu0 0.0
      %1163 = vmatpush1.msra.mxu0 0.0
      %1164 = vmatprep.subr.mxu0 0.0
      %1165 = vmatpush1.msra.mxu0 0.0
      %1166 = vmatprep.subr.mxu0 0.0
      %1167 = vmatpush1.msra.mxu0 0.0
      %1168 = vmatprep.subr.mxu0 0.0
      %1169 = vmatpush1.msra.mxu0 0.0
      %1170 = vmatprep.subr.mxu0 0.0
      %1171 = vmatpush1.msra.mxu0 0.0
      %1172 = vmatprep.subr.mxu0 0.0
      %1173 = vmatpush1.msra.mxu0 %v1141
      %1174 = vmatprep.subr.mxu0 0.0
      %1175 = vmatpush2.msra.mxu0 0.0
      %1176 = vmatprep.subr.mxu0 0.0
      %1177 = vmatpush2.msra.mxu0 0.0
      %1178 = vmatprep.subr.mxu0 0.0
      %1179 = vmatpush2.msra.mxu0 0.0
      %1180 = vmatprep.subr.mxu0 0.0
      %1181 = vmatpush2.msra.mxu0 0.0
      %1182 = vmatprep.subr.mxu0 0.0
      %1183 = vmatpush2.msra.mxu0 0.0
      %1184 = vmatprep.subr.mxu0 0.0
      %1185 = vmatpush2.msra.mxu0 0.0
      %1186 = vmatprep.subr.mxu0 0.0
      %1187 = vmatpush2.msra.mxu0 0.0
      %1188 = vmatprep.subr.mxu0 0.0
      %1189 = vmatpush2.msra.mxu0 0.0
      %1190 = vmatprep.subr.mxu0 0.0
      %1191 = vmatpush2.msra.mxu0 0.0
      %1192 = vmatprep.subr.mxu0 0.0
      %1193 = vmatpush2.msra.mxu0 0.0
      %1194 = vmatprep.subr.mxu0 0.0
      %1195 = vmatpush2.msra.mxu0 0.0
      %1196 = vmatprep.subr.mxu0 0.0
      %1197 = vmatpush2.msra.mxu0 0.0
      %1198 = vmatprep.subr.mxu0 0.0
      %1199 = vmatpush2.msra.mxu0 0.0
      %1200 = vmatprep.subr.mxu0 0.0
      %1201 = vmatpush2.msra.mxu0 0.0
      %1202 = vmatprep.subr.mxu0 0.0
      %1203 = vmatpush2.msra.mxu0 0.0
      %1204 = vmatprep.subr.mxu0 0.0
      %1205 = vmatpush2.msra.mxu0 0.0
      %1206 = vmatprep.mubr.f32.mxu0 0.0
      %1207 = vmatmul.mubr.f32.gmra.mxu0 %v636
      %v1208 = vpop.f32.mrf.mxu0
      %v1209 = vadd.f32 0.0, %v1208
      %v1210 = vpop.f32.mrf.mxu0
      %1211 = vmatprep.mubr.f32.mxu0 0.0
      %1212 = vmatmul.mubr.f32.gmra.mxu0 %v639
      %v1213 = vpop.f32.mrf.mxu0
      %v1214 = vadd.f32 0.0, %v1213
      %v1215 = vpop.f32.mrf.mxu0
      %1216 = vdwg.mxu0
      %v1217 = vld [vmem:[%s15] sm:$0xff]
      %1218 = vmatprep.subr.mxu0 0.0
      %1219 = vmatpush1.msra.mxu0 0.0
      %1220 = vmatprep.subr.mxu0 0.0
      %1221 = vmatpush1.msra.mxu0 0.0
      %1222 = vmatprep.subr.mxu0 0.0
      %1223 = vmatpush1.msra.mxu0 0.0
      %1224 = vmatprep.subr.mxu0 0.0
      %1225 = vmatpush1.msra.mxu0 0.0
      %1226 = vmatprep.subr.mxu0 0.0
      %1227 = vmatpush1.msra.mxu0 0.0
      %1228 = vmatprep.subr.mxu0 0.0
      %1229 = vmatpush1.msra.mxu0 0.0
      %1230 = vmatprep.subr.mxu0 0.0
      %1231 = vmatpush1.msra.mxu0 0.0
      %1232 = vmatprep.subr.mxu0 0.0
      %1233 = vmatpush1.msra.mxu0 0.0
      %1234 = vmatprep.subr.mxu0 0.0
      %1235 = vmatpush1.msra.mxu0 0.0
      %1236 = vmatprep.subr.mxu0 0.0
      %1237 = vmatpush1.msra.mxu0 0.0
      %1238 = vmatprep.subr.mxu0 0.0
      %1239 = vmatpush1.msra.mxu0 0.0
      %1240 = vmatprep.subr.mxu0 0.0
      %1241 = vmatpush1.msra.mxu0 0.0
      %1242 = vmatprep.subr.mxu0 0.0
      %1243 = vmatpush1.msra.mxu0 0.0
      %1244 = vmatprep.subr.mxu0 0.0
      %1245 = vmatpush1.msra.mxu0 0.0
      %1246 = vmatprep.subr.mxu0 0.0
      %1247 = vmatpush1.msra.mxu0 0.0
      %1248 = vmatprep.subr.mxu0 0.0
      %1249 = vmatpush1.msra.mxu0 %v1217
      %1250 = vmatprep.subr.mxu0 0.0
      %1251 = vmatpush2.msra.mxu0 0.0
      %1252 = vmatprep.subr.mxu0 0.0
      %1253 = vmatpush2.msra.mxu0 0.0
      %1254 = vmatprep.subr.mxu0 0.0
      %1255 = vmatpush2.msra.mxu0 0.0
      %1256 = vmatprep.subr.mxu0 0.0
      %1257 = vmatpush2.msra.mxu0 0.0
      %1258 = vmatprep.subr.mxu0 0.0
      %1259 = vmatpush2.msra.mxu0 0.0
      %1260 = vmatprep.subr.mxu0 0.0
      %1261 = vmatpush2.msra.mxu0 0.0
      %1262 = vmatprep.subr.mxu0 0.0
      %1263 = vmatpush2.msra.mxu0 0.0
      %1264 = vmatprep.subr.mxu0 0.0
      %1265 = vmatpush2.msra.mxu0 0.0
      %1266 = vmatprep.subr.mxu0 0.0
      %1267 = vmatpush2.msra.mxu0 0.0
      %1268 = vmatprep.subr.mxu0 0.0
      %1269 = vmatpush2.msra.mxu0 0.0
      %1270 = vmatprep.subr.mxu0 0.0
      %1271 = vmatpush2.msra.mxu0 0.0
      %1272 = vmatprep.subr.mxu0 0.0
      %1273 = vmatpush2.msra.mxu0 0.0
      %1274 = vmatprep.subr.mxu0 0.0
      %1275 = vmatpush2.msra.mxu0 0.0
      %1276 = vmatprep.subr.mxu0 0.0
      %1277 = vmatpush2.msra.mxu0 0.0
      %1278 = vmatprep.subr.mxu0 0.0
      %1279 = vmatpush2.msra.mxu0 0.0
      %1280 = vmatprep.subr.mxu0 0.0
      %1281 = vmatpush2.msra.mxu0 0.0
      %1282 = vmatprep.mubr.f32.mxu0 0.0
      %1283 = vmatmul.mubr.f32.gmra.mxu0 %v636
      %v1284 = vpop.f32.mrf.mxu0
      %v1285 = vadd.f32 0.0, %v1284
      %v1286 = vpop.f32.mrf.mxu0
      %1287 = vmatprep.mubr.f32.mxu0 0.0
      %1288 = vmatmul.mubr.f32.gmra.mxu0 %v639
      %v1289 = vpop.f32.mrf.mxu0
      %v1290 = vadd.f32 0.0, %v1289
      %v1291 = vpop.f32.mrf.mxu0
      %1292 = vdwg.mxu0
      %v1293 = vld [vmem:[%s2] sm:$0xff]
      %v1294 = vld [vmem:[%s2 + $0x8] sm:$0xff]
      %v1295 = vld [vmem:[%s2 + $0x10] sm:$0xff]
      %v1296 = vld [vmem:[%s2 + $0x18] sm:$0xff]
      %v1297 = vld [vmem:[%s3] sm:$0xff]
      %v1298 = vld [vmem:[%s3 + $0x8] sm:$0xff]
      %v1299 = vld [vmem:[%s3 + $0x10] sm:$0xff]
      %v1300 = vld [vmem:[%s3 + $0x18] sm:$0xff]
      %v1301 = vld [vmem:[%s3 + $0x20] sm:$0xff]
      %v1302 = vld [vmem:[%s3 + $0x28] sm:$0xff]
      %v1303 = vld [vmem:[%s3 + $0x30] sm:$0xff]
      %v1304 = vld [vmem:[%s3 + $0x38] sm:$0xff]
      %v1305 = vld [vmem:[%s3 + $0x40] sm:$0xff]
      %v1306 = vld [vmem:[%s3 + $0x48] sm:$0xff]
      %v1307 = vld [vmem:[%s3 + $0x50] sm:$0xff]
      %v1308 = vld [vmem:[%s3 + $0x58] sm:$0xff]
      %v1309 = vld [vmem:[%s3 + $0x60] sm:$0xff]
      %v1310 = vld [vmem:[%s3 + $0x68] sm:$0xff]
      %v1311 = vld [vmem:[%s3 + $0x70] sm:$0xff]
      %v1312 = vld [vmem:[%s3 + $0x78] sm:$0xff]
      %v1313 = vld [vmem:[%s3 + $0x80] sm:$0xff]
      %v1314 = vld [vmem:[%s3 + $0x88] sm:$0xff]
      %v1315 = vld [vmem:[%s3 + $0x90] sm:$0xff]
      %v1316 = vld [vmem:[%s3 + $0x98] sm:$0xff]
      %v1317 = vld [vmem:[%s3 + $0xa0] sm:$0xff]
      %v1318 = vld [vmem:[%s3 + $0xa8] sm:$0xff]
      %v1319 = vld [vmem:[%s3 + $0xb0] sm:$0xff]
      %v1320 = vld [vmem:[%s3 + $0xb8] sm:$0xff]
      %v1321 = vld [vmem:[%s3 + $0xc0] sm:$0xff]
      %v1322 = vld [vmem:[%s3 + $0xc8] sm:$0xff]
      %v1323 = vld [vmem:[%s3 + $0xd0] sm:$0xff]
      %v1324 = vld [vmem:[%s3 + $0xd8] sm:$0xff]
      %v1325 = vld [vmem:[%s3 + $0xe0] sm:$0xff]
      %v1326 = vld [vmem:[%s3 + $0xe8] sm:$0xff]
      %v1327 = vld [vmem:[%s3 + $0xf0] sm:$0xff]
      %v1328 = vld [vmem:[%s3 + $0xf8] sm:$0xff]
      %v1329 = vld [vmem:[%s626] sm:$0xff]
      %v1330 = vld [vmem:[%s626 + $0x8] sm:$0xff]
      %v1331 = vld [vmem:[%s626 + $0x10] sm:$0xff]
      %v1332 = vld [vmem:[%s626 + $0x18] sm:$0xff]
      %v1333 = vld [vmem:[%s626 + $0x20] sm:$0xff]
      %v1334 = vld [vmem:[%s626 + $0x28] sm:$0xff]
      %v1335 = vld [vmem:[%s626 + $0x30] sm:$0xff]
      %v1336 = vld [vmem:[%s626 + $0x38] sm:$0xff]
      %v1337 = vld [vmem:[%s626 + $0x40] sm:$0xff]
      %v1338 = vld [vmem:[%s626 + $0x48] sm:$0xff]
      %v1339 = vld [vmem:[%s626 + $0x50] sm:$0xff]
      %v1340 = vld [vmem:[%s626 + $0x58] sm:$0xff]
      %v1341 = vld [vmem:[%s626 + $0x60] sm:$0xff]
      %v1342 = vld [vmem:[%s626 + $0x68] sm:$0xff]
      %v1343 = vld [vmem:[%s626 + $0x70] sm:$0xff]
      %v1344 = vld [vmem:[%s626 + $0x78] sm:$0xff]
      %v1346 = vsel %vm718, %v835, 0
      %v1349 = vsel %vm718, %v836, 0
      %1351 = vmatprep.subr.mxu0 0.0
      %1352 = vmatpush1.msra.mxu0 0.0
      %1353 = vmatprep.subr.mxu0 0.0
      %1354 = vmatpush1.msra.mxu0 0.0
      %1355 = vmatprep.subr.mxu0 0.0
      %1356 = vmatpush1.msra.mxu0 0.0
      %1357 = vmatprep.subr.mxu0 0.0
      %1358 = vmatpush1.msra.mxu0 0.0
      %1359 = vmatprep.subr.mxu0 0.0
      %1360 = vmatpush1.msra.mxu0 0.0
      %1361 = vmatprep.subr.mxu0 0.0
      %1362 = vmatpush1.msra.mxu0 0.0
      %1363 = vmatprep.subr.mxu0 0.0
      %1364 = vmatpush1.msra.mxu0 0.0
      %1365 = vmatprep.subr.mxu0 0.0
      %1366 = vmatpush1.msra.mxu0 0.0
      %1367 = vmatprep.subr.mxu0 0.0
      %1368 = vmatpush1.msra.mxu0 0.0
      %1369 = vmatprep.subr.mxu0 0.0
      %1370 = vmatpush1.msra.mxu0 0.0
      %1371 = vmatprep.subr.mxu0 0.0
      %1372 = vmatpush1.msra.mxu0 0.0
      %1373 = vmatprep.subr.mxu0 0.0
      %1374 = vmatpush1.msra.mxu0 0.0
      %1375 = vmatprep.subr.mxu0 0.0
      %1376 = vmatpush1.msra.mxu0 0.0
      %1377 = vmatprep.subr.mxu0 0.0
      %1378 = vmatpush1.msra.mxu0 0.0
      %1379 = vmatprep.subr.mxu0 0.0
      %1380 = vmatpush1.msra.mxu0 %v1330
      %1381 = vmatprep.subr.mxu0 0.0
      %1382 = vmatpush1.msra.mxu0 %v1329
      %1383 = vmatprep.subr.mxu0 0.0
      %1384 = vmatpush2.msra.mxu0 0.0
      %1385 = vmatprep.subr.mxu0 0.0
      %1386 = vmatpush2.msra.mxu0 0.0
      %1387 = vmatprep.subr.mxu0 0.0
      %1388 = vmatpush2.msra.mxu0 0.0
      %1389 = vmatprep.subr.mxu0 0.0
      %1390 = vmatpush2.msra.mxu0 0.0
      %1391 = vmatprep.subr.mxu0 0.0
      %1392 = vmatpush2.msra.mxu0 0.0
      %1393 = vmatprep.subr.mxu0 0.0
      %1394 = vmatpush2.msra.mxu0 0.0
      %1395 = vmatprep.subr.mxu0 0.0
      %1396 = vmatpush2.msra.mxu0 0.0
      %1397 = vmatprep.subr.mxu0 0.0
      %1398 = vmatpush2.msra.mxu0 0.0
      %1399 = vmatprep.subr.mxu0 0.0
      %1400 = vmatpush2.msra.mxu0 0.0
      %1401 = vmatprep.subr.mxu0 0.0
      %1402 = vmatpush2.msra.mxu0 0.0
      %1403 = vmatprep.subr.mxu0 0.0
      %1404 = vmatpush2.msra.mxu0 0.0
      %1405 = vmatprep.subr.mxu0 0.0
      %1406 = vmatpush2.msra.mxu0 0.0
      %1407 = vmatprep.subr.mxu0 0.0
      %1408 = vmatpush2.msra.mxu0 0.0
      %1409 = vmatprep.subr.mxu0 0.0
      %1410 = vmatpush2.msra.mxu0 0.0
      %1411 = vmatprep.subr.mxu0 0.0
      %1412 = vmatpush2.msra.mxu0 0.0
      %1413 = vmatprep.subr.mxu0 0.0
      %1414 = vmatpush2.msra.mxu0 0.0
      %1415 = vmatprep.mubr.f32.mxu0 0.0
      %1416 = vmatmul.mubr.f32.gmra.mxu0 %v753
      %v1417 = vpop.f32.mrf.mxu0
      %v1418 = vadd.f32 0.0, %v1417
      %v1419 = vpop.f32.mrf.mxu0
      %1420 = vmatprep.mubr.f32.mxu0 0.0
      %1421 = vmatmul.mubr.f32.gmra.mxu0 %v756
      %v1422 = vpop.f32.mrf.mxu0
      %v1423 = vadd.f32 0.0, %v1422
      %v1424 = vpop.f32.mrf.mxu0
      %1425 = vmatprep.mubr.f32.mxu0 0.0
      %1426 = vmatmul.mubr.f32.gmra.mxu0 %v1346
      %v1427 = vpop.f32.mrf.mxu0
      %v1428 = vadd.f32 0.0, %v1427
      %v1429 = vpop.f32.mrf.mxu0
      %1430 = vmatprep.mubr.f32.mxu0 0.0
      %1431 = vmatmul.mubr.f32.gmra.mxu0 %v1349
      %v1432 = vpop.f32.mrf.mxu0
      %v1433 = vadd.f32 0.0, %v1432
      %v1434 = vpop.f32.mrf.mxu0
      %1435 = vdwg.mxu0
      %1436 = vmatprep.subr.mxu0 0.0
      %1437 = vmatpush1.msra.mxu0 0.0
      %1438 = vmatprep.subr.mxu0 0.0
      %1439 = vmatpush1.msra.mxu0 0.0
      %1440 = vmatprep.subr.mxu0 0.0
      %1441 = vmatpush1.msra.mxu0 0.0
      %1442 = vmatprep.subr.mxu0 0.0
      %1443 = vmatpush1.msra.mxu0 0.0
      %1444 = vmatprep.subr.mxu0 0.0
      %1445 = vmatpush1.msra.mxu0 0.0
      %1446 = vmatprep.subr.mxu0 0.0
      %1447 = vmatpush1.msra.mxu0 0.0
      %1448 = vmatprep.subr.mxu0 0.0
      %1449 = vmatpush1.msra.mxu0 0.0
      %1450 = vmatprep.subr.mxu0 0.0
      %1451 = vmatpush1.msra.mxu0 0.0
      %1452 = vmatprep.subr.mxu0 0.0
      %1453 = vmatpush1.msra.mxu0 0.0
      %1454 = vmatprep.subr.mxu0 0.0
      %1455 = vmatpush1.msra.mxu0 0.0
      %1456 = vmatprep.subr.mxu0 0.0
      %1457 = vmatpush1.msra.mxu0 0.0
      %1458 = vmatprep.subr.mxu0 0.0
      %1459 = vmatpush1.msra.mxu0 0.0
      %1460 = vmatprep.subr.mxu0 0.0
      %1461 = vmatpush1.msra.mxu0 0.0
      %1462 = vmatprep.subr.mxu0 0.0
      %1463 = vmatpush1.msra.mxu0 0.0
      %1464 = vmatprep.subr.mxu0 0.0
      %1465 = vmatpush1.msra.mxu0 %v1332
      %1466 = vmatprep.subr.mxu0 0.0
      %1467 = vmatpush1.msra.mxu0 %v1331
      %1468 = vmatprep.subr.mxu0 0.0
      %1469 = vmatpush2.msra.mxu0 0.0
      %1470 = vmatprep.subr.mxu0 0.0
      %1471 = vmatpush2.msra.mxu0 0.0
      %1472 = vmatprep.subr.mxu0 0.0
      %1473 = vmatpush2.msra.mxu0 0.0
      %1474 = vmatprep.subr.mxu0 0.0
      %1475 = vmatpush2.msra.mxu0 0.0
      %1476 = vmatprep.subr.mxu0 0.0
      %1477 = vmatpush2.msra.mxu0 0.0
      %1478 = vmatprep.subr.mxu0 0.0
      %1479 = vmatpush2.msra.mxu0 0.0
      %1480 = vmatprep.subr.mxu0 0.0
      %1481 = vmatpush2.msra.mxu0 0.0
      %1482 = vmatprep.subr.mxu0 0.0
      %1483 = vmatpush2.msra.mxu0 0.0
      %1484 = vmatprep.subr.mxu0 0.0
      %1485 = vmatpush2.msra.mxu0 0.0
      %1486 = vmatprep.subr.mxu0 0.0
      %1487 = vmatpush2.msra.mxu0 0.0
      %1488 = vmatprep.subr.mxu0 0.0
      %1489 = vmatpush2.msra.mxu0 0.0
      %1490 = vmatprep.subr.mxu0 0.0
      %1491 = vmatpush2.msra.mxu0 0.0
      %1492 = vmatprep.subr.mxu0 0.0
      %1493 = vmatpush2.msra.mxu0 0.0
      %1494 = vmatprep.subr.mxu0 0.0
      %1495 = vmatpush2.msra.mxu0 0.0
      %1496 = vmatprep.subr.mxu0 0.0
      %1497 = vmatpush2.msra.mxu0 0.0
      %1498 = vmatprep.subr.mxu0 0.0
      %1499 = vmatpush2.msra.mxu0 0.0
      %1500 = vmatprep.mubr.f32.mxu0 0.0
      %1501 = vmatmul.mubr.f32.gmra.mxu0 %v753
      %v1502 = vpop.f32.mrf.mxu0
      %v1503 = vadd.f32 0.0, %v1502
      %v1504 = vpop.f32.mrf.mxu0
      %1505 = vmatprep.mubr.f32.mxu0 0.0
      %1506 = vmatmul.mubr.f32.gmra.mxu0 %v756
      %v1507 = vpop.f32.mrf.mxu0
      %v1508 = vadd.f32 0.0, %v1507
      %v1509 = vpop.f32.mrf.mxu0
      %1510 = vmatprep.mubr.f32.mxu0 0.0
      %1511 = vmatmul.mubr.f32.gmra.mxu0 %v1346
      %v1512 = vpop.f32.mrf.mxu0
      %v1513 = vadd.f32 0.0, %v1512
      %v1514 = vpop.f32.mrf.mxu0
      %1515 = vmatprep.mubr.f32.mxu0 0.0
      %1516 = vmatmul.mubr.f32.gmra.mxu0 %v1349
      %v1517 = vpop.f32.mrf.mxu0
      %v1518 = vadd.f32 0.0, %v1517
      %v1519 = vpop.f32.mrf.mxu0
      %1520 = vdwg.mxu0
      %1521 = vmatprep.subr.mxu0 0.0
      %1522 = vmatpush1.msra.mxu0 0.0
      %1523 = vmatprep.subr.mxu0 0.0
      %1524 = vmatpush1.msra.mxu0 0.0
      %1525 = vmatprep.subr.mxu0 0.0
      %1526 = vmatpush1.msra.mxu0 0.0
      %1527 = vmatprep.subr.mxu0 0.0
      %1528 = vmatpush1.msra.mxu0 0.0
      %1529 = vmatprep.subr.mxu0 0.0
      %1530 = vmatpush1.msra.mxu0 0.0
      %1531 = vmatprep.subr.mxu0 0.0
      %1532 = vmatpush1.msra.mxu0 0.0
      %1533 = vmatprep.subr.mxu0 0.0
      %1534 = vmatpush1.msra.mxu0 0.0
      %1535 = vmatprep.subr.mxu0 0.0
      %1536 = vmatpush1.msra.mxu0 0.0
      %1537 = vmatprep.subr.mxu0 0.0
      %1538 = vmatpush1.msra.mxu0 0.0
      %1539 = vmatprep.subr.mxu0 0.0
      %1540 = vmatpush1.msra.mxu0 0.0
      %1541 = vmatprep.subr.mxu0 0.0
      %1542 = vmatpush1.msra.mxu0 0.0
      %1543 = vmatprep.subr.mxu0 0.0
      %1544 = vmatpush1.msra.mxu0 0.0
      %1545 = vmatprep.subr.mxu0 0.0
      %1546 = vmatpush1.msra.mxu0 0.0
      %1547 = vmatprep.subr.mxu0 0.0
      %1548 = vmatpush1.msra.mxu0 0.0
      %1549 = vmatprep.subr.mxu0 0.0
      %1550 = vmatpush1.msra.mxu0 %v1334
      %1551 = vmatprep.subr.mxu0 0.0
      %1552 = vmatpush1.msra.mxu0 %v1333
      %1553 = vmatprep.subr.mxu0 0.0
      %1554 = vmatpush2.msra.mxu0 0.0
      %1555 = vmatprep.subr.mxu0 0.0
      %1556 = vmatpush2.msra.mxu0 0.0
      %1557 = vmatprep.subr.mxu0 0.0
      %1558 = vmatpush2.msra.mxu0 0.0
      %1559 = vmatprep.subr.mxu0 0.0
      %1560 = vmatpush2.msra.mxu0 0.0
      %1561 = vmatprep.subr.mxu0 0.0
      %1562 = vmatpush2.msra.mxu0 0.0
      %1563 = vmatprep.subr.mxu0 0.0
      %1564 = vmatpush2.msra.mxu0 0.0
      %1565 = vmatprep.subr.mxu0 0.0
      %1566 = vmatpush2.msra.mxu0 0.0
      %1567 = vmatprep.subr.mxu0 0.0
      %1568 = vmatpush2.msra.mxu0 0.0
      %1569 = vmatprep.subr.mxu0 0.0
      %1570 = vmatpush2.msra.mxu0 0.0
      %1571 = vmatprep.subr.mxu0 0.0
      %1572 = vmatpush2.msra.mxu0 0.0
      %1573 = vmatprep.subr.mxu0 0.0
      %1574 = vmatpush2.msra.mxu0 0.0
      %1575 = vmatprep.subr.mxu0 0.0
      %1576 = vmatpush2.msra.mxu0 0.0
      %1577 = vmatprep.subr.mxu0 0.0
      %1578 = vmatpush2.msra.mxu0 0.0
      %1579 = vmatprep.subr.mxu0 0.0
      %1580 = vmatpush2.msra.mxu0 0.0
      %1581 = vmatprep.subr.mxu0 0.0
      %1582 = vmatpush2.msra.mxu0 0.0
      %1583 = vmatprep.subr.mxu0 0.0
      %1584 = vmatpush2.msra.mxu0 0.0
      %1585 = vmatprep.mubr.f32.mxu0 0.0
      %1586 = vmatmul.mubr.f32.gmra.mxu0 %v753
      %v1587 = vpop.f32.mrf.mxu0
      %v1588 = vadd.f32 0.0, %v1587
      %v1589 = vpop.f32.mrf.mxu0
      %1590 = vmatprep.mubr.f32.mxu0 0.0
      %1591 = vmatmul.mubr.f32.gmra.mxu0 %v756
      %v1592 = vpop.f32.mrf.mxu0
      %v1593 = vadd.f32 0.0, %v1592
      %v1594 = vpop.f32.mrf.mxu0
      %1595 = vmatprep.mubr.f32.mxu0 0.0
      %1596 = vmatmul.mubr.f32.gmra.mxu0 %v1346
      %v1597 = vpop.f32.mrf.mxu0
      %v1598 = vadd.f32 0.0, %v1597
      %v1599 = vpop.f32.mrf.mxu0
      %1600 = vmatprep.mubr.f32.mxu0 0.0
      %1601 = vmatmul.mubr.f32.gmra.mxu0 %v1349
      %v1602 = vpop.f32.mrf.mxu0
      %v1603 = vadd.f32 0.0, %v1602
      %v1604 = vpop.f32.mrf.mxu0
      %1605 = vdwg.mxu0
      %1606 = vmatprep.subr.mxu0 0.0
      %1607 = vmatpush1.msra.mxu0 0.0
      %1608 = vmatprep.subr.mxu0 0.0
      %1609 = vmatpush1.msra.mxu0 0.0
      %1610 = vmatprep.subr.mxu0 0.0
      %1611 = vmatpush1.msra.mxu0 0.0
      %1612 = vmatprep.subr.mxu0 0.0
      %1613 = vmatpush1.msra.mxu0 0.0
      %1614 = vmatprep.subr.mxu0 0.0
      %1615 = vmatpush1.msra.mxu0 0.0
      %1616 = vmatprep.subr.mxu0 0.0
      %1617 = vmatpush1.msra.mxu0 0.0
      %1618 = vmatprep.subr.mxu0 0.0
      %1619 = vmatpush1.msra.mxu0 0.0
      %1620 = vmatprep.subr.mxu0 0.0
      %1621 = vmatpush1.msra.mxu0 0.0
      %1622 = vmatprep.subr.mxu0 0.0
      %1623 = vmatpush1.msra.mxu0 0.0
      %1624 = vmatprep.subr.mxu0 0.0
      %1625 = vmatpush1.msra.mxu0 0.0
      %1626 = vmatprep.subr.mxu0 0.0
      %1627 = vmatpush1.msra.mxu0 0.0
      %1628 = vmatprep.subr.mxu0 0.0
      %1629 = vmatpush1.msra.mxu0 0.0
      %1630 = vmatprep.subr.mxu0 0.0
      %1631 = vmatpush1.msra.mxu0 0.0
      %1632 = vmatprep.subr.mxu0 0.0
      %1633 = vmatpush1.msra.mxu0 0.0
      %1634 = vmatprep.subr.mxu0 0.0
      %1635 = vmatpush1.msra.mxu0 %v1336
      %1636 = vmatprep.subr.mxu0 0.0
      %1637 = vmatpush1.msra.mxu0 %v1335
      %1638 = vmatprep.subr.mxu0 0.0
      %1639 = vmatpush2.msra.mxu0 0.0
      %1640 = vmatprep.subr.mxu0 0.0
      %1641 = vmatpush2.msra.mxu0 0.0
      %1642 = vmatprep.subr.mxu0 0.0
      %1643 = vmatpush2.msra.mxu0 0.0
      %1644 = vmatprep.subr.mxu0 0.0
      %1645 = vmatpush2.msra.mxu0 0.0
      %1646 = vmatprep.subr.mxu0 0.0
      %1647 = vmatpush2.msra.mxu0 0.0
      %1648 = vmatprep.subr.mxu0 0.0
      %1649 = vmatpush2.msra.mxu0 0.0
      %1650 = vmatprep.subr.mxu0 0.0
      %1651 = vmatpush2.msra.mxu0 0.0
      %1652 = vmatprep.subr.mxu0 0.0
      %1653 = vmatpush2.msra.mxu0 0.0
      %1654 = vmatprep.subr.mxu0 0.0
      %1655 = vmatpush2.msra.mxu0 0.0
      %1656 = vmatprep.subr.mxu0 0.0
      %1657 = vmatpush2.msra.mxu0 0.0
      %1658 = vmatprep.subr.mxu0 0.0
      %1659 = vmatpush2.msra.mxu0 0.0
      %1660 = vmatprep.subr.mxu0 0.0
      %1661 = vmatpush2.msra.mxu0 0.0
      %1662 = vmatprep.subr.mxu0 0.0
      %1663 = vmatpush2.msra.mxu0 0.0
      %1664 = vmatprep.subr.mxu0 0.0
      %1665 = vmatpush2.msra.mxu0 0.0
      %1666 = vmatprep.subr.mxu0 0.0
      %1667 = vmatpush2.msra.mxu0 0.0
      %1668 = vmatprep.subr.mxu0 0.0
      %1669 = vmatpush2.msra.mxu0 0.0
      %1670 = vmatprep.mubr.f32.mxu0 0.0
      %1671 = vmatmul.mubr.f32.gmra.mxu0 %v753
      %v1672 = vpop.f32.mrf.mxu0
      %v1673 = vadd.f32 0.0, %v1672
      %v1674 = vpop.f32.mrf.mxu0
      %1675 = vmatprep.mubr.f32.mxu0 0.0
      %1676 = vmatmul.mubr.f32.gmra.mxu0 %v756
      %v1677 = vpop.f32.mrf.mxu0
      %v1678 = vadd.f32 0.0, %v1677
      %v1679 = vpop.f32.mrf.mxu0
      %1680 = vmatprep.mubr.f32.mxu0 0.0
      %1681 = vmatmul.mubr.f32.gmra.mxu0 %v1346
      %v1682 = vpop.f32.mrf.mxu0
      %v1683 = vadd.f32 0.0, %v1682
      %v1684 = vpop.f32.mrf.mxu0
      %1685 = vmatprep.mubr.f32.mxu0 0.0
      %1686 = vmatmul.mubr.f32.gmra.mxu0 %v1349
      %v1687 = vpop.f32.mrf.mxu0
      %v1688 = vadd.f32 0.0, %v1687
      %v1689 = vpop.f32.mrf.mxu0
      %1690 = vdwg.mxu0
      %1691 = vmatprep.subr.mxu0 0.0
      %1692 = vmatpush1.msra.mxu0 0.0
      %1693 = vmatprep.subr.mxu0 0.0
      %1694 = vmatpush1.msra.mxu0 0.0
      %1695 = vmatprep.subr.mxu0 0.0
      %1696 = vmatpush1.msra.mxu0 0.0
      %1697 = vmatprep.subr.mxu0 0.0
      %1698 = vmatpush1.msra.mxu0 0.0
      %1699 = vmatprep.subr.mxu0 0.0
      %1700 = vmatpush1.msra.mxu0 0.0
      %1701 = vmatprep.subr.mxu0 0.0
      %1702 = vmatpush1.msra.mxu0 0.0
      %1703 = vmatprep.subr.mxu0 0.0
      %1704 = vmatpush1.msra.mxu0 0.0
      %1705 = vmatprep.subr.mxu0 0.0
      %1706 = vmatpush1.msra.mxu0 0.0
      %1707 = vmatprep.subr.mxu0 0.0
      %1708 = vmatpush1.msra.mxu0 0.0
      %1709 = vmatprep.subr.mxu0 0.0
      %1710 = vmatpush1.msra.mxu0 0.0
      %1711 = vmatprep.subr.mxu0 0.0
      %1712 = vmatpush1.msra.mxu0 0.0
      %1713 = vmatprep.subr.mxu0 0.0
      %1714 = vmatpush1.msra.mxu0 0.0
      %1715 = vmatprep.subr.mxu0 0.0
      %1716 = vmatpush1.msra.mxu0 0.0
      %1717 = vmatprep.subr.mxu0 0.0
      %1718 = vmatpush1.msra.mxu0 0.0
      %1719 = vmatprep.subr.mxu0 0.0
      %1720 = vmatpush1.msra.mxu0 %v1338
      %1721 = vmatprep.subr.mxu0 0.0
      %1722 = vmatpush1.msra.mxu0 %v1337
      %1723 = vmatprep.subr.mxu0 0.0
      %1724 = vmatpush2.msra.mxu0 0.0
      %1725 = vmatprep.subr.mxu0 0.0
      %1726 = vmatpush2.msra.mxu0 0.0
      %1727 = vmatprep.subr.mxu0 0.0
      %1728 = vmatpush2.msra.mxu0 0.0
      %1729 = vmatprep.subr.mxu0 0.0
      %1730 = vmatpush2.msra.mxu0 0.0
      %1731 = vmatprep.subr.mxu0 0.0
      %1732 = vmatpush2.msra.mxu0 0.0
      %1733 = vmatprep.subr.mxu0 0.0
      %1734 = vmatpush2.msra.mxu0 0.0
      %1735 = vmatprep.subr.mxu0 0.0
      %1736 = vmatpush2.msra.mxu0 0.0
      %1737 = vmatprep.subr.mxu0 0.0
      %1738 = vmatpush2.msra.mxu0 0.0
      %1739 = vmatprep.subr.mxu0 0.0
      %1740 = vmatpush2.msra.mxu0 0.0
      %1741 = vmatprep.subr.mxu0 0.0
      %1742 = vmatpush2.msra.mxu0 0.0
      %1743 = vmatprep.subr.mxu0 0.0
      %1744 = vmatpush2.msra.mxu0 0.0
      %1745 = vmatprep.subr.mxu0 0.0
      %1746 = vmatpush2.msra.mxu0 0.0
      %1747 = vmatprep.subr.mxu0 0.0
      %1748 = vmatpush2.msra.mxu0 0.0
      %1749 = vmatprep.subr.mxu0 0.0
      %1750 = vmatpush2.msra.mxu0 0.0
      %1751 = vmatprep.subr.mxu0 0.0
      %1752 = vmatpush2.msra.mxu0 0.0
      %1753 = vmatprep.subr.mxu0 0.0
      %1754 = vmatpush2.msra.mxu0 0.0
      %1755 = vmatprep.mubr.f32.mxu0 0.0
      %1756 = vmatmul.mubr.f32.gmra.mxu0 %v753
      %v1757 = vpop.f32.mrf.mxu0
      %v1758 = vadd.f32 0.0, %v1757
      %v1759 = vpop.f32.mrf.mxu0
      %1760 = vmatprep.mubr.f32.mxu0 0.0
      %1761 = vmatmul.mubr.f32.gmra.mxu0 %v756
      %v1762 = vpop.f32.mrf.mxu0
      %v1763 = vadd.f32 0.0, %v1762
      %v1764 = vpop.f32.mrf.mxu0
      %1765 = vmatprep.mubr.f32.mxu0 0.0
      %1766 = vmatmul.mubr.f32.gmra.mxu0 %v1346
      %v1767 = vpop.f32.mrf.mxu0
      %v1768 = vadd.f32 0.0, %v1767
      %v1769 = vpop.f32.mrf.mxu0
      %1770 = vmatprep.mubr.f32.mxu0 0.0
      %1771 = vmatmul.mubr.f32.gmra.mxu0 %v1349
      %v1772 = vpop.f32.mrf.mxu0
      %v1773 = vadd.f32 0.0, %v1772
      %v1774 = vpop.f32.mrf.mxu0
      %1775 = vdwg.mxu0
      %1776 = vmatprep.subr.mxu0 0.0
      %1777 = vmatpush1.msra.mxu0 0.0
      %1778 = vmatprep.subr.mxu0 0.0
      %1779 = vmatpush1.msra.mxu0 0.0
      %1780 = vmatprep.subr.mxu0 0.0
      %1781 = vmatpush1.msra.mxu0 0.0
      %1782 = vmatprep.subr.mxu0 0.0
      %1783 = vmatpush1.msra.mxu0 0.0
      %1784 = vmatprep.subr.mxu0 0.0
      %1785 = vmatpush1.msra.mxu0 0.0
      %1786 = vmatprep.subr.mxu0 0.0
      %1787 = vmatpush1.msra.mxu0 0.0
      %1788 = vmatprep.subr.mxu0 0.0
      %1789 = vmatpush1.msra.mxu0 0.0
      %1790 = vmatprep.subr.mxu0 0.0
      %1791 = vmatpush1.msra.mxu0 0.0
      %1792 = vmatprep.subr.mxu0 0.0
      %1793 = vmatpush1.msra.mxu0 0.0
      %1794 = vmatprep.subr.mxu0 0.0
      %1795 = vmatpush1.msra.mxu0 0.0
      %1796 = vmatprep.subr.mxu0 0.0
      %1797 = vmatpush1.msra.mxu0 0.0
      %1798 = vmatprep.subr.mxu0 0.0
      %1799 = vmatpush1.msra.mxu0 0.0
      %1800 = vmatprep.subr.mxu0 0.0
      %1801 = vmatpush1.msra.mxu0 0.0
      %1802 = vmatprep.subr.mxu0 0.0
      %1803 = vmatpush1.msra.mxu0 0.0
      %1804 = vmatprep.subr.mxu0 0.0
      %1805 = vmatpush1.msra.mxu0 %v1340
      %1806 = vmatprep.subr.mxu0 0.0
      %1807 = vmatpush1.msra.mxu0 %v1339
      %1808 = vmatprep.subr.mxu0 0.0
      %1809 = vmatpush2.msra.mxu0 0.0
      %1810 = vmatprep.subr.mxu0 0.0
      %1811 = vmatpush2.msra.mxu0 0.0
      %1812 = vmatprep.subr.mxu0 0.0
      %1813 = vmatpush2.msra.mxu0 0.0
      %1814 = vmatprep.subr.mxu0 0.0
      %1815 = vmatpush2.msra.mxu0 0.0
      %1816 = vmatprep.subr.mxu0 0.0
      %1817 = vmatpush2.msra.mxu0 0.0
      %1818 = vmatprep.subr.mxu0 0.0
      %1819 = vmatpush2.msra.mxu0 0.0
      %1820 = vmatprep.subr.mxu0 0.0
      %1821 = vmatpush2.msra.mxu0 0.0
      %1822 = vmatprep.subr.mxu0 0.0
      %1823 = vmatpush2.msra.mxu0 0.0
      %1824 = vmatprep.subr.mxu0 0.0
      %1825 = vmatpush2.msra.mxu0 0.0
      %1826 = vmatprep.subr.mxu0 0.0
      %1827 = vmatpush2.msra.mxu0 0.0
      %1828 = vmatprep.subr.mxu0 0.0
      %1829 = vmatpush2.msra.mxu0 0.0
      %1830 = vmatprep.subr.mxu0 0.0
      %1831 = vmatpush2.msra.mxu0 0.0
      %1832 = vmatprep.subr.mxu0 0.0
      %1833 = vmatpush2.msra.mxu0 0.0
      %1834 = vmatprep.subr.mxu0 0.0
      %1835 = vmatpush2.msra.mxu0 0.0
      %1836 = vmatprep.subr.mxu0 0.0
      %1837 = vmatpush2.msra.mxu0 0.0
      %1838 = vmatprep.subr.mxu0 0.0
      %1839 = vmatpush2.msra.mxu0 0.0
      %1840 = vmatprep.mubr.f32.mxu0 0.0
      %1841 = vmatmul.mubr.f32.gmra.mxu0 %v753
      %v1842 = vpop.f32.mrf.mxu0
      %v1843 = vadd.f32 0.0, %v1842
      %v1844 = vpop.f32.mrf.mxu0
      %1845 = vmatprep.mubr.f32.mxu0 0.0
      %1846 = vmatmul.mubr.f32.gmra.mxu0 %v756
      %v1847 = vpop.f32.mrf.mxu0
      %v1848 = vadd.f32 0.0, %v1847
      %v1849 = vpop.f32.mrf.mxu0
      %1850 = vmatprep.mubr.f32.mxu0 0.0
      %1851 = vmatmul.mubr.f32.gmra.mxu0 %v1346
      %v1852 = vpop.f32.mrf.mxu0
      %v1853 = vadd.f32 0.0, %v1852
      %v1854 = vpop.f32.mrf.mxu0
      %1855 = vmatprep.mubr.f32.mxu0 0.0
      %1856 = vmatmul.mubr.f32.gmra.mxu0 %v1349
      %v1857 = vpop.f32.mrf.mxu0
      %v1858 = vadd.f32 0.0, %v1857
      %v1859 = vpop.f32.mrf.mxu0
      %1860 = vdwg.mxu0
      %1861 = vmatprep.subr.mxu0 0.0
      %1862 = vmatpush1.msra.mxu0 0.0
      %1863 = vmatprep.subr.mxu0 0.0
      %1864 = vmatpush1.msra.mxu0 0.0
      %1865 = vmatprep.subr.mxu0 0.0
      %1866 = vmatpush1.msra.mxu0 0.0
      %1867 = vmatprep.subr.mxu0 0.0
      %1868 = vmatpush1.msra.mxu0 0.0
      %1869 = vmatprep.subr.mxu0 0.0
      %1870 = vmatpush1.msra.mxu0 0.0
      %1871 = vmatprep.subr.mxu0 0.0
      %1872 = vmatpush1.msra.mxu0 0.0
      %1873 = vmatprep.subr.mxu0 0.0
      %1874 = vmatpush1.msra.mxu0 0.0
      %1875 = vmatprep.subr.mxu0 0.0
      %1876 = vmatpush1.msra.mxu0 0.0
      %1877 = vmatprep.subr.mxu0 0.0
      %1878 = vmatpush1.msra.mxu0 0.0
      %1879 = vmatprep.subr.mxu0 0.0
      %1880 = vmatpush1.msra.mxu0 0.0
      %1881 = vmatprep.subr.mxu0 0.0
      %1882 = vmatpush1.msra.mxu0 0.0
      %1883 = vmatprep.subr.mxu0 0.0
      %1884 = vmatpush1.msra.mxu0 0.0
      %1885 = vmatprep.subr.mxu0 0.0
      %1886 = vmatpush1.msra.mxu0 0.0
      %1887 = vmatprep.subr.mxu0 0.0
      %1888 = vmatpush1.msra.mxu0 0.0
      %1889 = vmatprep.subr.mxu0 0.0
      %1890 = vmatpush1.msra.mxu0 %v1342
      %1891 = vmatprep.subr.mxu0 0.0
      %1892 = vmatpush1.msra.mxu0 %v1341
      %1893 = vmatprep.subr.mxu0 0.0
      %1894 = vmatpush2.msra.mxu0 0.0
      %1895 = vmatprep.subr.mxu0 0.0
      %1896 = vmatpush2.msra.mxu0 0.0
      %1897 = vmatprep.subr.mxu0 0.0
      %1898 = vmatpush2.msra.mxu0 0.0
      %1899 = vmatprep.subr.mxu0 0.0
      %1900 = vmatpush2.msra.mxu0 0.0
      %1901 = vmatprep.subr.mxu0 0.0
      %1902 = vmatpush2.msra.mxu0 0.0
      %1903 = vmatprep.subr.mxu0 0.0
      %1904 = vmatpush2.msra.mxu0 0.0
      %1905 = vmatprep.subr.mxu0 0.0
      %1906 = vmatpush2.msra.mxu0 0.0
      %1907 = vmatprep.subr.mxu0 0.0
      %1908 = vmatpush2.msra.mxu0 0.0
      %1909 = vmatprep.subr.mxu0 0.0
      %1910 = vmatpush2.msra.mxu0 0.0
      %1911 = vmatprep.subr.mxu0 0.0
      %1912 = vmatpush2.msra.mxu0 0.0
      %1913 = vmatprep.subr.mxu0 0.0
      %1914 = vmatpush2.msra.mxu0 0.0
      %1915 = vmatprep.subr.mxu0 0.0
      %1916 = vmatpush2.msra.mxu0 0.0
      %1917 = vmatprep.subr.mxu0 0.0
      %1918 = vmatpush2.msra.mxu0 0.0
      %1919 = vmatprep.subr.mxu0 0.0
      %1920 = vmatpush2.msra.mxu0 0.0
      %1921 = vmatprep.subr.mxu0 0.0
      %1922 = vmatpush2.msra.mxu0 0.0
      %1923 = vmatprep.subr.mxu0 0.0
      %1924 = vmatpush2.msra.mxu0 0.0
      %1925 = vmatprep.mubr.f32.mxu0 0.0
      %1926 = vmatmul.mubr.f32.gmra.mxu0 %v753
      %v1927 = vpop.f32.mrf.mxu0
      %v1928 = vadd.f32 0.0, %v1927
      %v1929 = vpop.f32.mrf.mxu0
      %1930 = vmatprep.mubr.f32.mxu0 0.0
      %1931 = vmatmul.mubr.f32.gmra.mxu0 %v756
      %v1932 = vpop.f32.mrf.mxu0
      %v1933 = vadd.f32 0.0, %v1932
      %v1934 = vpop.f32.mrf.mxu0
      %1935 = vmatprep.mubr.f32.mxu0 0.0
      %1936 = vmatmul.mubr.f32.gmra.mxu0 %v1346
      %v1937 = vpop.f32.mrf.mxu0
      %v1938 = vadd.f32 0.0, %v1937
      %v1939 = vpop.f32.mrf.mxu0
      %1940 = vmatprep.mubr.f32.mxu0 0.0
      %1941 = vmatmul.mubr.f32.gmra.mxu0 %v1349
      %v1942 = vpop.f32.mrf.mxu0
      %v1943 = vadd.f32 0.0, %v1942
      %v1944 = vpop.f32.mrf.mxu0
      %1945 = vdwg.mxu0
      %1946 = vmatprep.subr.mxu0 0.0
      %1947 = vmatpush1.msra.mxu0 0.0
      %1948 = vmatprep.subr.mxu0 0.0
      %1949 = vmatpush1.msra.mxu0 0.0
      %1950 = vmatprep.subr.mxu0 0.0
      %1951 = vmatpush1.msra.mxu0 0.0
      %1952 = vmatprep.subr.mxu0 0.0
      %1953 = vmatpush1.msra.mxu0 0.0
      %1954 = vmatprep.subr.mxu0 0.0
      %1955 = vmatpush1.msra.mxu0 0.0
      %1956 = vmatprep.subr.mxu0 0.0
      %1957 = vmatpush1.msra.mxu0 0.0
      %1958 = vmatprep.subr.mxu0 0.0
      %1959 = vmatpush1.msra.mxu0 0.0
      %1960 = vmatprep.subr.mxu0 0.0
      %1961 = vmatpush1.msra.mxu0 0.0
      %1962 = vmatprep.subr.mxu0 0.0
      %1963 = vmatpush1.msra.mxu0 0.0
      %1964 = vmatprep.subr.mxu0 0.0
      %1965 = vmatpush1.msra.mxu0 0.0
      %1966 = vmatprep.subr.mxu0 0.0
      %1967 = vmatpush1.msra.mxu0 0.0
      %1968 = vmatprep.subr.mxu0 0.0
      %1969 = vmatpush1.msra.mxu0 0.0
      %1970 = vmatprep.subr.mxu0 0.0
      %1971 = vmatpush1.msra.mxu0 0.0
      %1972 = vmatprep.subr.mxu0 0.0
      %1973 = vmatpush1.msra.mxu0 0.0
      %1974 = vmatprep.subr.mxu0 0.0
      %1975 = vmatpush1.msra.mxu0 %v1344
      %1976 = vmatprep.subr.mxu0 0.0
      %1977 = vmatpush1.msra.mxu0 %v1343
      %1978 = vmatprep.subr.mxu0 0.0
      %1979 = vmatpush2.msra.mxu0 0.0
      %1980 = vmatprep.subr.mxu0 0.0
      %1981 = vmatpush2.msra.mxu0 0.0
      %1982 = vmatprep.subr.mxu0 0.0
      %1983 = vmatpush2.msra.mxu0 0.0
      %1984 = vmatprep.subr.mxu0 0.0
      %1985 = vmatpush2.msra.mxu0 0.0
      %1986 = vmatprep.subr.mxu0 0.0
      %1987 = vmatpush2.msra.mxu0 0.0
      %1988 = vmatprep.subr.mxu0 0.0
      %1989 = vmatpush2.msra.mxu0 0.0
      %1990 = vmatprep.subr.mxu0 0.0
      %1991 = vmatpush2.msra.mxu0 0.0
      %1992 = vmatprep.subr.mxu0 0.0
      %1993 = vmatpush2.msra.mxu0 0.0
      %1994 = vmatprep.subr.mxu0 0.0
      %1995 = vmatpush2.msra.mxu0 0.0
      %1996 = vmatprep.subr.mxu0 0.0
      %1997 = vmatpush2.msra.mxu0 0.0
      %1998 = vmatprep.subr.mxu0 0.0
      %1999 = vmatpush2.msra.mxu0 0.0
      %2000 = vmatprep.subr.mxu0 0.0
      %2001 = vmatpush2.msra.mxu0 0.0
      %2002 = vmatprep.subr.mxu0 0.0
      %2003 = vmatpush2.msra.mxu0 0.0
      %2004 = vmatprep.subr.mxu0 0.0
      %2005 = vmatpush2.msra.mxu0 0.0
      %2006 = vmatprep.subr.mxu0 0.0
      %2007 = vmatpush2.msra.mxu0 0.0
      %2008 = vmatprep.subr.mxu0 0.0
      %2009 = vmatpush2.msra.mxu0 0.0
      %2010 = vmatprep.mubr.f32.mxu0 0.0
      %2011 = vmatmul.mubr.f32.gmra.mxu0 %v753
      %v2012 = vpop.f32.mrf.mxu0
      %v2013 = vadd.f32 0.0, %v2012
      %v2014 = vpop.f32.mrf.mxu0
      %2015 = vmatprep.mubr.f32.mxu0 0.0
      %2016 = vmatmul.mubr.f32.gmra.mxu0 %v756
      %v2017 = vpop.f32.mrf.mxu0
      %v2018 = vadd.f32 0.0, %v2017
      %v2019 = vpop.f32.mrf.mxu0
      %2020 = vmatprep.mubr.f32.mxu0 0.0
      %2021 = vmatmul.mubr.f32.gmra.mxu0 %v1346
      %v2022 = vpop.f32.mrf.mxu0
      %v2023 = vadd.f32 0.0, %v2022
      %v2024 = vpop.f32.mrf.mxu0
      %2025 = vmatprep.mubr.f32.mxu0 0.0
      %2026 = vmatmul.mubr.f32.gmra.mxu0 %v1349
      %v2027 = vpop.f32.mrf.mxu0
      %v2028 = vadd.f32 0.0, %v2027
      %v2029 = vpop.f32.mrf.mxu0
      %2030 = vdwg.mxu0
      %v2031 = vld [vmem:[%s4] sm:$0xff]
      %v2032 = vld [vmem:[%s4 + $0x8] sm:$0xf]
      %s2033 = scalar_lea.vmem %s4, 12
      %v2034 = vld [vmem:[%s2033] sm:$0xff]
      %v2035 = vld [vmem:[%s2033 + $0x8] sm:$0xf]
      %v2038 = vcombine.high %v2034, %v2034
      %v2040 = vunpack.c.l.s4 1983009808
      %v2041 = vunpack.c.0.s8 %v2040
      %v2042 = vlaneseq
      %v2043 = vshrl.u32 %v2042, 7
      %v2044 = vsub.s32 %v2041, %v2043
      %v2045 = vrot.slane %v2034, %v2044
      %v2047 = vunpack.c.l.s4 1983009808
      %v2048 = vunpack.c.0.s8 %v2047
      %v2049 = vlaneseq
      %v2050 = vshrl.u32 %v2049, 7
      %v2051 = vsub.s32 %v2048, %v2050
      %v2052 = vrot.slane %v2038, %v2051
      %v2053 = vcombine.high %v2045, %v2045
      %v2054 = vcombine.high %v2052, %v2052
      %v2056 = vunpack.c.l.s4 1983009808
      %v2057 = vunpack.c.0.s8 %v2056
      %v2058 = vlaneseq
      %v2059 = vshrl.u32 %v2058, 7
      %v2060 = vsub.s32 %v2057, %v2059
      %v2061 = vrot.slane %v2035, %v2060
      %v2062 = vcombine.high %v2061, %v2061
      %vm2063 = vcmask 15360
      %v2065 = vsel %vm2063, %v1418, 0
      %v2068 = vsel %vm2063, %v1423, 0
      %v2071 = vsel %vm2063, %v1503, 0
      %v2074 = vsel %vm2063, %v1508, 0
      %v2077 = vsel %vm2063, %v1588, 0
      %v2080 = vsel %vm2063, %v1593, 0
      %v2083 = vsel %vm2063, %v1673, 0
      %v2086 = vsel %vm2063, %v1678, 0
      %v2089 = vsel %vm2063, %v1758, 0
      %v2092 = vsel %vm2063, %v1763, 0
      %v2095 = vsel %vm2063, %v1843, 0
      %v2098 = vsel %vm2063, %v1848, 0
      %v2101 = vsel %vm2063, %v1928, 0
      %v2104 = vsel %vm2063, %v1933, 0
      %v2107 = vsel %vm2063, %v2013, 0
      %v2110 = vsel %vm2063, %v2018, 0
      %vm2112 = vcmask 1041408
      %v2113 = vsel %vm2112, %v2045, 0
      %v2115 = vsel %vm2112, %v2053, 0
      %v2117 = vsel %vm2112, %v2052, 0
      %v2119 = vsel %vm2112, %v2054, 0
      %v2121 = vsel %vm2112, %v2061, 0
      %v2123 = vsel %vm2112, %v2062, 0
      %2125 = vmatprep.subr.mxu0 0.0
      %2126 = vmatpush1.msra.mxu0 0.0
      %2127 = vmatprep.subr.mxu0 0.0
      %2128 = vmatpush1.msra.mxu0 0.0
      %2129 = vmatprep.subr.mxu0 0.0
      %2130 = vmatpush1.msra.mxu0 0.0
      %2131 = vmatprep.subr.mxu0 0.0
      %2132 = vmatpush1.msra.mxu0 0.0
      %2133 = vmatprep.subr.mxu0 0.0
      %2134 = vmatpush1.msra.mxu0 0.0
      %2135 = vmatprep.subr.mxu0 0.0
      %2136 = vmatpush1.msra.mxu0 0.0
      %2137 = vmatprep.subr.mxu0 0.0
      %2138 = vmatpush1.msra.mxu0 0.0
      %2139 = vmatprep.subr.mxu0 0.0
      %2140 = vmatpush1.msra.mxu0 0.0
      %2141 = vmatprep.subr.mxu0 0.0
      %2142 = vmatpush1.msra.mxu0 0.0
      %2143 = vmatprep.subr.mxu0 0.0
      %2144 = vmatpush1.msra.mxu0 0.0
      %2145 = vmatprep.subr.mxu0 0.0
      %2146 = vmatpush1.msra.mxu0 0.0
      %2147 = vmatprep.subr.mxu0 0.0
      %2148 = vmatpush1.msra.mxu0 0.0
      %2149 = vmatprep.subr.mxu0 0.0
      %2150 = vmatpush1.msra.mxu0 0.0
      %2151 = vmatprep.subr.mxu0 0.0
      %2152 = vmatpush1.msra.mxu0 0.0
      %2153 = vmatprep.subr.mxu0 0.0
      %2154 = vmatpush1.msra.mxu0 0.0
      %2155 = vmatprep.subr.mxu0 %v2115
      %2156 = vmatpush1.msra.mxu0 %v2113
      %2157 = vmatprep.subr.mxu0 0.0
      %2158 = vmatpush2.msra.mxu0 0.0
      %2159 = vmatprep.subr.mxu0 0.0
      %2160 = vmatpush2.msra.mxu0 0.0
      %2161 = vmatprep.subr.mxu0 0.0
      %2162 = vmatpush2.msra.mxu0 0.0
      %2163 = vmatprep.subr.mxu0 0.0
      %2164 = vmatpush2.msra.mxu0 0.0
      %2165 = vmatprep.subr.mxu0 0.0
      %2166 = vmatpush2.msra.mxu0 0.0
      %2167 = vmatprep.subr.mxu0 0.0
      %2168 = vmatpush2.msra.mxu0 0.0
      %2169 = vmatprep.subr.mxu0 0.0
      %2170 = vmatpush2.msra.mxu0 0.0
      %2171 = vmatprep.subr.mxu0 0.0
      %2172 = vmatpush2.msra.mxu0 0.0
      %2173 = vmatprep.subr.mxu0 0.0
      %2174 = vmatpush2.msra.mxu0 0.0
      %2175 = vmatprep.subr.mxu0 0.0
      %2176 = vmatpush2.msra.mxu0 0.0
      %2177 = vmatprep.subr.mxu0 0.0
      %2178 = vmatpush2.msra.mxu0 0.0
      %2179 = vmatprep.subr.mxu0 0.0
      %2180 = vmatpush2.msra.mxu0 0.0
      %2181 = vmatprep.subr.mxu0 0.0
      %2182 = vmatpush2.msra.mxu0 0.0
      %2183 = vmatprep.subr.mxu0 0.0
      %2184 = vmatpush2.msra.mxu0 0.0
      %2185 = vmatprep.subr.mxu0 0.0
      %2186 = vmatpush2.msra.mxu0 0.0
      %2187 = vmatprep.subr.mxu0 0.0
      %2188 = vmatpush2.msra.mxu0 0.0
      %2189 = vmatprep.mubr.f32.mxu0 0.0
      %2190 = vmatmul.mubr.f32.gmra.mxu0 %v2065
      %v2191 = vpop.f32.mrf.mxu0
      %v2192 = vadd.f32 0.0, %v2191
      %v2193 = vpop.f32.mrf.mxu0
      %v2194 = vadd.f32 0.0, %v2193
      %2195 = vmatprep.mubr.f32.mxu0 0.0
      %2196 = vmatmul.mubr.f32.gmra.mxu0 %v2068
      %v2197 = vpop.f32.mrf.mxu0
      %v2198 = vadd.f32 0.0, %v2197
      %v2199 = vpop.f32.mrf.mxu0
      %v2200 = vadd.f32 0.0, %v2199
      %2201 = vmatprep.mubr.f32.mxu0 0.0
      %2202 = vmatmul.mubr.f32.gmra.mxu0 %v2071
      %v2203 = vpop.f32.mrf.mxu0
      %v2204 = vadd.f32 0.0, %v2203
      %v2205 = vpop.f32.mrf.mxu0
      %v2206 = vadd.f32 0.0, %v2205
      %2207 = vmatprep.mubr.f32.mxu0 0.0
      %2208 = vmatmul.mubr.f32.gmra.mxu0 %v2074
      %v2209 = vpop.f32.mrf.mxu0
      %v2210 = vadd.f32 0.0, %v2209
      %v2211 = vpop.f32.mrf.mxu0
      %v2212 = vadd.f32 0.0, %v2211
      %2213 = vmatprep.mubr.f32.mxu0 0.0
      %2214 = vmatmul.mubr.f32.gmra.mxu0 %v2077
      %v2215 = vpop.f32.mrf.mxu0
      %v2216 = vadd.f32 0.0, %v2215
      %v2217 = vpop.f32.mrf.mxu0
      %v2218 = vadd.f32 0.0, %v2217
      %2219 = vmatprep.mubr.f32.mxu0 0.0
      %2220 = vmatmul.mubr.f32.gmra.mxu0 %v2080
      %v2221 = vpop.f32.mrf.mxu0
      %v2222 = vadd.f32 0.0, %v2221
      %v2223 = vpop.f32.mrf.mxu0
      %v2224 = vadd.f32 0.0, %v2223
      %2225 = vmatprep.mubr.f32.mxu0 0.0
      %2226 = vmatmul.mubr.f32.gmra.mxu0 %v2083
      %v2227 = vpop.f32.mrf.mxu0
      %v2228 = vadd.f32 0.0, %v2227
      %v2229 = vpop.f32.mrf.mxu0
      %v2230 = vadd.f32 0.0, %v2229
      %2231 = vmatprep.mubr.f32.mxu0 0.0
      %2232 = vmatmul.mubr.f32.gmra.mxu0 %v2086
      %v2233 = vpop.f32.mrf.mxu0
      %v2234 = vadd.f32 0.0, %v2233
      %v2235 = vpop.f32.mrf.mxu0
      %v2236 = vadd.f32 0.0, %v2235
      %2237 = vmatprep.mubr.f32.mxu0 0.0
      %2238 = vmatmul.mubr.f32.gmra.mxu0 %v2089
      %v2239 = vpop.f32.mrf.mxu0
      %v2240 = vadd.f32 0.0, %v2239
      %v2241 = vpop.f32.mrf.mxu0
      %v2242 = vadd.f32 0.0, %v2241
      %2243 = vmatprep.mubr.f32.mxu0 0.0
      %2244 = vmatmul.mubr.f32.gmra.mxu0 %v2092
      %v2245 = vpop.f32.mrf.mxu0
      %v2246 = vadd.f32 0.0, %v2245
      %v2247 = vpop.f32.mrf.mxu0
      %v2248 = vadd.f32 0.0, %v2247
      %2249 = vmatprep.mubr.f32.mxu0 0.0
      %2250 = vmatmul.mubr.f32.gmra.mxu0 %v2095
      %v2251 = vpop.f32.mrf.mxu0
      %v2252 = vadd.f32 0.0, %v2251
      %v2253 = vpop.f32.mrf.mxu0
      %v2254 = vadd.f32 0.0, %v2253
      %2255 = vmatprep.mubr.f32.mxu0 0.0
      %2256 = vmatmul.mubr.f32.gmra.mxu0 %v2098
      %v2257 = vpop.f32.mrf.mxu0
      %v2258 = vadd.f32 0.0, %v2257
      %v2259 = vpop.f32.mrf.mxu0
      %v2260 = vadd.f32 0.0, %v2259
      %2261 = vmatprep.mubr.f32.mxu0 0.0
      %2262 = vmatmul.mubr.f32.gmra.mxu0 %v2101
      %v2263 = vpop.f32.mrf.mxu0
      %v2264 = vadd.f32 0.0, %v2263
      %v2265 = vpop.f32.mrf.mxu0
      %v2266 = vadd.f32 0.0, %v2265
      %2267 = vmatprep.mubr.f32.mxu0 0.0
      %2268 = vmatmul.mubr.f32.gmra.mxu0 %v2104
      %v2269 = vpop.f32.mrf.mxu0
      %v2270 = vadd.f32 0.0, %v2269
      %v2271 = vpop.f32.mrf.mxu0
      %v2272 = vadd.f32 0.0, %v2271
      %2273 = vmatprep.mubr.f32.mxu0 0.0
      %2274 = vmatmul.mubr.f32.gmra.mxu0 %v2107
      %v2275 = vpop.f32.mrf.mxu0
      %v2276 = vadd.f32 0.0, %v2275
      %v2277 = vpop.f32.mrf.mxu0
      %v2278 = vadd.f32 0.0, %v2277
      %2279 = vmatprep.mubr.f32.mxu0 0.0
      %2280 = vmatmul.mubr.f32.gmra.mxu0 %v2110
      %v2281 = vpop.f32.mrf.mxu0
      %v2282 = vadd.f32 0.0, %v2281
      %v2283 = vpop.f32.mrf.mxu0
      %v2284 = vadd.f32 0.0, %v2283
      %2285 = vdwg.mxu0
      %2286 = vmatprep.subr.mxu0 0.0
      %2287 = vmatpush1.msra.mxu0 0.0
      %2288 = vmatprep.subr.mxu0 0.0
      %2289 = vmatpush1.msra.mxu0 0.0
      %2290 = vmatprep.subr.mxu0 0.0
      %2291 = vmatpush1.msra.mxu0 0.0
      %2292 = vmatprep.subr.mxu0 0.0
      %2293 = vmatpush1.msra.mxu0 0.0
      %2294 = vmatprep.subr.mxu0 0.0
      %2295 = vmatpush1.msra.mxu0 0.0
      %2296 = vmatprep.subr.mxu0 0.0
      %2297 = vmatpush1.msra.mxu0 0.0
      %2298 = vmatprep.subr.mxu0 0.0
      %2299 = vmatpush1.msra.mxu0 0.0
      %2300 = vmatprep.subr.mxu0 0.0
      %2301 = vmatpush1.msra.mxu0 0.0
      %2302 = vmatprep.subr.mxu0 0.0
      %2303 = vmatpush1.msra.mxu0 0.0
      %2304 = vmatprep.subr.mxu0 0.0
      %2305 = vmatpush1.msra.mxu0 0.0
      %2306 = vmatprep.subr.mxu0 0.0
      %2307 = vmatpush1.msra.mxu0 0.0
      %2308 = vmatprep.subr.mxu0 0.0
      %2309 = vmatpush1.msra.mxu0 0.0
      %2310 = vmatprep.subr.mxu0 0.0
      %2311 = vmatpush1.msra.mxu0 0.0
      %2312 = vmatprep.subr.mxu0 0.0
      %2313 = vmatpush1.msra.mxu0 0.0
      %2314 = vmatprep.subr.mxu0 0.0
      %2315 = vmatpush1.msra.mxu0 0.0
      %2316 = vmatprep.subr.mxu0 %v2119
      %2317 = vmatpush1.msra.mxu0 %v2117
      %2318 = vmatprep.subr.mxu0 0.0
      %2319 = vmatpush2.msra.mxu0 0.0
      %2320 = vmatprep.subr.mxu0 0.0
      %2321 = vmatpush2.msra.mxu0 0.0
      %2322 = vmatprep.subr.mxu0 0.0
      %2323 = vmatpush2.msra.mxu0 0.0
      %2324 = vmatprep.subr.mxu0 0.0
      %2325 = vmatpush2.msra.mxu0 0.0
      %2326 = vmatprep.subr.mxu0 0.0
      %2327 = vmatpush2.msra.mxu0 0.0
      %2328 = vmatprep.subr.mxu0 0.0
      %2329 = vmatpush2.msra.mxu0 0.0
      %2330 = vmatprep.subr.mxu0 0.0
      %2331 = vmatpush2.msra.mxu0 0.0
      %2332 = vmatprep.subr.mxu0 0.0
      %2333 = vmatpush2.msra.mxu0 0.0
      %2334 = vmatprep.subr.mxu0 0.0
      %2335 = vmatpush2.msra.mxu0 0.0
      %2336 = vmatprep.subr.mxu0 0.0
      %2337 = vmatpush2.msra.mxu0 0.0
      %2338 = vmatprep.subr.mxu0 0.0
      %2339 = vmatpush2.msra.mxu0 0.0
      %2340 = vmatprep.subr.mxu0 0.0
      %2341 = vmatpush2.msra.mxu0 0.0
      %2342 = vmatprep.subr.mxu0 0.0
      %2343 = vmatpush2.msra.mxu0 0.0
      %2344 = vmatprep.subr.mxu0 0.0
      %2345 = vmatpush2.msra.mxu0 0.0
      %2346 = vmatprep.subr.mxu0 0.0
      %2347 = vmatpush2.msra.mxu0 0.0
      %2348 = vmatprep.subr.mxu0 0.0
      %2349 = vmatpush2.msra.mxu0 0.0
      %2350 = vmatprep.mubr.f32.mxu0 0.0
      %2351 = vmatmul.mubr.f32.gmra.mxu0 %v2065
      %v2352 = vpop.f32.mrf.mxu0
      %v2353 = vadd.f32 0.0, %v2352
      %v2354 = vpop.f32.mrf.mxu0
      %v2355 = vadd.f32 0.0, %v2354
      %2356 = vmatprep.mubr.f32.mxu0 0.0
      %2357 = vmatmul.mubr.f32.gmra.mxu0 %v2068
      %v2358 = vpop.f32.mrf.mxu0
      %v2359 = vadd.f32 0.0, %v2358
      %v2360 = vpop.f32.mrf.mxu0
      %v2361 = vadd.f32 0.0, %v2360
      %2362 = vmatprep.mubr.f32.mxu0 0.0
      %2363 = vmatmul.mubr.f32.gmra.mxu0 %v2071
      %v2364 = vpop.f32.mrf.mxu0
      %v2365 = vadd.f32 0.0, %v2364
      %v2366 = vpop.f32.mrf.mxu0
      %v2367 = vadd.f32 0.0, %v2366
      %2368 = vmatprep.mubr.f32.mxu0 0.0
      %2369 = vmatmul.mubr.f32.gmra.mxu0 %v2074
      %v2370 = vpop.f32.mrf.mxu0
      %v2371 = vadd.f32 0.0, %v2370
      %v2372 = vpop.f32.mrf.mxu0
      %v2373 = vadd.f32 0.0, %v2372
      %2374 = vmatprep.mubr.f32.mxu0 0.0
      %2375 = vmatmul.mubr.f32.gmra.mxu0 %v2077
      %v2376 = vpop.f32.mrf.mxu0
      %v2377 = vadd.f32 0.0, %v2376
      %v2378 = vpop.f32.mrf.mxu0
      %v2379 = vadd.f32 0.0, %v2378
      %2380 = vmatprep.mubr.f32.mxu0 0.0
      %2381 = vmatmul.mubr.f32.gmra.mxu0 %v2080
      %v2382 = vpop.f32.mrf.mxu0
      %v2383 = vadd.f32 0.0, %v2382
      %v2384 = vpop.f32.mrf.mxu0
      %v2385 = vadd.f32 0.0, %v2384
      %2386 = vmatprep.mubr.f32.mxu0 0.0
      %2387 = vmatmul.mubr.f32.gmra.mxu0 %v2083
      %v2388 = vpop.f32.mrf.mxu0
      %v2389 = vadd.f32 0.0, %v2388
      %v2390 = vpop.f32.mrf.mxu0
      %v2391 = vadd.f32 0.0, %v2390
      %2392 = vmatprep.mubr.f32.mxu0 0.0
      %2393 = vmatmul.mubr.f32.gmra.mxu0 %v2086
      %v2394 = vpop.f32.mrf.mxu0
      %v2395 = vadd.f32 0.0, %v2394
      %v2396 = vpop.f32.mrf.mxu0
      %v2397 = vadd.f32 0.0, %v2396
      %2398 = vmatprep.mubr.f32.mxu0 0.0
      %2399 = vmatmul.mubr.f32.gmra.mxu0 %v2089
      %v2400 = vpop.f32.mrf.mxu0
      %v2401 = vadd.f32 0.0, %v2400
      %v2402 = vpop.f32.mrf.mxu0
      %v2403 = vadd.f32 0.0, %v2402
      %2404 = vmatprep.mubr.f32.mxu0 0.0
      %2405 = vmatmul.mubr.f32.gmra.mxu0 %v2092
      %v2406 = vpop.f32.mrf.mxu0
      %v2407 = vadd.f32 0.0, %v2406
      %v2408 = vpop.f32.mrf.mxu0
      %v2409 = vadd.f32 0.0, %v2408
      %2410 = vmatprep.mubr.f32.mxu0 0.0
      %2411 = vmatmul.mubr.f32.gmra.mxu0 %v2095
      %v2412 = vpop.f32.mrf.mxu0
      %v2413 = vadd.f32 0.0, %v2412
      %v2414 = vpop.f32.mrf.mxu0
      %v2415 = vadd.f32 0.0, %v2414
      %2416 = vmatprep.mubr.f32.mxu0 0.0
      %2417 = vmatmul.mubr.f32.gmra.mxu0 %v2098
      %v2418 = vpop.f32.mrf.mxu0
      %v2419 = vadd.f32 0.0, %v2418
      %v2420 = vpop.f32.mrf.mxu0
      %v2421 = vadd.f32 0.0, %v2420
      %2422 = vmatprep.mubr.f32.mxu0 0.0
      %2423 = vmatmul.mubr.f32.gmra.mxu0 %v2101
      %v2424 = vpop.f32.mrf.mxu0
      %v2425 = vadd.f32 0.0, %v2424
      %v2426 = vpop.f32.mrf.mxu0
      %v2427 = vadd.f32 0.0, %v2426
      %2428 = vmatprep.mubr.f32.mxu0 0.0
      %2429 = vmatmul.mubr.f32.gmra.mxu0 %v2104
      %v2430 = vpop.f32.mrf.mxu0
      %v2431 = vadd.f32 0.0, %v2430
      %v2432 = vpop.f32.mrf.mxu0
      %v2433 = vadd.f32 0.0, %v2432
      %2434 = vmatprep.mubr.f32.mxu0 0.0
      %2435 = vmatmul.mubr.f32.gmra.mxu0 %v2107
      %v2436 = vpop.f32.mrf.mxu0
      %v2437 = vadd.f32 0.0, %v2436
      %v2438 = vpop.f32.mrf.mxu0
      %v2439 = vadd.f32 0.0, %v2438
      %2440 = vmatprep.mubr.f32.mxu0 0.0
      %2441 = vmatmul.mubr.f32.gmra.mxu0 %v2110
      %v2442 = vpop.f32.mrf.mxu0
      %v2443 = vadd.f32 0.0, %v2442
      %v2444 = vpop.f32.mrf.mxu0
      %v2445 = vadd.f32 0.0, %v2444
      %2446 = vdwg.mxu0
      %2447 = vmatprep.subr.mxu0 0.0
      %2448 = vmatpush1.msra.mxu0 0.0
      %2449 = vmatprep.subr.mxu0 0.0
      %2450 = vmatpush1.msra.mxu0 0.0
      %2451 = vmatprep.subr.mxu0 0.0
      %2452 = vmatpush1.msra.mxu0 0.0
      %2453 = vmatprep.subr.mxu0 0.0
      %2454 = vmatpush1.msra.mxu0 0.0
      %2455 = vmatprep.subr.mxu0 0.0
      %2456 = vmatpush1.msra.mxu0 0.0
      %2457 = vmatprep.subr.mxu0 0.0
      %2458 = vmatpush1.msra.mxu0 0.0
      %2459 = vmatprep.subr.mxu0 0.0
      %2460 = vmatpush1.msra.mxu0 0.0
      %2461 = vmatprep.subr.mxu0 0.0
      %2462 = vmatpush1.msra.mxu0 0.0
      %2463 = vmatprep.subr.mxu0 0.0
      %2464 = vmatpush1.msra.mxu0 0.0
      %2465 = vmatprep.subr.mxu0 0.0
      %2466 = vmatpush1.msra.mxu0 0.0
      %2467 = vmatprep.subr.mxu0 0.0
      %2468 = vmatpush1.msra.mxu0 0.0
      %2469 = vmatprep.subr.mxu0 0.0
      %2470 = vmatpush1.msra.mxu0 0.0
      %2471 = vmatprep.subr.mxu0 0.0
      %2472 = vmatpush1.msra.mxu0 0.0
      %2473 = vmatprep.subr.mxu0 0.0
      %2474 = vmatpush1.msra.mxu0 0.0
      %2475 = vmatprep.subr.mxu0 0.0
      %2476 = vmatpush1.msra.mxu0 0.0
      %2477 = vmatprep.subr.mxu0 %v2123
      %2478 = vmatpush1.msra.mxu0 %v2121
      %2479 = vmatprep.subr.mxu0 0.0
      %2480 = vmatpush2.msra.mxu0 0.0
      %2481 = vmatprep.subr.mxu0 0.0
      %2482 = vmatpush2.msra.mxu0 0.0
      %2483 = vmatprep.subr.mxu0 0.0
      %2484 = vmatpush2.msra.mxu0 0.0
      %2485 = vmatprep.subr.mxu0 0.0
      %2486 = vmatpush2.msra.mxu0 0.0
      %2487 = vmatprep.subr.mxu0 0.0
      %2488 = vmatpush2.msra.mxu0 0.0
      %2489 = vmatprep.subr.mxu0 0.0
      %2490 = vmatpush2.msra.mxu0 0.0
      %2491 = vmatprep.subr.mxu0 0.0
      %2492 = vmatpush2.msra.mxu0 0.0
      %2493 = vmatprep.subr.mxu0 0.0
      %2494 = vmatpush2.msra.mxu0 0.0
      %2495 = vmatprep.subr.mxu0 0.0
      %2496 = vmatpush2.msra.mxu0 0.0
      %2497 = vmatprep.subr.mxu0 0.0
      %2498 = vmatpush2.msra.mxu0 0.0
      %2499 = vmatprep.subr.mxu0 0.0
      %2500 = vmatpush2.msra.mxu0 0.0
      %2501 = vmatprep.subr.mxu0 0.0
      %2502 = vmatpush2.msra.mxu0 0.0
      %2503 = vmatprep.subr.mxu0 0.0
      %2504 = vmatpush2.msra.mxu0 0.0
      %2505 = vmatprep.subr.mxu0 0.0
      %2506 = vmatpush2.msra.mxu0 0.0
      %2507 = vmatprep.subr.mxu0 0.0
      %2508 = vmatpush2.msra.mxu0 0.0
      %2509 = vmatprep.subr.mxu0 0.0
      %2510 = vmatpush2.msra.mxu0 0.0
      %2511 = vmatprep.mubr.f32.mxu0 0.0
      %2512 = vmatmul.mubr.f32.gmra.mxu0 %v2065
      %v2513 = vpop.f32.mrf.mxu0
      %v2514 = vadd.f32 0.0, %v2513
      %v2515 = vpop.f32.mrf.mxu0
      %v2516 = vadd.f32 0.0, %v2515
      %2517 = vmatprep.mubr.f32.mxu0 0.0
      %2518 = vmatmul.mubr.f32.gmra.mxu0 %v2068
      %v2519 = vpop.f32.mrf.mxu0
      %v2520 = vadd.f32 0.0, %v2519
      %v2521 = vpop.f32.mrf.mxu0
      %v2522 = vadd.f32 0.0, %v2521
      %2523 = vmatprep.mubr.f32.mxu0 0.0
      %2524 = vmatmul.mubr.f32.gmra.mxu0 %v2071
      %v2525 = vpop.f32.mrf.mxu0
      %v2526 = vadd.f32 0.0, %v2525
      %v2527 = vpop.f32.mrf.mxu0
      %v2528 = vadd.f32 0.0, %v2527
      %2529 = vmatprep.mubr.f32.mxu0 0.0
      %2530 = vmatmul.mubr.f32.gmra.mxu0 %v2074
      %v2531 = vpop.f32.mrf.mxu0
      %v2532 = vadd.f32 0.0, %v2531
      %v2533 = vpop.f32.mrf.mxu0
      %v2534 = vadd.f32 0.0, %v2533
      %2535 = vmatprep.mubr.f32.mxu0 0.0
      %2536 = vmatmul.mubr.f32.gmra.mxu0 %v2077
      %v2537 = vpop.f32.mrf.mxu0
      %v2538 = vadd.f32 0.0, %v2537
      %v2539 = vpop.f32.mrf.mxu0
      %v2540 = vadd.f32 0.0, %v2539
      %2541 = vmatprep.mubr.f32.mxu0 0.0
      %2542 = vmatmul.mubr.f32.gmra.mxu0 %v2080
      %v2543 = vpop.f32.mrf.mxu0
      %v2544 = vadd.f32 0.0, %v2543
      %v2545 = vpop.f32.mrf.mxu0
      %v2546 = vadd.f32 0.0, %v2545
      %2547 = vmatprep.mubr.f32.mxu0 0.0
      %2548 = vmatmul.mubr.f32.gmra.mxu0 %v2083
      %v2549 = vpop.f32.mrf.mxu0
      %v2550 = vadd.f32 0.0, %v2549
      %v2551 = vpop.f32.mrf.mxu0
      %v2552 = vadd.f32 0.0, %v2551
      %2553 = vmatprep.mubr.f32.mxu0 0.0
      %2554 = vmatmul.mubr.f32.gmra.mxu0 %v2086
      %v2555 = vpop.f32.mrf.mxu0
      %v2556 = vadd.f32 0.0, %v2555
      %v2557 = vpop.f32.mrf.mxu0
      %v2558 = vadd.f32 0.0, %v2557
      %2559 = vmatprep.mubr.f32.mxu0 0.0
      %2560 = vmatmul.mubr.f32.gmra.mxu0 %v2089
      %v2561 = vpop.f32.mrf.mxu0
      %v2562 = vadd.f32 0.0, %v2561
      %v2563 = vpop.f32.mrf.mxu0
      %v2564 = vadd.f32 0.0, %v2563
      %2565 = vmatprep.mubr.f32.mxu0 0.0
      %2566 = vmatmul.mubr.f32.gmra.mxu0 %v2092
      %v2567 = vpop.f32.mrf.mxu0
      %v2568 = vadd.f32 0.0, %v2567
      %v2569 = vpop.f32.mrf.mxu0
      %v2570 = vadd.f32 0.0, %v2569
      %2571 = vmatprep.mubr.f32.mxu0 0.0
      %2572 = vmatmul.mubr.f32.gmra.mxu0 %v2095
      %v2573 = vpop.f32.mrf.mxu0
      %v2574 = vadd.f32 0.0, %v2573
      %v2575 = vpop.f32.mrf.mxu0
      %v2576 = vadd.f32 0.0, %v2575
      %2577 = vmatprep.mubr.f32.mxu0 0.0
      %2578 = vmatmul.mubr.f32.gmra.mxu0 %v2098
      %v2579 = vpop.f32.mrf.mxu0
      %v2580 = vadd.f32 0.0, %v2579
      %v2581 = vpop.f32.mrf.mxu0
      %v2582 = vadd.f32 0.0, %v2581
      %2583 = vmatprep.mubr.f32.mxu0 0.0
      %2584 = vmatmul.mubr.f32.gmra.mxu0 %v2101
      %v2585 = vpop.f32.mrf.mxu0
      %v2586 = vadd.f32 0.0, %v2585
      %v2587 = vpop.f32.mrf.mxu0
      %v2588 = vadd.f32 0.0, %v2587
      %2589 = vmatprep.mubr.f32.mxu0 0.0
      %2590 = vmatmul.mubr.f32.gmra.mxu0 %v2104
      %v2591 = vpop.f32.mrf.mxu0
      %v2592 = vadd.f32 0.0, %v2591
      %v2593 = vpop.f32.mrf.mxu0
      %v2594 = vadd.f32 0.0, %v2593
      %2595 = vmatprep.mubr.f32.mxu0 0.0
      %2596 = vmatmul.mubr.f32.gmra.mxu0 %v2107
      %v2597 = vpop.f32.mrf.mxu0
      %v2598 = vadd.f32 0.0, %v2597
      %v2599 = vpop.f32.mrf.mxu0
      %v2600 = vadd.f32 0.0, %v2599
      %2601 = vmatprep.mubr.f32.mxu0 0.0
      %2602 = vmatmul.mubr.f32.gmra.mxu0 %v2110
      %v2603 = vpop.f32.mrf.mxu0
      %v2604 = vadd.f32 0.0, %v2603
      %v2605 = vpop.f32.mrf.mxu0
      %v2606 = vadd.f32 0.0, %v2605
      %2607 = vdwg.mxu0
      %v2610 = vcombine.high %v2031, %v2031
      %v2612 = vunpack.c.l.s4 1983009808
      %v2613 = vunpack.c.0.s8 %v2612
      %v2614 = vlaneseq
      %v2615 = vshrl.u32 %v2614, 7
      %v2616 = vsub.s32 %v2613, %v2615
      %v2617 = vrot.slane %v2031, %v2616
      %v2619 = vunpack.c.l.s4 1983009808
      %v2620 = vunpack.c.0.s8 %v2619
      %v2621 = vlaneseq
      %v2622 = vshrl.u32 %v2621, 7
      %v2623 = vsub.s32 %v2620, %v2622
      %v2624 = vrot.slane %v2610, %v2623
      %v2625 = vcombine.high %v2617, %v2617
      %v2626 = vcombine.high %v2624, %v2624
      %v2628 = vunpack.c.l.s4 1983009808
      %v2629 = vunpack.c.0.s8 %v2628
      %v2630 = vlaneseq
      %v2631 = vshrl.u32 %v2630, 7
      %v2632 = vsub.s32 %v2629, %v2631
      %v2633 = vrot.slane %v2032, %v2632
      %v2634 = vcombine.high %v2633, %v2633
      %v2636 = vsel %vm2063, %v1329, 0
      %v2639 = vsel %vm2063, %v1330, 0
      %v2642 = vsel %vm2063, %v1331, 0
      %v2645 = vsel %vm2063, %v1332, 0
      %v2648 = vsel %vm2063, %v1333, 0
      %v2651 = vsel %vm2063, %v1334, 0
      %v2654 = vsel %vm2063, %v1335, 0
      %v2657 = vsel %vm2063, %v1336, 0
      %v2660 = vsel %vm2063, %v1337, 0
      %v2663 = vsel %vm2063, %v1338, 0
      %v2666 = vsel %vm2063, %v1339, 0
      %v2669 = vsel %vm2063, %v1340, 0
      %v2672 = vsel %vm2063, %v1341, 0
      %v2675 = vsel %vm2063, %v1342, 0
      %v2678 = vsel %vm2063, %v1343, 0
      %v2681 = vsel %vm2063, %v1344, 0
      %v2683 = vsel %vm2112, %v2617, 0
      %v2685 = vsel %vm2112, %v2625, 0
      %v2687 = vsel %vm2112, %v2624, 0
      %v2689 = vsel %vm2112, %v2626, 0
      %v2691 = vsel %vm2112, %v2633, 0
      %v2693 = vsel %vm2112, %v2634, 0
      %2695 = vmatprep.subr.mxu0 0.0
      %2696 = vmatpush1.msra.mxu0 0.0
      %2697 = vmatprep.subr.mxu0 0.0
      %2698 = vmatpush1.msra.mxu0 0.0
      %2699 = vmatprep.subr.mxu0 0.0
      %2700 = vmatpush1.msra.mxu0 0.0
      %2701 = vmatprep.subr.mxu0 0.0
      %2702 = vmatpush1.msra.mxu0 0.0
      %2703 = vmatprep.subr.mxu0 0.0
      %2704 = vmatpush1.msra.mxu0 0.0
      %2705 = vmatprep.subr.mxu0 0.0
      %2706 = vmatpush1.msra.mxu0 0.0
      %2707 = vmatprep.subr.mxu0 0.0
      %2708 = vmatpush1.msra.mxu0 0.0
      %2709 = vmatprep.subr.mxu0 0.0
      %2710 = vmatpush1.msra.mxu0 0.0
      %2711 = vmatprep.subr.mxu0 0.0
      %2712 = vmatpush1.msra.mxu0 0.0
      %2713 = vmatprep.subr.mxu0 0.0
      %2714 = vmatpush1.msra.mxu0 0.0
      %2715 = vmatprep.subr.mxu0 0.0
      %2716 = vmatpush1.msra.mxu0 0.0
      %2717 = vmatprep.subr.mxu0 0.0
      %2718 = vmatpush1.msra.mxu0 0.0
      %2719 = vmatprep.subr.mxu0 0.0
      %2720 = vmatpush1.msra.mxu0 0.0
      %2721 = vmatprep.subr.mxu0 0.0
      %2722 = vmatpush1.msra.mxu0 0.0
      %2723 = vmatprep.subr.mxu0 0.0
      %2724 = vmatpush1.msra.mxu0 0.0
      %2725 = vmatprep.subr.mxu0 %v2685
      %2726 = vmatpush1.msra.mxu0 %v2683
      %2727 = vmatprep.subr.mxu0 0.0
      %2728 = vmatpush2.msra.mxu0 0.0
      %2729 = vmatprep.subr.mxu0 0.0
      %2730 = vmatpush2.msra.mxu0 0.0
      %2731 = vmatprep.subr.mxu0 0.0
      %2732 = vmatpush2.msra.mxu0 0.0
      %2733 = vmatprep.subr.mxu0 0.0
      %2734 = vmatpush2.msra.mxu0 0.0
      %2735 = vmatprep.subr.mxu0 0.0
      %2736 = vmatpush2.msra.mxu0 0.0
      %2737 = vmatprep.subr.mxu0 0.0
      %2738 = vmatpush2.msra.mxu0 0.0
      %2739 = vmatprep.subr.mxu0 0.0
      %2740 = vmatpush2.msra.mxu0 0.0
      %2741 = vmatprep.subr.mxu0 0.0
      %2742 = vmatpush2.msra.mxu0 0.0
      %2743 = vmatprep.subr.mxu0 0.0
      %2744 = vmatpush2.msra.mxu0 0.0
      %2745 = vmatprep.subr.mxu0 0.0
      %2746 = vmatpush2.msra.mxu0 0.0
      %2747 = vmatprep.subr.mxu0 0.0
      %2748 = vmatpush2.msra.mxu0 0.0
      %2749 = vmatprep.subr.mxu0 0.0
      %2750 = vmatpush2.msra.mxu0 0.0
      %2751 = vmatprep.subr.mxu0 0.0
      %2752 = vmatpush2.msra.mxu0 0.0
      %2753 = vmatprep.subr.mxu0 0.0
      %2754 = vmatpush2.msra.mxu0 0.0
      %2755 = vmatprep.subr.mxu0 0.0
      %2756 = vmatpush2.msra.mxu0 0.0
      %2757 = vmatprep.subr.mxu0 0.0
      %2758 = vmatpush2.msra.mxu0 0.0
      %2759 = vmatprep.mubr.f32.mxu0 0.0
      %2760 = vmatmul.mubr.f32.gmra.mxu0 %v2636
      %v2761 = vpop.f32.mrf.mxu0
      %v2762 = vadd.f32 %v2192, %v2761
      %v2763 = vpop.f32.mrf.mxu0
      %v2764 = vadd.f32 %v2194, %v2763
      %2765 = vmatprep.mubr.f32.mxu0 0.0
      %2766 = vmatmul.mubr.f32.gmra.mxu0 %v2639
      %v2767 = vpop.f32.mrf.mxu0
      %v2768 = vadd.f32 %v2198, %v2767
      %v2769 = vpop.f32.mrf.mxu0
      %v2770 = vadd.f32 %v2200, %v2769
      %2771 = vmatprep.mubr.f32.mxu0 0.0
      %2772 = vmatmul.mubr.f32.gmra.mxu0 %v2642
      %v2773 = vpop.f32.mrf.mxu0
      %v2774 = vadd.f32 %v2204, %v2773
      %v2775 = vpop.f32.mrf.mxu0
      %v2776 = vadd.f32 %v2206, %v2775
      %2777 = vmatprep.mubr.f32.mxu0 0.0
      %2778 = vmatmul.mubr.f32.gmra.mxu0 %v2645
      %v2779 = vpop.f32.mrf.mxu0
      %v2780 = vadd.f32 %v2210, %v2779
      %v2781 = vpop.f32.mrf.mxu0
      %v2782 = vadd.f32 %v2212, %v2781
      %2783 = vmatprep.mubr.f32.mxu0 0.0
      %2784 = vmatmul.mubr.f32.gmra.mxu0 %v2648
      %v2785 = vpop.f32.mrf.mxu0
      %v2786 = vadd.f32 %v2216, %v2785
      %v2787 = vpop.f32.mrf.mxu0
      %v2788 = vadd.f32 %v2218, %v2787
      %2789 = vmatprep.mubr.f32.mxu0 0.0
      %2790 = vmatmul.mubr.f32.gmra.mxu0 %v2651
      %v2791 = vpop.f32.mrf.mxu0
      %v2792 = vadd.f32 %v2222, %v2791
      %v2793 = vpop.f32.mrf.mxu0
      %v2794 = vadd.f32 %v2224, %v2793
      %2795 = vmatprep.mubr.f32.mxu0 0.0
      %2796 = vmatmul.mubr.f32.gmra.mxu0 %v2654
      %v2797 = vpop.f32.mrf.mxu0
      %v2798 = vadd.f32 %v2228, %v2797
      %v2799 = vpop.f32.mrf.mxu0
      %v2800 = vadd.f32 %v2230, %v2799
      %2801 = vmatprep.mubr.f32.mxu0 0.0
      %2802 = vmatmul.mubr.f32.gmra.mxu0 %v2657
      %v2803 = vpop.f32.mrf.mxu0
      %v2804 = vadd.f32 %v2234, %v2803
      %v2805 = vpop.f32.mrf.mxu0
      %v2806 = vadd.f32 %v2236, %v2805
      %2807 = vmatprep.mubr.f32.mxu0 0.0
      %2808 = vmatmul.mubr.f32.gmra.mxu0 %v2660
      %v2809 = vpop.f32.mrf.mxu0
      %v2810 = vadd.f32 %v2240, %v2809
      %v2811 = vpop.f32.mrf.mxu0
      %v2812 = vadd.f32 %v2242, %v2811
      %2813 = vmatprep.mubr.f32.mxu0 0.0
      %2814 = vmatmul.mubr.f32.gmra.mxu0 %v2663
      %v2815 = vpop.f32.mrf.mxu0
      %v2816 = vadd.f32 %v2246, %v2815
      %v2817 = vpop.f32.mrf.mxu0
      %v2818 = vadd.f32 %v2248, %v2817
      %2819 = vmatprep.mubr.f32.mxu0 0.0
      %2820 = vmatmul.mubr.f32.gmra.mxu0 %v2666
      %v2821 = vpop.f32.mrf.mxu0
      %v2822 = vadd.f32 %v2252, %v2821
      %v2823 = vpop.f32.mrf.mxu0
      %v2824 = vadd.f32 %v2254, %v2823
      %2825 = vmatprep.mubr.f32.mxu0 0.0
      %2826 = vmatmul.mubr.f32.gmra.mxu0 %v2669
      %v2827 = vpop.f32.mrf.mxu0
      %v2828 = vadd.f32 %v2258, %v2827
      %v2829 = vpop.f32.mrf.mxu0
      %v2830 = vadd.f32 %v2260, %v2829
      %2831 = vmatprep.mubr.f32.mxu0 0.0
      %2832 = vmatmul.mubr.f32.gmra.mxu0 %v2672
      %v2833 = vpop.f32.mrf.mxu0
      %v2834 = vadd.f32 %v2264, %v2833
      %v2835 = vpop.f32.mrf.mxu0
      %v2836 = vadd.f32 %v2266, %v2835
      %2837 = vmatprep.mubr.f32.mxu0 0.0
      %2838 = vmatmul.mubr.f32.gmra.mxu0 %v2675
      %v2839 = vpop.f32.mrf.mxu0
      %v2840 = vadd.f32 %v2270, %v2839
      %v2841 = vpop.f32.mrf.mxu0
      %v2842 = vadd.f32 %v2272, %v2841
      %2843 = vmatprep.mubr.f32.mxu0 0.0
      %2844 = vmatmul.mubr.f32.gmra.mxu0 %v2678
      %v2845 = vpop.f32.mrf.mxu0
      %v2846 = vadd.f32 %v2276, %v2845
      %v2847 = vpop.f32.mrf.mxu0
      %v2848 = vadd.f32 %v2278, %v2847
      %2849 = vmatprep.mubr.f32.mxu0 0.0
      %2850 = vmatmul.mubr.f32.gmra.mxu0 %v2681
      %v2851 = vpop.f32.mrf.mxu0
      %v2852 = vadd.f32 %v2282, %v2851
      %v2853 = vpop.f32.mrf.mxu0
      %v2854 = vadd.f32 %v2284, %v2853
      %2855 = vdwg.mxu0
      %2856 = vmatprep.subr.mxu0 0.0
      %2857 = vmatpush1.msra.mxu0 0.0
      %2858 = vmatprep.subr.mxu0 0.0
      %2859 = vmatpush1.msra.mxu0 0.0
      %2860 = vmatprep.subr.mxu0 0.0
      %2861 = vmatpush1.msra.mxu0 0.0
      %2862 = vmatprep.subr.mxu0 0.0
      %2863 = vmatpush1.msra.mxu0 0.0
      %2864 = vmatprep.subr.mxu0 0.0
      %2865 = vmatpush1.msra.mxu0 0.0
      %2866 = vmatprep.subr.mxu0 0.0
      %2867 = vmatpush1.msra.mxu0 0.0
      %2868 = vmatprep.subr.mxu0 0.0
      %2869 = vmatpush1.msra.mxu0 0.0
      %2870 = vmatprep.subr.mxu0 0.0
      %2871 = vmatpush1.msra.mxu0 0.0
      %2872 = vmatprep.subr.mxu0 0.0
      %2873 = vmatpush1.msra.mxu0 0.0
      %2874 = vmatprep.subr.mxu0 0.0
      %2875 = vmatpush1.msra.mxu0 0.0
      %2876 = vmatprep.subr.mxu0 0.0
      %2877 = vmatpush1.msra.mxu0 0.0
      %2878 = vmatprep.subr.mxu0 0.0
      %2879 = vmatpush1.msra.mxu0 0.0
      %2880 = vmatprep.subr.mxu0 0.0
      %2881 = vmatpush1.msra.mxu0 0.0
      %2882 = vmatprep.subr.mxu0 0.0
      %2883 = vmatpush1.msra.mxu0 0.0
      %2884 = vmatprep.subr.mxu0 0.0
      %2885 = vmatpush1.msra.mxu0 0.0
      %2886 = vmatprep.subr.mxu0 %v2689
      %2887 = vmatpush1.msra.mxu0 %v2687
      %2888 = vmatprep.subr.mxu0 0.0
      %2889 = vmatpush2.msra.mxu0 0.0
      %2890 = vmatprep.subr.mxu0 0.0
      %2891 = vmatpush2.msra.mxu0 0.0
      %2892 = vmatprep.subr.mxu0 0.0
      %2893 = vmatpush2.msra.mxu0 0.0
      %2894 = vmatprep.subr.mxu0 0.0
      %2895 = vmatpush2.msra.mxu0 0.0
      %2896 = vmatprep.subr.mxu0 0.0
      %2897 = vmatpush2.msra.mxu0 0.0
      %2898 = vmatprep.subr.mxu0 0.0
      %2899 = vmatpush2.msra.mxu0 0.0
      %2900 = vmatprep.subr.mxu0 0.0
      %2901 = vmatpush2.msra.mxu0 0.0
      %2902 = vmatprep.subr.mxu0 0.0
      %2903 = vmatpush2.msra.mxu0 0.0
      %2904 = vmatprep.subr.mxu0 0.0
      %2905 = vmatpush2.msra.mxu0 0.0
      %2906 = vmatprep.subr.mxu0 0.0
      %2907 = vmatpush2.msra.mxu0 0.0
      %2908 = vmatprep.subr.mxu0 0.0
      %2909 = vmatpush2.msra.mxu0 0.0
      %2910 = vmatprep.subr.mxu0 0.0
      %2911 = vmatpush2.msra.mxu0 0.0
      %2912 = vmatprep.subr.mxu0 0.0
      %2913 = vmatpush2.msra.mxu0 0.0
      %2914 = vmatprep.subr.mxu0 0.0
      %2915 = vmatpush2.msra.mxu0 0.0
      %2916 = vmatprep.subr.mxu0 0.0
      %2917 = vmatpush2.msra.mxu0 0.0
      %2918 = vmatprep.subr.mxu0 0.0
      %2919 = vmatpush2.msra.mxu0 0.0
      %2920 = vmatprep.mubr.f32.mxu0 0.0
      %2921 = vmatmul.mubr.f32.gmra.mxu0 %v2636
      %v2922 = vpop.f32.mrf.mxu0
      %v2923 = vadd.f32 %v2353, %v2922
      %v2924 = vpop.f32.mrf.mxu0
      %v2925 = vadd.f32 %v2355, %v2924
      %2926 = vmatprep.mubr.f32.mxu0 0.0
      %2927 = vmatmul.mubr.f32.gmra.mxu0 %v2639
      %v2928 = vpop.f32.mrf.mxu0
      %v2929 = vadd.f32 %v2359, %v2928
      %v2930 = vpop.f32.mrf.mxu0
      %v2931 = vadd.f32 %v2361, %v2930
      %2932 = vmatprep.mubr.f32.mxu0 0.0
      %2933 = vmatmul.mubr.f32.gmra.mxu0 %v2642
      %v2934 = vpop.f32.mrf.mxu0
      %v2935 = vadd.f32 %v2365, %v2934
      %v2936 = vpop.f32.mrf.mxu0
      %v2937 = vadd.f32 %v2367, %v2936
      %2938 = vmatprep.mubr.f32.mxu0 0.0
      %2939 = vmatmul.mubr.f32.gmra.mxu0 %v2645
      %v2940 = vpop.f32.mrf.mxu0
      %v2941 = vadd.f32 %v2371, %v2940
      %v2942 = vpop.f32.mrf.mxu0
      %v2943 = vadd.f32 %v2373, %v2942
      %2944 = vmatprep.mubr.f32.mxu0 0.0
      %2945 = vmatmul.mubr.f32.gmra.mxu0 %v2648
      %v2946 = vpop.f32.mrf.mxu0
      %v2947 = vadd.f32 %v2377, %v2946
      %v2948 = vpop.f32.mrf.mxu0
      %v2949 = vadd.f32 %v2379, %v2948
      %2950 = vmatprep.mubr.f32.mxu0 0.0
      %2951 = vmatmul.mubr.f32.gmra.mxu0 %v2651
      %v2952 = vpop.f32.mrf.mxu0
      %v2953 = vadd.f32 %v2383, %v2952
      %v2954 = vpop.f32.mrf.mxu0
      %v2955 = vadd.f32 %v2385, %v2954
      %2956 = vmatprep.mubr.f32.mxu0 0.0
      %2957 = vmatmul.mubr.f32.gmra.mxu0 %v2654
      %v2958 = vpop.f32.mrf.mxu0
      %v2959 = vadd.f32 %v2389, %v2958
      %v2960 = vpop.f32.mrf.mxu0
      %v2961 = vadd.f32 %v2391, %v2960
      %2962 = vmatprep.mubr.f32.mxu0 0.0
      %2963 = vmatmul.mubr.f32.gmra.mxu0 %v2657
      %v2964 = vpop.f32.mrf.mxu0
      %v2965 = vadd.f32 %v2395, %v2964
      %v2966 = vpop.f32.mrf.mxu0
      %v2967 = vadd.f32 %v2397, %v2966
      %2968 = vmatprep.mubr.f32.mxu0 0.0
      %2969 = vmatmul.mubr.f32.gmra.mxu0 %v2660
      %v2970 = vpop.f32.mrf.mxu0
      %v2971 = vadd.f32 %v2401, %v2970
      %v2972 = vpop.f32.mrf.mxu0
      %v2973 = vadd.f32 %v2403, %v2972
      %2974 = vmatprep.mubr.f32.mxu0 0.0
      %2975 = vmatmul.mubr.f32.gmra.mxu0 %v2663
      %v2976 = vpop.f32.mrf.mxu0
      %v2977 = vadd.f32 %v2407, %v2976
      %v2978 = vpop.f32.mrf.mxu0
      %v2979 = vadd.f32 %v2409, %v2978
      %2980 = vmatprep.mubr.f32.mxu0 0.0
      %2981 = vmatmul.mubr.f32.gmra.mxu0 %v2666
      %v2982 = vpop.f32.mrf.mxu0
      %v2983 = vadd.f32 %v2413, %v2982
      %v2984 = vpop.f32.mrf.mxu0
      %v2985 = vadd.f32 %v2415, %v2984
      %2986 = vmatprep.mubr.f32.mxu0 0.0
      %2987 = vmatmul.mubr.f32.gmra.mxu0 %v2669
      %v2988 = vpop.f32.mrf.mxu0
      %v2989 = vadd.f32 %v2419, %v2988
      %v2990 = vpop.f32.mrf.mxu0
      %v2991 = vadd.f32 %v2421, %v2990
      %2992 = vmatprep.mubr.f32.mxu0 0.0
      %2993 = vmatmul.mubr.f32.gmra.mxu0 %v2672
      %v2994 = vpop.f32.mrf.mxu0
      %v2995 = vadd.f32 %v2425, %v2994
      %v2996 = vpop.f32.mrf.mxu0
      %v2997 = vadd.f32 %v2427, %v2996
      %2998 = vmatprep.mubr.f32.mxu0 0.0
      %2999 = vmatmul.mubr.f32.gmra.mxu0 %v2675
      %v3000 = vpop.f32.mrf.mxu0
      %v3001 = vadd.f32 %v2431, %v3000
      %v3002 = vpop.f32.mrf.mxu0
      %v3003 = vadd.f32 %v2433, %v3002
      %3004 = vmatprep.mubr.f32.mxu0 0.0
      %3005 = vmatmul.mubr.f32.gmra.mxu0 %v2678
      %v3006 = vpop.f32.mrf.mxu0
      %v3007 = vadd.f32 %v2437, %v3006
      %v3008 = vpop.f32.mrf.mxu0
      %v3009 = vadd.f32 %v2439, %v3008
      %3010 = vmatprep.mubr.f32.mxu0 0.0
      %3011 = vmatmul.mubr.f32.gmra.mxu0 %v2681
      %v3012 = vpop.f32.mrf.mxu0
      %v3013 = vadd.f32 %v2443, %v3012
      %v3014 = vpop.f32.mrf.mxu0
      %v3015 = vadd.f32 %v2445, %v3014
      %3016 = vdwg.mxu0
      %3017 = vmatprep.subr.mxu0 0.0
      %3018 = vmatpush1.msra.mxu0 0.0
      %3019 = vmatprep.subr.mxu0 0.0
      %3020 = vmatpush1.msra.mxu0 0.0
      %3021 = vmatprep.subr.mxu0 0.0
      %3022 = vmatpush1.msra.mxu0 0.0
      %3023 = vmatprep.subr.mxu0 0.0
      %3024 = vmatpush1.msra.mxu0 0.0
      %3025 = vmatprep.subr.mxu0 0.0
      %3026 = vmatpush1.msra.mxu0 0.0
      %3027 = vmatprep.subr.mxu0 0.0
      %3028 = vmatpush1.msra.mxu0 0.0
      %3029 = vmatprep.subr.mxu0 0.0
      %3030 = vmatpush1.msra.mxu0 0.0
      %3031 = vmatprep.subr.mxu0 0.0
      %3032 = vmatpush1.msra.mxu0 0.0
      %3033 = vmatprep.subr.mxu0 0.0
      %3034 = vmatpush1.msra.mxu0 0.0
      %3035 = vmatprep.subr.mxu0 0.0
      %3036 = vmatpush1.msra.mxu0 0.0
      %3037 = vmatprep.subr.mxu0 0.0
      %3038 = vmatpush1.msra.mxu0 0.0
      %3039 = vmatprep.subr.mxu0 0.0
      %3040 = vmatpush1.msra.mxu0 0.0
      %3041 = vmatprep.subr.mxu0 0.0
      %3042 = vmatpush1.msra.mxu0 0.0
      %3043 = vmatprep.subr.mxu0 0.0
      %3044 = vmatpush1.msra.mxu0 0.0
      %3045 = vmatprep.subr.mxu0 0.0
      %3046 = vmatpush1.msra.mxu0 0.0
      %3047 = vmatprep.subr.mxu0 %v2693
      %3048 = vmatpush1.msra.mxu0 %v2691
      %3049 = vmatprep.subr.mxu0 0.0
      %3050 = vmatpush2.msra.mxu0 0.0
      %3051 = vmatprep.subr.mxu0 0.0
      %3052 = vmatpush2.msra.mxu0 0.0
      %3053 = vmatprep.subr.mxu0 0.0
      %3054 = vmatpush2.msra.mxu0 0.0
      %3055 = vmatprep.subr.mxu0 0.0
      %3056 = vmatpush2.msra.mxu0 0.0
      %3057 = vmatprep.subr.mxu0 0.0
      %3058 = vmatpush2.msra.mxu0 0.0
      %3059 = vmatprep.subr.mxu0 0.0
      %3060 = vmatpush2.msra.mxu0 0.0
      %3061 = vmatprep.subr.mxu0 0.0
      %3062 = vmatpush2.msra.mxu0 0.0
      %3063 = vmatprep.subr.mxu0 0.0
      %3064 = vmatpush2.msra.mxu0 0.0
      %3065 = vmatprep.subr.mxu0 0.0
      %3066 = vmatpush2.msra.mxu0 0.0
      %3067 = vmatprep.subr.mxu0 0.0
      %3068 = vmatpush2.msra.mxu0 0.0
      %3069 = vmatprep.subr.mxu0 0.0
      %3070 = vmatpush2.msra.mxu0 0.0
      %3071 = vmatprep.subr.mxu0 0.0
      %3072 = vmatpush2.msra.mxu0 0.0
      %3073 = vmatprep.subr.mxu0 0.0
      %3074 = vmatpush2.msra.mxu0 0.0
      %3075 = vmatprep.subr.mxu0 0.0
      %3076 = vmatpush2.msra.mxu0 0.0
      %3077 = vmatprep.subr.mxu0 0.0
      %3078 = vmatpush2.msra.mxu0 0.0
      %3079 = vmatprep.subr.mxu0 0.0
      %3080 = vmatpush2.msra.mxu0 0.0
      %3081 = vmatprep.mubr.f32.mxu0 0.0
      %3082 = vmatmul.mubr.f32.gmra.mxu0 %v2636
      %v3083 = vpop.f32.mrf.mxu0
      %v3084 = vadd.f32 %v2514, %v3083
      %v3085 = vpop.f32.mrf.mxu0
      %v3086 = vadd.f32 %v2516, %v3085
      %3087 = vmatprep.mubr.f32.mxu0 0.0
      %3088 = vmatmul.mubr.f32.gmra.mxu0 %v2639
      %v3089 = vpop.f32.mrf.mxu0
      %v3090 = vadd.f32 %v2520, %v3089
      %v3091 = vpop.f32.mrf.mxu0
      %v3092 = vadd.f32 %v2522, %v3091
      %3093 = vmatprep.mubr.f32.mxu0 0.0
      %3094 = vmatmul.mubr.f32.gmra.mxu0 %v2642
      %v3095 = vpop.f32.mrf.mxu0
      %v3096 = vadd.f32 %v2526, %v3095
      %v3097 = vpop.f32.mrf.mxu0
      %v3098 = vadd.f32 %v2528, %v3097
      %3099 = vmatprep.mubr.f32.mxu0 0.0
      %3100 = vmatmul.mubr.f32.gmra.mxu0 %v2645
      %v3101 = vpop.f32.mrf.mxu0
      %v3102 = vadd.f32 %v2532, %v3101
      %v3103 = vpop.f32.mrf.mxu0
      %v3104 = vadd.f32 %v2534, %v3103
      %3105 = vmatprep.mubr.f32.mxu0 0.0
      %3106 = vmatmul.mubr.f32.gmra.mxu0 %v2648
      %v3107 = vpop.f32.mrf.mxu0
      %v3108 = vadd.f32 %v2538, %v3107
      %v3109 = vpop.f32.mrf.mxu0
      %v3110 = vadd.f32 %v2540, %v3109
      %3111 = vmatprep.mubr.f32.mxu0 0.0
      %3112 = vmatmul.mubr.f32.gmra.mxu0 %v2651
      %v3113 = vpop.f32.mrf.mxu0
      %v3114 = vadd.f32 %v2544, %v3113
      %v3115 = vpop.f32.mrf.mxu0
      %v3116 = vadd.f32 %v2546, %v3115
      %3117 = vmatprep.mubr.f32.mxu0 0.0
      %3118 = vmatmul.mubr.f32.gmra.mxu0 %v2654
      %v3119 = vpop.f32.mrf.mxu0
      %v3120 = vadd.f32 %v2550, %v3119
      %v3121 = vpop.f32.mrf.mxu0
      %v3122 = vadd.f32 %v2552, %v3121
      %3123 = vmatprep.mubr.f32.mxu0 0.0
      %3124 = vmatmul.mubr.f32.gmra.mxu0 %v2657
      %v3125 = vpop.f32.mrf.mxu0
      %v3126 = vadd.f32 %v2556, %v3125
      %v3127 = vpop.f32.mrf.mxu0
      %v3128 = vadd.f32 %v2558, %v3127
      %3129 = vmatprep.mubr.f32.mxu0 0.0
      %3130 = vmatmul.mubr.f32.gmra.mxu0 %v2660
      %v3131 = vpop.f32.mrf.mxu0
      %v3132 = vadd.f32 %v2562, %v3131
      %v3133 = vpop.f32.mrf.mxu0
      %v3134 = vadd.f32 %v2564, %v3133
      %3135 = vmatprep.mubr.f32.mxu0 0.0
      %3136 = vmatmul.mubr.f32.gmra.mxu0 %v2663
      %v3137 = vpop.f32.mrf.mxu0
      %v3138 = vadd.f32 %v2568, %v3137
      %v3139 = vpop.f32.mrf.mxu0
      %v3140 = vadd.f32 %v2570, %v3139
      %3141 = vmatprep.mubr.f32.mxu0 0.0
      %3142 = vmatmul.mubr.f32.gmra.mxu0 %v2666
      %v3143 = vpop.f32.mrf.mxu0
      %v3144 = vadd.f32 %v2574, %v3143
      %v3145 = vpop.f32.mrf.mxu0
      %v3146 = vadd.f32 %v2576, %v3145
      %3147 = vmatprep.mubr.f32.mxu0 0.0
      %3148 = vmatmul.mubr.f32.gmra.mxu0 %v2669
      %v3149 = vpop.f32.mrf.mxu0
      %v3150 = vadd.f32 %v2580, %v3149
      %v3151 = vpop.f32.mrf.mxu0
      %v3152 = vadd.f32 %v2582, %v3151
      %3153 = vmatprep.mubr.f32.mxu0 0.0
      %3154 = vmatmul.mubr.f32.gmra.mxu0 %v2672
      %v3155 = vpop.f32.mrf.mxu0
      %v3156 = vadd.f32 %v2586, %v3155
      %v3157 = vpop.f32.mrf.mxu0
      %v3158 = vadd.f32 %v2588, %v3157
      %3159 = vmatprep.mubr.f32.mxu0 0.0
      %3160 = vmatmul.mubr.f32.gmra.mxu0 %v2675
      %v3161 = vpop.f32.mrf.mxu0
      %v3162 = vadd.f32 %v2592, %v3161
      %v3163 = vpop.f32.mrf.mxu0
      %v3164 = vadd.f32 %v2594, %v3163
      %3165 = vmatprep.mubr.f32.mxu0 0.0
      %3166 = vmatmul.mubr.f32.gmra.mxu0 %v2678
      %v3167 = vpop.f32.mrf.mxu0
      %v3168 = vadd.f32 %v2598, %v3167
      %v3169 = vpop.f32.mrf.mxu0
      %v3170 = vadd.f32 %v2600, %v3169
      %3171 = vmatprep.mubr.f32.mxu0 0.0
      %3172 = vmatmul.mubr.f32.gmra.mxu0 %v2681
      %v3173 = vpop.f32.mrf.mxu0
      %v3174 = vadd.f32 %v2604, %v3173
      %v3175 = vpop.f32.mrf.mxu0
      %v3176 = vadd.f32 %v2606, %v3175
      %3177 = vdwg.mxu0
      %s3178 = scalar_lea.vmem %s4, 24
      %v3179 = vld [vmem:[%s3178] sm:$0xff]
      %v3180 = vld [vmem:[%s3178 + $0x8] sm:$0xf]
      %v3183 = vcombine.high %v3179, %v3179
      %v3185 = vunpack.c.l.s4 1983009808
      %v3186 = vunpack.c.0.s8 %v3185
      %v3187 = vlaneseq
      %v3188 = vshrl.u32 %v3187, 7
      %v3189 = vsub.s32 %v3186, %v3188
      %v3190 = vrot.slane %v3179, %v3189
      %v3192 = vunpack.c.l.s4 1983009808
      %v3193 = vunpack.c.0.s8 %v3192
      %v3194 = vlaneseq
      %v3195 = vshrl.u32 %v3194, 7
      %v3196 = vsub.s32 %v3193, %v3195
      %v3197 = vrot.slane %v3183, %v3196
      %v3198 = vcombine.high %v3190, %v3190
      %v3199 = vcombine.high %v3197, %v3197
      %v3201 = vunpack.c.l.s4 1983009808
      %v3202 = vunpack.c.0.s8 %v3201
      %v3203 = vlaneseq
      %v3204 = vshrl.u32 %v3203, 7
      %v3205 = vsub.s32 %v3202, %v3204
      %v3206 = vrot.slane %v3180, %v3205
      %v3207 = vcombine.high %v3206, %v3206
      %v3209 = vsel %vm2063, %v1428, 0
      %v3212 = vsel %vm2063, %v1433, 0
      %v3215 = vsel %vm2063, %v1513, 0
      %v3218 = vsel %vm2063, %v1518, 0
      %v3221 = vsel %vm2063, %v1598, 0
      %v3224 = vsel %vm2063, %v1603, 0
      %v3227 = vsel %vm2063, %v1683, 0
      %v3230 = vsel %vm2063, %v1688, 0
      %v3233 = vsel %vm2063, %v1768, 0
      %v3236 = vsel %vm2063, %v1773, 0
      %v3239 = vsel %vm2063, %v1853, 0
      %v3242 = vsel %vm2063, %v1858, 0
      %v3245 = vsel %vm2063, %v1938, 0
      %v3248 = vsel %vm2063, %v1943, 0
      %v3251 = vsel %vm2063, %v2023, 0
      %v3254 = vsel %vm2063, %v2028, 0
      %v3256 = vsel %vm2112, %v3190, 0
      %v3258 = vsel %vm2112, %v3198, 0
      %v3260 = vsel %vm2112, %v3197, 0
      %v3262 = vsel %vm2112, %v3199, 0
      %v3264 = vsel %vm2112, %v3206, 0
      %v3266 = vsel %vm2112, %v3207, 0
      %3268 = vmatprep.subr.mxu0 0.0
      %3269 = vmatpush1.msra.mxu0 0.0
      %3270 = vmatprep.subr.mxu0 0.0
      %3271 = vmatpush1.msra.mxu0 0.0
      %3272 = vmatprep.subr.mxu0 0.0
      %3273 = vmatpush1.msra.mxu0 0.0
      %3274 = vmatprep.subr.mxu0 0.0
      %3275 = vmatpush1.msra.mxu0 0.0
      %3276 = vmatprep.subr.mxu0 0.0
      %3277 = vmatpush1.msra.mxu0 0.0
      %3278 = vmatprep.subr.mxu0 0.0
      %3279 = vmatpush1.msra.mxu0 0.0
      %3280 = vmatprep.subr.mxu0 0.0
      %3281 = vmatpush1.msra.mxu0 0.0
      %3282 = vmatprep.subr.mxu0 0.0
      %3283 = vmatpush1.msra.mxu0 0.0
      %3284 = vmatprep.subr.mxu0 0.0
      %3285 = vmatpush1.msra.mxu0 0.0
      %3286 = vmatprep.subr.mxu0 0.0
      %3287 = vmatpush1.msra.mxu0 0.0
      %3288 = vmatprep.subr.mxu0 0.0
      %3289 = vmatpush1.msra.mxu0 0.0
      %3290 = vmatprep.subr.mxu0 0.0
      %3291 = vmatpush1.msra.mxu0 0.0
      %3292 = vmatprep.subr.mxu0 0.0
      %3293 = vmatpush1.msra.mxu0 0.0
      %3294 = vmatprep.subr.mxu0 0.0
      %3295 = vmatpush1.msra.mxu0 0.0
      %3296 = vmatprep.subr.mxu0 0.0
      %3297 = vmatpush1.msra.mxu0 0.0
      %3298 = vmatprep.subr.mxu0 %v3258
      %3299 = vmatpush1.msra.mxu0 %v3256
      %3300 = vmatprep.subr.mxu0 0.0
      %3301 = vmatpush2.msra.mxu0 0.0
      %3302 = vmatprep.subr.mxu0 0.0
      %3303 = vmatpush2.msra.mxu0 0.0
      %3304 = vmatprep.subr.mxu0 0.0
      %3305 = vmatpush2.msra.mxu0 0.0
      %3306 = vmatprep.subr.mxu0 0.0
      %3307 = vmatpush2.msra.mxu0 0.0
      %3308 = vmatprep.subr.mxu0 0.0
      %3309 = vmatpush2.msra.mxu0 0.0
      %3310 = vmatprep.subr.mxu0 0.0
      %3311 = vmatpush2.msra.mxu0 0.0
      %3312 = vmatprep.subr.mxu0 0.0
      %3313 = vmatpush2.msra.mxu0 0.0
      %3314 = vmatprep.subr.mxu0 0.0
      %3315 = vmatpush2.msra.mxu0 0.0
      %3316 = vmatprep.subr.mxu0 0.0
      %3317 = vmatpush2.msra.mxu0 0.0
      %3318 = vmatprep.subr.mxu0 0.0
      %3319 = vmatpush2.msra.mxu0 0.0
      %3320 = vmatprep.subr.mxu0 0.0
      %3321 = vmatpush2.msra.mxu0 0.0
      %3322 = vmatprep.subr.mxu0 0.0
      %3323 = vmatpush2.msra.mxu0 0.0
      %3324 = vmatprep.subr.mxu0 0.0
      %3325 = vmatpush2.msra.mxu0 0.0
      %3326 = vmatprep.subr.mxu0 0.0
      %3327 = vmatpush2.msra.mxu0 0.0
      %3328 = vmatprep.subr.mxu0 0.0
      %3329 = vmatpush2.msra.mxu0 0.0
      %3330 = vmatprep.subr.mxu0 0.0
      %3331 = vmatpush2.msra.mxu0 0.0
      %3332 = vmatprep.mubr.f32.mxu0 0.0
      %3333 = vmatmul.mubr.f32.gmra.mxu0 %v3209
      %v3334 = vpop.f32.mrf.mxu0
      %v3335 = vadd.f32 0.0, %v3334
      %v3336 = vpop.f32.mrf.mxu0
      %v3337 = vadd.f32 0.0, %v3336
      %3338 = vmatprep.mubr.f32.mxu0 0.0
      %3339 = vmatmul.mubr.f32.gmra.mxu0 %v3212
      %v3340 = vpop.f32.mrf.mxu0
      %v3341 = vadd.f32 0.0, %v3340
      %v3342 = vpop.f32.mrf.mxu0
      %v3343 = vadd.f32 0.0, %v3342
      %3344 = vmatprep.mubr.f32.mxu0 0.0
      %3345 = vmatmul.mubr.f32.gmra.mxu0 %v3215
      %v3346 = vpop.f32.mrf.mxu0
      %v3347 = vadd.f32 0.0, %v3346
      %v3348 = vpop.f32.mrf.mxu0
      %v3349 = vadd.f32 0.0, %v3348
      %3350 = vmatprep.mubr.f32.mxu0 0.0
      %3351 = vmatmul.mubr.f32.gmra.mxu0 %v3218
      %v3352 = vpop.f32.mrf.mxu0
      %v3353 = vadd.f32 0.0, %v3352
      %v3354 = vpop.f32.mrf.mxu0
      %v3355 = vadd.f32 0.0, %v3354
      %3356 = vmatprep.mubr.f32.mxu0 0.0
      %3357 = vmatmul.mubr.f32.gmra.mxu0 %v3221
      %v3358 = vpop.f32.mrf.mxu0
      %v3359 = vadd.f32 0.0, %v3358
      %v3360 = vpop.f32.mrf.mxu0
      %v3361 = vadd.f32 0.0, %v3360
      %3362 = vmatprep.mubr.f32.mxu0 0.0
      %3363 = vmatmul.mubr.f32.gmra.mxu0 %v3224
      %v3364 = vpop.f32.mrf.mxu0
      %v3365 = vadd.f32 0.0, %v3364
      %v3366 = vpop.f32.mrf.mxu0
      %v3367 = vadd.f32 0.0, %v3366
      %3368 = vmatprep.mubr.f32.mxu0 0.0
      %3369 = vmatmul.mubr.f32.gmra.mxu0 %v3227
      %v3370 = vpop.f32.mrf.mxu0
      %v3371 = vadd.f32 0.0, %v3370
      %v3372 = vpop.f32.mrf.mxu0
      %v3373 = vadd.f32 0.0, %v3372
      %3374 = vmatprep.mubr.f32.mxu0 0.0
      %3375 = vmatmul.mubr.f32.gmra.mxu0 %v3230
      %v3376 = vpop.f32.mrf.mxu0
      %v3377 = vadd.f32 0.0, %v3376
      %v3378 = vpop.f32.mrf.mxu0
      %v3379 = vadd.f32 0.0, %v3378
      %3380 = vmatprep.mubr.f32.mxu0 0.0
      %3381 = vmatmul.mubr.f32.gmra.mxu0 %v3233
      %v3382 = vpop.f32.mrf.mxu0
      %v3383 = vadd.f32 0.0, %v3382
      %v3384 = vpop.f32.mrf.mxu0
      %v3385 = vadd.f32 0.0, %v3384
      %3386 = vmatprep.mubr.f32.mxu0 0.0
      %3387 = vmatmul.mubr.f32.gmra.mxu0 %v3236
      %v3388 = vpop.f32.mrf.mxu0
      %v3389 = vadd.f32 0.0, %v3388
      %v3390 = vpop.f32.mrf.mxu0
      %v3391 = vadd.f32 0.0, %v3390
      %3392 = vmatprep.mubr.f32.mxu0 0.0
      %3393 = vmatmul.mubr.f32.gmra.mxu0 %v3239
      %v3394 = vpop.f32.mrf.mxu0
      %v3395 = vadd.f32 0.0, %v3394
      %v3396 = vpop.f32.mrf.mxu0
      %v3397 = vadd.f32 0.0, %v3396
      %3398 = vmatprep.mubr.f32.mxu0 0.0
      %3399 = vmatmul.mubr.f32.gmra.mxu0 %v3242
      %v3400 = vpop.f32.mrf.mxu0
      %v3401 = vadd.f32 0.0, %v3400
      %v3402 = vpop.f32.mrf.mxu0
      %v3403 = vadd.f32 0.0, %v3402
      %3404 = vmatprep.mubr.f32.mxu0 0.0
      %3405 = vmatmul.mubr.f32.gmra.mxu0 %v3245
      %v3406 = vpop.f32.mrf.mxu0
      %v3407 = vadd.f32 0.0, %v3406
      %v3408 = vpop.f32.mrf.mxu0
      %v3409 = vadd.f32 0.0, %v3408
      %3410 = vmatprep.mubr.f32.mxu0 0.0
      %3411 = vmatmul.mubr.f32.gmra.mxu0 %v3248
      %v3412 = vpop.f32.mrf.mxu0
      %v3413 = vadd.f32 0.0, %v3412
      %v3414 = vpop.f32.mrf.mxu0
      %v3415 = vadd.f32 0.0, %v3414
      %3416 = vmatprep.mubr.f32.mxu0 0.0
      %3417 = vmatmul.mubr.f32.gmra.mxu0 %v3251
      %v3418 = vpop.f32.mrf.mxu0
      %v3419 = vadd.f32 0.0, %v3418
      %v3420 = vpop.f32.mrf.mxu0
      %v3421 = vadd.f32 0.0, %v3420
      %3422 = vmatprep.mubr.f32.mxu0 0.0
      %3423 = vmatmul.mubr.f32.gmra.mxu0 %v3254
      %v3424 = vpop.f32.mrf.mxu0
      %v3425 = vadd.f32 0.0, %v3424
      %v3426 = vpop.f32.mrf.mxu0
      %v3427 = vadd.f32 0.0, %v3426
      %3428 = vdwg.mxu0
      %3429 = vmatprep.subr.mxu0 0.0
      %3430 = vmatpush1.msra.mxu0 0.0
      %3431 = vmatprep.subr.mxu0 0.0
      %3432 = vmatpush1.msra.mxu0 0.0
      %3433 = vmatprep.subr.mxu0 0.0
      %3434 = vmatpush1.msra.mxu0 0.0
      %3435 = vmatprep.subr.mxu0 0.0
      %3436 = vmatpush1.msra.mxu0 0.0
      %3437 = vmatprep.subr.mxu0 0.0
      %3438 = vmatpush1.msra.mxu0 0.0
      %3439 = vmatprep.subr.mxu0 0.0
      %3440 = vmatpush1.msra.mxu0 0.0
      %3441 = vmatprep.subr.mxu0 0.0
      %3442 = vmatpush1.msra.mxu0 0.0
      %3443 = vmatprep.subr.mxu0 0.0
      %3444 = vmatpush1.msra.mxu0 0.0
      %3445 = vmatprep.subr.mxu0 0.0
      %3446 = vmatpush1.msra.mxu0 0.0
      %3447 = vmatprep.subr.mxu0 0.0
      %3448 = vmatpush1.msra.mxu0 0.0
      %3449 = vmatprep.subr.mxu0 0.0
      %3450 = vmatpush1.msra.mxu0 0.0
      %3451 = vmatprep.subr.mxu0 0.0
      %3452 = vmatpush1.msra.mxu0 0.0
      %3453 = vmatprep.subr.mxu0 0.0
      %3454 = vmatpush1.msra.mxu0 0.0
      %3455 = vmatprep.subr.mxu0 0.0
      %3456 = vmatpush1.msra.mxu0 0.0
      %3457 = vmatprep.subr.mxu0 0.0
      %3458 = vmatpush1.msra.mxu0 0.0
      %3459 = vmatprep.subr.mxu0 %v3262
      %3460 = vmatpush1.msra.mxu0 %v3260
      %3461 = vmatprep.subr.mxu0 0.0
      %3462 = vmatpush2.msra.mxu0 0.0
      %3463 = vmatprep.subr.mxu0 0.0
      %3464 = vmatpush2.msra.mxu0 0.0
      %3465 = vmatprep.subr.mxu0 0.0
      %3466 = vmatpush2.msra.mxu0 0.0
      %3467 = vmatprep.subr.mxu0 0.0
      %3468 = vmatpush2.msra.mxu0 0.0
      %3469 = vmatprep.subr.mxu0 0.0
      %3470 = vmatpush2.msra.mxu0 0.0
      %3471 = vmatprep.subr.mxu0 0.0
      %3472 = vmatpush2.msra.mxu0 0.0
      %3473 = vmatprep.subr.mxu0 0.0
      %3474 = vmatpush2.msra.mxu0 0.0
      %3475 = vmatprep.subr.mxu0 0.0
      %3476 = vmatpush2.msra.mxu0 0.0
      %3477 = vmatprep.subr.mxu0 0.0
      %3478 = vmatpush2.msra.mxu0 0.0
      %3479 = vmatprep.subr.mxu0 0.0
      %3480 = vmatpush2.msra.mxu0 0.0
      %3481 = vmatprep.subr.mxu0 0.0
      %3482 = vmatpush2.msra.mxu0 0.0
      %3483 = vmatprep.subr.mxu0 0.0
      %3484 = vmatpush2.msra.mxu0 0.0
      %3485 = vmatprep.subr.mxu0 0.0
      %3486 = vmatpush2.msra.mxu0 0.0
      %3487 = vmatprep.subr.mxu0 0.0
      %3488 = vmatpush2.msra.mxu0 0.0
      %3489 = vmatprep.subr.mxu0 0.0
      %3490 = vmatpush2.msra.mxu0 0.0
      %3491 = vmatprep.subr.mxu0 0.0
      %3492 = vmatpush2.msra.mxu0 0.0
      %3493 = vmatprep.mubr.f32.mxu0 0.0
      %3494 = vmatmul.mubr.f32.gmra.mxu0 %v3209
      %v3495 = vpop.f32.mrf.mxu0
      %v3496 = vadd.f32 0.0, %v3495
      %v3497 = vpop.f32.mrf.mxu0
      %v3498 = vadd.f32 0.0, %v3497
      %3499 = vmatprep.mubr.f32.mxu0 0.0
      %3500 = vmatmul.mubr.f32.gmra.mxu0 %v3212
      %v3501 = vpop.f32.mrf.mxu0
      %v3502 = vadd.f32 0.0, %v3501
      %v3503 = vpop.f32.mrf.mxu0
      %v3504 = vadd.f32 0.0, %v3503
      %3505 = vmatprep.mubr.f32.mxu0 0.0
      %3506 = vmatmul.mubr.f32.gmra.mxu0 %v3215
      %v3507 = vpop.f32.mrf.mxu0
      %v3508 = vadd.f32 0.0, %v3507
      %v3509 = vpop.f32.mrf.mxu0
      %v3510 = vadd.f32 0.0, %v3509
      %3511 = vmatprep.mubr.f32.mxu0 0.0
      %3512 = vmatmul.mubr.f32.gmra.mxu0 %v3218
      %v3513 = vpop.f32.mrf.mxu0
      %v3514 = vadd.f32 0.0, %v3513
      %v3515 = vpop.f32.mrf.mxu0
      %v3516 = vadd.f32 0.0, %v3515
      %3517 = vmatprep.mubr.f32.mxu0 0.0
      %3518 = vmatmul.mubr.f32.gmra.mxu0 %v3221
      %v3519 = vpop.f32.mrf.mxu0
      %v3520 = vadd.f32 0.0, %v3519
      %v3521 = vpop.f32.mrf.mxu0
      %v3522 = vadd.f32 0.0, %v3521
      %3523 = vmatprep.mubr.f32.mxu0 0.0
      %3524 = vmatmul.mubr.f32.gmra.mxu0 %v3224
      %v3525 = vpop.f32.mrf.mxu0
      %v3526 = vadd.f32 0.0, %v3525
      %v3527 = vpop.f32.mrf.mxu0
      %v3528 = vadd.f32 0.0, %v3527
      %3529 = vmatprep.mubr.f32.mxu0 0.0
      %3530 = vmatmul.mubr.f32.gmra.mxu0 %v3227
      %v3531 = vpop.f32.mrf.mxu0
      %v3532 = vadd.f32 0.0, %v3531
      %v3533 = vpop.f32.mrf.mxu0
      %v3534 = vadd.f32 0.0, %v3533
      %3535 = vmatprep.mubr.f32.mxu0 0.0
      %3536 = vmatmul.mubr.f32.gmra.mxu0 %v3230
      %v3537 = vpop.f32.mrf.mxu0
      %v3538 = vadd.f32 0.0, %v3537
      %v3539 = vpop.f32.mrf.mxu0
      %v3540 = vadd.f32 0.0, %v3539
      %3541 = vmatprep.mubr.f32.mxu0 0.0
      %3542 = vmatmul.mubr.f32.gmra.mxu0 %v3233
      %v3543 = vpop.f32.mrf.mxu0
      %v3544 = vadd.f32 0.0, %v3543
      %v3545 = vpop.f32.mrf.mxu0
      %v3546 = vadd.f32 0.0, %v3545
      %3547 = vmatprep.mubr.f32.mxu0 0.0
      %3548 = vmatmul.mubr.f32.gmra.mxu0 %v3236
      %v3549 = vpop.f32.mrf.mxu0
      %v3550 = vadd.f32 0.0, %v3549
      %v3551 = vpop.f32.mrf.mxu0
      %v3552 = vadd.f32 0.0, %v3551
      %3553 = vmatprep.mubr.f32.mxu0 0.0
      %3554 = vmatmul.mubr.f32.gmra.mxu0 %v3239
      %v3555 = vpop.f32.mrf.mxu0
      %v3556 = vadd.f32 0.0, %v3555
      %v3557 = vpop.f32.mrf.mxu0
      %v3558 = vadd.f32 0.0, %v3557
      %3559 = vmatprep.mubr.f32.mxu0 0.0
      %3560 = vmatmul.mubr.f32.gmra.mxu0 %v3242
      %v3561 = vpop.f32.mrf.mxu0
      %v3562 = vadd.f32 0.0, %v3561
      %v3563 = vpop.f32.mrf.mxu0
      %v3564 = vadd.f32 0.0, %v3563
      %3565 = vmatprep.mubr.f32.mxu0 0.0
      %3566 = vmatmul.mubr.f32.gmra.mxu0 %v3245
      %v3567 = vpop.f32.mrf.mxu0
      %v3568 = vadd.f32 0.0, %v3567
      %v3569 = vpop.f32.mrf.mxu0
      %v3570 = vadd.f32 0.0, %v3569
      %3571 = vmatprep.mubr.f32.mxu0 0.0
      %3572 = vmatmul.mubr.f32.gmra.mxu0 %v3248
      %v3573 = vpop.f32.mrf.mxu0
      %v3574 = vadd.f32 0.0, %v3573
      %v3575 = vpop.f32.mrf.mxu0
      %v3576 = vadd.f32 0.0, %v3575
      %3577 = vmatprep.mubr.f32.mxu0 0.0
      %3578 = vmatmul.mubr.f32.gmra.mxu0 %v3251
      %v3579 = vpop.f32.mrf.mxu0
      %v3580 = vadd.f32 0.0, %v3579
      %v3581 = vpop.f32.mrf.mxu0
      %v3582 = vadd.f32 0.0, %v3581
      %3583 = vmatprep.mubr.f32.mxu0 0.0
      %3584 = vmatmul.mubr.f32.gmra.mxu0 %v3254
      %v3585 = vpop.f32.mrf.mxu0
      %v3586 = vadd.f32 0.0, %v3585
      %v3587 = vpop.f32.mrf.mxu0
      %v3588 = vadd.f32 0.0, %v3587
      %3589 = vdwg.mxu0
      %3590 = vmatprep.subr.mxu0 0.0
      %3591 = vmatpush1.msra.mxu0 0.0
      %3592 = vmatprep.subr.mxu0 0.0
      %3593 = vmatpush1.msra.mxu0 0.0
      %3594 = vmatprep.subr.mxu0 0.0
      %3595 = vmatpush1.msra.mxu0 0.0
      %3596 = vmatprep.subr.mxu0 0.0
      %3597 = vmatpush1.msra.mxu0 0.0
      %3598 = vmatprep.subr.mxu0 0.0
      %3599 = vmatpush1.msra.mxu0 0.0
      %3600 = vmatprep.subr.mxu0 0.0
      %3601 = vmatpush1.msra.mxu0 0.0
      %3602 = vmatprep.subr.mxu0 0.0
      %3603 = vmatpush1.msra.mxu0 0.0
      %3604 = vmatprep.subr.mxu0 0.0
      %3605 = vmatpush1.msra.mxu0 0.0
      %3606 = vmatprep.subr.mxu0 0.0
      %3607 = vmatpush1.msra.mxu0 0.0
      %3608 = vmatprep.subr.mxu0 0.0
      %3609 = vmatpush1.msra.mxu0 0.0
      %3610 = vmatprep.subr.mxu0 0.0
      %3611 = vmatpush1.msra.mxu0 0.0
      %3612 = vmatprep.subr.mxu0 0.0
      %3613 = vmatpush1.msra.mxu0 0.0
      %3614 = vmatprep.subr.mxu0 0.0
      %3615 = vmatpush1.msra.mxu0 0.0
      %3616 = vmatprep.subr.mxu0 0.0
      %3617 = vmatpush1.msra.mxu0 0.0
      %3618 = vmatprep.subr.mxu0 0.0
      %3619 = vmatpush1.msra.mxu0 0.0
      %3620 = vmatprep.subr.mxu0 %v3266
      %3621 = vmatpush1.msra.mxu0 %v3264
      %3622 = vmatprep.subr.mxu0 0.0
      %3623 = vmatpush2.msra.mxu0 0.0
      %3624 = vmatprep.subr.mxu0 0.0
      %3625 = vmatpush2.msra.mxu0 0.0
      %3626 = vmatprep.subr.mxu0 0.0
      %3627 = vmatpush2.msra.mxu0 0.0
      %3628 = vmatprep.subr.mxu0 0.0
      %3629 = vmatpush2.msra.mxu0 0.0
      %3630 = vmatprep.subr.mxu0 0.0
      %3631 = vmatpush2.msra.mxu0 0.0
      %3632 = vmatprep.subr.mxu0 0.0
      %3633 = vmatpush2.msra.mxu0 0.0
      %3634 = vmatprep.subr.mxu0 0.0
      %3635 = vmatpush2.msra.mxu0 0.0
      %3636 = vmatprep.subr.mxu0 0.0
      %3637 = vmatpush2.msra.mxu0 0.0
      %3638 = vmatprep.subr.mxu0 0.0
      %3639 = vmatpush2.msra.mxu0 0.0
      %3640 = vmatprep.subr.mxu0 0.0
      %3641 = vmatpush2.msra.mxu0 0.0
      %3642 = vmatprep.subr.mxu0 0.0
      %3643 = vmatpush2.msra.mxu0 0.0
      %3644 = vmatprep.subr.mxu0 0.0
      %3645 = vmatpush2.msra.mxu0 0.0
      %3646 = vmatprep.subr.mxu0 0.0
      %3647 = vmatpush2.msra.mxu0 0.0
      %3648 = vmatprep.subr.mxu0 0.0
      %3649 = vmatpush2.msra.mxu0 0.0
      %3650 = vmatprep.subr.mxu0 0.0
      %3651 = vmatpush2.msra.mxu0 0.0
      %3652 = vmatprep.subr.mxu0 0.0
      %3653 = vmatpush2.msra.mxu0 0.0
      %3654 = vmatprep.mubr.f32.mxu0 0.0
      %3655 = vmatmul.mubr.f32.gmra.mxu0 %v3209
      %v3656 = vpop.f32.mrf.mxu0
      %v3657 = vadd.f32 0.0, %v3656
      %v3658 = vpop.f32.mrf.mxu0
      %v3659 = vadd.f32 0.0, %v3658
      %3660 = vmatprep.mubr.f32.mxu0 0.0
      %3661 = vmatmul.mubr.f32.gmra.mxu0 %v3212
      %v3662 = vpop.f32.mrf.mxu0
      %v3663 = vadd.f32 0.0, %v3662
      %v3664 = vpop.f32.mrf.mxu0
      %v3665 = vadd.f32 0.0, %v3664
      %3666 = vmatprep.mubr.f32.mxu0 0.0
      %3667 = vmatmul.mubr.f32.gmra.mxu0 %v3215
      %v3668 = vpop.f32.mrf.mxu0
      %v3669 = vadd.f32 0.0, %v3668
      %v3670 = vpop.f32.mrf.mxu0
      %v3671 = vadd.f32 0.0, %v3670
      %3672 = vmatprep.mubr.f32.mxu0 0.0
      %3673 = vmatmul.mubr.f32.gmra.mxu0 %v3218
      %v3674 = vpop.f32.mrf.mxu0
      %v3675 = vadd.f32 0.0, %v3674
      %v3676 = vpop.f32.mrf.mxu0
      %v3677 = vadd.f32 0.0, %v3676
      %3678 = vmatprep.mubr.f32.mxu0 0.0
      %3679 = vmatmul.mubr.f32.gmra.mxu0 %v3221
      %v3680 = vpop.f32.mrf.mxu0
      %v3681 = vadd.f32 0.0, %v3680
      %v3682 = vpop.f32.mrf.mxu0
      %v3683 = vadd.f32 0.0, %v3682
      %3684 = vmatprep.mubr.f32.mxu0 0.0
      %3685 = vmatmul.mubr.f32.gmra.mxu0 %v3224
      %v3686 = vpop.f32.mrf.mxu0
      %v3687 = vadd.f32 0.0, %v3686
      %v3688 = vpop.f32.mrf.mxu0
      %v3689 = vadd.f32 0.0, %v3688
      %3690 = vmatprep.mubr.f32.mxu0 0.0
      %3691 = vmatmul.mubr.f32.gmra.mxu0 %v3227
      %v3692 = vpop.f32.mrf.mxu0
      %v3693 = vadd.f32 0.0, %v3692
      %v3694 = vpop.f32.mrf.mxu0
      %v3695 = vadd.f32 0.0, %v3694
      %3696 = vmatprep.mubr.f32.mxu0 0.0
      %3697 = vmatmul.mubr.f32.gmra.mxu0 %v3230
      %v3698 = vpop.f32.mrf.mxu0
      %v3699 = vadd.f32 0.0, %v3698
      %v3700 = vpop.f32.mrf.mxu0
      %v3701 = vadd.f32 0.0, %v3700
      %3702 = vmatprep.mubr.f32.mxu0 0.0
      %3703 = vmatmul.mubr.f32.gmra.mxu0 %v3233
      %v3704 = vpop.f32.mrf.mxu0
      %v3705 = vadd.f32 0.0, %v3704
      %v3706 = vpop.f32.mrf.mxu0
      %v3707 = vadd.f32 0.0, %v3706
      %3708 = vmatprep.mubr.f32.mxu0 0.0
      %3709 = vmatmul.mubr.f32.gmra.mxu0 %v3236
      %v3710 = vpop.f32.mrf.mxu0
      %v3711 = vadd.f32 0.0, %v3710
      %v3712 = vpop.f32.mrf.mxu0
      %v3713 = vadd.f32 0.0, %v3712
      %3714 = vmatprep.mubr.f32.mxu0 0.0
      %3715 = vmatmul.mubr.f32.gmra.mxu0 %v3239
      %v3716 = vpop.f32.mrf.mxu0
      %v3717 = vadd.f32 0.0, %v3716
      %v3718 = vpop.f32.mrf.mxu0
      %v3719 = vadd.f32 0.0, %v3718
      %3720 = vmatprep.mubr.f32.mxu0 0.0
      %3721 = vmatmul.mubr.f32.gmra.mxu0 %v3242
      %v3722 = vpop.f32.mrf.mxu0
      %v3723 = vadd.f32 0.0, %v3722
      %v3724 = vpop.f32.mrf.mxu0
      %v3725 = vadd.f32 0.0, %v3724
      %3726 = vmatprep.mubr.f32.mxu0 0.0
      %3727 = vmatmul.mubr.f32.gmra.mxu0 %v3245
      %v3728 = vpop.f32.mrf.mxu0
      %v3729 = vadd.f32 0.0, %v3728
      %v3730 = vpop.f32.mrf.mxu0
      %v3731 = vadd.f32 0.0, %v3730
      %3732 = vmatprep.mubr.f32.mxu0 0.0
      %3733 = vmatmul.mubr.f32.gmra.mxu0 %v3248
      %v3734 = vpop.f32.mrf.mxu0
      %v3735 = vadd.f32 0.0, %v3734
      %v3736 = vpop.f32.mrf.mxu0
      %v3737 = vadd.f32 0.0, %v3736
      %3738 = vmatprep.mubr.f32.mxu0 0.0
      %3739 = vmatmul.mubr.f32.gmra.mxu0 %v3251
      %v3740 = vpop.f32.mrf.mxu0
      %v3741 = vadd.f32 0.0, %v3740
      %v3742 = vpop.f32.mrf.mxu0
      %v3743 = vadd.f32 0.0, %v3742
      %3744 = vmatprep.mubr.f32.mxu0 0.0
      %3745 = vmatmul.mubr.f32.gmra.mxu0 %v3254
      %v3746 = vpop.f32.mrf.mxu0
      %v3747 = vadd.f32 0.0, %v3746
      %v3748 = vpop.f32.mrf.mxu0
      %v3749 = vadd.f32 0.0, %v3748
      %3750 = vdwg.mxu0
      %v3751 = vadd.f32 %v2762, %v3335
      %v3752 = vadd.f32 %v2764, %v3337
      %v3753 = vadd.f32 %v2923, %v3496
      %v3754 = vadd.f32 %v2925, %v3498
      %v3755 = vadd.f32 %v3084, %v3657
      %v3756 = vadd.f32 %v3086, %v3659
      %v3757 = vadd.f32 %v2768, %v3341
      %v3758 = vadd.f32 %v2770, %v3343
      %v3759 = vadd.f32 %v2929, %v3502
      %v3760 = vadd.f32 %v2931, %v3504
      %v3761 = vadd.f32 %v3090, %v3663
      %v3762 = vadd.f32 %v3092, %v3665
      %v3763 = vadd.f32 %v2774, %v3347
      %v3764 = vadd.f32 %v2776, %v3349
      %v3765 = vadd.f32 %v2935, %v3508
      %v3766 = vadd.f32 %v2937, %v3510
      %v3767 = vadd.f32 %v3096, %v3669
      %v3768 = vadd.f32 %v3098, %v3671
      %v3769 = vadd.f32 %v2780, %v3353
      %v3770 = vadd.f32 %v2782, %v3355
      %v3771 = vadd.f32 %v2941, %v3514
      %v3772 = vadd.f32 %v2943, %v3516
      %v3773 = vadd.f32 %v3102, %v3675
      %v3774 = vadd.f32 %v3104, %v3677
      %v3775 = vadd.f32 %v2786, %v3359
      %v3776 = vadd.f32 %v2788, %v3361
      %v3777 = vadd.f32 %v2947, %v3520
      %v3778 = vadd.f32 %v2949, %v3522
      %v3779 = vadd.f32 %v3108, %v3681
      %v3780 = vadd.f32 %v3110, %v3683
      %v3781 = vadd.f32 %v2792, %v3365
      %v3782 = vadd.f32 %v2794, %v3367
      %v3783 = vadd.f32 %v2953, %v3526
      %v3784 = vadd.f32 %v2955, %v3528
      %v3785 = vadd.f32 %v3114, %v3687
      %v3786 = vadd.f32 %v3116, %v3689
      %v3787 = vadd.f32 %v2798, %v3371
      %v3788 = vadd.f32 %v2800, %v3373
      %v3789 = vadd.f32 %v2959, %v3532
      %v3790 = vadd.f32 %v2961, %v3534
      %v3791 = vadd.f32 %v3120, %v3693
      %v3792 = vadd.f32 %v3122, %v3695
      %v3793 = vadd.f32 %v2804, %v3377
      %v3794 = vadd.f32 %v2806, %v3379
      %v3795 = vadd.f32 %v2965, %v3538
      %v3796 = vadd.f32 %v2967, %v3540
      %v3797 = vadd.f32 %v3126, %v3699
      %v3798 = vadd.f32 %v3128, %v3701
      %v3799 = vadd.f32 %v2810, %v3383
      %v3800 = vadd.f32 %v2812, %v3385
      %v3801 = vadd.f32 %v2971, %v3544
      %v3802 = vadd.f32 %v2973, %v3546
      %v3803 = vadd.f32 %v3132, %v3705
      %v3804 = vadd.f32 %v3134, %v3707
      %v3805 = vadd.f32 %v2816, %v3389
      %v3806 = vadd.f32 %v2818, %v3391
      %v3807 = vadd.f32 %v2977, %v3550
      %v3808 = vadd.f32 %v2979, %v3552
      %v3809 = vadd.f32 %v3138, %v3711
      %v3810 = vadd.f32 %v3140, %v3713
      %v3811 = vadd.f32 %v2822, %v3395
      %v3812 = vadd.f32 %v2824, %v3397
      %v3813 = vadd.f32 %v2983, %v3556
      %v3814 = vadd.f32 %v2985, %v3558
      %v3815 = vadd.f32 %v3144, %v3717
      %v3816 = vadd.f32 %v3146, %v3719
      %v3817 = vadd.f32 %v2828, %v3401
      %v3818 = vadd.f32 %v2830, %v3403
      %v3819 = vadd.f32 %v2989, %v3562
      %v3820 = vadd.f32 %v2991, %v3564
      %v3821 = vadd.f32 %v3150, %v3723
      %v3822 = vadd.f32 %v3152, %v3725
      %v3823 = vadd.f32 %v2834, %v3407
      %v3824 = vadd.f32 %v2836, %v3409
      %v3825 = vadd.f32 %v2995, %v3568
      %v3826 = vadd.f32 %v2997, %v3570
      %v3827 = vadd.f32 %v3156, %v3729
      %v3828 = vadd.f32 %v3158, %v3731
      %v3829 = vadd.f32 %v2840, %v3413
      %v3830 = vadd.f32 %v2842, %v3415
      %v3831 = vadd.f32 %v3001, %v3574
      %v3832 = vadd.f32 %v3003, %v3576
      %v3833 = vadd.f32 %v3162, %v3735
      %v3834 = vadd.f32 %v3164, %v3737
      %v3835 = vadd.f32 %v2846, %v3419
      %v3836 = vadd.f32 %v2848, %v3421
      %v3837 = vadd.f32 %v3007, %v3580
      %v3838 = vadd.f32 %v3009, %v3582
      %v3839 = vadd.f32 %v3168, %v3741
      %v3840 = vadd.f32 %v3170, %v3743
      %v3841 = vadd.f32 %v2852, %v3425
      %v3842 = vadd.f32 %v2854, %v3427
      %v3843 = vadd.f32 %v3013, %v3586
      %v3844 = vadd.f32 %v3015, %v3588
      %v3845 = vadd.f32 %v3174, %v3747
      %v3846 = vadd.f32 %v3176, %v3749
      %v3847 = vmul.f32 %v3751, %v1297
      %v3848 = vmul.f32 %v3752, %v1298
      %v3849 = vmul.f32 %v3757, %v1299
      %v3850 = vmul.f32 %v3758, %v1300
      %v3851 = vmul.f32 %v3763, %v1301
      %v3852 = vmul.f32 %v3764, %v1302
      %v3853 = vmul.f32 %v3769, %v1303
      %v3854 = vmul.f32 %v3770, %v1304
      %v3855 = vmul.f32 %v3775, %v1305
      %v3856 = vmul.f32 %v3776, %v1306
      %v3857 = vmul.f32 %v3781, %v1307
      %v3858 = vmul.f32 %v3782, %v1308
      %v3859 = vmul.f32 %v3787, %v1309
      %v3860 = vmul.f32 %v3788, %v1310
      %v3861 = vmul.f32 %v3793, %v1311
      %v3862 = vmul.f32 %v3794, %v1312
      %v3863 = vmul.f32 %v3799, %v1313
      %v3864 = vmul.f32 %v3800, %v1314
      %v3865 = vmul.f32 %v3805, %v1315
      %v3866 = vmul.f32 %v3806, %v1316
      %v3867 = vmul.f32 %v3811, %v1317
      %v3868 = vmul.f32 %v3812, %v1318
      %v3869 = vmul.f32 %v3817, %v1319
      %v3870 = vmul.f32 %v3818, %v1320
      %v3871 = vmul.f32 %v3823, %v1321
      %v3872 = vmul.f32 %v3824, %v1322
      %v3873 = vmul.f32 %v3829, %v1323
      %v3874 = vmul.f32 %v3830, %v1324
      %v3875 = vmul.f32 %v3835, %v1325
      %v3876 = vmul.f32 %v3836, %v1326
      %v3877 = vmul.f32 %v3841, %v1327
      %v3878 = vmul.f32 %v3842, %v1328
      %v3879 = vadd.f32 %v3847, %v3848
      %v3880 = vadd.f32 %v3849, %v3850
      %v3881 = vadd.f32 %v3851, %v3852
      %v3882 = vadd.f32 %v3853, %v3854
      %v3883 = vadd.f32 %v3855, %v3856
      %v3884 = vadd.f32 %v3857, %v3858
      %v3885 = vadd.f32 %v3859, %v3860
      %v3886 = vadd.f32 %v3861, %v3862
      %v3887 = vadd.f32 %v3863, %v3864
      %v3888 = vadd.f32 %v3865, %v3866
      %v3889 = vadd.f32 %v3867, %v3868
      %v3890 = vadd.f32 %v3869, %v3870
      %v3891 = vadd.f32 %v3871, %v3872
      %v3892 = vadd.f32 %v3873, %v3874
      %v3893 = vadd.f32 %v3875, %v3876
      %v3894 = vadd.f32 %v3877, %v3878
      %3895 = vrot.lane.b32.xlu0 %v3879, 64
      %v3896 = vpop.permute.xlu0 %3895
      %3897 = vrot.lane.b32.xlu0 %v3880, 64
      %v3898 = vpop.permute.xlu0 %3897
      %3899 = vrot.lane.b32.xlu0 %v3881, 64
      %v3900 = vpop.permute.xlu0 %3899
      %3901 = vrot.lane.b32.xlu0 %v3882, 64
      %v3902 = vpop.permute.xlu0 %3901
      %3903 = vrot.lane.b32.xlu0 %v3883, 64
      %v3904 = vpop.permute.xlu0 %3903
      %3905 = vrot.lane.b32.xlu0 %v3884, 64
      %v3906 = vpop.permute.xlu0 %3905
      %3907 = vrot.lane.b32.xlu0 %v3885, 64
      %v3908 = vpop.permute.xlu0 %3907
      %3909 = vrot.lane.b32.xlu0 %v3886, 64
      %v3910 = vpop.permute.xlu0 %3909
      %3911 = vrot.lane.b32.xlu0 %v3887, 64
      %v3912 = vpop.permute.xlu0 %3911
      %3913 = vrot.lane.b32.xlu0 %v3888, 64
      %v3914 = vpop.permute.xlu0 %3913
      %3915 = vrot.lane.b32.xlu0 %v3889, 64
      %v3916 = vpop.permute.xlu0 %3915
      %3917 = vrot.lane.b32.xlu0 %v3890, 64
      %v3918 = vpop.permute.xlu0 %3917
      %3919 = vrot.lane.b32.xlu0 %v3891, 64
      %v3920 = vpop.permute.xlu0 %3919
      %3921 = vrot.lane.b32.xlu0 %v3892, 64
      %v3922 = vpop.permute.xlu0 %3921
      %3923 = vrot.lane.b32.xlu0 %v3893, 64
      %v3924 = vpop.permute.xlu0 %3923
      %3925 = vrot.lane.b32.xlu0 %v3894, 64
      %v3926 = vpop.permute.xlu0 %3925
      %v3927 = vadd.f32 %v3879, %v3896
      %v3928 = vadd.f32 %v3880, %v3898
      %v3929 = vadd.f32 %v3881, %v3900
      %v3930 = vadd.f32 %v3882, %v3902
      %v3931 = vadd.f32 %v3883, %v3904
      %v3932 = vadd.f32 %v3884, %v3906
      %v3933 = vadd.f32 %v3885, %v3908
      %v3934 = vadd.f32 %v3886, %v3910
      %v3935 = vadd.f32 %v3887, %v3912
      %v3936 = vadd.f32 %v3888, %v3914
      %v3937 = vadd.f32 %v3889, %v3916
      %v3938 = vadd.f32 %v3890, %v3918
      %v3939 = vadd.f32 %v3891, %v3920
      %v3940 = vadd.f32 %v3892, %v3922
      %v3941 = vadd.f32 %v3893, %v3924
      %v3942 = vadd.f32 %v3894, %v3926
      %3943 = vrot.lane.b32.xlu0 %v3927, 32
      %v3944 = vpop.permute.xlu0 %3943
      %3945 = vrot.lane.b32.xlu0 %v3928, 32
      %v3946 = vpop.permute.xlu0 %3945
      %3947 = vrot.lane.b32.xlu0 %v3929, 32
      %v3948 = vpop.permute.xlu0 %3947
      %3949 = vrot.lane.b32.xlu0 %v3930, 32
      %v3950 = vpop.permute.xlu0 %3949
      %3951 = vrot.lane.b32.xlu0 %v3931, 32
      %v3952 = vpop.permute.xlu0 %3951
      %3953 = vrot.lane.b32.xlu0 %v3932, 32
      %v3954 = vpop.permute.xlu0 %3953
      %3955 = vrot.lane.b32.xlu0 %v3933, 32
      %v3956 = vpop.permute.xlu0 %3955
      %3957 = vrot.lane.b32.xlu0 %v3934, 32
      %v3958 = vpop.permute.xlu0 %3957
      %3959 = vrot.lane.b32.xlu0 %v3935, 32
      %v3960 = vpop.permute.xlu0 %3959
      %3961 = vrot.lane.b32.xlu0 %v3936, 32
      %v3962 = vpop.permute.xlu0 %3961
      %3963 = vrot.lane.b32.xlu0 %v3937, 32
      %v3964 = vpop.permute.xlu0 %3963
      %3965 = vrot.lane.b32.xlu0 %v3938, 32
      %v3966 = vpop.permute.xlu0 %3965
      %3967 = vrot.lane.b32.xlu0 %v3939, 32
      %v3968 = vpop.permute.xlu0 %3967
      %3969 = vrot.lane.b32.xlu0 %v3940, 32
      %v3970 = vpop.permute.xlu0 %3969
      %3971 = vrot.lane.b32.xlu0 %v3941, 32
      %v3972 = vpop.permute.xlu0 %3971
      %3973 = vrot.lane.b32.xlu0 %v3942, 32
      %v3974 = vpop.permute.xlu0 %3973
      %v3975 = vadd.f32 %v3927, %v3944
      %v3976 = vadd.f32 %v3928, %v3946
      %v3977 = vadd.f32 %v3929, %v3948
      %v3978 = vadd.f32 %v3930, %v3950
      %v3979 = vadd.f32 %v3931, %v3952
      %v3980 = vadd.f32 %v3932, %v3954
      %v3981 = vadd.f32 %v3933, %v3956
      %v3982 = vadd.f32 %v3934, %v3958
      %v3983 = vadd.f32 %v3935, %v3960
      %v3984 = vadd.f32 %v3936, %v3962
      %v3985 = vadd.f32 %v3937, %v3964
      %v3986 = vadd.f32 %v3938, %v3966
      %v3987 = vadd.f32 %v3939, %v3968
      %v3988 = vadd.f32 %v3940, %v3970
      %v3989 = vadd.f32 %v3941, %v3972
      %v3990 = vadd.f32 %v3942, %v3974
      %vm3991 = vcmask 261120
      %3992 = vst.msk [vmem:[#allocation2] sm:$0xff] %vm3991, %v3975
      %3993 = vst.msk [vmem:[#allocation2 + $0x8] sm:$0xff] %vm3991, %v3976
      %3994 = vst.msk [vmem:[#allocation2 + $0x10] sm:$0xff] %vm3991, %v3977
      %3995 = vst.msk [vmem:[#allocation2 + $0x18] sm:$0xff] %vm3991, %v3978
      %3996 = vst.msk [vmem:[#allocation2 + $0x20] sm:$0xff] %vm3991, %v3979
      %3997 = vst.msk [vmem:[#allocation2 + $0x28] sm:$0xff] %vm3991, %v3980
      %3998 = vst.msk [vmem:[#allocation2 + $0x30] sm:$0xff] %vm3991, %v3981
      %3999 = vst.msk [vmem:[#allocation2 + $0x38] sm:$0xff] %vm3991, %v3982
      %4000 = vst.msk [vmem:[#allocation2 + $0x40] sm:$0xff] %vm3991, %v3983
      %4001 = vst.msk [vmem:[#allocation2 + $0x48] sm:$0xff] %vm3991, %v3984
      %4002 = vst.msk [vmem:[#allocation2 + $0x50] sm:$0xff] %vm3991, %v3985
      %4003 = vst.msk [vmem:[#allocation2 + $0x58] sm:$0xff] %vm3991, %v3986
      %4004 = vst.msk [vmem:[#allocation2 + $0x60] sm:$0xff] %vm3991, %v3987
      %4005 = vst.msk [vmem:[#allocation2 + $0x68] sm:$0xff] %vm3991, %v3988
      %4006 = vst.msk [vmem:[#allocation2 + $0x70] sm:$0xff] %vm3991, %v3989
      %4007 = vst.msk [vmem:[#allocation2 + $0x78] sm:$0xff] %vm3991, %v3990
      %v4008 = vmul.f32 %v3753, %v1297
      %v4009 = vmul.f32 %v3754, %v1298
      %v4010 = vmul.f32 %v3759, %v1299
      %v4011 = vmul.f32 %v3760, %v1300
      %v4012 = vmul.f32 %v3765, %v1301
      %v4013 = vmul.f32 %v3766, %v1302
      %v4014 = vmul.f32 %v3771, %v1303
      %v4015 = vmul.f32 %v3772, %v1304
      %v4016 = vmul.f32 %v3777, %v1305
      %v4017 = vmul.f32 %v3778, %v1306
      %v4018 = vmul.f32 %v3783, %v1307
      %v4019 = vmul.f32 %v3784, %v1308
      %v4020 = vmul.f32 %v3789, %v1309
      %v4021 = vmul.f32 %v3790, %v1310
      %v4022 = vmul.f32 %v3795, %v1311
      %v4023 = vmul.f32 %v3796, %v1312
      %v4024 = vmul.f32 %v3801, %v1313
      %v4025 = vmul.f32 %v3802, %v1314
      %v4026 = vmul.f32 %v3807, %v1315
      %v4027 = vmul.f32 %v3808, %v1316
      %v4028 = vmul.f32 %v3813, %v1317
      %v4029 = vmul.f32 %v3814, %v1318
      %v4030 = vmul.f32 %v3819, %v1319
      %v4031 = vmul.f32 %v3820, %v1320
      %v4032 = vmul.f32 %v3825, %v1321
      %v4033 = vmul.f32 %v3826, %v1322
      %v4034 = vmul.f32 %v3831, %v1323
      %v4035 = vmul.f32 %v3832, %v1324
      %v4036 = vmul.f32 %v3837, %v1325
      %v4037 = vmul.f32 %v3838, %v1326
      %v4038 = vmul.f32 %v3843, %v1327
      %v4039 = vmul.f32 %v3844, %v1328
      %v4040 = vadd.f32 %v4008, %v4009
      %v4041 = vadd.f32 %v4010, %v4011
      %v4042 = vadd.f32 %v4012, %v4013
      %v4043 = vadd.f32 %v4014, %v4015
      %v4044 = vadd.f32 %v4016, %v4017
      %v4045 = vadd.f32 %v4018, %v4019
      %v4046 = vadd.f32 %v4020, %v4021
      %v4047 = vadd.f32 %v4022, %v4023
      %v4048 = vadd.f32 %v4024, %v4025
      %v4049 = vadd.f32 %v4026, %v4027
      %v4050 = vadd.f32 %v4028, %v4029
      %v4051 = vadd.f32 %v4030, %v4031
      %v4052 = vadd.f32 %v4032, %v4033
      %v4053 = vadd.f32 %v4034, %v4035
      %v4054 = vadd.f32 %v4036, %v4037
      %v4055 = vadd.f32 %v4038, %v4039
      %4056 = vrot.lane.b32.xlu0 %v4040, 64
      %v4057 = vpop.permute.xlu0 %4056
      %4058 = vrot.lane.b32.xlu0 %v4041, 64
      %v4059 = vpop.permute.xlu0 %4058
      %4060 = vrot.lane.b32.xlu0 %v4042, 64
      %v4061 = vpop.permute.xlu0 %4060
      %4062 = vrot.lane.b32.xlu0 %v4043, 64
      %v4063 = vpop.permute.xlu0 %4062
      %4064 = vrot.lane.b32.xlu0 %v4044, 64
      %v4065 = vpop.permute.xlu0 %4064
      %4066 = vrot.lane.b32.xlu0 %v4045, 64
      %v4067 = vpop.permute.xlu0 %4066
      %4068 = vrot.lane.b32.xlu0 %v4046, 64
      %v4069 = vpop.permute.xlu0 %4068
      %4070 = vrot.lane.b32.xlu0 %v4047, 64
      %v4071 = vpop.permute.xlu0 %4070
      %4072 = vrot.lane.b32.xlu0 %v4048, 64
      %v4073 = vpop.permute.xlu0 %4072
      %4074 = vrot.lane.b32.xlu0 %v4049, 64
      %v4075 = vpop.permute.xlu0 %4074
      %4076 = vrot.lane.b32.xlu0 %v4050, 64
      %v4077 = vpop.permute.xlu0 %4076
      %4078 = vrot.lane.b32.xlu0 %v4051, 64
      %v4079 = vpop.permute.xlu0 %4078
      %4080 = vrot.lane.b32.xlu0 %v4052, 64
      %v4081 = vpop.permute.xlu0 %4080
      %4082 = vrot.lane.b32.xlu0 %v4053, 64
      %v4083 = vpop.permute.xlu0 %4082
      %4084 = vrot.lane.b32.xlu0 %v4054, 64
      %v4085 = vpop.permute.xlu0 %4084
      %4086 = vrot.lane.b32.xlu0 %v4055, 64
      %v4087 = vpop.permute.xlu0 %4086
      %v4088 = vadd.f32 %v4040, %v4057
      %v4089 = vadd.f32 %v4041, %v4059
      %v4090 = vadd.f32 %v4042, %v4061
      %v4091 = vadd.f32 %v4043, %v4063
      %v4092 = vadd.f32 %v4044, %v4065
      %v4093 = vadd.f32 %v4045, %v4067
      %v4094 = vadd.f32 %v4046, %v4069
      %v4095 = vadd.f32 %v4047, %v4071
      %v4096 = vadd.f32 %v4048, %v4073
      %v4097 = vadd.f32 %v4049, %v4075
      %v4098 = vadd.f32 %v4050, %v4077
      %v4099 = vadd.f32 %v4051, %v4079
      %v4100 = vadd.f32 %v4052, %v4081
      %v4101 = vadd.f32 %v4053, %v4083
      %v4102 = vadd.f32 %v4054, %v4085
      %v4103 = vadd.f32 %v4055, %v4087
      %4104 = vrot.lane.b32.xlu0 %v4088, 32
      %v4105 = vpop.permute.xlu0 %4104
      %4106 = vrot.lane.b32.xlu0 %v4089, 32
      %v4107 = vpop.permute.xlu0 %4106
      %4108 = vrot.lane.b32.xlu0 %v4090, 32
      %v4109 = vpop.permute.xlu0 %4108
      %4110 = vrot.lane.b32.xlu0 %v4091, 32
      %v4111 = vpop.permute.xlu0 %4110
      %4112 = vrot.lane.b32.xlu0 %v4092, 32
      %v4113 = vpop.permute.xlu0 %4112
      %4114 = vrot.lane.b32.xlu0 %v4093, 32
      %v4115 = vpop.permute.xlu0 %4114
      %4116 = vrot.lane.b32.xlu0 %v4094, 32
      %v4117 = vpop.permute.xlu0 %4116
      %4118 = vrot.lane.b32.xlu0 %v4095, 32
      %v4119 = vpop.permute.xlu0 %4118
      %4120 = vrot.lane.b32.xlu0 %v4096, 32
      %v4121 = vpop.permute.xlu0 %4120
      %4122 = vrot.lane.b32.xlu0 %v4097, 32
      %v4123 = vpop.permute.xlu0 %4122
      %4124 = vrot.lane.b32.xlu0 %v4098, 32
      %v4125 = vpop.permute.xlu0 %4124
      %4126 = vrot.lane.b32.xlu0 %v4099, 32
      %v4127 = vpop.permute.xlu0 %4126
      %4128 = vrot.lane.b32.xlu0 %v4100, 32
      %v4129 = vpop.permute.xlu0 %4128
      %4130 = vrot.lane.b32.xlu0 %v4101, 32
      %v4131 = vpop.permute.xlu0 %4130
      %4132 = vrot.lane.b32.xlu0 %v4102, 32
      %v4133 = vpop.permute.xlu0 %4132
      %4134 = vrot.lane.b32.xlu0 %v4103, 32
      %v4135 = vpop.permute.xlu0 %4134
      %v4136 = vadd.f32 %v4088, %v4105
      %v4137 = vadd.f32 %v4089, %v4107
      %v4138 = vadd.f32 %v4090, %v4109
      %v4139 = vadd.f32 %v4091, %v4111
      %v4140 = vadd.f32 %v4092, %v4113
      %v4141 = vadd.f32 %v4093, %v4115
      %v4142 = vadd.f32 %v4094, %v4117
      %v4143 = vadd.f32 %v4095, %v4119
      %v4144 = vadd.f32 %v4096, %v4121
      %v4145 = vadd.f32 %v4097, %v4123
      %v4146 = vadd.f32 %v4098, %v4125
      %v4147 = vadd.f32 %v4099, %v4127
      %v4148 = vadd.f32 %v4100, %v4129
      %v4149 = vadd.f32 %v4101, %v4131
      %v4150 = vadd.f32 %v4102, %v4133
      %v4151 = vadd.f32 %v4103, %v4135
      %4152 = vst.msk [vmem:[#allocation3] sm:$0xff] %vm3991, %v4136
      %4153 = vst.msk [vmem:[#allocation3 + $0x8] sm:$0xff] %vm3991, %v4137
      %4154 = vst.msk [vmem:[#allocation3 + $0x10] sm:$0xff] %vm3991, %v4138
      %4155 = vst.msk [vmem:[#allocation3 + $0x18] sm:$0xff] %vm3991, %v4139
      %4156 = vst.msk [vmem:[#allocation3 + $0x20] sm:$0xff] %vm3991, %v4140
      %4157 = vst.msk [vmem:[#allocation3 + $0x28] sm:$0xff] %vm3991, %v4141
      %4158 = vst.msk [vmem:[#allocation3 + $0x30] sm:$0xff] %vm3991, %v4142
      %4159 = vst.msk [vmem:[#allocation3 + $0x38] sm:$0xff] %vm3991, %v4143
      %4160 = vst.msk [vmem:[#allocation3 + $0x40] sm:$0xff] %vm3991, %v4144
      %4161 = vst.msk [vmem:[#allocation3 + $0x48] sm:$0xff] %vm3991, %v4145
      %4162 = vst.msk [vmem:[#allocation3 + $0x50] sm:$0xff] %vm3991, %v4146
      %4163 = vst.msk [vmem:[#allocation3 + $0x58] sm:$0xff] %vm3991, %v4147
      %4164 = vst.msk [vmem:[#allocation3 + $0x60] sm:$0xff] %vm3991, %v4148
      %4165 = vst.msk [vmem:[#allocation3 + $0x68] sm:$0xff] %vm3991, %v4149
      %4166 = vst.msk [vmem:[#allocation3 + $0x70] sm:$0xff] %vm3991, %v4150
      %4167 = vst.msk [vmem:[#allocation3 + $0x78] sm:$0xff] %vm3991, %v4151
      %v4168 = vmul.f32 %v3755, %v1297
      %v4169 = vmul.f32 %v3756, %v1298
      %v4170 = vmul.f32 %v3761, %v1299
      %v4171 = vmul.f32 %v3762, %v1300
      %v4172 = vmul.f32 %v3767, %v1301
      %v4173 = vmul.f32 %v3768, %v1302
      %v4174 = vmul.f32 %v3773, %v1303
      %v4175 = vmul.f32 %v3774, %v1304
      %v4176 = vmul.f32 %v3779, %v1305
      %v4177 = vmul.f32 %v3780, %v1306
      %v4178 = vmul.f32 %v3785, %v1307
      %v4179 = vmul.f32 %v3786, %v1308
      %v4180 = vmul.f32 %v3791, %v1309
      %v4181 = vmul.f32 %v3792, %v1310
      %v4182 = vmul.f32 %v3797, %v1311
      %v4183 = vmul.f32 %v3798, %v1312
      %v4184 = vmul.f32 %v3803, %v1313
      %v4185 = vmul.f32 %v3804, %v1314
      %v4186 = vmul.f32 %v3809, %v1315
      %v4187 = vmul.f32 %v3810, %v1316
      %v4188 = vmul.f32 %v3815, %v1317
      %v4189 = vmul.f32 %v3816, %v1318
      %v4190 = vmul.f32 %v3821, %v1319
      %v4191 = vmul.f32 %v3822, %v1320
      %v4192 = vmul.f32 %v3827, %v1321
      %v4193 = vmul.f32 %v3828, %v1322
      %v4194 = vmul.f32 %v3833, %v1323
      %v4195 = vmul.f32 %v3834, %v1324
      %v4196 = vmul.f32 %v3839, %v1325
      %v4197 = vmul.f32 %v3840, %v1326
      %v4198 = vmul.f32 %v3845, %v1327
      %v4199 = vmul.f32 %v3846, %v1328
      %v4200 = vadd.f32 %v4168, %v4169
      %v4201 = vadd.f32 %v4170, %v4171
      %v4202 = vadd.f32 %v4172, %v4173
      %v4203 = vadd.f32 %v4174, %v4175
      %v4204 = vadd.f32 %v4176, %v4177
      %v4205 = vadd.f32 %v4178, %v4179
      %v4206 = vadd.f32 %v4180, %v4181
      %v4207 = vadd.f32 %v4182, %v4183
      %v4208 = vadd.f32 %v4184, %v4185
      %v4209 = vadd.f32 %v4186, %v4187
      %v4210 = vadd.f32 %v4188, %v4189
      %v4211 = vadd.f32 %v4190, %v4191
      %v4212 = vadd.f32 %v4192, %v4193
      %v4213 = vadd.f32 %v4194, %v4195
      %v4214 = vadd.f32 %v4196, %v4197
      %v4215 = vadd.f32 %v4198, %v4199
      %4216 = vrot.lane.b32.xlu0 %v4200, 64
      %v4217 = vpop.permute.xlu0 %4216
      %4218 = vrot.lane.b32.xlu0 %v4201, 64
      %v4219 = vpop.permute.xlu0 %4218
      %4220 = vrot.lane.b32.xlu0 %v4202, 64
      %v4221 = vpop.permute.xlu0 %4220
      %4222 = vrot.lane.b32.xlu0 %v4203, 64
      %v4223 = vpop.permute.xlu0 %4222
      %4224 = vrot.lane.b32.xlu0 %v4204, 64
      %v4225 = vpop.permute.xlu0 %4224
      %4226 = vrot.lane.b32.xlu0 %v4205, 64
      %v4227 = vpop.permute.xlu0 %4226
      %4228 = vrot.lane.b32.xlu0 %v4206, 64
      %v4229 = vpop.permute.xlu0 %4228
      %4230 = vrot.lane.b32.xlu0 %v4207, 64
      %v4231 = vpop.permute.xlu0 %4230
      %4232 = vrot.lane.b32.xlu0 %v4208, 64
      %v4233 = vpop.permute.xlu0 %4232
      %4234 = vrot.lane.b32.xlu0 %v4209, 64
      %v4235 = vpop.permute.xlu0 %4234
      %4236 = vrot.lane.b32.xlu0 %v4210, 64
      %v4237 = vpop.permute.xlu0 %4236
      %4238 = vrot.lane.b32.xlu0 %v4211, 64
      %v4239 = vpop.permute.xlu0 %4238
      %4240 = vrot.lane.b32.xlu0 %v4212, 64
      %v4241 = vpop.permute.xlu0 %4240
      %4242 = vrot.lane.b32.xlu0 %v4213, 64
      %v4243 = vpop.permute.xlu0 %4242
      %4244 = vrot.lane.b32.xlu0 %v4214, 64
      %v4245 = vpop.permute.xlu0 %4244
      %4246 = vrot.lane.b32.xlu0 %v4215, 64
      %v4247 = vpop.permute.xlu0 %4246
      %v4248 = vadd.f32 %v4200, %v4217
      %v4249 = vadd.f32 %v4201, %v4219
      %v4250 = vadd.f32 %v4202, %v4221
      %v4251 = vadd.f32 %v4203, %v4223
      %v4252 = vadd.f32 %v4204, %v4225
      %v4253 = vadd.f32 %v4205, %v4227
      %v4254 = vadd.f32 %v4206, %v4229
      %v4255 = vadd.f32 %v4207, %v4231
      %v4256 = vadd.f32 %v4208, %v4233
      %v4257 = vadd.f32 %v4209, %v4235
      %v4258 = vadd.f32 %v4210, %v4237
      %v4259 = vadd.f32 %v4211, %v4239
      %v4260 = vadd.f32 %v4212, %v4241
      %v4261 = vadd.f32 %v4213, %v4243
      %v4262 = vadd.f32 %v4214, %v4245
      %v4263 = vadd.f32 %v4215, %v4247
      %4264 = vrot.lane.b32.xlu0 %v4248, 32
      %v4265 = vpop.permute.xlu0 %4264
      %4266 = vrot.lane.b32.xlu0 %v4249, 32
      %v4267 = vpop.permute.xlu0 %4266
      %4268 = vrot.lane.b32.xlu0 %v4250, 32
      %v4269 = vpop.permute.xlu0 %4268
      %4270 = vrot.lane.b32.xlu0 %v4251, 32
      %v4271 = vpop.permute.xlu0 %4270
      %4272 = vrot.lane.b32.xlu0 %v4252, 32
      %v4273 = vpop.permute.xlu0 %4272
      %4274 = vrot.lane.b32.xlu0 %v4253, 32
      %v4275 = vpop.permute.xlu0 %4274
      %4276 = vrot.lane.b32.xlu0 %v4254, 32
      %v4277 = vpop.permute.xlu0 %4276
      %4278 = vrot.lane.b32.xlu0 %v4255, 32
      %v4279 = vpop.permute.xlu0 %4278
      %4280 = vrot.lane.b32.xlu0 %v4256, 32
      %v4281 = vpop.permute.xlu0 %4280
      %4282 = vrot.lane.b32.xlu0 %v4257, 32
      %v4283 = vpop.permute.xlu0 %4282
      %4284 = vrot.lane.b32.xlu0 %v4258, 32
      %v4285 = vpop.permute.xlu0 %4284
      %4286 = vrot.lane.b32.xlu0 %v4259, 32
      %v4287 = vpop.permute.xlu0 %4286
      %4288 = vrot.lane.b32.xlu0 %v4260, 32
      %v4289 = vpop.permute.xlu0 %4288
      %4290 = vrot.lane.b32.xlu0 %v4261, 32
      %v4291 = vpop.permute.xlu0 %4290
      %4292 = vrot.lane.b32.xlu0 %v4262, 32
      %v4293 = vpop.permute.xlu0 %4292
      %4294 = vrot.lane.b32.xlu0 %v4263, 32
      %v4295 = vpop.permute.xlu0 %4294
      %v4296 = vadd.f32 %v4248, %v4265
      %v4297 = vadd.f32 %v4249, %v4267
      %v4298 = vadd.f32 %v4250, %v4269
      %v4299 = vadd.f32 %v4251, %v4271
      %v4300 = vadd.f32 %v4252, %v4273
      %v4301 = vadd.f32 %v4253, %v4275
      %v4302 = vadd.f32 %v4254, %v4277
      %v4303 = vadd.f32 %v4255, %v4279
      %v4304 = vadd.f32 %v4256, %v4281
      %v4305 = vadd.f32 %v4257, %v4283
      %v4306 = vadd.f32 %v4258, %v4285
      %v4307 = vadd.f32 %v4259, %v4287
      %v4308 = vadd.f32 %v4260, %v4289
      %v4309 = vadd.f32 %v4261, %v4291
      %v4310 = vadd.f32 %v4262, %v4293
      %v4311 = vadd.f32 %v4263, %v4295
      %4312 = vst.msk [vmem:[#allocation4] sm:$0xff] %vm3991, %v4296
      %4313 = vst.msk [vmem:[#allocation4 + $0x8] sm:$0xff] %vm3991, %v4297
      %4314 = vst.msk [vmem:[#allocation4 + $0x10] sm:$0xff] %vm3991, %v4298
      %4315 = vst.msk [vmem:[#allocation4 + $0x18] sm:$0xff] %vm3991, %v4299
      %4316 = vst.msk [vmem:[#allocation4 + $0x20] sm:$0xff] %vm3991, %v4300
      %4317 = vst.msk [vmem:[#allocation4 + $0x28] sm:$0xff] %vm3991, %v4301
      %4318 = vst.msk [vmem:[#allocation4 + $0x30] sm:$0xff] %vm3991, %v4302
      %4319 = vst.msk [vmem:[#allocation4 + $0x38] sm:$0xff] %vm3991, %v4303
      %4320 = vst.msk [vmem:[#allocation4 + $0x40] sm:$0xff] %vm3991, %v4304
      %4321 = vst.msk [vmem:[#allocation4 + $0x48] sm:$0xff] %vm3991, %v4305
      %4322 = vst.msk [vmem:[#allocation4 + $0x50] sm:$0xff] %vm3991, %v4306
      %4323 = vst.msk [vmem:[#allocation4 + $0x58] sm:$0xff] %vm3991, %v4307
      %4324 = vst.msk [vmem:[#allocation4 + $0x60] sm:$0xff] %vm3991, %v4308
      %4325 = vst.msk [vmem:[#allocation4 + $0x68] sm:$0xff] %vm3991, %v4309
      %4326 = vst.msk [vmem:[#allocation4 + $0x70] sm:$0xff] %vm3991, %v4310
      %4327 = vst.msk [vmem:[#allocation4 + $0x78] sm:$0xff] %vm3991, %v4311
      loop: start=0, step=1, limit=8
      $region101: #{astgcrn_forward.1} parent=99 // loop_pre_header
        _
      $region102: #{astgcrn_forward.1} parent=99 // loop_header
        %s4329 = sphi 0, %s4333
        %p4330 = scmp.ge.s32.totalorder %s4329, 8
        %v4334 = vphi 0.0, %v5435
        %v4335 = vphi 0.0, %v5436
        %v4336 = vphi 0.0, %v7412
        %v4337 = vphi 0.0, %v7413
      $region103: #{astgcrn_forward.1} parent=99 // loop_header_branch
        %4332 = sbr.rel (%p4330) target = $region107
      $region104: #{astgcrn_forward.1} parent=99 // loop_body
        %s4338 = smul.u32 %s4329, 16
        %s4339 = scalar_lea.vmem [#allocation2], %s4338
        %v4340 = vld [vmem:[%s4339] sm:$0xff]
        %v4341 = vld [vmem:[%s4339 + $0x8] sm:$0xff]
        %s4342 = scalar_lea.vmem [#allocation3], %s4338
        %v4343 = vld [vmem:[%s4342] sm:$0xff]
        %v4344 = vld [vmem:[%s4342 + $0x8] sm:$0xff]
        %s4345 = scalar_lea.vmem [#allocation4], %s4338
        %v4346 = vld [vmem:[%s4345] sm:$0xff]
        %v4347 = vld [vmem:[%s4345 + $0x8] sm:$0xff]
        %4348 = vmatprep.subr.mxu0 0.0
        %4349 = vmatpush1.msra.mxu0 0.0
        %4350 = vmatprep.subr.mxu0 0.0
        %4351 = vmatpush1.msra.mxu0 0.0
        %4352 = vmatprep.subr.mxu0 0.0
        %4353 = vmatpush1.msra.mxu0 0.0
        %4354 = vmatprep.subr.mxu0 0.0
        %4355 = vmatpush1.msra.mxu0 0.0
        %4356 = vmatprep.subr.mxu0 0.0
        %4357 = vmatpush1.msra.mxu0 0.0
        %4358 = vmatprep.subr.mxu0 0.0
        %4359 = vmatpush1.msra.mxu0 0.0
        %4360 = vmatprep.subr.mxu0 0.0
        %4361 = vmatpush1.msra.mxu0 0.0
        %4362 = vmatprep.subr.mxu0 0.0
        %4363 = vmatpush1.msra.mxu0 0.0
        %4364 = vmatprep.subr.mxu0 0.0
        %4365 = vmatpush1.msra.mxu0 0.0
        %4366 = vmatprep.subr.mxu0 0.0
        %4367 = vmatpush1.msra.mxu0 0.0
        %4368 = vmatprep.subr.mxu0 0.0
        %4369 = vmatpush1.msra.mxu0 0.0
        %4370 = vmatprep.subr.mxu0 0.0
        %4371 = vmatpush1.msra.mxu0 0.0
        %4372 = vmatprep.subr.mxu0 0.0
        %4373 = vmatpush1.msra.mxu0 0.0
        %4374 = vmatprep.subr.mxu0 0.0
        %4375 = vmatpush1.msra.mxu0 0.0
        %4376 = vmatprep.subr.mxu0 0.0
        %4377 = vmatpush1.msra.mxu0 %v4335
        %4378 = vmatprep.subr.mxu0 0.0
        %4379 = vmatpush1.msra.mxu0 %v4334
        %4380 = vmatprep.subr.mxu0 0.0
        %4381 = vmatpush2.msra.mxu0 0.0
        %4382 = vmatprep.subr.mxu0 0.0
        %4383 = vmatpush2.msra.mxu0 0.0
        %4384 = vmatprep.subr.mxu0 0.0
        %4385 = vmatpush2.msra.mxu0 0.0
        %4386 = vmatprep.subr.mxu0 0.0
        %4387 = vmatpush2.msra.mxu0 0.0
        %4388 = vmatprep.subr.mxu0 0.0
        %4389 = vmatpush2.msra.mxu0 0.0
        %4390 = vmatprep.subr.mxu0 0.0
        %4391 = vmatpush2.msra.mxu0 0.0
        %4392 = vmatprep.subr.mxu0 0.0
        %4393 = vmatpush2.msra.mxu0 0.0
        %4394 = vmatprep.subr.mxu0 0.0
        %4395 = vmatpush2.msra.mxu0 0.0
        %4396 = vmatprep.subr.mxu0 0.0
        %4397 = vmatpush2.msra.mxu0 0.0
        %4398 = vmatprep.subr.mxu0 0.0
        %4399 = vmatpush2.msra.mxu0 0.0
        %4400 = vmatprep.subr.mxu0 0.0
        %4401 = vmatpush2.msra.mxu0 0.0
        %4402 = vmatprep.subr.mxu0 0.0
        %4403 = vmatpush2.msra.mxu0 0.0
        %4404 = vmatprep.subr.mxu0 0.0
        %4405 = vmatpush2.msra.mxu0 0.0
        %4406 = vmatprep.subr.mxu0 0.0
        %4407 = vmatpush2.msra.mxu0 0.0
        %4408 = vmatprep.subr.mxu0 0.0
        %4409 = vmatpush2.msra.mxu0 0.0
        %4410 = vmatprep.subr.mxu0 0.0
        %4411 = vmatpush2.msra.mxu0 0.0
        %4412 = vmatprep.mubr.f32.mxu0 0.0
        %4413 = vmatmul.mubr.f32.gmra.mxu0 %v753
        %v4414 = vpop.f32.mrf.mxu0
        %v4415 = vadd.f32 0.0, %v4414
        %v4416 = vpop.f32.mrf.mxu0
        %4417 = vmatprep.mubr.f32.mxu0 0.0
        %4418 = vmatmul.mubr.f32.gmra.mxu0 %v756
        %v4419 = vpop.f32.mrf.mxu0
        %v4420 = vadd.f32 0.0, %v4419
        %v4421 = vpop.f32.mrf.mxu0
        %4422 = vmatprep.mubr.f32.mxu0 0.0
        %4423 = vmatmul.mubr.f32.gmra.mxu0 %v1346
        %v4424 = vpop.f32.mrf.mxu0
        %v4425 = vadd.f32 0.0, %v4424
        %v4426 = vpop.f32.mrf.mxu0
        %4427 = vmatprep.mubr.f32.mxu0 0.0
        %4428 = vmatmul.mubr.f32.gmra.mxu0 %v1349
        %v4429 = vpop.f32.mrf.mxu0
        %v4430 = vadd.f32 0.0, %v4429
        %v4431 = vpop.f32.mrf.mxu0
        %4432 = vdwg.mxu0
        %v4433 = vld [vmem:[%s5] sm:$0xff]
        %v4434 = vld [vmem:[%s5 + $0x8] sm:$0xff]
        %v4435 = vld [vmem:[%s5 + $0x10] sm:$0xff]
        %v4436 = vld [vmem:[%s5 + $0x18] sm:$0xff]
        %v4437 = vld [vmem:[%s5 + $0x20] sm:$0xff]
        %v4438 = vld [vmem:[%s5 + $0x28] sm:$0xff]
        %v4439 = vld [vmem:[%s5 + $0x30] sm:$0xff]
        %v4440 = vld [vmem:[%s5 + $0x38] sm:$0xff]
        %v4441 = vld [vmem:[%s5 + $0x40] sm:$0xff]
        %v4442 = vld [vmem:[%s5 + $0x48] sm:$0xff]
        %v4443 = vld [vmem:[%s5 + $0x50] sm:$0xff]
        %v4444 = vld [vmem:[%s5 + $0x58] sm:$0xff]
        %v4445 = vld [vmem:[%s5 + $0x60] sm:$0xff]
        %v4446 = vld [vmem:[%s5 + $0x68] sm:$0xff]
        %v4447 = vld [vmem:[%s5 + $0x70] sm:$0xff]
        %v4448 = vld [vmem:[%s5 + $0x78] sm:$0xff]
        %s4449 = scalar_lea.vmem %s5, 128
        %v4450 = vld [vmem:[%s4449] sm:$0xff]
        %v4451 = vld [vmem:[%s4449 + $0x8] sm:$0xff]
        %v4452 = vld [vmem:[%s4449 + $0x10] sm:$0xff]
        %v4453 = vld [vmem:[%s4449 + $0x18] sm:$0xff]
        %v4454 = vld [vmem:[%s4449 + $0x20] sm:$0xff]
        %v4455 = vld [vmem:[%s4449 + $0x28] sm:$0xff]
        %v4456 = vld [vmem:[%s4449 + $0x30] sm:$0xff]
        %v4457 = vld [vmem:[%s4449 + $0x38] sm:$0xff]
        %v4458 = vld [vmem:[%s4449 + $0x40] sm:$0xff]
        %v4459 = vld [vmem:[%s4449 + $0x48] sm:$0xff]
        %v4460 = vld [vmem:[%s4449 + $0x50] sm:$0xff]
        %v4461 = vld [vmem:[%s4449 + $0x58] sm:$0xff]
        %v4462 = vld [vmem:[%s4449 + $0x60] sm:$0xff]
        %v4463 = vld [vmem:[%s4449 + $0x68] sm:$0xff]
        %v4464 = vld [vmem:[%s4449 + $0x70] sm:$0xff]
        %v4465 = vld [vmem:[%s4449 + $0x78] sm:$0xff]
        %v4467 = vsel %vm3991, %v4415, 0
        %v4470 = vsel %vm3991, %v4420, 0
        %4472 = vmatprep.subr.mxu0 0.0
        %4473 = vmatpush1.msra.mxu0 0.0
        %4474 = vmatprep.subr.mxu0 0.0
        %4475 = vmatpush1.msra.mxu0 0.0
        %4476 = vmatprep.subr.mxu0 0.0
        %4477 = vmatpush1.msra.mxu0 0.0
        %4478 = vmatprep.subr.mxu0 0.0
        %4479 = vmatpush1.msra.mxu0 0.0
        %4480 = vmatprep.subr.mxu0 0.0
        %4481 = vmatpush1.msra.mxu0 0.0
        %4482 = vmatprep.subr.mxu0 0.0
        %4483 = vmatpush1.msra.mxu0 0.0
        %4484 = vmatprep.subr.mxu0 0.0
        %4485 = vmatpush1.msra.mxu0 0.0
        %4486 = vmatprep.subr.mxu0 0.0
        %4487 = vmatpush1.msra.mxu0 0.0
        %4488 = vmatprep.subr.mxu0 0.0
        %4489 = vmatpush1.msra.mxu0 0.0
        %4490 = vmatprep.subr.mxu0 0.0
        %4491 = vmatpush1.msra.mxu0 0.0
        %4492 = vmatprep.subr.mxu0 0.0
        %4493 = vmatpush1.msra.mxu0 0.0
        %4494 = vmatprep.subr.mxu0 0.0
        %4495 = vmatpush1.msra.mxu0 0.0
        %4496 = vmatprep.subr.mxu0 %v4463
        %4497 = vmatpush1.msra.mxu0 %v4462
        %4498 = vmatprep.subr.mxu0 %v4459
        %4499 = vmatpush1.msra.mxu0 %v4458
        %4500 = vmatprep.subr.mxu0 %v4455
        %4501 = vmatpush1.msra.mxu0 %v4454
        %4502 = vmatprep.subr.mxu0 %v4451
        %4503 = vmatpush1.msra.mxu0 %v4450
        %4504 = vmatprep.subr.mxu0 0.0
        %4505 = vmatpush2.msra.mxu0 0.0
        %4506 = vmatprep.subr.mxu0 0.0
        %4507 = vmatpush2.msra.mxu0 0.0
        %4508 = vmatprep.subr.mxu0 0.0
        %4509 = vmatpush2.msra.mxu0 0.0
        %4510 = vmatprep.subr.mxu0 0.0
        %4511 = vmatpush2.msra.mxu0 0.0
        %4512 = vmatprep.subr.mxu0 0.0
        %4513 = vmatpush2.msra.mxu0 0.0
        %4514 = vmatprep.subr.mxu0 0.0
        %4515 = vmatpush2.msra.mxu0 0.0
        %4516 = vmatprep.subr.mxu0 0.0
        %4517 = vmatpush2.msra.mxu0 0.0
        %4518 = vmatprep.subr.mxu0 0.0
        %4519 = vmatpush2.msra.mxu0 0.0
        %4520 = vmatprep.subr.mxu0 0.0
        %4521 = vmatpush2.msra.mxu0 0.0
        %4522 = vmatprep.subr.mxu0 0.0
        %4523 = vmatpush2.msra.mxu0 0.0
        %4524 = vmatprep.subr.mxu0 0.0
        %4525 = vmatpush2.msra.mxu0 0.0
        %4526 = vmatprep.subr.mxu0 0.0
        %4527 = vmatpush2.msra.mxu0 0.0
        %4528 = vmatprep.subr.mxu0 0.0
        %4529 = vmatpush2.msra.mxu0 0.0
        %4530 = vmatprep.subr.mxu0 0.0
        %4531 = vmatpush2.msra.mxu0 0.0
        %4532 = vmatprep.subr.mxu0 0.0
        %4533 = vmatpush2.msra.mxu0 0.0
        %4534 = vmatprep.subr.mxu0 0.0
        %4535 = vmatpush2.msra.mxu0 0.0
        %4536 = vmatprep.mubr.f32.mxu0 0.0
        %4537 = vmatmul.mubr.f32.gmra.mxu0 %v4467
        %v4538 = vpop.f32.mrf.mxu0
        %v4539 = vadd.f32 0.0, %v4538
        %v4540 = vpop.f32.mrf.mxu0
        %v4541 = vadd.f32 0.0, %v4540
        %4542 = vmatprep.mubr.f32.mxu0 0.0
        %4543 = vmatmul.mubr.f32.gmra.mxu0 %v4470
        %v4544 = vpop.f32.mrf.mxu0
        %v4545 = vadd.f32 0.0, %v4544
        %v4546 = vpop.f32.mrf.mxu0
        %v4547 = vadd.f32 0.0, %v4546
        %4548 = vdwg.mxu0
        %4549 = vmatprep.subr.mxu0 0.0
        %4550 = vmatpush1.msra.mxu0 0.0
        %4551 = vmatprep.subr.mxu0 0.0
        %4552 = vmatpush1.msra.mxu0 0.0
        %4553 = vmatprep.subr.mxu0 0.0
        %4554 = vmatpush1.msra.mxu0 0.0
        %4555 = vmatprep.subr.mxu0 0.0
        %4556 = vmatpush1.msra.mxu0 0.0
        %4557 = vmatprep.subr.mxu0 0.0
        %4558 = vmatpush1.msra.mxu0 0.0
        %4559 = vmatprep.subr.mxu0 0.0
        %4560 = vmatpush1.msra.mxu0 0.0
        %4561 = vmatprep.subr.mxu0 0.0
        %4562 = vmatpush1.msra.mxu0 0.0
        %4563 = vmatprep.subr.mxu0 0.0
        %4564 = vmatpush1.msra.mxu0 0.0
        %4565 = vmatprep.subr.mxu0 0.0
        %4566 = vmatpush1.msra.mxu0 0.0
        %4567 = vmatprep.subr.mxu0 0.0
        %4568 = vmatpush1.msra.mxu0 0.0
        %4569 = vmatprep.subr.mxu0 0.0
        %4570 = vmatpush1.msra.mxu0 0.0
        %4571 = vmatprep.subr.mxu0 0.0
        %4572 = vmatpush1.msra.mxu0 0.0
        %4573 = vmatprep.subr.mxu0 %v4465
        %4574 = vmatpush1.msra.mxu0 %v4464
        %4575 = vmatprep.subr.mxu0 %v4461
        %4576 = vmatpush1.msra.mxu0 %v4460
        %4577 = vmatprep.subr.mxu0 %v4457
        %4578 = vmatpush1.msra.mxu0 %v4456
        %4579 = vmatprep.subr.mxu0 %v4453
        %4580 = vmatpush1.msra.mxu0 %v4452
        %4581 = vmatprep.subr.mxu0 0.0
        %4582 = vmatpush2.msra.mxu0 0.0
        %4583 = vmatprep.subr.mxu0 0.0
        %4584 = vmatpush2.msra.mxu0 0.0
        %4585 = vmatprep.subr.mxu0 0.0
        %4586 = vmatpush2.msra.mxu0 0.0
        %4587 = vmatprep.subr.mxu0 0.0
        %4588 = vmatpush2.msra.mxu0 0.0
        %4589 = vmatprep.subr.mxu0 0.0
        %4590 = vmatpush2.msra.mxu0 0.0
        %4591 = vmatprep.subr.mxu0 0.0
        %4592 = vmatpush2.msra.mxu0 0.0
        %4593 = vmatprep.subr.mxu0 0.0
        %4594 = vmatpush2.msra.mxu0 0.0
        %4595 = vmatprep.subr.mxu0 0.0
        %4596 = vmatpush2.msra.mxu0 0.0
        %4597 = vmatprep.subr.mxu0 0.0
        %4598 = vmatpush2.msra.mxu0 0.0
        %4599 = vmatprep.subr.mxu0 0.0
        %4600 = vmatpush2.msra.mxu0 0.0
        %4601 = vmatprep.subr.mxu0 0.0
        %4602 = vmatpush2.msra.mxu0 0.0
        %4603 = vmatprep.subr.mxu0 0.0
        %4604 = vmatpush2.msra.mxu0 0.0
        %4605 = vmatprep.subr.mxu0 0.0
        %4606 = vmatpush2.msra.mxu0 0.0
        %4607 = vmatprep.subr.mxu0 0.0
        %4608 = vmatpush2.msra.mxu0 0.0
        %4609 = vmatprep.subr.mxu0 0.0
        %4610 = vmatpush2.msra.mxu0 0.0
        %4611 = vmatprep.subr.mxu0 0.0
        %4612 = vmatpush2.msra.mxu0 0.0
        %4613 = vmatprep.mubr.f32.mxu0 0.0
        %4614 = vmatmul.mubr.f32.gmra.mxu0 %v4467
        %v4615 = vpop.f32.mrf.mxu0
        %v4616 = vadd.f32 0.0, %v4615
        %v4617 = vpop.f32.mrf.mxu0
        %v4618 = vadd.f32 0.0, %v4617
        %4619 = vmatprep.mubr.f32.mxu0 0.0
        %4620 = vmatmul.mubr.f32.gmra.mxu0 %v4470
        %v4621 = vpop.f32.mrf.mxu0
        %v4622 = vadd.f32 0.0, %v4621
        %v4623 = vpop.f32.mrf.mxu0
        %v4624 = vadd.f32 0.0, %v4623
        %4625 = vdwg.mxu0
        %v4627 = vsel %vm3991, %v4334, 0
        %v4630 = vsel %vm3991, %v4335, 0
        %4632 = vmatprep.subr.mxu0 0.0
        %4633 = vmatpush1.msra.mxu0 0.0
        %4634 = vmatprep.subr.mxu0 0.0
        %4635 = vmatpush1.msra.mxu0 0.0
        %4636 = vmatprep.subr.mxu0 0.0
        %4637 = vmatpush1.msra.mxu0 0.0
        %4638 = vmatprep.subr.mxu0 0.0
        %4639 = vmatpush1.msra.mxu0 0.0
        %4640 = vmatprep.subr.mxu0 0.0
        %4641 = vmatpush1.msra.mxu0 0.0
        %4642 = vmatprep.subr.mxu0 0.0
        %4643 = vmatpush1.msra.mxu0 0.0
        %4644 = vmatprep.subr.mxu0 0.0
        %4645 = vmatpush1.msra.mxu0 0.0
        %4646 = vmatprep.subr.mxu0 0.0
        %4647 = vmatpush1.msra.mxu0 0.0
        %4648 = vmatprep.subr.mxu0 0.0
        %4649 = vmatpush1.msra.mxu0 0.0
        %4650 = vmatprep.subr.mxu0 0.0
        %4651 = vmatpush1.msra.mxu0 0.0
        %4652 = vmatprep.subr.mxu0 0.0
        %4653 = vmatpush1.msra.mxu0 0.0
        %4654 = vmatprep.subr.mxu0 0.0
        %4655 = vmatpush1.msra.mxu0 0.0
        %4656 = vmatprep.subr.mxu0 %v4446
        %4657 = vmatpush1.msra.mxu0 %v4445
        %4658 = vmatprep.subr.mxu0 %v4442
        %4659 = vmatpush1.msra.mxu0 %v4441
        %4660 = vmatprep.subr.mxu0 %v4438
        %4661 = vmatpush1.msra.mxu0 %v4437
        %4662 = vmatprep.subr.mxu0 %v4434
        %4663 = vmatpush1.msra.mxu0 %v4433
        %4664 = vmatprep.subr.mxu0 0.0
        %4665 = vmatpush2.msra.mxu0 0.0
        %4666 = vmatprep.subr.mxu0 0.0
        %4667 = vmatpush2.msra.mxu0 0.0
        %4668 = vmatprep.subr.mxu0 0.0
        %4669 = vmatpush2.msra.mxu0 0.0
        %4670 = vmatprep.subr.mxu0 0.0
        %4671 = vmatpush2.msra.mxu0 0.0
        %4672 = vmatprep.subr.mxu0 0.0
        %4673 = vmatpush2.msra.mxu0 0.0
        %4674 = vmatprep.subr.mxu0 0.0
        %4675 = vmatpush2.msra.mxu0 0.0
        %4676 = vmatprep.subr.mxu0 0.0
        %4677 = vmatpush2.msra.mxu0 0.0
        %4678 = vmatprep.subr.mxu0 0.0
        %4679 = vmatpush2.msra.mxu0 0.0
        %4680 = vmatprep.subr.mxu0 0.0
        %4681 = vmatpush2.msra.mxu0 0.0
        %4682 = vmatprep.subr.mxu0 0.0
        %4683 = vmatpush2.msra.mxu0 0.0
        %4684 = vmatprep.subr.mxu0 0.0
        %4685 = vmatpush2.msra.mxu0 0.0
        %4686 = vmatprep.subr.mxu0 0.0
        %4687 = vmatpush2.msra.mxu0 0.0
        %4688 = vmatprep.subr.mxu0 0.0
        %4689 = vmatpush2.msra.mxu0 0.0
        %4690 = vmatprep.subr.mxu0 0.0
        %4691 = vmatpush2.msra.mxu0 0.0
        %4692 = vmatprep.subr.mxu0 0.0
        %4693 = vmatpush2.msra.mxu0 0.0
        %4694 = vmatprep.subr.mxu0 0.0
        %4695 = vmatpush2.msra.mxu0 0.0
        %4696 = vmatprep.mubr.f32.mxu0 0.0
        %4697 = vmatmul.mubr.f32.gmra.mxu0 %v4627
        %v4698 = vpop.f32.mrf.mxu0
        %v4699 = vadd.f32 %v4539, %v4698
        %v4700 = vpop.f32.mrf.mxu0
        %v4701 = vadd.f32 %v4541, %v4700
        %4702 = vmatprep.mubr.f32.mxu0 0.0
        %4703 = vmatmul.mubr.f32.gmra.mxu0 %v4630
        %v4704 = vpop.f32.mrf.mxu0
        %v4705 = vadd.f32 %v4545, %v4704
        %v4706 = vpop.f32.mrf.mxu0
        %v4707 = vadd.f32 %v4547, %v4706
        %4708 = vdwg.mxu0
        %4709 = vmatprep.subr.mxu0 0.0
        %4710 = vmatpush1.msra.mxu0 0.0
        %4711 = vmatprep.subr.mxu0 0.0
        %4712 = vmatpush1.msra.mxu0 0.0
        %4713 = vmatprep.subr.mxu0 0.0
        %4714 = vmatpush1.msra.mxu0 0.0
        %4715 = vmatprep.subr.mxu0 0.0
        %4716 = vmatpush1.msra.mxu0 0.0
        %4717 = vmatprep.subr.mxu0 0.0
        %4718 = vmatpush1.msra.mxu0 0.0
        %4719 = vmatprep.subr.mxu0 0.0
        %4720 = vmatpush1.msra.mxu0 0.0
        %4721 = vmatprep.subr.mxu0 0.0
        %4722 = vmatpush1.msra.mxu0 0.0
        %4723 = vmatprep.subr.mxu0 0.0
        %4724 = vmatpush1.msra.mxu0 0.0
        %4725 = vmatprep.subr.mxu0 0.0
        %4726 = vmatpush1.msra.mxu0 0.0
        %4727 = vmatprep.subr.mxu0 0.0
        %4728 = vmatpush1.msra.mxu0 0.0
        %4729 = vmatprep.subr.mxu0 0.0
        %4730 = vmatpush1.msra.mxu0 0.0
        %4731 = vmatprep.subr.mxu0 0.0
        %4732 = vmatpush1.msra.mxu0 0.0
        %4733 = vmatprep.subr.mxu0 %v4448
        %4734 = vmatpush1.msra.mxu0 %v4447
        %4735 = vmatprep.subr.mxu0 %v4444
        %4736 = vmatpush1.msra.mxu0 %v4443
        %4737 = vmatprep.subr.mxu0 %v4440
        %4738 = vmatpush1.msra.mxu0 %v4439
        %4739 = vmatprep.subr.mxu0 %v4436
        %4740 = vmatpush1.msra.mxu0 %v4435
        %4741 = vmatprep.subr.mxu0 0.0
        %4742 = vmatpush2.msra.mxu0 0.0
        %4743 = vmatprep.subr.mxu0 0.0
        %4744 = vmatpush2.msra.mxu0 0.0
        %4745 = vmatprep.subr.mxu0 0.0
        %4746 = vmatpush2.msra.mxu0 0.0
        %4747 = vmatprep.subr.mxu0 0.0
        %4748 = vmatpush2.msra.mxu0 0.0
        %4749 = vmatprep.subr.mxu0 0.0
        %4750 = vmatpush2.msra.mxu0 0.0
        %4751 = vmatprep.subr.mxu0 0.0
        %4752 = vmatpush2.msra.mxu0 0.0
        %4753 = vmatprep.subr.mxu0 0.0
        %4754 = vmatpush2.msra.mxu0 0.0
        %4755 = vmatprep.subr.mxu0 0.0
        %4756 = vmatpush2.msra.mxu0 0.0
        %4757 = vmatprep.subr.mxu0 0.0
        %4758 = vmatpush2.msra.mxu0 0.0
        %4759 = vmatprep.subr.mxu0 0.0
        %4760 = vmatpush2.msra.mxu0 0.0
        %4761 = vmatprep.subr.mxu0 0.0
        %4762 = vmatpush2.msra.mxu0 0.0
        %4763 = vmatprep.subr.mxu0 0.0
        %4764 = vmatpush2.msra.mxu0 0.0
        %4765 = vmatprep.subr.mxu0 0.0
        %4766 = vmatpush2.msra.mxu0 0.0
        %4767 = vmatprep.subr.mxu0 0.0
        %4768 = vmatpush2.msra.mxu0 0.0
        %4769 = vmatprep.subr.mxu0 0.0
        %4770 = vmatpush2.msra.mxu0 0.0
        %4771 = vmatprep.subr.mxu0 0.0
        %4772 = vmatpush2.msra.mxu0 0.0
        %4773 = vmatprep.mubr.f32.mxu0 0.0
        %4774 = vmatmul.mubr.f32.gmra.mxu0 %v4627
        %v4775 = vpop.f32.mrf.mxu0
        %v4776 = vadd.f32 %v4616, %v4775
        %v4777 = vpop.f32.mrf.mxu0
        %v4778 = vadd.f32 %v4618, %v4777
        %4779 = vmatprep.mubr.f32.mxu0 0.0
        %4780 = vmatmul.mubr.f32.gmra.mxu0 %v4630
        %v4781 = vpop.f32.mrf.mxu0
        %v4782 = vadd.f32 %v4622, %v4781
        %v4783 = vpop.f32.mrf.mxu0
        %v4784 = vadd.f32 %v4624, %v4783
        %4785 = vdwg.mxu0
        %s4786 = scalar_lea.vmem %s5, 256
        %v4787 = vld [vmem:[%s4786] sm:$0xff]
        %v4788 = vld [vmem:[%s4786 + $0x8] sm:$0xff]
        %v4789 = vld [vmem:[%s4786 + $0x10] sm:$0xff]
        %v4790 = vld [vmem:[%s4786 + $0x18] sm:$0xff]
        %v4791 = vld [vmem:[%s4786 + $0x20] sm:$0xff]
        %v4792 = vld [vmem:[%s4786 + $0x28] sm:$0xff]
        %v4793 = vld [vmem:[%s4786 + $0x30] sm:$0xff]
        %v4794 = vld [vmem:[%s4786 + $0x38] sm:$0xff]
        %v4795 = vld [vmem:[%s4786 + $0x40] sm:$0xff]
        %v4796 = vld [vmem:[%s4786 + $0x48] sm:$0xff]
        %v4797 = vld [vmem:[%s4786 + $0x50] sm:$0xff]
        %v4798 = vld [vmem:[%s4786 + $0x58] sm:$0xff]
        %v4799 = vld [vmem:[%s4786 + $0x60] sm:$0xff]
        %v4800 = vld [vmem:[%s4786 + $0x68] sm:$0xff]
        %v4801 = vld [vmem:[%s4786 + $0x70] sm:$0xff]
        %v4802 = vld [vmem:[%s4786 + $0x78] sm:$0xff]
        %v4804 = vsel %vm3991, %v4425, 0
        %v4807 = vsel %vm3991, %v4430, 0
        %4809 = vmatprep.subr.mxu0 0.0
        %4810 = vmatpush1.msra.mxu0 0.0
        %4811 = vmatprep.subr.mxu0 0.0
        %4812 = vmatpush1.msra.mxu0 0.0
        %4813 = vmatprep.subr.mxu0 0.0
        %4814 = vmatpush1.msra.mxu0 0.0
        %4815 = vmatprep.subr.mxu0 0.0
        %4816 = vmatpush1.msra.mxu0 0.0
        %4817 = vmatprep.subr.mxu0 0.0
        %4818 = vmatpush1.msra.mxu0 0.0
        %4819 = vmatprep.subr.mxu0 0.0
        %4820 = vmatpush1.msra.mxu0 0.0
        %4821 = vmatprep.subr.mxu0 0.0
        %4822 = vmatpush1.msra.mxu0 0.0
        %4823 = vmatprep.subr.mxu0 0.0
        %4824 = vmatpush1.msra.mxu0 0.0
        %4825 = vmatprep.subr.mxu0 0.0
        %4826 = vmatpush1.msra.mxu0 0.0
        %4827 = vmatprep.subr.mxu0 0.0
        %4828 = vmatpush1.msra.mxu0 0.0
        %4829 = vmatprep.subr.mxu0 0.0
        %4830 = vmatpush1.msra.mxu0 0.0
        %4831 = vmatprep.subr.mxu0 0.0
        %4832 = vmatpush1.msra.mxu0 0.0
        %4833 = vmatprep.subr.mxu0 %v4800
        %4834 = vmatpush1.msra.mxu0 %v4799
        %4835 = vmatprep.subr.mxu0 %v4796
        %4836 = vmatpush1.msra.mxu0 %v4795
        %4837 = vmatprep.subr.mxu0 %v4792
        %4838 = vmatpush1.msra.mxu0 %v4791
        %4839 = vmatprep.subr.mxu0 %v4788
        %4840 = vmatpush1.msra.mxu0 %v4787
        %4841 = vmatprep.subr.mxu0 0.0
        %4842 = vmatpush2.msra.mxu0 0.0
        %4843 = vmatprep.subr.mxu0 0.0
        %4844 = vmatpush2.msra.mxu0 0.0
        %4845 = vmatprep.subr.mxu0 0.0
        %4846 = vmatpush2.msra.mxu0 0.0
        %4847 = vmatprep.subr.mxu0 0.0
        %4848 = vmatpush2.msra.mxu0 0.0
        %4849 = vmatprep.subr.mxu0 0.0
        %4850 = vmatpush2.msra.mxu0 0.0
        %4851 = vmatprep.subr.mxu0 0.0
        %4852 = vmatpush2.msra.mxu0 0.0
        %4853 = vmatprep.subr.mxu0 0.0
        %4854 = vmatpush2.msra.mxu0 0.0
        %4855 = vmatprep.subr.mxu0 0.0
        %4856 = vmatpush2.msra.mxu0 0.0
        %4857 = vmatprep.subr.mxu0 0.0
        %4858 = vmatpush2.msra.mxu0 0.0
        %4859 = vmatprep.subr.mxu0 0.0
        %4860 = vmatpush2.msra.mxu0 0.0
        %4861 = vmatprep.subr.mxu0 0.0
        %4862 = vmatpush2.msra.mxu0 0.0
        %4863 = vmatprep.subr.mxu0 0.0
        %4864 = vmatpush2.msra.mxu0 0.0
        %4865 = vmatprep.subr.mxu0 0.0
        %4866 = vmatpush2.msra.mxu0 0.0
        %4867 = vmatprep.subr.mxu0 0.0
        %4868 = vmatpush2.msra.mxu0 0.0
        %4869 = vmatprep.subr.mxu0 0.0
        %4870 = vmatpush2.msra.mxu0 0.0
        %4871 = vmatprep.subr.mxu0 0.0
        %4872 = vmatpush2.msra.mxu0 0.0
        %4873 = vmatprep.mubr.f32.mxu0 0.0
        %4874 = vmatmul.mubr.f32.gmra.mxu0 %v4804
        %v4875 = vpop.f32.mrf.mxu0
        %v4876 = vadd.f32 0.0, %v4875
        %v4877 = vpop.f32.mrf.mxu0
        %v4878 = vadd.f32 0.0, %v4877
        %4879 = vmatprep.mubr.f32.mxu0 0.0
        %4880 = vmatmul.mubr.f32.gmra.mxu0 %v4807
        %v4881 = vpop.f32.mrf.mxu0
        %v4882 = vadd.f32 0.0, %v4881
        %v4883 = vpop.f32.mrf.mxu0
        %v4884 = vadd.f32 0.0, %v4883
        %4885 = vdwg.mxu0
        %4886 = vmatprep.subr.mxu0 0.0
        %4887 = vmatpush1.msra.mxu0 0.0
        %4888 = vmatprep.subr.mxu0 0.0
        %4889 = vmatpush1.msra.mxu0 0.0
        %4890 = vmatprep.subr.mxu0 0.0
        %4891 = vmatpush1.msra.mxu0 0.0
        %4892 = vmatprep.subr.mxu0 0.0
        %4893 = vmatpush1.msra.mxu0 0.0
        %4894 = vmatprep.subr.mxu0 0.0
        %4895 = vmatpush1.msra.mxu0 0.0
        %4896 = vmatprep.subr.mxu0 0.0
        %4897 = vmatpush1.msra.mxu0 0.0
        %4898 = vmatprep.subr.mxu0 0.0
        %4899 = vmatpush1.msra.mxu0 0.0
        %4900 = vmatprep.subr.mxu0 0.0
        %4901 = vmatpush1.msra.mxu0 0.0
        %4902 = vmatprep.subr.mxu0 0.0
        %4903 = vmatpush1.msra.mxu0 0.0
        %4904 = vmatprep.subr.mxu0 0.0
        %4905 = vmatpush1.msra.mxu0 0.0
        %4906 = vmatprep.subr.mxu0 0.0
        %4907 = vmatpush1.msra.mxu0 0.0
        %4908 = vmatprep.subr.mxu0 0.0
        %4909 = vmatpush1.msra.mxu0 0.0
        %4910 = vmatprep.subr.mxu0 %v4802
        %4911 = vmatpush1.msra.mxu0 %v4801
        %4912 = vmatprep.subr.mxu0 %v4798
        %4913 = vmatpush1.msra.mxu0 %v4797
        %4914 = vmatprep.subr.mxu0 %v4794
        %4915 = vmatpush1.msra.mxu0 %v4793
        %4916 = vmatprep.subr.mxu0 %v4790
        %4917 = vmatpush1.msra.mxu0 %v4789
        %4918 = vmatprep.subr.mxu0 0.0
        %4919 = vmatpush2.msra.mxu0 0.0
        %4920 = vmatprep.subr.mxu0 0.0
        %4921 = vmatpush2.msra.mxu0 0.0
        %4922 = vmatprep.subr.mxu0 0.0
        %4923 = vmatpush2.msra.mxu0 0.0
        %4924 = vmatprep.subr.mxu0 0.0
        %4925 = vmatpush2.msra.mxu0 0.0
        %4926 = vmatprep.subr.mxu0 0.0
        %4927 = vmatpush2.msra.mxu0 0.0
        %4928 = vmatprep.subr.mxu0 0.0
        %4929 = vmatpush2.msra.mxu0 0.0
        %4930 = vmatprep.subr.mxu0 0.0
        %4931 = vmatpush2.msra.mxu0 0.0
        %4932 = vmatprep.subr.mxu0 0.0
        %4933 = vmatpush2.msra.mxu0 0.0
        %4934 = vmatprep.subr.mxu0 0.0
        %4935 = vmatpush2.msra.mxu0 0.0
        %4936 = vmatprep.subr.mxu0 0.0
        %4937 = vmatpush2.msra.mxu0 0.0
        %4938 = vmatprep.subr.mxu0 0.0
        %4939 = vmatpush2.msra.mxu0 0.0
        %4940 = vmatprep.subr.mxu0 0.0
        %4941 = vmatpush2.msra.mxu0 0.0
        %4942 = vmatprep.subr.mxu0 0.0
        %4943 = vmatpush2.msra.mxu0 0.0
        %4944 = vmatprep.subr.mxu0 0.0
        %4945 = vmatpush2.msra.mxu0 0.0
        %4946 = vmatprep.subr.mxu0 0.0
        %4947 = vmatpush2.msra.mxu0 0.0
        %4948 = vmatprep.subr.mxu0 0.0
        %4949 = vmatpush2.msra.mxu0 0.0
        %4950 = vmatprep.mubr.f32.mxu0 0.0
        %4951 = vmatmul.mubr.f32.gmra.mxu0 %v4804
        %v4952 = vpop.f32.mrf.mxu0
        %v4953 = vadd.f32 0.0, %v4952
        %v4954 = vpop.f32.mrf.mxu0
        %v4955 = vadd.f32 0.0, %v4954
        %4956 = vmatprep.mubr.f32.mxu0 0.0
        %4957 = vmatmul.mubr.f32.gmra.mxu0 %v4807
        %v4958 = vpop.f32.mrf.mxu0
        %v4959 = vadd.f32 0.0, %v4958
        %v4960 = vpop.f32.mrf.mxu0
        %v4961 = vadd.f32 0.0, %v4960
        %4962 = vdwg.mxu0
        %v4963 = vadd.f32 %v4699, %v4876
        %v4964 = vadd.f32 %v4701, %v4878
        %v4965 = vadd.f32 %v4776, %v4953
        %v4966 = vadd.f32 %v4778, %v4955
        %v4967 = vadd.f32 %v4705, %v4882
        %v4968 = vadd.f32 %v4707, %v4884
        %v4969 = vadd.f32 %v4782, %v4959
        %v4970 = vadd.f32 %v4784, %v4961
        %v4971 = vmul.f32 %v4963, %v1293
        %v4972 = vmul.f32 %v4964, %v1294
        %v4973 = vmul.f32 %v4967, %v1295
        %v4974 = vmul.f32 %v4968, %v1296
        %v4975 = vadd.f32 %v4971, %v4972
        %v4976 = vadd.f32 %v4973, %v4974
        %4977 = vrot.lane.b32.xlu0 %v4975, 64
        %v4978 = vpop.permute.xlu0 %4977
        %4979 = vrot.lane.b32.xlu0 %v4976, 64
        %v4980 = vpop.permute.xlu0 %4979
        %v4981 = vadd.f32 %v4975, %v4978
        %v4982 = vadd.f32 %v4976, %v4980
        %4983 = vrot.lane.b32.xlu0 %v4981, 32
        %v4984 = vpop.permute.xlu0 %4983
        %4985 = vrot.lane.b32.xlu0 %v4982, 32
        %v4986 = vpop.permute.xlu0 %4985
        %v4987 = vadd.f32 %v4981, %v4984
        %v4988 = vadd.f32 %v4982, %v4986
        %v4989 = vadd.f32 %v4340, %v4987
        %v4990 = vadd.f32 %v4341, %v4988
        %v4991 = vadd.f32 %v4989, %v905
        %v4992 = vadd.f32 %v4990, %v910
        %v4993 = vxor.u32 %v4991, 2147483648
        %v4994 = vxor.u32 %v4992, 2147483648
        %v4995 = vmul.f32 %v4993, 1.442695
        %v4996 = vpow.pop %v4995
        %v4997 = vmul.f32 %v4994, 1.442695
        %v4998 = vpow.pop %v4997
        %v4999 = vadd.f32 %v4996, 1.0
        %v5000 = vadd.f32 %v4998, 1.0
        %v5001 = vrcp.pop %v4999
        %v5002 = vmul.f32 1.0, %v5001
        %v5003 = vrcp.pop %v5000
        %v5004 = vmul.f32 1.0, %v5003
        %v5005 = vmul.f32 %v4965, %v1293
        %v5006 = vmul.f32 %v4966, %v1294
        %v5007 = vmul.f32 %v4969, %v1295
        %v5008 = vmul.f32 %v4970, %v1296
        %v5009 = vadd.f32 %v5005, %v5006
        %v5010 = vadd.f32 %v5007, %v5008
        %5011 = vrot.lane.b32.xlu0 %v5009, 64
        %v5012 = vpop.permute.xlu0 %5011
        %5013 = vrot.lane.b32.xlu0 %v5010, 64
        %v5014 = vpop.permute.xlu0 %5013
        %v5015 = vadd.f32 %v5009, %v5012
        %v5016 = vadd.f32 %v5010, %v5014
        %5017 = vrot.lane.b32.xlu0 %v5015, 32
        %v5018 = vpop.permute.xlu0 %5017
        %5019 = vrot.lane.b32.xlu0 %v5016, 32
        %v5020 = vpop.permute.xlu0 %5019
        %v5021 = vadd.f32 %v5015, %v5018
        %v5022 = vadd.f32 %v5016, %v5020
        %v5023 = vadd.f32 %v4343, %v5021
        %v5024 = vadd.f32 %v4344, %v5022
        %v5025 = vadd.f32 %v5023, %v981
        %v5026 = vadd.f32 %v5024, %v986
        %v5027 = vxor.u32 %v5025, 2147483648
        %v5028 = vxor.u32 %v5026, 2147483648
        %v5029 = vmul.f32 %v5027, 1.442695
        %v5030 = vpow.pop %v5029
        %v5031 = vmul.f32 %v5028, 1.442695
        %v5032 = vpow.pop %v5031
        %v5033 = vadd.f32 %v5030, 1.0
        %v5034 = vadd.f32 %v5032, 1.0
        %v5035 = vrcp.pop %v5033
        %v5036 = vmul.f32 1.0, %v5035
        %v5037 = vrcp.pop %v5034
        %v5038 = vmul.f32 1.0, %v5037
        %v5039 = vmul.f32 %v5002, %v4334
        %v5040 = vmul.f32 %v5004, %v4335
        %5041 = vmatprep.subr.mxu0 0.0
        %5042 = vmatpush1.msra.mxu0 0.0
        %5043 = vmatprep.subr.mxu0 0.0
        %5044 = vmatpush1.msra.mxu0 0.0
        %5045 = vmatprep.subr.mxu0 0.0
        %5046 = vmatpush1.msra.mxu0 0.0
        %5047 = vmatprep.subr.mxu0 0.0
        %5048 = vmatpush1.msra.mxu0 0.0
        %5049 = vmatprep.subr.mxu0 0.0
        %5050 = vmatpush1.msra.mxu0 0.0
        %5051 = vmatprep.subr.mxu0 0.0
        %5052 = vmatpush1.msra.mxu0 0.0
        %5053 = vmatprep.subr.mxu0 0.0
        %5054 = vmatpush1.msra.mxu0 0.0
        %5055 = vmatprep.subr.mxu0 0.0
        %5056 = vmatpush1.msra.mxu0 0.0
        %5057 = vmatprep.subr.mxu0 0.0
        %5058 = vmatpush1.msra.mxu0 0.0
        %5059 = vmatprep.subr.mxu0 0.0
        %5060 = vmatpush1.msra.mxu0 0.0
        %5061 = vmatprep.subr.mxu0 0.0
        %5062 = vmatpush1.msra.mxu0 0.0
        %5063 = vmatprep.subr.mxu0 0.0
        %5064 = vmatpush1.msra.mxu0 0.0
        %5065 = vmatprep.subr.mxu0 0.0
        %5066 = vmatpush1.msra.mxu0 0.0
        %5067 = vmatprep.subr.mxu0 0.0
        %5068 = vmatpush1.msra.mxu0 0.0
        %5069 = vmatprep.subr.mxu0 0.0
        %5070 = vmatpush1.msra.mxu0 %v5040
        %5071 = vmatprep.subr.mxu0 0.0
        %5072 = vmatpush1.msra.mxu0 %v5039
        %5073 = vmatprep.subr.mxu0 0.0
        %5074 = vmatpush2.msra.mxu0 0.0
        %5075 = vmatprep.subr.mxu0 0.0
        %5076 = vmatpush2.msra.mxu0 0.0
        %5077 = vmatprep.subr.mxu0 0.0
        %5078 = vmatpush2.msra.mxu0 0.0
        %5079 = vmatprep.subr.mxu0 0.0
        %5080 = vmatpush2.msra.mxu0 0.0
        %5081 = vmatprep.subr.mxu0 0.0
        %5082 = vmatpush2.msra.mxu0 0.0
        %5083 = vmatprep.subr.mxu0 0.0
        %5084 = vmatpush2.msra.mxu0 0.0
        %5085 = vmatprep.subr.mxu0 0.0
        %5086 = vmatpush2.msra.mxu0 0.0
        %5087 = vmatprep.subr.mxu0 0.0
        %5088 = vmatpush2.msra.mxu0 0.0
        %5089 = vmatprep.subr.mxu0 0.0
        %5090 = vmatpush2.msra.mxu0 0.0
        %5091 = vmatprep.subr.mxu0 0.0
        %5092 = vmatpush2.msra.mxu0 0.0
        %5093 = vmatprep.subr.mxu0 0.0
        %5094 = vmatpush2.msra.mxu0 0.0
        %5095 = vmatprep.subr.mxu0 0.0
        %5096 = vmatpush2.msra.mxu0 0.0
        %5097 = vmatprep.subr.mxu0 0.0
        %5098 = vmatpush2.msra.mxu0 0.0
        %5099 = vmatprep.subr.mxu0 0.0
        %5100 = vmatpush2.msra.mxu0 0.0
        %5101 = vmatprep.subr.mxu0 0.0
        %5102 = vmatpush2.msra.mxu0 0.0
        %5103 = vmatprep.subr.mxu0 0.0
        %5104 = vmatpush2.msra.mxu0 0.0
        %5105 = vmatprep.mubr.f32.mxu0 0.0
        %5106 = vmatmul.mubr.f32.gmra.mxu0 %v753
        %v5107 = vpop.f32.mrf.mxu0
        %v5108 = vadd.f32 0.0, %v5107
        %v5109 = vpop.f32.mrf.mxu0
        %5110 = vmatprep.mubr.f32.mxu0 0.0
        %5111 = vmatmul.mubr.f32.gmra.mxu0 %v756
        %v5112 = vpop.f32.mrf.mxu0
        %v5113 = vadd.f32 0.0, %v5112
        %v5114 = vpop.f32.mrf.mxu0
        %5115 = vmatprep.mubr.f32.mxu0 0.0
        %5116 = vmatmul.mubr.f32.gmra.mxu0 %v1346
        %v5117 = vpop.f32.mrf.mxu0
        %v5118 = vadd.f32 0.0, %v5117
        %v5119 = vpop.f32.mrf.mxu0
        %5120 = vmatprep.mubr.f32.mxu0 0.0
        %5121 = vmatmul.mubr.f32.gmra.mxu0 %v1349
        %v5122 = vpop.f32.mrf.mxu0
        %v5123 = vadd.f32 0.0, %v5122
        %v5124 = vpop.f32.mrf.mxu0
        %5125 = vdwg.mxu0
        %v5126 = vld [vmem:[%s6] sm:$0xff]
        %v5127 = vld [vmem:[%s6 + $0x8] sm:$0xff]
        %v5128 = vld [vmem:[%s6 + $0x10] sm:$0xff]
        %v5129 = vld [vmem:[%s6 + $0x18] sm:$0xff]
        %v5130 = vld [vmem:[%s6 + $0x20] sm:$0xff]
        %v5131 = vld [vmem:[%s6 + $0x28] sm:$0xff]
        %v5132 = vld [vmem:[%s6 + $0x30] sm:$0xff]
        %v5133 = vld [vmem:[%s6 + $0x38] sm:$0xff]
        %s5134 = scalar_lea.vmem %s6, 64
        %v5135 = vld [vmem:[%s5134] sm:$0xff]
        %v5136 = vld [vmem:[%s5134 + $0x8] sm:$0xff]
        %v5137 = vld [vmem:[%s5134 + $0x10] sm:$0xff]
        %v5138 = vld [vmem:[%s5134 + $0x18] sm:$0xff]
        %v5139 = vld [vmem:[%s5134 + $0x20] sm:$0xff]
        %v5140 = vld [vmem:[%s5134 + $0x28] sm:$0xff]
        %v5141 = vld [vmem:[%s5134 + $0x30] sm:$0xff]
        %v5142 = vld [vmem:[%s5134 + $0x38] sm:$0xff]
        %v5144 = vsel %vm3991, %v5108, 0
        %v5147 = vsel %vm3991, %v5113, 0
        %5149 = vmatprep.subr.mxu0 0.0
        %5150 = vmatpush1.msra.mxu0 0.0
        %5151 = vmatprep.subr.mxu0 0.0
        %5152 = vmatpush1.msra.mxu0 0.0
        %5153 = vmatprep.subr.mxu0 0.0
        %5154 = vmatpush1.msra.mxu0 0.0
        %5155 = vmatprep.subr.mxu0 0.0
        %5156 = vmatpush1.msra.mxu0 0.0
        %5157 = vmatprep.subr.mxu0 0.0
        %5158 = vmatpush1.msra.mxu0 0.0
        %5159 = vmatprep.subr.mxu0 0.0
        %5160 = vmatpush1.msra.mxu0 0.0
        %5161 = vmatprep.subr.mxu0 0.0
        %5162 = vmatpush1.msra.mxu0 0.0
        %5163 = vmatprep.subr.mxu0 0.0
        %5164 = vmatpush1.msra.mxu0 0.0
        %5165 = vmatprep.subr.mxu0 0.0
        %5166 = vmatpush1.msra.mxu0 0.0
        %5167 = vmatprep.subr.mxu0 0.0
        %5168 = vmatpush1.msra.mxu0 0.0
        %5169 = vmatprep.subr.mxu0 0.0
        %5170 = vmatpush1.msra.mxu0 0.0
        %5171 = vmatprep.subr.mxu0 0.0
        %5172 = vmatpush1.msra.mxu0 0.0
        %5173 = vmatprep.subr.mxu0 %v5142
        %5174 = vmatpush1.msra.mxu0 %v5141
        %5175 = vmatprep.subr.mxu0 %v5140
        %5176 = vmatpush1.msra.mxu0 %v5139
        %5177 = vmatprep.subr.mxu0 %v5138
        %5178 = vmatpush1.msra.mxu0 %v5137
        %5179 = vmatprep.subr.mxu0 %v5136
        %5180 = vmatpush1.msra.mxu0 %v5135
        %5181 = vmatprep.subr.mxu0 0.0
        %5182 = vmatpush2.msra.mxu0 0.0
        %5183 = vmatprep.subr.mxu0 0.0
        %5184 = vmatpush2.msra.mxu0 0.0
        %5185 = vmatprep.subr.mxu0 0.0
        %5186 = vmatpush2.msra.mxu0 0.0
        %5187 = vmatprep.subr.mxu0 0.0
        %5188 = vmatpush2.msra.mxu0 0.0
        %5189 = vmatprep.subr.mxu0 0.0
        %5190 = vmatpush2.msra.mxu0 0.0
        %5191 = vmatprep.subr.mxu0 0.0
        %5192 = vmatpush2.msra.mxu0 0.0
        %5193 = vmatprep.subr.mxu0 0.0
        %5194 = vmatpush2.msra.mxu0 0.0
        %5195 = vmatprep.subr.mxu0 0.0
        %5196 = vmatpush2.msra.mxu0 0.0
        %5197 = vmatprep.subr.mxu0 0.0
        %5198 = vmatpush2.msra.mxu0 0.0
        %5199 = vmatprep.subr.mxu0 0.0
        %5200 = vmatpush2.msra.mxu0 0.0
        %5201 = vmatprep.subr.mxu0 0.0
        %5202 = vmatpush2.msra.mxu0 0.0
        %5203 = vmatprep.subr.mxu0 0.0
        %5204 = vmatpush2.msra.mxu0 0.0
        %5205 = vmatprep.subr.mxu0 0.0
        %5206 = vmatpush2.msra.mxu0 0.0
        %5207 = vmatprep.subr.mxu0 0.0
        %5208 = vmatpush2.msra.mxu0 0.0
        %5209 = vmatprep.subr.mxu0 0.0
        %5210 = vmatpush2.msra.mxu0 0.0
        %5211 = vmatprep.subr.mxu0 0.0
        %5212 = vmatpush2.msra.mxu0 0.0
        %5213 = vmatprep.mubr.f32.mxu0 0.0
        %5214 = vmatmul.mubr.f32.gmra.mxu0 %v5144
        %v5215 = vpop.f32.mrf.mxu0
        %v5216 = vadd.f32 0.0, %v5215
        %v5217 = vpop.f32.mrf.mxu0
        %v5218 = vadd.f32 0.0, %v5217
        %5219 = vmatprep.mubr.f32.mxu0 0.0
        %5220 = vmatmul.mubr.f32.gmra.mxu0 %v5147
        %v5221 = vpop.f32.mrf.mxu0
        %v5222 = vadd.f32 0.0, %v5221
        %v5223 = vpop.f32.mrf.mxu0
        %v5224 = vadd.f32 0.0, %v5223
        %5225 = vdwg.mxu0
        %v5227 = vsel %vm3991, %v5039, 0
        %v5230 = vsel %vm3991, %v5040, 0
        %5232 = vmatprep.subr.mxu0 0.0
        %5233 = vmatpush1.msra.mxu0 0.0
        %5234 = vmatprep.subr.mxu0 0.0
        %5235 = vmatpush1.msra.mxu0 0.0
        %5236 = vmatprep.subr.mxu0 0.0
        %5237 = vmatpush1.msra.mxu0 0.0
        %5238 = vmatprep.subr.mxu0 0.0
        %5239 = vmatpush1.msra.mxu0 0.0
        %5240 = vmatprep.subr.mxu0 0.0
        %5241 = vmatpush1.msra.mxu0 0.0
        %5242 = vmatprep.subr.mxu0 0.0
        %5243 = vmatpush1.msra.mxu0 0.0
        %5244 = vmatprep.subr.mxu0 0.0
        %5245 = vmatpush1.msra.mxu0 0.0
        %5246 = vmatprep.subr.mxu0 0.0
        %5247 = vmatpush1.msra.mxu0 0.0
        %5248 = vmatprep.subr.mxu0 0.0
        %5249 = vmatpush1.msra.mxu0 0.0
        %5250 = vmatprep.subr.mxu0 0.0
        %5251 = vmatpush1.msra.mxu0 0.0
        %5252 = vmatprep.subr.mxu0 0.0
        %5253 = vmatpush1.msra.mxu0 0.0
        %5254 = vmatprep.subr.mxu0 0.0
        %5255 = vmatpush1.msra.mxu0 0.0
        %5256 = vmatprep.subr.mxu0 %v5133
        %5257 = vmatpush1.msra.mxu0 %v5132
        %5258 = vmatprep.subr.mxu0 %v5131
        %5259 = vmatpush1.msra.mxu0 %v5130
        %5260 = vmatprep.subr.mxu0 %v5129
        %5261 = vmatpush1.msra.mxu0 %v5128
        %5262 = vmatprep.subr.mxu0 %v5127
        %5263 = vmatpush1.msra.mxu0 %v5126
        %5264 = vmatprep.subr.mxu0 0.0
        %5265 = vmatpush2.msra.mxu0 0.0
        %5266 = vmatprep.subr.mxu0 0.0
        %5267 = vmatpush2.msra.mxu0 0.0
        %5268 = vmatprep.subr.mxu0 0.0
        %5269 = vmatpush2.msra.mxu0 0.0
        %5270 = vmatprep.subr.mxu0 0.0
        %5271 = vmatpush2.msra.mxu0 0.0
        %5272 = vmatprep.subr.mxu0 0.0
        %5273 = vmatpush2.msra.mxu0 0.0
        %5274 = vmatprep.subr.mxu0 0.0
        %5275 = vmatpush2.msra.mxu0 0.0
        %5276 = vmatprep.subr.mxu0 0.0
        %5277 = vmatpush2.msra.mxu0 0.0
        %5278 = vmatprep.subr.mxu0 0.0
        %5279 = vmatpush2.msra.mxu0 0.0
        %5280 = vmatprep.subr.mxu0 0.0
        %5281 = vmatpush2.msra.mxu0 0.0
        %5282 = vmatprep.subr.mxu0 0.0
        %5283 = vmatpush2.msra.mxu0 0.0
        %5284 = vmatprep.subr.mxu0 0.0
        %5285 = vmatpush2.msra.mxu0 0.0
        %5286 = vmatprep.subr.mxu0 0.0
        %5287 = vmatpush2.msra.mxu0 0.0
        %5288 = vmatprep.subr.mxu0 0.0
        %5289 = vmatpush2.msra.mxu0 0.0
        %5290 = vmatprep.subr.mxu0 0.0
        %5291 = vmatpush2.msra.mxu0 0.0
        %5292 = vmatprep.subr.mxu0 0.0
        %5293 = vmatpush2.msra.mxu0 0.0
        %5294 = vmatprep.subr.mxu0 0.0
        %5295 = vmatpush2.msra.mxu0 0.0
        %5296 = vmatprep.mubr.f32.mxu0 0.0
        %5297 = vmatmul.mubr.f32.gmra.mxu0 %v5227
        %v5298 = vpop.f32.mrf.mxu0
        %v5299 = vadd.f32 %v5216, %v5298
        %v5300 = vpop.f32.mrf.mxu0
        %v5301 = vadd.f32 %v5218, %v5300
        %5302 = vmatprep.mubr.f32.mxu0 0.0
        %5303 = vmatmul.mubr.f32.gmra.mxu0 %v5230
        %v5304 = vpop.f32.mrf.mxu0
        %v5305 = vadd.f32 %v5222, %v5304
        %v5306 = vpop.f32.mrf.mxu0
        %v5307 = vadd.f32 %v5224, %v5306
        %5308 = vdwg.mxu0
        %s5309 = scalar_lea.vmem %s6, 128
        %v5310 = vld [vmem:[%s5309] sm:$0xff]
        %v5311 = vld [vmem:[%s5309 + $0x8] sm:$0xff]
        %v5312 = vld [vmem:[%s5309 + $0x10] sm:$0xff]
        %v5313 = vld [vmem:[%s5309 + $0x18] sm:$0xff]
        %v5314 = vld [vmem:[%s5309 + $0x20] sm:$0xff]
        %v5315 = vld [vmem:[%s5309 + $0x28] sm:$0xff]
        %v5316 = vld [vmem:[%s5309 + $0x30] sm:$0xff]
        %v5317 = vld [vmem:[%s5309 + $0x38] sm:$0xff]
        %v5319 = vsel %vm3991, %v5118, 0
        %v5322 = vsel %vm3991, %v5123, 0
        %5324 = vmatprep.subr.mxu0 0.0
        %5325 = vmatpush1.msra.mxu0 0.0
        %5326 = vmatprep.subr.mxu0 0.0
        %5327 = vmatpush1.msra.mxu0 0.0
        %5328 = vmatprep.subr.mxu0 0.0
        %5329 = vmatpush1.msra.mxu0 0.0
        %5330 = vmatprep.subr.mxu0 0.0
        %5331 = vmatpush1.msra.mxu0 0.0
        %5332 = vmatprep.subr.mxu0 0.0
        %5333 = vmatpush1.msra.mxu0 0.0
        %5334 = vmatprep.subr.mxu0 0.0
        %5335 = vmatpush1.msra.mxu0 0.0
        %5336 = vmatprep.subr.mxu0 0.0
        %5337 = vmatpush1.msra.mxu0 0.0
        %5338 = vmatprep.subr.mxu0 0.0
        %5339 = vmatpush1.msra.mxu0 0.0
        %5340 = vmatprep.subr.mxu0 0.0
        %5341 = vmatpush1.msra.mxu0 0.0
        %5342 = vmatprep.subr.mxu0 0.0
        %5343 = vmatpush1.msra.mxu0 0.0
        %5344 = vmatprep.subr.mxu0 0.0
        %5345 = vmatpush1.msra.mxu0 0.0
        %5346 = vmatprep.subr.mxu0 0.0
        %5347 = vmatpush1.msra.mxu0 0.0
        %5348 = vmatprep.subr.mxu0 %v5317
        %5349 = vmatpush1.msra.mxu0 %v5316
        %5350 = vmatprep.subr.mxu0 %v5315
        %5351 = vmatpush1.msra.mxu0 %v5314
        %5352 = vmatprep.subr.mxu0 %v5313
        %5353 = vmatpush1.msra.mxu0 %v5312
        %5354 = vmatprep.subr.mxu0 %v5311
        %5355 = vmatpush1.msra.mxu0 %v5310
        %5356 = vmatprep.subr.mxu0 0.0
        %5357 = vmatpush2.msra.mxu0 0.0
        %5358 = vmatprep.subr.mxu0 0.0
        %5359 = vmatpush2.msra.mxu0 0.0
        %5360 = vmatprep.subr.mxu0 0.0
        %5361 = vmatpush2.msra.mxu0 0.0
        %5362 = vmatprep.subr.mxu0 0.0
        %5363 = vmatpush2.msra.mxu0 0.0
        %5364 = vmatprep.subr.mxu0 0.0
        %5365 = vmatpush2.msra.mxu0 0.0
        %5366 = vmatprep.subr.mxu0 0.0
        %5367 = vmatpush2.msra.mxu0 0.0
        %5368 = vmatprep.subr.mxu0 0.0
        %5369 = vmatpush2.msra.mxu0 0.0
        %5370 = vmatprep.subr.mxu0 0.0
        %5371 = vmatpush2.msra.mxu0 0.0
        %5372 = vmatprep.subr.mxu0 0.0
        %5373 = vmatpush2.msra.mxu0 0.0
        %5374 = vmatprep.subr.mxu0 0.0
        %5375 = vmatpush2.msra.mxu0 0.0
        %5376 = vmatprep.subr.mxu0 0.0
        %5377 = vmatpush2.msra.mxu0 0.0
        %5378 = vmatprep.subr.mxu0 0.0
        %5379 = vmatpush2.msra.mxu0 0.0
        %5380 = vmatprep.subr.mxu0 0.0
        %5381 = vmatpush2.msra.mxu0 0.0
        %5382 = vmatprep.subr.mxu0 0.0
        %5383 = vmatpush2.msra.mxu0 0.0
        %5384 = vmatprep.subr.mxu0 0.0
        %5385 = vmatpush2.msra.mxu0 0.0
        %5386 = vmatprep.subr.mxu0 0.0
        %5387 = vmatpush2.msra.mxu0 0.0
        %5388 = vmatprep.mubr.f32.mxu0 0.0
        %5389 = vmatmul.mubr.f32.gmra.mxu0 %v5319
        %v5390 = vpop.f32.mrf.mxu0
        %v5391 = vadd.f32 0.0, %v5390
        %v5392 = vpop.f32.mrf.mxu0
        %v5393 = vadd.f32 0.0, %v5392
        %5394 = vmatprep.mubr.f32.mxu0 0.0
        %5395 = vmatmul.mubr.f32.gmra.mxu0 %v5322
        %v5396 = vpop.f32.mrf.mxu0
        %v5397 = vadd.f32 0.0, %v5396
        %v5398 = vpop.f32.mrf.mxu0
        %v5399 = vadd.f32 0.0, %v5398
        %5400 = vdwg.mxu0
        %v5401 = vadd.f32 %v5299, %v5391
        %v5402 = vadd.f32 %v5301, %v5393
        %v5403 = vadd.f32 %v5305, %v5397
        %v5404 = vadd.f32 %v5307, %v5399
        %v5405 = vmul.f32 %v5401, %v1293
        %v5406 = vmul.f32 %v5402, %v1294
        %v5407 = vmul.f32 %v5403, %v1295
        %v5408 = vmul.f32 %v5404, %v1296
        %v5409 = vadd.f32 %v5405, %v5406
        %v5410 = vadd.f32 %v5407, %v5408
        %5411 = vrot.lane.b32.xlu0 %v5409, 64
        %v5412 = vpop.permute.xlu0 %5411
        %5413 = vrot.lane.b32.xlu0 %v5410, 64
        %v5414 = vpop.permute.xlu0 %5413
        %v5415 = vadd.f32 %v5409, %v5412
        %v5416 = vadd.f32 %v5410, %v5414
        %5417 = vrot.lane.b32.xlu0 %v5415, 32
        %v5418 = vpop.permute.xlu0 %5417
        %5419 = vrot.lane.b32.xlu0 %v5416, 32
        %v5420 = vpop.permute.xlu0 %5419
        %v5421 = vadd.f32 %v5415, %v5418
        %v5422 = vadd.f32 %v5416, %v5420
        %v5423 = vadd.f32 %v4346, %v5421
        %v5424 = vadd.f32 %v4347, %v5422
        %v5425 = vadd.f32 %v5423, %v1057
        %v5426 = vadd.f32 %v5424, %v1062
        %v5427 = vtanh.pop %v5425
        %v5428 = vtanh.pop %v5426
        %v5429 = vmul.f32 %v5036, %v4334
        %v5430 = vmul.f32 %v5038, %v4335
        %v5431 = vsub.f32 1.0, %v5036
        %v5432 = vsub.f32 1.0, %v5038
        %v5433 = vmul.f32 %v5431, %v5427
        %v5434 = vmul.f32 %v5432, %v5428
        %v5435 = vadd.f32 %v5429, %v5433
        %v5436 = vadd.f32 %v5430, %v5434
        %5437 = vmatprep.subr.mxu0 0.0
        %5438 = vmatpush1.msra.mxu0 0.0
        %5439 = vmatprep.subr.mxu0 0.0
        %5440 = vmatpush1.msra.mxu0 0.0
        %5441 = vmatprep.subr.mxu0 0.0
        %5442 = vmatpush1.msra.mxu0 0.0
        %5443 = vmatprep.subr.mxu0 0.0
        %5444 = vmatpush1.msra.mxu0 0.0
        %5445 = vmatprep.subr.mxu0 0.0
        %5446 = vmatpush1.msra.mxu0 0.0
        %5447 = vmatprep.subr.mxu0 0.0
        %5448 = vmatpush1.msra.mxu0 0.0
        %5449 = vmatprep.subr.mxu0 0.0
        %5450 = vmatpush1.msra.mxu0 0.0
        %5451 = vmatprep.subr.mxu0 0.0
        %5452 = vmatpush1.msra.mxu0 0.0
        %5453 = vmatprep.subr.mxu0 0.0
        %5454 = vmatpush1.msra.mxu0 0.0
        %5455 = vmatprep.subr.mxu0 0.0
        %5456 = vmatpush1.msra.mxu0 0.0
        %5457 = vmatprep.subr.mxu0 0.0
        %5458 = vmatpush1.msra.mxu0 0.0
        %5459 = vmatprep.subr.mxu0 0.0
        %5460 = vmatpush1.msra.mxu0 0.0
        %5461 = vmatprep.subr.mxu0 0.0
        %5462 = vmatpush1.msra.mxu0 0.0
        %5463 = vmatprep.subr.mxu0 0.0
        %5464 = vmatpush1.msra.mxu0 0.0
        %5465 = vmatprep.subr.mxu0 0.0
        %5466 = vmatpush1.msra.mxu0 %v5436
        %5467 = vmatprep.subr.mxu0 0.0
        %5468 = vmatpush1.msra.mxu0 %v5435
        %5469 = vmatprep.subr.mxu0 0.0
        %5470 = vmatpush2.msra.mxu0 0.0
        %5471 = vmatprep.subr.mxu0 0.0
        %5472 = vmatpush2.msra.mxu0 0.0
        %5473 = vmatprep.subr.mxu0 0.0
        %5474 = vmatpush2.msra.mxu0 0.0
        %5475 = vmatprep.subr.mxu0 0.0
        %5476 = vmatpush2.msra.mxu0 0.0
        %5477 = vmatprep.subr.mxu0 0.0
        %5478 = vmatpush2.msra.mxu0 0.0
        %5479 = vmatprep.subr.mxu0 0.0
        %5480 = vmatpush2.msra.mxu0 0.0
        %5481 = vmatprep.subr.mxu0 0.0
        %5482 = vmatpush2.msra.mxu0 0.0
        %5483 = vmatprep.subr.mxu0 0.0
        %5484 = vmatpush2.msra.mxu0 0.0
        %5485 = vmatprep.subr.mxu0 0.0
        %5486 = vmatpush2.msra.mxu0 0.0
        %5487 = vmatprep.subr.mxu0 0.0
        %5488 = vmatpush2.msra.mxu0 0.0
        %5489 = vmatprep.subr.mxu0 0.0
        %5490 = vmatpush2.msra.mxu0 0.0
        %5491 = vmatprep.subr.mxu0 0.0
        %5492 = vmatpush2.msra.mxu0 0.0
        %5493 = vmatprep.subr.mxu0 0.0
        %5494 = vmatpush2.msra.mxu0 0.0
        %5495 = vmatprep.subr.mxu0 0.0
        %5496 = vmatpush2.msra.mxu0 0.0
        %5497 = vmatprep.subr.mxu0 0.0
        %5498 = vmatpush2.msra.mxu0 0.0
        %5499 = vmatprep.subr.mxu0 0.0
        %5500 = vmatpush2.msra.mxu0 0.0
        %5501 = vmatprep.mubr.f32.mxu0 0.0
        %5502 = vmatmul.mubr.f32.gmra.mxu0 %v753
        %v5503 = vpop.f32.mrf.mxu0
        %v5504 = vadd.f32 0.0, %v5503
        %v5505 = vpop.f32.mrf.mxu0
        %5506 = vmatprep.mubr.f32.mxu0 0.0
        %5507 = vmatmul.mubr.f32.gmra.mxu0 %v756
        %v5508 = vpop.f32.mrf.mxu0
        %v5509 = vadd.f32 0.0, %v5508
        %v5510 = vpop.f32.mrf.mxu0
        %5511 = vmatprep.mubr.f32.mxu0 0.0
        %5512 = vmatmul.mubr.f32.gmra.mxu0 %v1346
        %v5513 = vpop.f32.mrf.mxu0
        %v5514 = vadd.f32 0.0, %v5513
        %v5515 = vpop.f32.mrf.mxu0
        %5516 = vmatprep.mubr.f32.mxu0 0.0
        %5517 = vmatmul.mubr.f32.gmra.mxu0 %v1349
        %v5518 = vpop.f32.mrf.mxu0
        %v5519 = vadd.f32 0.0, %v5518
        %v5520 = vpop.f32.mrf.mxu0
        %5521 = vdwg.mxu0
        %v5522 = vld [vmem:[%s7] sm:$0xff]
        %v5523 = vld [vmem:[%s7 + $0x8] sm:$0xff]
        %v5524 = vld [vmem:[%s7 + $0x10] sm:$0xff]
        %v5525 = vld [vmem:[%s7 + $0x18] sm:$0xff]
        %v5526 = vld [vmem:[%s7 + $0x20] sm:$0xff]
        %v5527 = vld [vmem:[%s7 + $0x28] sm:$0xff]
        %v5528 = vld [vmem:[%s7 + $0x30] sm:$0xff]
        %v5529 = vld [vmem:[%s7 + $0x38] sm:$0xff]
        %v5530 = vld [vmem:[%s7 + $0x40] sm:$0xff]
        %v5531 = vld [vmem:[%s7 + $0x48] sm:$0xff]
        %v5532 = vld [vmem:[%s7 + $0x50] sm:$0xff]
        %v5533 = vld [vmem:[%s7 + $0x58] sm:$0xff]
        %v5534 = vld [vmem:[%s7 + $0x60] sm:$0xff]
        %v5535 = vld [vmem:[%s7 + $0x68] sm:$0xff]
        %v5536 = vld [vmem:[%s7 + $0x70] sm:$0xff]
        %v5537 = vld [vmem:[%s7 + $0x78] sm:$0xff]
        %v5538 = vld [vmem:[%s7 + $0x80] sm:$0xff]
        %v5539 = vld [vmem:[%s7 + $0x88] sm:$0xff]
        %v5540 = vld [vmem:[%s7 + $0x90] sm:$0xff]
        %v5541 = vld [vmem:[%s7 + $0x98] sm:$0xff]
        %v5542 = vld [vmem:[%s7 + $0xa0] sm:$0xff]
        %v5543 = vld [vmem:[%s7 + $0xa8] sm:$0xff]
        %v5544 = vld [vmem:[%s7 + $0xb0] sm:$0xff]
        %v5545 = vld [vmem:[%s7 + $0xb8] sm:$0xff]
        %s5546 = scalar_lea.vmem %s7, 192
        %v5547 = vld [vmem:[%s5546] sm:$0xff]
        %v5548 = vld [vmem:[%s5546 + $0x8] sm:$0xff]
        %v5549 = vld [vmem:[%s5546 + $0x10] sm:$0xff]
        %v5550 = vld [vmem:[%s5546 + $0x18] sm:$0xff]
        %v5551 = vld [vmem:[%s5546 + $0x20] sm:$0xff]
        %v5552 = vld [vmem:[%s5546 + $0x28] sm:$0xff]
        %v5553 = vld [vmem:[%s5546 + $0x30] sm:$0xff]
        %v5554 = vld [vmem:[%s5546 + $0x38] sm:$0xff]
        %v5555 = vld [vmem:[%s5546 + $0x40] sm:$0xff]
        %v5556 = vld [vmem:[%s5546 + $0x48] sm:$0xff]
        %v5557 = vld [vmem:[%s5546 + $0x50] sm:$0xff]
        %v5558 = vld [vmem:[%s5546 + $0x58] sm:$0xff]
        %v5559 = vld [vmem:[%s5546 + $0x60] sm:$0xff]
        %v5560 = vld [vmem:[%s5546 + $0x68] sm:$0xff]
        %v5561 = vld [vmem:[%s5546 + $0x70] sm:$0xff]
        %v5562 = vld [vmem:[%s5546 + $0x78] sm:$0xff]
        %v5563 = vld [vmem:[%s5546 + $0x80] sm:$0xff]
        %v5564 = vld [vmem:[%s5546 + $0x88] sm:$0xff]
        %v5565 = vld [vmem:[%s5546 + $0x90] sm:$0xff]
        %v5566 = vld [vmem:[%s5546 + $0x98] sm:$0xff]
        %v5567 = vld [vmem:[%s5546 + $0xa0] sm:$0xff]
        %v5568 = vld [vmem:[%s5546 + $0xa8] sm:$0xff]
        %v5569 = vld [vmem:[%s5546 + $0xb0] sm:$0xff]
        %v5570 = vld [vmem:[%s5546 + $0xb8] sm:$0xff]
        %v5572 = vsel %vm3991, %v5504, 0
        %v5575 = vsel %vm3991, %v5509, 0
        %5577 = vmatprep.subr.mxu0 0.0
        %5578 = vmatpush1.msra.mxu0 0.0
        %5579 = vmatprep.subr.mxu0 0.0
        %5580 = vmatpush1.msra.mxu0 0.0
        %5581 = vmatprep.subr.mxu0 0.0
        %5582 = vmatpush1.msra.mxu0 0.0
        %5583 = vmatprep.subr.mxu0 0.0
        %5584 = vmatpush1.msra.mxu0 0.0
        %5585 = vmatprep.subr.mxu0 0.0
        %5586 = vmatpush1.msra.mxu0 0.0
        %5587 = vmatprep.subr.mxu0 0.0
        %5588 = vmatpush1.msra.mxu0 0.0
        %5589 = vmatprep.subr.mxu0 0.0
        %5590 = vmatpush1.msra.mxu0 0.0
        %5591 = vmatprep.subr.mxu0 0.0
        %5592 = vmatpush1.msra.mxu0 0.0
        %5593 = vmatprep.subr.mxu0 0.0
        %5594 = vmatpush1.msra.mxu0 0.0
        %5595 = vmatprep.subr.mxu0 0.0
        %5596 = vmatpush1.msra.mxu0 0.0
        %5597 = vmatprep.subr.mxu0 0.0
        %5598 = vmatpush1.msra.mxu0 0.0
        %5599 = vmatprep.subr.mxu0 0.0
        %5600 = vmatpush1.msra.mxu0 0.0
        %5601 = vmatprep.subr.mxu0 %v5566
        %5602 = vmatpush1.msra.mxu0 %v5565
        %5603 = vmatprep.subr.mxu0 %v5560
        %5604 = vmatpush1.msra.mxu0 %v5559
        %5605 = vmatprep.subr.mxu0 %v5554
        %5606 = vmatpush1.msra.mxu0 %v5553
        %5607 = vmatprep.subr.mxu0 %v5548
        %5608 = vmatpush1.msra.mxu0 %v5547
        %5609 = vmatprep.subr.mxu0 0.0
        %5610 = vmatpush2.msra.mxu0 0.0
        %5611 = vmatprep.subr.mxu0 0.0
        %5612 = vmatpush2.msra.mxu0 0.0
        %5613 = vmatprep.subr.mxu0 0.0
        %5614 = vmatpush2.msra.mxu0 0.0
        %5615 = vmatprep.subr.mxu0 0.0
        %5616 = vmatpush2.msra.mxu0 0.0
        %5617 = vmatprep.subr.mxu0 0.0
        %5618 = vmatpush2.msra.mxu0 0.0
        %5619 = vmatprep.subr.mxu0 0.0
        %5620 = vmatpush2.msra.mxu0 0.0
        %5621 = vmatprep.subr.mxu0 0.0
        %5622 = vmatpush2.msra.mxu0 0.0
        %5623 = vmatprep.subr.mxu0 0.0
        %5624 = vmatpush2.msra.mxu0 0.0
        %5625 = vmatprep.subr.mxu0 0.0
        %5626 = vmatpush2.msra.mxu0 0.0
        %5627 = vmatprep.subr.mxu0 0.0
        %5628 = vmatpush2.msra.mxu0 0.0
        %5629 = vmatprep.subr.mxu0 0.0
        %5630 = vmatpush2.msra.mxu0 0.0
        %5631 = vmatprep.subr.mxu0 0.0
        %5632 = vmatpush2.msra.mxu0 0.0
        %5633 = vmatprep.subr.mxu0 0.0
        %5634 = vmatpush2.msra.mxu0 0.0
        %5635 = vmatprep.subr.mxu0 0.0
        %5636 = vmatpush2.msra.mxu0 0.0
        %5637 = vmatprep.subr.mxu0 0.0
        %5638 = vmatpush2.msra.mxu0 0.0
        %5639 = vmatprep.subr.mxu0 0.0
        %5640 = vmatpush2.msra.mxu0 0.0
        %5641 = vmatprep.mubr.f32.mxu0 0.0
        %5642 = vmatmul.mubr.f32.gmra.mxu0 %v5572
        %v5643 = vpop.f32.mrf.mxu0
        %v5644 = vadd.f32 0.0, %v5643
        %v5645 = vpop.f32.mrf.mxu0
        %v5646 = vadd.f32 0.0, %v5645
        %5647 = vmatprep.mubr.f32.mxu0 0.0
        %5648 = vmatmul.mubr.f32.gmra.mxu0 %v5575
        %v5649 = vpop.f32.mrf.mxu0
        %v5650 = vadd.f32 0.0, %v5649
        %v5651 = vpop.f32.mrf.mxu0
        %v5652 = vadd.f32 0.0, %v5651
        %5653 = vdwg.mxu0
        %5654 = vmatprep.subr.mxu0 0.0
        %5655 = vmatpush1.msra.mxu0 0.0
        %5656 = vmatprep.subr.mxu0 0.0
        %5657 = vmatpush1.msra.mxu0 0.0
        %5658 = vmatprep.subr.mxu0 0.0
        %5659 = vmatpush1.msra.mxu0 0.0
        %5660 = vmatprep.subr.mxu0 0.0
        %5661 = vmatpush1.msra.mxu0 0.0
        %5662 = vmatprep.subr.mxu0 0.0
        %5663 = vmatpush1.msra.mxu0 0.0
        %5664 = vmatprep.subr.mxu0 0.0
        %5665 = vmatpush1.msra.mxu0 0.0
        %5666 = vmatprep.subr.mxu0 0.0
        %5667 = vmatpush1.msra.mxu0 0.0
        %5668 = vmatprep.subr.mxu0 0.0
        %5669 = vmatpush1.msra.mxu0 0.0
        %5670 = vmatprep.subr.mxu0 0.0
        %5671 = vmatpush1.msra.mxu0 0.0
        %5672 = vmatprep.subr.mxu0 0.0
        %5673 = vmatpush1.msra.mxu0 0.0
        %5674 = vmatprep.subr.mxu0 0.0
        %5675 = vmatpush1.msra.mxu0 0.0
        %5676 = vmatprep.subr.mxu0 0.0
        %5677 = vmatpush1.msra.mxu0 0.0
        %5678 = vmatprep.subr.mxu0 %v5568
        %5679 = vmatpush1.msra.mxu0 %v5567
        %5680 = vmatprep.subr.mxu0 %v5562
        %5681 = vmatpush1.msra.mxu0 %v5561
        %5682 = vmatprep.subr.mxu0 %v5556
        %5683 = vmatpush1.msra.mxu0 %v5555
        %5684 = vmatprep.subr.mxu0 %v5550
        %5685 = vmatpush1.msra.mxu0 %v5549
        %5686 = vmatprep.subr.mxu0 0.0
        %5687 = vmatpush2.msra.mxu0 0.0
        %5688 = vmatprep.subr.mxu0 0.0
        %5689 = vmatpush2.msra.mxu0 0.0
        %5690 = vmatprep.subr.mxu0 0.0
        %5691 = vmatpush2.msra.mxu0 0.0
        %5692 = vmatprep.subr.mxu0 0.0
        %5693 = vmatpush2.msra.mxu0 0.0
        %5694 = vmatprep.subr.mxu0 0.0
        %5695 = vmatpush2.msra.mxu0 0.0
        %5696 = vmatprep.subr.mxu0 0.0
        %5697 = vmatpush2.msra.mxu0 0.0
        %5698 = vmatprep.subr.mxu0 0.0
        %5699 = vmatpush2.msra.mxu0 0.0
        %5700 = vmatprep.subr.mxu0 0.0
        %5701 = vmatpush2.msra.mxu0 0.0
        %5702 = vmatprep.subr.mxu0 0.0
        %5703 = vmatpush2.msra.mxu0 0.0
        %5704 = vmatprep.subr.mxu0 0.0
        %5705 = vmatpush2.msra.mxu0 0.0
        %5706 = vmatprep.subr.mxu0 0.0
        %5707 = vmatpush2.msra.mxu0 0.0
        %5708 = vmatprep.subr.mxu0 0.0
        %5709 = vmatpush2.msra.mxu0 0.0
        %5710 = vmatprep.subr.mxu0 0.0
        %5711 = vmatpush2.msra.mxu0 0.0
        %5712 = vmatprep.subr.mxu0 0.0
        %5713 = vmatpush2.msra.mxu0 0.0
        %5714 = vmatprep.subr.mxu0 0.0
        %5715 = vmatpush2.msra.mxu0 0.0
        %5716 = vmatprep.subr.mxu0 0.0
        %5717 = vmatpush2.msra.mxu0 0.0
        %5718 = vmatprep.mubr.f32.mxu0 0.0
        %5719 = vmatmul.mubr.f32.gmra.mxu0 %v5572
        %v5720 = vpop.f32.mrf.mxu0
        %v5721 = vadd.f32 0.0, %v5720
        %v5722 = vpop.f32.mrf.mxu0
        %v5723 = vadd.f32 0.0, %v5722
        %5724 = vmatprep.mubr.f32.mxu0 0.0
        %5725 = vmatmul.mubr.f32.gmra.mxu0 %v5575
        %v5726 = vpop.f32.mrf.mxu0
        %v5727 = vadd.f32 0.0, %v5726
        %v5728 = vpop.f32.mrf.mxu0
        %v5729 = vadd.f32 0.0, %v5728
        %5730 = vdwg.mxu0
        %5731 = vmatprep.subr.mxu0 0.0
        %5732 = vmatpush1.msra.mxu0 0.0
        %5733 = vmatprep.subr.mxu0 0.0
        %5734 = vmatpush1.msra.mxu0 0.0
        %5735 = vmatprep.subr.mxu0 0.0
        %5736 = vmatpush1.msra.mxu0 0.0
        %5737 = vmatprep.subr.mxu0 0.0
        %5738 = vmatpush1.msra.mxu0 0.0
        %5739 = vmatprep.subr.mxu0 0.0
        %5740 = vmatpush1.msra.mxu0 0.0
        %5741 = vmatprep.subr.mxu0 0.0
        %5742 = vmatpush1.msra.mxu0 0.0
        %5743 = vmatprep.subr.mxu0 0.0
        %5744 = vmatpush1.msra.mxu0 0.0
        %5745 = vmatprep.subr.mxu0 0.0
        %5746 = vmatpush1.msra.mxu0 0.0
        %5747 = vmatprep.subr.mxu0 0.0
        %5748 = vmatpush1.msra.mxu0 0.0
        %5749 = vmatprep.subr.mxu0 0.0
        %5750 = vmatpush1.msra.mxu0 0.0
        %5751 = vmatprep.subr.mxu0 0.0
        %5752 = vmatpush1.msra.mxu0 0.0
        %5753 = vmatprep.subr.mxu0 0.0
        %5754 = vmatpush1.msra.mxu0 0.0
        %5755 = vmatprep.subr.mxu0 %v5570
        %5756 = vmatpush1.msra.mxu0 %v5569
        %5757 = vmatprep.subr.mxu0 %v5564
        %5758 = vmatpush1.msra.mxu0 %v5563
        %5759 = vmatprep.subr.mxu0 %v5558
        %5760 = vmatpush1.msra.mxu0 %v5557
        %5761 = vmatprep.subr.mxu0 %v5552
        %5762 = vmatpush1.msra.mxu0 %v5551
        %5763 = vmatprep.subr.mxu0 0.0
        %5764 = vmatpush2.msra.mxu0 0.0
        %5765 = vmatprep.subr.mxu0 0.0
        %5766 = vmatpush2.msra.mxu0 0.0
        %5767 = vmatprep.subr.mxu0 0.0
        %5768 = vmatpush2.msra.mxu0 0.0
        %5769 = vmatprep.subr.mxu0 0.0
        %5770 = vmatpush2.msra.mxu0 0.0
        %5771 = vmatprep.subr.mxu0 0.0
        %5772 = vmatpush2.msra.mxu0 0.0
        %5773 = vmatprep.subr.mxu0 0.0
        %5774 = vmatpush2.msra.mxu0 0.0
        %5775 = vmatprep.subr.mxu0 0.0
        %5776 = vmatpush2.msra.mxu0 0.0
        %5777 = vmatprep.subr.mxu0 0.0
        %5778 = vmatpush2.msra.mxu0 0.0
        %5779 = vmatprep.subr.mxu0 0.0
        %5780 = vmatpush2.msra.mxu0 0.0
        %5781 = vmatprep.subr.mxu0 0.0
        %5782 = vmatpush2.msra.mxu0 0.0
        %5783 = vmatprep.subr.mxu0 0.0
        %5784 = vmatpush2.msra.mxu0 0.0
        %5785 = vmatprep.subr.mxu0 0.0
        %5786 = vmatpush2.msra.mxu0 0.0
        %5787 = vmatprep.subr.mxu0 0.0
        %5788 = vmatpush2.msra.mxu0 0.0
        %5789 = vmatprep.subr.mxu0 0.0
        %5790 = vmatpush2.msra.mxu0 0.0
        %5791 = vmatprep.subr.mxu0 0.0
        %5792 = vmatpush2.msra.mxu0 0.0
        %5793 = vmatprep.subr.mxu0 0.0
        %5794 = vmatpush2.msra.mxu0 0.0
        %5795 = vmatprep.mubr.f32.mxu0 0.0
        %5796 = vmatmul.mubr.f32.gmra.mxu0 %v5572
        %v5797 = vpop.f32.mrf.mxu0
        %v5798 = vadd.f32 0.0, %v5797
        %v5799 = vpop.f32.mrf.mxu0
        %v5800 = vadd.f32 0.0, %v5799
        %5801 = vmatprep.mubr.f32.mxu0 0.0
        %5802 = vmatmul.mubr.f32.gmra.mxu0 %v5575
        %v5803 = vpop.f32.mrf.mxu0
        %v5804 = vadd.f32 0.0, %v5803
        %v5805 = vpop.f32.mrf.mxu0
        %v5806 = vadd.f32 0.0, %v5805
        %5807 = vdwg.mxu0
        %v5809 = vsel %vm3991, %v5435, 0
        %v5812 = vsel %vm3991, %v5436, 0
        %5814 = vmatprep.subr.mxu0 0.0
        %5815 = vmatpush1.msra.mxu0 0.0
        %5816 = vmatprep.subr.mxu0 0.0
        %5817 = vmatpush1.msra.mxu0 0.0
        %5818 = vmatprep.subr.mxu0 0.0
        %5819 = vmatpush1.msra.mxu0 0.0
        %5820 = vmatprep.subr.mxu0 0.0
        %5821 = vmatpush1.msra.mxu0 0.0
        %5822 = vmatprep.subr.mxu0 0.0
        %5823 = vmatpush1.msra.mxu0 0.0
        %5824 = vmatprep.subr.mxu0 0.0
        %5825 = vmatpush1.msra.mxu0 0.0
        %5826 = vmatprep.subr.mxu0 0.0
        %5827 = vmatpush1.msra.mxu0 0.0
        %5828 = vmatprep.subr.mxu0 0.0
        %5829 = vmatpush1.msra.mxu0 0.0
        %5830 = vmatprep.subr.mxu0 0.0
        %5831 = vmatpush1.msra.mxu0 0.0
        %5832 = vmatprep.subr.mxu0 0.0
        %5833 = vmatpush1.msra.mxu0 0.0
        %5834 = vmatprep.subr.mxu0 0.0
        %5835 = vmatpush1.msra.mxu0 0.0
        %5836 = vmatprep.subr.mxu0 0.0
        %5837 = vmatpush1.msra.mxu0 0.0
        %5838 = vmatprep.subr.mxu0 %v5541
        %5839 = vmatpush1.msra.mxu0 %v5540
        %5840 = vmatprep.subr.mxu0 %v5535
        %5841 = vmatpush1.msra.mxu0 %v5534
        %5842 = vmatprep.subr.mxu0 %v5529
        %5843 = vmatpush1.msra.mxu0 %v5528
        %5844 = vmatprep.subr.mxu0 %v5523
        %5845 = vmatpush1.msra.mxu0 %v5522
        %5846 = vmatprep.subr.mxu0 0.0
        %5847 = vmatpush2.msra.mxu0 0.0
        %5848 = vmatprep.subr.mxu0 0.0
        %5849 = vmatpush2.msra.mxu0 0.0
        %5850 = vmatprep.subr.mxu0 0.0
        %5851 = vmatpush2.msra.mxu0 0.0
        %5852 = vmatprep.subr.mxu0 0.0
        %5853 = vmatpush2.msra.mxu0 0.0
        %5854 = vmatprep.subr.mxu0 0.0
        %5855 = vmatpush2.msra.mxu0 0.0
        %5856 = vmatprep.subr.mxu0 0.0
        %5857 = vmatpush2.msra.mxu0 0.0
        %5858 = vmatprep.subr.mxu0 0.0
        %5859 = vmatpush2.msra.mxu0 0.0
        %5860 = vmatprep.subr.mxu0 0.0
        %5861 = vmatpush2.msra.mxu0 0.0
        %5862 = vmatprep.subr.mxu0 0.0
        %5863 = vmatpush2.msra.mxu0 0.0
        %5864 = vmatprep.subr.mxu0 0.0
        %5865 = vmatpush2.msra.mxu0 0.0
        %5866 = vmatprep.subr.mxu0 0.0
        %5867 = vmatpush2.msra.mxu0 0.0
        %5868 = vmatprep.subr.mxu0 0.0
        %5869 = vmatpush2.msra.mxu0 0.0
        %5870 = vmatprep.subr.mxu0 0.0
        %5871 = vmatpush2.msra.mxu0 0.0
        %5872 = vmatprep.subr.mxu0 0.0
        %5873 = vmatpush2.msra.mxu0 0.0
        %5874 = vmatprep.subr.mxu0 0.0
        %5875 = vmatpush2.msra.mxu0 0.0
        %5876 = vmatprep.subr.mxu0 0.0
        %5877 = vmatpush2.msra.mxu0 0.0
        %5878 = vmatprep.mubr.f32.mxu0 0.0
        %5879 = vmatmul.mubr.f32.gmra.mxu0 %v5809
        %v5880 = vpop.f32.mrf.mxu0
        %v5881 = vadd.f32 %v5644, %v5880
        %v5882 = vpop.f32.mrf.mxu0
        %v5883 = vadd.f32 %v5646, %v5882
        %5884 = vmatprep.mubr.f32.mxu0 0.0
        %5885 = vmatmul.mubr.f32.gmra.mxu0 %v5812
        %v5886 = vpop.f32.mrf.mxu0
        %v5887 = vadd.f32 %v5650, %v5886
        %v5888 = vpop.f32.mrf.mxu0
        %v5889 = vadd.f32 %v5652, %v5888
        %5890 = vdwg.mxu0
        %5891 = vmatprep.subr.mxu0 0.0
        %5892 = vmatpush1.msra.mxu0 0.0
        %5893 = vmatprep.subr.mxu0 0.0
        %5894 = vmatpush1.msra.mxu0 0.0
        %5895 = vmatprep.subr.mxu0 0.0
        %5896 = vmatpush1.msra.mxu0 0.0
        %5897 = vmatprep.subr.mxu0 0.0
        %5898 = vmatpush1.msra.mxu0 0.0
        %5899 = vmatprep.subr.mxu0 0.0
        %5900 = vmatpush1.msra.mxu0 0.0
        %5901 = vmatprep.subr.mxu0 0.0
        %5902 = vmatpush1.msra.mxu0 0.0
        %5903 = vmatprep.subr.mxu0 0.0
        %5904 = vmatpush1.msra.mxu0 0.0
        %5905 = vmatprep.subr.mxu0 0.0
        %5906 = vmatpush1.msra.mxu0 0.0
        %5907 = vmatprep.subr.mxu0 0.0
        %5908 = vmatpush1.msra.mxu0 0.0
        %5909 = vmatprep.subr.mxu0 0.0
        %5910 = vmatpush1.msra.mxu0 0.0
        %5911 = vmatprep.subr.mxu0 0.0
        %5912 = vmatpush1.msra.mxu0 0.0
        %5913 = vmatprep.subr.mxu0 0.0
        %5914 = vmatpush1.msra.mxu0 0.0
        %5915 = vmatprep.subr.mxu0 %v5543
        %5916 = vmatpush1.msra.mxu0 %v5542
        %5917 = vmatprep.subr.mxu0 %v5537
        %5918 = vmatpush1.msra.mxu0 %v5536
        %5919 = vmatprep.subr.mxu0 %v5531
        %5920 = vmatpush1.msra.mxu0 %v5530
        %5921 = vmatprep.subr.mxu0 %v5525
        %5922 = vmatpush1.msra.mxu0 %v5524
        %5923 = vmatprep.subr.mxu0 0.0
        %5924 = vmatpush2.msra.mxu0 0.0
        %5925 = vmatprep.subr.mxu0 0.0
        %5926 = vmatpush2.msra.mxu0 0.0
        %5927 = vmatprep.subr.mxu0 0.0
        %5928 = vmatpush2.msra.mxu0 0.0
        %5929 = vmatprep.subr.mxu0 0.0
        %5930 = vmatpush2.msra.mxu0 0.0
        %5931 = vmatprep.subr.mxu0 0.0
        %5932 = vmatpush2.msra.mxu0 0.0
        %5933 = vmatprep.subr.mxu0 0.0
        %5934 = vmatpush2.msra.mxu0 0.0
        %5935 = vmatprep.subr.mxu0 0.0
        %5936 = vmatpush2.msra.mxu0 0.0
        %5937 = vmatprep.subr.mxu0 0.0
        %5938 = vmatpush2.msra.mxu0 0.0
        %5939 = vmatprep.subr.mxu0 0.0
        %5940 = vmatpush2.msra.mxu0 0.0
        %5941 = vmatprep.subr.mxu0 0.0
        %5942 = vmatpush2.msra.mxu0 0.0
        %5943 = vmatprep.subr.mxu0 0.0
        %5944 = vmatpush2.msra.mxu0 0.0
        %5945 = vmatprep.subr.mxu0 0.0
        %5946 = vmatpush2.msra.mxu0 0.0
        %5947 = vmatprep.subr.mxu0 0.0
        %5948 = vmatpush2.msra.mxu0 0.0
        %5949 = vmatprep.subr.mxu0 0.0
        %5950 = vmatpush2.msra.mxu0 0.0
        %5951 = vmatprep.subr.mxu0 0.0
        %5952 = vmatpush2.msra.mxu0 0.0
        %5953 = vmatprep.subr.mxu0 0.0
        %5954 = vmatpush2.msra.mxu0 0.0
        %5955 = vmatprep.mubr.f32.mxu0 0.0
        %5956 = vmatmul.mubr.f32.gmra.mxu0 %v5809
        %v5957 = vpop.f32.mrf.mxu0
        %v5958 = vadd.f32 %v5721, %v5957
        %v5959 = vpop.f32.mrf.mxu0
        %v5960 = vadd.f32 %v5723, %v5959
        %5961 = vmatprep.mubr.f32.mxu0 0.0
        %5962 = vmatmul.mubr.f32.gmra.mxu0 %v5812
        %v5963 = vpop.f32.mrf.mxu0
        %v5964 = vadd.f32 %v5727, %v5963
        %v5965 = vpop.f32.mrf.mxu0
        %v5966 = vadd.f32 %v5729, %v5965
        %5967 = vdwg.mxu0
        %5968 = vmatprep.subr.mxu0 0.0
        %5969 = vmatpush1.msra.mxu0 0.0
        %5970 = vmatprep.subr.mxu0 0.0
        %5971 = vmatpush1.msra.mxu0 0.0
        %5972 = vmatprep.subr.mxu0 0.0
        %5973 = vmatpush1.msra.mxu0 0.0
        %5974 = vmatprep.subr.mxu0 0.0
        %5975 = vmatpush1.msra.mxu0 0.0
        %5976 = vmatprep.subr.mxu0 0.0
        %5977 = vmatpush1.msra.mxu0 0.0
        %5978 = vmatprep.subr.mxu0 0.0
        %5979 = vmatpush1.msra.mxu0 0.0
        %5980 = vmatprep.subr.mxu0 0.0
        %5981 = vmatpush1.msra.mxu0 0.0
        %5982 = vmatprep.subr.mxu0 0.0
        %5983 = vmatpush1.msra.mxu0 0.0
        %5984 = vmatprep.subr.mxu0 0.0
        %5985 = vmatpush1.msra.mxu0 0.0
        %5986 = vmatprep.subr.mxu0 0.0
        %5987 = vmatpush1.msra.mxu0 0.0
        %5988 = vmatprep.subr.mxu0 0.0
        %5989 = vmatpush1.msra.mxu0 0.0
        %5990 = vmatprep.subr.mxu0 0.0
        %5991 = vmatpush1.msra.mxu0 0.0
        %5992 = vmatprep.subr.mxu0 %v5545
        %5993 = vmatpush1.msra.mxu0 %v5544
        %5994 = vmatprep.subr.mxu0 %v5539
        %5995 = vmatpush1.msra.mxu0 %v5538
        %5996 = vmatprep.subr.mxu0 %v5533
        %5997 = vmatpush1.msra.mxu0 %v5532
        %5998 = vmatprep.subr.mxu0 %v5527
        %5999 = vmatpush1.msra.mxu0 %v5526
        %6000 = vmatprep.subr.mxu0 0.0
        %6001 = vmatpush2.msra.mxu0 0.0
        %6002 = vmatprep.subr.mxu0 0.0
        %6003 = vmatpush2.msra.mxu0 0.0
        %6004 = vmatprep.subr.mxu0 0.0
        %6005 = vmatpush2.msra.mxu0 0.0
        %6006 = vmatprep.subr.mxu0 0.0
        %6007 = vmatpush2.msra.mxu0 0.0
        %6008 = vmatprep.subr.mxu0 0.0
        %6009 = vmatpush2.msra.mxu0 0.0
        %6010 = vmatprep.subr.mxu0 0.0
        %6011 = vmatpush2.msra.mxu0 0.0
        %6012 = vmatprep.subr.mxu0 0.0
        %6013 = vmatpush2.msra.mxu0 0.0
        %6014 = vmatprep.subr.mxu0 0.0
        %6015 = vmatpush2.msra.mxu0 0.0
        %6016 = vmatprep.subr.mxu0 0.0
        %6017 = vmatpush2.msra.mxu0 0.0
        %6018 = vmatprep.subr.mxu0 0.0
        %6019 = vmatpush2.msra.mxu0 0.0
        %6020 = vmatprep.subr.mxu0 0.0
        %6021 = vmatpush2.msra.mxu0 0.0
        %6022 = vmatprep.subr.mxu0 0.0
        %6023 = vmatpush2.msra.mxu0 0.0
        %6024 = vmatprep.subr.mxu0 0.0
        %6025 = vmatpush2.msra.mxu0 0.0
        %6026 = vmatprep.subr.mxu0 0.0
        %6027 = vmatpush2.msra.mxu0 0.0
        %6028 = vmatprep.subr.mxu0 0.0
        %6029 = vmatpush2.msra.mxu0 0.0
        %6030 = vmatprep.subr.mxu0 0.0
        %6031 = vmatpush2.msra.mxu0 0.0
        %6032 = vmatprep.mubr.f32.mxu0 0.0
        %6033 = vmatmul.mubr.f32.gmra.mxu0 %v5809
        %v6034 = vpop.f32.mrf.mxu0
        %v6035 = vadd.f32 %v5798, %v6034
        %v6036 = vpop.f32.mrf.mxu0
        %v6037 = vadd.f32 %v5800, %v6036
        %6038 = vmatprep.mubr.f32.mxu0 0.0
        %6039 = vmatmul.mubr.f32.gmra.mxu0 %v5812
        %v6040 = vpop.f32.mrf.mxu0
        %v6041 = vadd.f32 %v5804, %v6040
        %v6042 = vpop.f32.mrf.mxu0
        %v6043 = vadd.f32 %v5806, %v6042
        %6044 = vdwg.mxu0
        %s6045 = scalar_lea.vmem %s7, 384
        %v6046 = vld [vmem:[%s6045] sm:$0xff]
        %v6047 = vld [vmem:[%s6045 + $0x8] sm:$0xff]
        %v6048 = vld [vmem:[%s6045 + $0x10] sm:$0xff]
        %v6049 = vld [vmem:[%s6045 + $0x18] sm:$0xff]
        %v6050 = vld [vmem:[%s6045 + $0x20] sm:$0xff]
        %v6051 = vld [vmem:[%s6045 + $0x28] sm:$0xff]
        %v6052 = vld [vmem:[%s6045 + $0x30] sm:$0xff]
        %v6053 = vld [vmem:[%s6045 + $0x38] sm:$0xff]
        %v6054 = vld [vmem:[%s6045 + $0x40] sm:$0xff]
        %v6055 = vld [vmem:[%s6045 + $0x48] sm:$0xff]
        %v6056 = vld [vmem:[%s6045 + $0x50] sm:$0xff]
        %v6057 = vld [vmem:[%s6045 + $0x58] sm:$0xff]
        %v6058 = vld [vmem:[%s6045 + $0x60] sm:$0xff]
        %v6059 = vld [vmem:[%s6045 + $0x68] sm:$0xff]
        %v6060 = vld [vmem:[%s6045 + $0x70] sm:$0xff]
        %v6061 = vld [vmem:[%s6045 + $0x78] sm:$0xff]
        %v6062 = vld [vmem:[%s6045 + $0x80] sm:$0xff]
        %v6063 = vld [vmem:[%s6045 + $0x88] sm:$0xff]
        %v6064 = vld [vmem:[%s6045 + $0x90] sm:$0xff]
        %v6065 = vld [vmem:[%s6045 + $0x98] sm:$0xff]
        %v6066 = vld [vmem:[%s6045 + $0xa0] sm:$0xff]
        %v6067 = vld [vmem:[%s6045 + $0xa8] sm:$0xff]
        %v6068 = vld [vmem:[%s6045 + $0xb0] sm:$0xff]
        %v6069 = vld [vmem:[%s6045 + $0xb8] sm:$0xff]
        %v6071 = vsel %vm3991, %v5514, 0
        %v6074 = vsel %vm3991, %v5519, 0
        %6076 = vmatprep.subr.mxu0 0.0
        %6077 = vmatpush1.msra.mxu0 0.0
        %6078 = vmatprep.subr.mxu0 0.0
        %6079 = vmatpush1.msra.mxu0 0.0
        %6080 = vmatprep.subr.mxu0 0.0
        %6081 = vmatpush1.msra.mxu0 0.0
        %6082 = vmatprep.subr.mxu0 0.0
        %6083 = vmatpush1.msra.mxu0 0.0
        %6084 = vmatprep.subr.mxu0 0.0
        %6085 = vmatpush1.msra.mxu0 0.0
        %6086 = vmatprep.subr.mxu0 0.0
        %6087 = vmatpush1.msra.mxu0 0.0
        %6088 = vmatprep.subr.mxu0 0.0
        %6089 = vmatpush1.msra.mxu0 0.0
        %6090 = vmatprep.subr.mxu0 0.0
        %6091 = vmatpush1.msra.mxu0 0.0
        %6092 = vmatprep.subr.mxu0 0.0
        %6093 = vmatpush1.msra.mxu0 0.0
        %6094 = vmatprep.subr.mxu0 0.0
        %6095 = vmatpush1.msra.mxu0 0.0
        %6096 = vmatprep.subr.mxu0 0.0
        %6097 = vmatpush1.msra.mxu0 0.0
        %6098 = vmatprep.subr.mxu0 0.0
        %6099 = vmatpush1.msra.mxu0 0.0
        %6100 = vmatprep.subr.mxu0 %v6065
        %6101 = vmatpush1.msra.mxu0 %v6064
        %6102 = vmatprep.subr.mxu0 %v6059
        %6103 = vmatpush1.msra.mxu0 %v6058
        %6104 = vmatprep.subr.mxu0 %v6053
        %6105 = vmatpush1.msra.mxu0 %v6052
        %6106 = vmatprep.subr.mxu0 %v6047
        %6107 = vmatpush1.msra.mxu0 %v6046
        %6108 = vmatprep.subr.mxu0 0.0
        %6109 = vmatpush2.msra.mxu0 0.0
        %6110 = vmatprep.subr.mxu0 0.0
        %6111 = vmatpush2.msra.mxu0 0.0
        %6112 = vmatprep.subr.mxu0 0.0
        %6113 = vmatpush2.msra.mxu0 0.0
        %6114 = vmatprep.subr.mxu0 0.0
        %6115 = vmatpush2.msra.mxu0 0.0
        %6116 = vmatprep.subr.mxu0 0.0
        %6117 = vmatpush2.msra.mxu0 0.0
        %6118 = vmatprep.subr.mxu0 0.0
        %6119 = vmatpush2.msra.mxu0 0.0
        %6120 = vmatprep.subr.mxu0 0.0
        %6121 = vmatpush2.msra.mxu0 0.0
        %6122 = vmatprep.subr.mxu0 0.0
        %6123 = vmatpush2.msra.mxu0 0.0
        %6124 = vmatprep.subr.mxu0 0.0
        %6125 = vmatpush2.msra.mxu0 0.0
        %6126 = vmatprep.subr.mxu0 0.0
        %6127 = vmatpush2.msra.mxu0 0.0
        %6128 = vmatprep.subr.mxu0 0.0
        %6129 = vmatpush2.msra.mxu0 0.0
        %6130 = vmatprep.subr.mxu0 0.0
        %6131 = vmatpush2.msra.mxu0 0.0
        %6132 = vmatprep.subr.mxu0 0.0
        %6133 = vmatpush2.msra.mxu0 0.0
        %6134 = vmatprep.subr.mxu0 0.0
        %6135 = vmatpush2.msra.mxu0 0.0
        %6136 = vmatprep.subr.mxu0 0.0
        %6137 = vmatpush2.msra.mxu0 0.0
        %6138 = vmatprep.subr.mxu0 0.0
        %6139 = vmatpush2.msra.mxu0 0.0
        %6140 = vmatprep.mubr.f32.mxu0 0.0
        %6141 = vmatmul.mubr.f32.gmra.mxu0 %v6071
        %v6142 = vpop.f32.mrf.mxu0
        %v6143 = vadd.f32 0.0, %v6142
        %v6144 = vpop.f32.mrf.mxu0
        %v6145 = vadd.f32 0.0, %v6144
        %6146 = vmatprep.mubr.f32.mxu0 0.0
        %6147 = vmatmul.mubr.f32.gmra.mxu0 %v6074
        %v6148 = vpop.f32.mrf.mxu0
        %v6149 = vadd.f32 0.0, %v6148
        %v6150 = vpop.f32.mrf.mxu0
        %v6151 = vadd.f32 0.0, %v6150
        %6152 = vdwg.mxu0
        %6153 = vmatprep.subr.mxu0 0.0
        %6154 = vmatpush1.msra.mxu0 0.0
        %6155 = vmatprep.subr.mxu0 0.0
        %6156 = vmatpush1.msra.mxu0 0.0
        %6157 = vmatprep.subr.mxu0 0.0
        %6158 = vmatpush1.msra.mxu0 0.0
        %6159 = vmatprep.subr.mxu0 0.0
        %6160 = vmatpush1.msra.mxu0 0.0
        %6161 = vmatprep.subr.mxu0 0.0
        %6162 = vmatpush1.msra.mxu0 0.0
        %6163 = vmatprep.subr.mxu0 0.0
        %6164 = vmatpush1.msra.mxu0 0.0
        %6165 = vmatprep.subr.mxu0 0.0
        %6166 = vmatpush1.msra.mxu0 0.0
        %6167 = vmatprep.subr.mxu0 0.0
        %6168 = vmatpush1.msra.mxu0 0.0
        %6169 = vmatprep.subr.mxu0 0.0
        %6170 = vmatpush1.msra.mxu0 0.0
        %6171 = vmatprep.subr.mxu0 0.0
        %6172 = vmatpush1.msra.mxu0 0.0
        %6173 = vmatprep.subr.mxu0 0.0
        %6174 = vmatpush1.msra.mxu0 0.0
        %6175 = vmatprep.subr.mxu0 0.0
        %6176 = vmatpush1.msra.mxu0 0.0
        %6177 = vmatprep.subr.mxu0 %v6067
        %6178 = vmatpush1.msra.mxu0 %v6066
        %6179 = vmatprep.subr.mxu0 %v6061
        %6180 = vmatpush1.msra.mxu0 %v6060
        %6181 = vmatprep.subr.mxu0 %v6055
        %6182 = vmatpush1.msra.mxu0 %v6054
        %6183 = vmatprep.subr.mxu0 %v6049
        %6184 = vmatpush1.msra.mxu0 %v6048
        %6185 = vmatprep.subr.mxu0 0.0
        %6186 = vmatpush2.msra.mxu0 0.0
        %6187 = vmatprep.subr.mxu0 0.0
        %6188 = vmatpush2.msra.mxu0 0.0
        %6189 = vmatprep.subr.mxu0 0.0
        %6190 = vmatpush2.msra.mxu0 0.0
        %6191 = vmatprep.subr.mxu0 0.0
        %6192 = vmatpush2.msra.mxu0 0.0
        %6193 = vmatprep.subr.mxu0 0.0
        %6194 = vmatpush2.msra.mxu0 0.0
        %6195 = vmatprep.subr.mxu0 0.0
        %6196 = vmatpush2.msra.mxu0 0.0
        %6197 = vmatprep.subr.mxu0 0.0
        %6198 = vmatpush2.msra.mxu0 0.0
        %6199 = vmatprep.subr.mxu0 0.0
        %6200 = vmatpush2.msra.mxu0 0.0
        %6201 = vmatprep.subr.mxu0 0.0
        %6202 = vmatpush2.msra.mxu0 0.0
        %6203 = vmatprep.subr.mxu0 0.0
        %6204 = vmatpush2.msra.mxu0 0.0
        %6205 = vmatprep.subr.mxu0 0.0
        %6206 = vmatpush2.msra.mxu0 0.0
        %6207 = vmatprep.subr.mxu0 0.0
        %6208 = vmatpush2.msra.mxu0 0.0
        %6209 = vmatprep.subr.mxu0 0.0
        %6210 = vmatpush2.msra.mxu0 0.0
        %6211 = vmatprep.subr.mxu0 0.0
        %6212 = vmatpush2.msra.mxu0 0.0
        %6213 = vmatprep.subr.mxu0 0.0
        %6214 = vmatpush2.msra.mxu0 0.0
        %6215 = vmatprep.subr.mxu0 0.0
        %6216 = vmatpush2.msra.mxu0 0.0
        %6217 = vmatprep.mubr.f32.mxu0 0.0
        %6218 = vmatmul.mubr.f32.gmra.mxu0 %v6071
        %v6219 = vpop.f32.mrf.mxu0
        %v6220 = vadd.f32 0.0, %v6219
        %v6221 = vpop.f32.mrf.mxu0
        %v6222 = vadd.f32 0.0, %v6221
        %6223 = vmatprep.mubr.f32.mxu0 0.0
        %6224 = vmatmul.mubr.f32.gmra.mxu0 %v6074
        %v6225 = vpop.f32.mrf.mxu0
        %v6226 = vadd.f32 0.0, %v6225
        %v6227 = vpop.f32.mrf.mxu0
        %v6228 = vadd.f32 0.0, %v6227
        %6229 = vdwg.mxu0
        %6230 = vmatprep.subr.mxu0 0.0
        %6231 = vmatpush1.msra.mxu0 0.0
        %6232 = vmatprep.subr.mxu0 0.0
        %6233 = vmatpush1.msra.mxu0 0.0
        %6234 = vmatprep.subr.mxu0 0.0
        %6235 = vmatpush1.msra.mxu0 0.0
        %6236 = vmatprep.subr.mxu0 0.0
        %6237 = vmatpush1.msra.mxu0 0.0
        %6238 = vmatprep.subr.mxu0 0.0
        %6239 = vmatpush1.msra.mxu0 0.0
        %6240 = vmatprep.subr.mxu0 0.0
        %6241 = vmatpush1.msra.mxu0 0.0
        %6242 = vmatprep.subr.mxu0 0.0
        %6243 = vmatpush1.msra.mxu0 0.0
        %6244 = vmatprep.subr.mxu0 0.0
        %6245 = vmatpush1.msra.mxu0 0.0
        %6246 = vmatprep.subr.mxu0 0.0
        %6247 = vmatpush1.msra.mxu0 0.0
        %6248 = vmatprep.subr.mxu0 0.0
        %6249 = vmatpush1.msra.mxu0 0.0
        %6250 = vmatprep.subr.mxu0 0.0
        %6251 = vmatpush1.msra.mxu0 0.0
        %6252 = vmatprep.subr.mxu0 0.0
        %6253 = vmatpush1.msra.mxu0 0.0
        %6254 = vmatprep.subr.mxu0 %v6069
        %6255 = vmatpush1.msra.mxu0 %v6068
        %6256 = vmatprep.subr.mxu0 %v6063
        %6257 = vmatpush1.msra.mxu0 %v6062
        %6258 = vmatprep.subr.mxu0 %v6057
        %6259 = vmatpush1.msra.mxu0 %v6056
        %6260 = vmatprep.subr.mxu0 %v6051
        %6261 = vmatpush1.msra.mxu0 %v6050
        %6262 = vmatprep.subr.mxu0 0.0
        %6263 = vmatpush2.msra.mxu0 0.0
        %6264 = vmatprep.subr.mxu0 0.0
        %6265 = vmatpush2.msra.mxu0 0.0
        %6266 = vmatprep.subr.mxu0 0.0
        %6267 = vmatpush2.msra.mxu0 0.0
        %6268 = vmatprep.subr.mxu0 0.0
        %6269 = vmatpush2.msra.mxu0 0.0
        %6270 = vmatprep.subr.mxu0 0.0
        %6271 = vmatpush2.msra.mxu0 0.0
        %6272 = vmatprep.subr.mxu0 0.0
        %6273 = vmatpush2.msra.mxu0 0.0
        %6274 = vmatprep.subr.mxu0 0.0
        %6275 = vmatpush2.msra.mxu0 0.0
        %6276 = vmatprep.subr.mxu0 0.0
        %6277 = vmatpush2.msra.mxu0 0.0
        %6278 = vmatprep.subr.mxu0 0.0
        %6279 = vmatpush2.msra.mxu0 0.0
        %6280 = vmatprep.subr.mxu0 0.0
        %6281 = vmatpush2.msra.mxu0 0.0
        %6282 = vmatprep.subr.mxu0 0.0
        %6283 = vmatpush2.msra.mxu0 0.0
        %6284 = vmatprep.subr.mxu0 0.0
        %6285 = vmatpush2.msra.mxu0 0.0
        %6286 = vmatprep.subr.mxu0 0.0
        %6287 = vmatpush2.msra.mxu0 0.0
        %6288 = vmatprep.subr.mxu0 0.0
        %6289 = vmatpush2.msra.mxu0 0.0
        %6290 = vmatprep.subr.mxu0 0.0
        %6291 = vmatpush2.msra.mxu0 0.0
        %6292 = vmatprep.subr.mxu0 0.0
        %6293 = vmatpush2.msra.mxu0 0.0
        %6294 = vmatprep.mubr.f32.mxu0 0.0
        %6295 = vmatmul.mubr.f32.gmra.mxu0 %v6071
        %v6296 = vpop.f32.mrf.mxu0
        %v6297 = vadd.f32 0.0, %v6296
        %v6298 = vpop.f32.mrf.mxu0
        %v6299 = vadd.f32 0.0, %v6298
        %6300 = vmatprep.mubr.f32.mxu0 0.0
        %6301 = vmatmul.mubr.f32.gmra.mxu0 %v6074
        %v6302 = vpop.f32.mrf.mxu0
        %v6303 = vadd.f32 0.0, %v6302
        %v6304 = vpop.f32.mrf.mxu0
        %v6305 = vadd.f32 0.0, %v6304
        %6306 = vdwg.mxu0
        %v6307 = vadd.f32 %v5881, %v6143
        %v6308 = vadd.f32 %v5883, %v6145
        %v6309 = vadd.f32 %v5958, %v6220
        %v6310 = vadd.f32 %v5960, %v6222
        %v6311 = vadd.f32 %v6035, %v6297
        %v6312 = vadd.f32 %v6037, %v6299
        %v6313 = vadd.f32 %v5887, %v6149
        %v6314 = vadd.f32 %v5889, %v6151
        %v6315 = vadd.f32 %v5964, %v6226
        %v6316 = vadd.f32 %v5966, %v6228
        %v6317 = vadd.f32 %v6041, %v6303
        %v6318 = vadd.f32 %v6043, %v6305
        %6319 = vmatprep.subr.mxu0 0.0
        %6320 = vmatpush1.msra.mxu0 0.0
        %6321 = vmatprep.subr.mxu0 0.0
        %6322 = vmatpush1.msra.mxu0 0.0
        %6323 = vmatprep.subr.mxu0 0.0
        %6324 = vmatpush1.msra.mxu0 0.0
        %6325 = vmatprep.subr.mxu0 0.0
        %6326 = vmatpush1.msra.mxu0 0.0
        %6327 = vmatprep.subr.mxu0 0.0
        %6328 = vmatpush1.msra.mxu0 0.0
        %6329 = vmatprep.subr.mxu0 0.0
        %6330 = vmatpush1.msra.mxu0 0.0
        %6331 = vmatprep.subr.mxu0 0.0
        %6332 = vmatpush1.msra.mxu0 0.0
        %6333 = vmatprep.subr.mxu0 0.0
        %6334 = vmatpush1.msra.mxu0 0.0
        %6335 = vmatprep.subr.mxu0 0.0
        %6336 = vmatpush1.msra.mxu0 0.0
        %6337 = vmatprep.subr.mxu0 0.0
        %6338 = vmatpush1.msra.mxu0 0.0
        %6339 = vmatprep.subr.mxu0 0.0
        %6340 = vmatpush1.msra.mxu0 0.0
        %6341 = vmatprep.subr.mxu0 0.0
        %6342 = vmatpush1.msra.mxu0 0.0
        %6343 = vmatprep.subr.mxu0 0.0
        %6344 = vmatpush1.msra.mxu0 0.0
        %6345 = vmatprep.subr.mxu0 0.0
        %6346 = vmatpush1.msra.mxu0 0.0
        %6347 = vmatprep.subr.mxu0 0.0
        %6348 = vmatpush1.msra.mxu0 %v4337
        %6349 = vmatprep.subr.mxu0 0.0
        %6350 = vmatpush1.msra.mxu0 %v4336
        %6351 = vmatprep.subr.mxu0 0.0
        %6352 = vmatpush2.msra.mxu0 0.0
        %6353 = vmatprep.subr.mxu0 0.0
        %6354 = vmatpush2.msra.mxu0 0.0
        %6355 = vmatprep.subr.mxu0 0.0
        %6356 = vmatpush2.msra.mxu0 0.0
        %6357 = vmatprep.subr.mxu0 0.0
        %6358 = vmatpush2.msra.mxu0 0.0
        %6359 = vmatprep.subr.mxu0 0.0
        %6360 = vmatpush2.msra.mxu0 0.0
        %6361 = vmatprep.subr.mxu0 0.0
        %6362 = vmatpush2.msra.mxu0 0.0
        %6363 = vmatprep.subr.mxu0 0.0
        %6364 = vmatpush2.msra.mxu0 0.0
        %6365 = vmatprep.subr.mxu0 0.0
        %6366 = vmatpush2.msra.mxu0 0.0
        %6367 = vmatprep.subr.mxu0 0.0
        %6368 = vmatpush2.msra.mxu0 0.0
        %6369 = vmatprep.subr.mxu0 0.0
        %6370 = vmatpush2.msra.mxu0 0.0
        %6371 = vmatprep.subr.mxu0 0.0
        %6372 = vmatpush2.msra.mxu0 0.0
        %6373 = vmatprep.subr.mxu0 0.0
        %6374 = vmatpush2.msra.mxu0 0.0
        %6375 = vmatprep.subr.mxu0 0.0
        %6376 = vmatpush2.msra.mxu0 0.0
        %6377 = vmatprep.subr.mxu0 0.0
        %6378 = vmatpush2.msra.mxu0 0.0
        %6379 = vmatprep.subr.mxu0 0.0
        %6380 = vmatpush2.msra.mxu0 0.0
        %6381 = vmatprep.subr.mxu0 0.0
        %6382 = vmatpush2.msra.mxu0 0.0
        %6383 = vmatprep.mubr.f32.mxu0 0.0
        %6384 = vmatmul.mubr.f32.gmra.mxu0 %v753
        %v6385 = vpop.f32.mrf.mxu0
        %v6386 = vadd.f32 0.0, %v6385
        %v6387 = vpop.f32.mrf.mxu0
        %6388 = vmatprep.mubr.f32.mxu0 0.0
        %6389 = vmatmul.mubr.f32.gmra.mxu0 %v756
        %v6390 = vpop.f32.mrf.mxu0
        %v6391 = vadd.f32 0.0, %v6390
        %v6392 = vpop.f32.mrf.mxu0
        %6393 = vmatprep.mubr.f32.mxu0 0.0
        %6394 = vmatmul.mubr.f32.gmra.mxu0 %v1346
        %v6395 = vpop.f32.mrf.mxu0
        %v6396 = vadd.f32 0.0, %v6395
        %v6397 = vpop.f32.mrf.mxu0
        %6398 = vmatprep.mubr.f32.mxu0 0.0
        %6399 = vmatmul.mubr.f32.gmra.mxu0 %v1349
        %v6400 = vpop.f32.mrf.mxu0
        %v6401 = vadd.f32 0.0, %v6400
        %v6402 = vpop.f32.mrf.mxu0
        %6403 = vdwg.mxu0
        %v6404 = vld [vmem:[%s8] sm:$0xff]
        %v6405 = vld [vmem:[%s8 + $0x8] sm:$0xff]
        %v6406 = vld [vmem:[%s8 + $0x10] sm:$0xff]
        %v6407 = vld [vmem:[%s8 + $0x18] sm:$0xff]
        %v6408 = vld [vmem:[%s8 + $0x20] sm:$0xff]
        %v6409 = vld [vmem:[%s8 + $0x28] sm:$0xff]
        %v6410 = vld [vmem:[%s8 + $0x30] sm:$0xff]
        %v6411 = vld [vmem:[%s8 + $0x38] sm:$0xff]
        %v6412 = vld [vmem:[%s8 + $0x40] sm:$0xff]
        %v6413 = vld [vmem:[%s8 + $0x48] sm:$0xff]
        %v6414 = vld [vmem:[%s8 + $0x50] sm:$0xff]
        %v6415 = vld [vmem:[%s8 + $0x58] sm:$0xff]
        %v6416 = vld [vmem:[%s8 + $0x60] sm:$0xff]
        %v6417 = vld [vmem:[%s8 + $0x68] sm:$0xff]
        %v6418 = vld [vmem:[%s8 + $0x70] sm:$0xff]
        %v6419 = vld [vmem:[%s8 + $0x78] sm:$0xff]
        %s6420 = scalar_lea.vmem %s8, 128
        %v6421 = vld [vmem:[%s6420] sm:$0xff]
        %v6422 = vld [vmem:[%s6420 + $0x8] sm:$0xff]
        %v6423 = vld [vmem:[%s6420 + $0x10] sm:$0xff]
        %v6424 = vld [vmem:[%s6420 + $0x18] sm:$0xff]
        %v6425 = vld [vmem:[%s6420 + $0x20] sm:$0xff]
        %v6426 = vld [vmem:[%s6420 + $0x28] sm:$0xff]
        %v6427 = vld [vmem:[%s6420 + $0x30] sm:$0xff]
        %v6428 = vld [vmem:[%s6420 + $0x38] sm:$0xff]
        %v6429 = vld [vmem:[%s6420 + $0x40] sm:$0xff]
        %v6430 = vld [vmem:[%s6420 + $0x48] sm:$0xff]
        %v6431 = vld [vmem:[%s6420 + $0x50] sm:$0xff]
        %v6432 = vld [vmem:[%s6420 + $0x58] sm:$0xff]
        %v6433 = vld [vmem:[%s6420 + $0x60] sm:$0xff]
        %v6434 = vld [vmem:[%s6420 + $0x68] sm:$0xff]
        %v6435 = vld [vmem:[%s6420 + $0x70] sm:$0xff]
        %v6436 = vld [vmem:[%s6420 + $0x78] sm:$0xff]
        %v6438 = vsel %vm3991, %v6386, 0
        %v6441 = vsel %vm3991, %v6391, 0
        %6443 = vmatprep.subr.mxu0 0.0
        %6444 = vmatpush1.msra.mxu0 0.0
        %6445 = vmatprep.subr.mxu0 0.0
        %6446 = vmatpush1.msra.mxu0 0.0
        %6447 = vmatprep.subr.mxu0 0.0
        %6448 = vmatpush1.msra.mxu0 0.0
        %6449 = vmatprep.subr.mxu0 0.0
        %6450 = vmatpush1.msra.mxu0 0.0
        %6451 = vmatprep.subr.mxu0 0.0
        %6452 = vmatpush1.msra.mxu0 0.0
        %6453 = vmatprep.subr.mxu0 0.0
        %6454 = vmatpush1.msra.mxu0 0.0
        %6455 = vmatprep.subr.mxu0 0.0
        %6456 = vmatpush1.msra.mxu0 0.0
        %6457 = vmatprep.subr.mxu0 0.0
        %6458 = vmatpush1.msra.mxu0 0.0
        %6459 = vmatprep.subr.mxu0 0.0
        %6460 = vmatpush1.msra.mxu0 0.0
        %6461 = vmatprep.subr.mxu0 0.0
        %6462 = vmatpush1.msra.mxu0 0.0
        %6463 = vmatprep.subr.mxu0 0.0
        %6464 = vmatpush1.msra.mxu0 0.0
        %6465 = vmatprep.subr.mxu0 0.0
        %6466 = vmatpush1.msra.mxu0 0.0
        %6467 = vmatprep.subr.mxu0 %v6434
        %6468 = vmatpush1.msra.mxu0 %v6433
        %6469 = vmatprep.subr.mxu0 %v6430
        %6470 = vmatpush1.msra.mxu0 %v6429
        %6471 = vmatprep.subr.mxu0 %v6426
        %6472 = vmatpush1.msra.mxu0 %v6425
        %6473 = vmatprep.subr.mxu0 %v6422
        %6474 = vmatpush1.msra.mxu0 %v6421
        %6475 = vmatprep.subr.mxu0 0.0
        %6476 = vmatpush2.msra.mxu0 0.0
        %6477 = vmatprep.subr.mxu0 0.0
        %6478 = vmatpush2.msra.mxu0 0.0
        %6479 = vmatprep.subr.mxu0 0.0
        %6480 = vmatpush2.msra.mxu0 0.0
        %6481 = vmatprep.subr.mxu0 0.0
        %6482 = vmatpush2.msra.mxu0 0.0
        %6483 = vmatprep.subr.mxu0 0.0
        %6484 = vmatpush2.msra.mxu0 0.0
        %6485 = vmatprep.subr.mxu0 0.0
        %6486 = vmatpush2.msra.mxu0 0.0
        %6487 = vmatprep.subr.mxu0 0.0
        %6488 = vmatpush2.msra.mxu0 0.0
        %6489 = vmatprep.subr.mxu0 0.0
        %6490 = vmatpush2.msra.mxu0 0.0
        %6491 = vmatprep.subr.mxu0 0.0
        %6492 = vmatpush2.msra.mxu0 0.0
        %6493 = vmatprep.subr.mxu0 0.0
        %6494 = vmatpush2.msra.mxu0 0.0
        %6495 = vmatprep.subr.mxu0 0.0
        %6496 = vmatpush2.msra.mxu0 0.0
        %6497 = vmatprep.subr.mxu0 0.0
        %6498 = vmatpush2.msra.mxu0 0.0
        %6499 = vmatprep.subr.mxu0 0.0
        %6500 = vmatpush2.msra.mxu0 0.0
        %6501 = vmatprep.subr.mxu0 0.0
        %6502 = vmatpush2.msra.mxu0 0.0
        %6503 = vmatprep.subr.mxu0 0.0
        %6504 = vmatpush2.msra.mxu0 0.0
        %6505 = vmatprep.subr.mxu0 0.0
        %6506 = vmatpush2.msra.mxu0 0.0
        %6507 = vmatprep.mubr.f32.mxu0 0.0
        %6508 = vmatmul.mubr.f32.gmra.mxu0 %v6438
        %v6509 = vpop.f32.mrf.mxu0
        %v6510 = vadd.f32 0.0, %v6509
        %v6511 = vpop.f32.mrf.mxu0
        %v6512 = vadd.f32 0.0, %v6511
        %6513 = vmatprep.mubr.f32.mxu0 0.0
        %6514 = vmatmul.mubr.f32.gmra.mxu0 %v6441
        %v6515 = vpop.f32.mrf.mxu0
        %v6516 = vadd.f32 0.0, %v6515
        %v6517 = vpop.f32.mrf.mxu0
        %v6518 = vadd.f32 0.0, %v6517
        %6519 = vdwg.mxu0
        %6520 = vmatprep.subr.mxu0 0.0
        %6521 = vmatpush1.msra.mxu0 0.0
        %6522 = vmatprep.subr.mxu0 0.0
        %6523 = vmatpush1.msra.mxu0 0.0
        %6524 = vmatprep.subr.mxu0 0.0
        %6525 = vmatpush1.msra.mxu0 0.0
        %6526 = vmatprep.subr.mxu0 0.0
        %6527 = vmatpush1.msra.mxu0 0.0
        %6528 = vmatprep.subr.mxu0 0.0
        %6529 = vmatpush1.msra.mxu0 0.0
        %6530 = vmatprep.subr.mxu0 0.0
        %6531 = vmatpush1.msra.mxu0 0.0
        %6532 = vmatprep.subr.mxu0 0.0
        %6533 = vmatpush1.msra.mxu0 0.0
        %6534 = vmatprep.subr.mxu0 0.0
        %6535 = vmatpush1.msra.mxu0 0.0
        %6536 = vmatprep.subr.mxu0 0.0
        %6537 = vmatpush1.msra.mxu0 0.0
        %6538 = vmatprep.subr.mxu0 0.0
        %6539 = vmatpush1.msra.mxu0 0.0
        %6540 = vmatprep.subr.mxu0 0.0
        %6541 = vmatpush1.msra.mxu0 0.0
        %6542 = vmatprep.subr.mxu0 0.0
        %6543 = vmatpush1.msra.mxu0 0.0
        %6544 = vmatprep.subr.mxu0 %v6436
        %6545 = vmatpush1.msra.mxu0 %v6435
        %6546 = vmatprep.subr.mxu0 %v6432
        %6547 = vmatpush1.msra.mxu0 %v6431
        %6548 = vmatprep.subr.mxu0 %v6428
        %6549 = vmatpush1.msra.mxu0 %v6427
        %6550 = vmatprep.subr.mxu0 %v6424
        %6551 = vmatpush1.msra.mxu0 %v6423
        %6552 = vmatprep.subr.mxu0 0.0
        %6553 = vmatpush2.msra.mxu0 0.0
        %6554 = vmatprep.subr.mxu0 0.0
        %6555 = vmatpush2.msra.mxu0 0.0
        %6556 = vmatprep.subr.mxu0 0.0
        %6557 = vmatpush2.msra.mxu0 0.0
        %6558 = vmatprep.subr.mxu0 0.0
        %6559 = vmatpush2.msra.mxu0 0.0
        %6560 = vmatprep.subr.mxu0 0.0
        %6561 = vmatpush2.msra.mxu0 0.0
        %6562 = vmatprep.subr.mxu0 0.0
        %6563 = vmatpush2.msra.mxu0 0.0
        %6564 = vmatprep.subr.mxu0 0.0
        %6565 = vmatpush2.msra.mxu0 0.0
        %6566 = vmatprep.subr.mxu0 0.0
        %6567 = vmatpush2.msra.mxu0 0.0
        %6568 = vmatprep.subr.mxu0 0.0
        %6569 = vmatpush2.msra.mxu0 0.0
        %6570 = vmatprep.subr.mxu0 0.0
        %6571 = vmatpush2.msra.mxu0 0.0
        %6572 = vmatprep.subr.mxu0 0.0
        %6573 = vmatpush2.msra.mxu0 0.0
        %6574 = vmatprep.subr.mxu0 0.0
        %6575 = vmatpush2.msra.mxu0 0.0
        %6576 = vmatprep.subr.mxu0 0.0
        %6577 = vmatpush2.msra.mxu0 0.0
        %6578 = vmatprep.subr.mxu0 0.0
        %6579 = vmatpush2.msra.mxu0 0.0
        %6580 = vmatprep.subr.mxu0 0.0
        %6581 = vmatpush2.msra.mxu0 0.0
        %6582 = vmatprep.subr.mxu0 0.0
        %6583 = vmatpush2.msra.mxu0 0.0
        %6584 = vmatprep.mubr.f32.mxu0 0.0
        %6585 = vmatmul.mubr.f32.gmra.mxu0 %v6438
        %v6586 = vpop.f32.mrf.mxu0
        %v6587 = vadd.f32 0.0, %v6586
        %v6588 = vpop.f32.mrf.mxu0
        %v6589 = vadd.f32 0.0, %v6588
        %6590 = vmatprep.mubr.f32.mxu0 0.0
        %6591 = vmatmul.mubr.f32.gmra.mxu0 %v6441
        %v6592 = vpop.f32.mrf.mxu0
        %v6593 = vadd.f32 0.0, %v6592
        %v6594 = vpop.f32.mrf.mxu0
        %v6595 = vadd.f32 0.0, %v6594
        %6596 = vdwg.mxu0
        %v6598 = vsel %vm3991, %v4336, 0
        %v6601 = vsel %vm3991, %v4337, 0
        %6603 = vmatprep.subr.mxu0 0.0
        %6604 = vmatpush1.msra.mxu0 0.0
        %6605 = vmatprep.subr.mxu0 0.0
        %6606 = vmatpush1.msra.mxu0 0.0
        %6607 = vmatprep.subr.mxu0 0.0
        %6608 = vmatpush1.msra.mxu0 0.0
        %6609 = vmatprep.subr.mxu0 0.0
        %6610 = vmatpush1.msra.mxu0 0.0
        %6611 = vmatprep.subr.mxu0 0.0
        %6612 = vmatpush1.msra.mxu0 0.0
        %6613 = vmatprep.subr.mxu0 0.0
        %6614 = vmatpush1.msra.mxu0 0.0
        %6615 = vmatprep.subr.mxu0 0.0
        %6616 = vmatpush1.msra.mxu0 0.0
        %6617 = vmatprep.subr.mxu0 0.0
        %6618 = vmatpush1.msra.mxu0 0.0
        %6619 = vmatprep.subr.mxu0 0.0
        %6620 = vmatpush1.msra.mxu0 0.0
        %6621 = vmatprep.subr.mxu0 0.0
        %6622 = vmatpush1.msra.mxu0 0.0
        %6623 = vmatprep.subr.mxu0 0.0
        %6624 = vmatpush1.msra.mxu0 0.0
        %6625 = vmatprep.subr.mxu0 0.0
        %6626 = vmatpush1.msra.mxu0 0.0
        %6627 = vmatprep.subr.mxu0 %v6417
        %6628 = vmatpush1.msra.mxu0 %v6416
        %6629 = vmatprep.subr.mxu0 %v6413
        %6630 = vmatpush1.msra.mxu0 %v6412
        %6631 = vmatprep.subr.mxu0 %v6409
        %6632 = vmatpush1.msra.mxu0 %v6408
        %6633 = vmatprep.subr.mxu0 %v6405
        %6634 = vmatpush1.msra.mxu0 %v6404
        %6635 = vmatprep.subr.mxu0 0.0
        %6636 = vmatpush2.msra.mxu0 0.0
        %6637 = vmatprep.subr.mxu0 0.0
        %6638 = vmatpush2.msra.mxu0 0.0
        %6639 = vmatprep.subr.mxu0 0.0
        %6640 = vmatpush2.msra.mxu0 0.0
        %6641 = vmatprep.subr.mxu0 0.0
        %6642 = vmatpush2.msra.mxu0 0.0
        %6643 = vmatprep.subr.mxu0 0.0
        %6644 = vmatpush2.msra.mxu0 0.0
        %6645 = vmatprep.subr.mxu0 0.0
        %6646 = vmatpush2.msra.mxu0 0.0
        %6647 = vmatprep.subr.mxu0 0.0
        %6648 = vmatpush2.msra.mxu0 0.0
        %6649 = vmatprep.subr.mxu0 0.0
        %6650 = vmatpush2.msra.mxu0 0.0
        %6651 = vmatprep.subr.mxu0 0.0
        %6652 = vmatpush2.msra.mxu0 0.0
        %6653 = vmatprep.subr.mxu0 0.0
        %6654 = vmatpush2.msra.mxu0 0.0
        %6655 = vmatprep.subr.mxu0 0.0
        %6656 = vmatpush2.msra.mxu0 0.0
        %6657 = vmatprep.subr.mxu0 0.0
        %6658 = vmatpush2.msra.mxu0 0.0
        %6659 = vmatprep.subr.mxu0 0.0
        %6660 = vmatpush2.msra.mxu0 0.0
        %6661 = vmatprep.subr.mxu0 0.0
        %6662 = vmatpush2.msra.mxu0 0.0
        %6663 = vmatprep.subr.mxu0 0.0
        %6664 = vmatpush2.msra.mxu0 0.0
        %6665 = vmatprep.subr.mxu0 0.0
        %6666 = vmatpush2.msra.mxu0 0.0
        %6667 = vmatprep.mubr.f32.mxu0 0.0
        %6668 = vmatmul.mubr.f32.gmra.mxu0 %v6598
        %v6669 = vpop.f32.mrf.mxu0
        %v6670 = vadd.f32 %v6510, %v6669
        %v6671 = vpop.f32.mrf.mxu0
        %v6672 = vadd.f32 %v6512, %v6671
        %6673 = vmatprep.mubr.f32.mxu0 0.0
        %6674 = vmatmul.mubr.f32.gmra.mxu0 %v6601
        %v6675 = vpop.f32.mrf.mxu0
        %v6676 = vadd.f32 %v6516, %v6675
        %v6677 = vpop.f32.mrf.mxu0
        %v6678 = vadd.f32 %v6518, %v6677
        %6679 = vdwg.mxu0
        %6680 = vmatprep.subr.mxu0 0.0
        %6681 = vmatpush1.msra.mxu0 0.0
        %6682 = vmatprep.subr.mxu0 0.0
        %6683 = vmatpush1.msra.mxu0 0.0
        %6684 = vmatprep.subr.mxu0 0.0
        %6685 = vmatpush1.msra.mxu0 0.0
        %6686 = vmatprep.subr.mxu0 0.0
        %6687 = vmatpush1.msra.mxu0 0.0
        %6688 = vmatprep.subr.mxu0 0.0
        %6689 = vmatpush1.msra.mxu0 0.0
        %6690 = vmatprep.subr.mxu0 0.0
        %6691 = vmatpush1.msra.mxu0 0.0
        %6692 = vmatprep.subr.mxu0 0.0
        %6693 = vmatpush1.msra.mxu0 0.0
        %6694 = vmatprep.subr.mxu0 0.0
        %6695 = vmatpush1.msra.mxu0 0.0
        %6696 = vmatprep.subr.mxu0 0.0
        %6697 = vmatpush1.msra.mxu0 0.0
        %6698 = vmatprep.subr.mxu0 0.0
        %6699 = vmatpush1.msra.mxu0 0.0
        %6700 = vmatprep.subr.mxu0 0.0
        %6701 = vmatpush1.msra.mxu0 0.0
        %6702 = vmatprep.subr.mxu0 0.0
        %6703 = vmatpush1.msra.mxu0 0.0
        %6704 = vmatprep.subr.mxu0 %v6419
        %6705 = vmatpush1.msra.mxu0 %v6418
        %6706 = vmatprep.subr.mxu0 %v6415
        %6707 = vmatpush1.msra.mxu0 %v6414
        %6708 = vmatprep.subr.mxu0 %v6411
        %6709 = vmatpush1.msra.mxu0 %v6410
        %6710 = vmatprep.subr.mxu0 %v6407
        %6711 = vmatpush1.msra.mxu0 %v6406
        %6712 = vmatprep.subr.mxu0 0.0
        %6713 = vmatpush2.msra.mxu0 0.0
        %6714 = vmatprep.subr.mxu0 0.0
        %6715 = vmatpush2.msra.mxu0 0.0
        %6716 = vmatprep.subr.mxu0 0.0
        %6717 = vmatpush2.msra.mxu0 0.0
        %6718 = vmatprep.subr.mxu0 0.0
        %6719 = vmatpush2.msra.mxu0 0.0
        %6720 = vmatprep.subr.mxu0 0.0
        %6721 = vmatpush2.msra.mxu0 0.0
        %6722 = vmatprep.subr.mxu0 0.0
        %6723 = vmatpush2.msra.mxu0 0.0
        %6724 = vmatprep.subr.mxu0 0.0
        %6725 = vmatpush2.msra.mxu0 0.0
        %6726 = vmatprep.subr.mxu0 0.0
        %6727 = vmatpush2.msra.mxu0 0.0
        %6728 = vmatprep.subr.mxu0 0.0
        %6729 = vmatpush2.msra.mxu0 0.0
        %6730 = vmatprep.subr.mxu0 0.0
        %6731 = vmatpush2.msra.mxu0 0.0
        %6732 = vmatprep.subr.mxu0 0.0
        %6733 = vmatpush2.msra.mxu0 0.0
        %6734 = vmatprep.subr.mxu0 0.0
        %6735 = vmatpush2.msra.mxu0 0.0
        %6736 = vmatprep.subr.mxu0 0.0
        %6737 = vmatpush2.msra.mxu0 0.0
        %6738 = vmatprep.subr.mxu0 0.0
        %6739 = vmatpush2.msra.mxu0 0.0
        %6740 = vmatprep.subr.mxu0 0.0
        %6741 = vmatpush2.msra.mxu0 0.0
        %6742 = vmatprep.subr.mxu0 0.0
        %6743 = vmatpush2.msra.mxu0 0.0
        %6744 = vmatprep.mubr.f32.mxu0 0.0
        %6745 = vmatmul.mubr.f32.gmra.mxu0 %v6598
        %v6746 = vpop.f32.mrf.mxu0
        %v6747 = vadd.f32 %v6587, %v6746
        %v6748 = vpop.f32.mrf.mxu0
        %v6749 = vadd.f32 %v6589, %v6748
        %6750 = vmatprep.mubr.f32.mxu0 0.0
        %6751 = vmatmul.mubr.f32.gmra.mxu0 %v6601
        %v6752 = vpop.f32.mrf.mxu0
        %v6753 = vadd.f32 %v6593, %v6752
        %v6754 = vpop.f32.mrf.mxu0
        %v6755 = vadd.f32 %v6595, %v6754
        %6756 = vdwg.mxu0
        %s6757 = scalar_lea.vmem %s8, 256
        %v6758 = vld [vmem:[%s6757] sm:$0xff]
        %v6759 = vld [vmem:[%s6757 + $0x8] sm:$0xff]
        %v6760 = vld [vmem:[%s6757 + $0x10] sm:$0xff]
        %v6761 = vld [vmem:[%s6757 + $0x18] sm:$0xff]
        %v6762 = vld [vmem:[%s6757 + $0x20] sm:$0xff]
        %v6763 = vld [vmem:[%s6757 + $0x28] sm:$0xff]
        %v6764 = vld [vmem:[%s6757 + $0x30] sm:$0xff]
        %v6765 = vld [vmem:[%s6757 + $0x38] sm:$0xff]
        %v6766 = vld [vmem:[%s6757 + $0x40] sm:$0xff]
        %v6767 = vld [vmem:[%s6757 + $0x48] sm:$0xff]
        %v6768 = vld [vmem:[%s6757 + $0x50] sm:$0xff]
        %v6769 = vld [vmem:[%s6757 + $0x58] sm:$0xff]
        %v6770 = vld [vmem:[%s6757 + $0x60] sm:$0xff]
        %v6771 = vld [vmem:[%s6757 + $0x68] sm:$0xff]
        %v6772 = vld [vmem:[%s6757 + $0x70] sm:$0xff]
        %v6773 = vld [vmem:[%s6757 + $0x78] sm:$0xff]
        %v6775 = vsel %vm3991, %v6396, 0
        %v6778 = vsel %vm3991, %v6401, 0
        %6780 = vmatprep.subr.mxu0 0.0
        %6781 = vmatpush1.msra.mxu0 0.0
        %6782 = vmatprep.subr.mxu0 0.0
        %6783 = vmatpush1.msra.mxu0 0.0
        %6784 = vmatprep.subr.mxu0 0.0
        %6785 = vmatpush1.msra.mxu0 0.0
        %6786 = vmatprep.subr.mxu0 0.0
        %6787 = vmatpush1.msra.mxu0 0.0
        %6788 = vmatprep.subr.mxu0 0.0
        %6789 = vmatpush1.msra.mxu0 0.0
        %6790 = vmatprep.subr.mxu0 0.0
        %6791 = vmatpush1.msra.mxu0 0.0
        %6792 = vmatprep.subr.mxu0 0.0
        %6793 = vmatpush1.msra.mxu0 0.0
        %6794 = vmatprep.subr.mxu0 0.0
        %6795 = vmatpush1.msra.mxu0 0.0
        %6796 = vmatprep.subr.mxu0 0.0
        %6797 = vmatpush1.msra.mxu0 0.0
        %6798 = vmatprep.subr.mxu0 0.0
        %6799 = vmatpush1.msra.mxu0 0.0
        %6800 = vmatprep.subr.mxu0 0.0
        %6801 = vmatpush1.msra.mxu0 0.0
        %6802 = vmatprep.subr.mxu0 0.0
        %6803 = vmatpush1.msra.mxu0 0.0
        %6804 = vmatprep.subr.mxu0 %v6771
        %6805 = vmatpush1.msra.mxu0 %v6770
        %6806 = vmatprep.subr.mxu0 %v6767
        %6807 = vmatpush1.msra.mxu0 %v6766
        %6808 = vmatprep.subr.mxu0 %v6763
        %6809 = vmatpush1.msra.mxu0 %v6762
        %6810 = vmatprep.subr.mxu0 %v6759
        %6811 = vmatpush1.msra.mxu0 %v6758
        %6812 = vmatprep.subr.mxu0 0.0
        %6813 = vmatpush2.msra.mxu0 0.0
        %6814 = vmatprep.subr.mxu0 0.0
        %6815 = vmatpush2.msra.mxu0 0.0
        %6816 = vmatprep.subr.mxu0 0.0
        %6817 = vmatpush2.msra.mxu0 0.0
        %6818 = vmatprep.subr.mxu0 0.0
        %6819 = vmatpush2.msra.mxu0 0.0
        %6820 = vmatprep.subr.mxu0 0.0
        %6821 = vmatpush2.msra.mxu0 0.0
        %6822 = vmatprep.subr.mxu0 0.0
        %6823 = vmatpush2.msra.mxu0 0.0
        %6824 = vmatprep.subr.mxu0 0.0
        %6825 = vmatpush2.msra.mxu0 0.0
        %6826 = vmatprep.subr.mxu0 0.0
        %6827 = vmatpush2.msra.mxu0 0.0
        %6828 = vmatprep.subr.mxu0 0.0
        %6829 = vmatpush2.msra.mxu0 0.0
        %6830 = vmatprep.subr.mxu0 0.0
        %6831 = vmatpush2.msra.mxu0 0.0
        %6832 = vmatprep.subr.mxu0 0.0
        %6833 = vmatpush2.msra.mxu0 0.0
        %6834 = vmatprep.subr.mxu0 0.0
        %6835 = vmatpush2.msra.mxu0 0.0
        %6836 = vmatprep.subr.mxu0 0.0
        %6837 = vmatpush2.msra.mxu0 0.0
        %6838 = vmatprep.subr.mxu0 0.0
        %6839 = vmatpush2.msra.mxu0 0.0
        %6840 = vmatprep.subr.mxu0 0.0
        %6841 = vmatpush2.msra.mxu0 0.0
        %6842 = vmatprep.subr.mxu0 0.0
        %6843 = vmatpush2.msra.mxu0 0.0
        %6844 = vmatprep.mubr.f32.mxu0 0.0
        %6845 = vmatmul.mubr.f32.gmra.mxu0 %v6775
        %v6846 = vpop.f32.mrf.mxu0
        %v6847 = vadd.f32 0.0, %v6846
        %v6848 = vpop.f32.mrf.mxu0
        %v6849 = vadd.f32 0.0, %v6848
        %6850 = vmatprep.mubr.f32.mxu0 0.0
        %6851 = vmatmul.mubr.f32.gmra.mxu0 %v6778
        %v6852 = vpop.f32.mrf.mxu0
        %v6853 = vadd.f32 0.0, %v6852
        %v6854 = vpop.f32.mrf.mxu0
        %v6855 = vadd.f32 0.0, %v6854
        %6856 = vdwg.mxu0
        %6857 = vmatprep.subr.mxu0 0.0
        %6858 = vmatpush1.msra.mxu0 0.0
        %6859 = vmatprep.subr.mxu0 0.0
        %6860 = vmatpush1.msra.mxu0 0.0
        %6861 = vmatprep.subr.mxu0 0.0
        %6862 = vmatpush1.msra.mxu0 0.0
        %6863 = vmatprep.subr.mxu0 0.0
        %6864 = vmatpush1.msra.mxu0 0.0
        %6865 = vmatprep.subr.mxu0 0.0
        %6866 = vmatpush1.msra.mxu0 0.0
        %6867 = vmatprep.subr.mxu0 0.0
        %6868 = vmatpush1.msra.mxu0 0.0
        %6869 = vmatprep.subr.mxu0 0.0
        %6870 = vmatpush1.msra.mxu0 0.0
        %6871 = vmatprep.subr.mxu0 0.0
        %6872 = vmatpush1.msra.mxu0 0.0
        %6873 = vmatprep.subr.mxu0 0.0
        %6874 = vmatpush1.msra.mxu0 0.0
        %6875 = vmatprep.subr.mxu0 0.0
        %6876 = vmatpush1.msra.mxu0 0.0
        %6877 = vmatprep.subr.mxu0 0.0
        %6878 = vmatpush1.msra.mxu0 0.0
        %6879 = vmatprep.subr.mxu0 0.0
        %6880 = vmatpush1.msra.mxu0 0.0
        %6881 = vmatprep.subr.mxu0 %v6773
        %6882 = vmatpush1.msra.mxu0 %v6772
        %6883 = vmatprep.subr.mxu0 %v6769
        %6884 = vmatpush1.msra.mxu0 %v6768
        %6885 = vmatprep.subr.mxu0 %v6765
        %6886 = vmatpush1.msra.mxu0 %v6764
        %6887 = vmatprep.subr.mxu0 %v6761
        %6888 = vmatpush1.msra.mxu0 %v6760
        %6889 = vmatprep.subr.mxu0 0.0
        %6890 = vmatpush2.msra.mxu0 0.0
        %6891 = vmatprep.subr.mxu0 0.0
        %6892 = vmatpush2.msra.mxu0 0.0
        %6893 = vmatprep.subr.mxu0 0.0
        %6894 = vmatpush2.msra.mxu0 0.0
        %6895 = vmatprep.subr.mxu0 0.0
        %6896 = vmatpush2.msra.mxu0 0.0
        %6897 = vmatprep.subr.mxu0 0.0
        %6898 = vmatpush2.msra.mxu0 0.0
        %6899 = vmatprep.subr.mxu0 0.0
        %6900 = vmatpush2.msra.mxu0 0.0
        %6901 = vmatprep.subr.mxu0 0.0
        %6902 = vmatpush2.msra.mxu0 0.0
        %6903 = vmatprep.subr.mxu0 0.0
        %6904 = vmatpush2.msra.mxu0 0.0
        %6905 = vmatprep.subr.mxu0 0.0
        %6906 = vmatpush2.msra.mxu0 0.0
        %6907 = vmatprep.subr.mxu0 0.0
        %6908 = vmatpush2.msra.mxu0 0.0
        %6909 = vmatprep.subr.mxu0 0.0
        %6910 = vmatpush2.msra.mxu0 0.0
        %6911 = vmatprep.subr.mxu0 0.0
        %6912 = vmatpush2.msra.mxu0 0.0
        %6913 = vmatprep.subr.mxu0 0.0
        %6914 = vmatpush2.msra.mxu0 0.0
        %6915 = vmatprep.subr.mxu0 0.0
        %6916 = vmatpush2.msra.mxu0 0.0
        %6917 = vmatprep.subr.mxu0 0.0
        %6918 = vmatpush2.msra.mxu0 0.0
        %6919 = vmatprep.subr.mxu0 0.0
        %6920 = vmatpush2.msra.mxu0 0.0
        %6921 = vmatprep.mubr.f32.mxu0 0.0
        %6922 = vmatmul.mubr.f32.gmra.mxu0 %v6775
        %v6923 = vpop.f32.mrf.mxu0
        %v6924 = vadd.f32 0.0, %v6923
        %v6925 = vpop.f32.mrf.mxu0
        %v6926 = vadd.f32 0.0, %v6925
        %6927 = vmatprep.mubr.f32.mxu0 0.0
        %6928 = vmatmul.mubr.f32.gmra.mxu0 %v6778
        %v6929 = vpop.f32.mrf.mxu0
        %v6930 = vadd.f32 0.0, %v6929
        %v6931 = vpop.f32.mrf.mxu0
        %v6932 = vadd.f32 0.0, %v6931
        %6933 = vdwg.mxu0
        %v6934 = vadd.f32 %v6670, %v6847
        %v6935 = vadd.f32 %v6672, %v6849
        %v6936 = vadd.f32 %v6747, %v6924
        %v6937 = vadd.f32 %v6749, %v6926
        %v6938 = vadd.f32 %v6676, %v6853
        %v6939 = vadd.f32 %v6678, %v6855
        %v6940 = vadd.f32 %v6753, %v6930
        %v6941 = vadd.f32 %v6755, %v6932
        %v6942 = vadd.f32 %v6307, %v6934
        %v6943 = vadd.f32 %v6308, %v6935
        %v6944 = vadd.f32 %v6313, %v6938
        %v6945 = vadd.f32 %v6314, %v6939
        %v6946 = vmul.f32 %v6942, %v1293
        %v6947 = vmul.f32 %v6943, %v1294
        %v6948 = vmul.f32 %v6944, %v1295
        %v6949 = vmul.f32 %v6945, %v1296
        %v6950 = vadd.f32 %v6946, %v6947
        %v6951 = vadd.f32 %v6948, %v6949
        %6952 = vrot.lane.b32.xlu0 %v6950, 64
        %v6953 = vpop.permute.xlu0 %6952
        %6954 = vrot.lane.b32.xlu0 %v6951, 64
        %v6955 = vpop.permute.xlu0 %6954
        %v6956 = vadd.f32 %v6950, %v6953
        %v6957 = vadd.f32 %v6951, %v6955
        %6958 = vrot.lane.b32.xlu0 %v6956, 32
        %v6959 = vpop.permute.xlu0 %6958
        %6960 = vrot.lane.b32.xlu0 %v6957, 32
        %v6961 = vpop.permute.xlu0 %6960
        %v6962 = vadd.f32 %v6956, %v6959
        %v6963 = vadd.f32 %v6957, %v6961
        %v6964 = vadd.f32 %v6962, %v1133
        %v6965 = vadd.f32 %v6963, %v1138
        %v6966 = vxor.u32 %v6964, 2147483648
        %v6967 = vxor.u32 %v6965, 2147483648
        %v6968 = vmul.f32 %v6966, 1.442695
        %v6969 = vpow.pop %v6968
        %v6970 = vmul.f32 %v6967, 1.442695
        %v6971 = vpow.pop %v6970
        %v6972 = vadd.f32 %v6969, 1.0
        %v6973 = vadd.f32 %v6971, 1.0
        %v6974 = vrcp.pop %v6972
        %v6975 = vmul.f32 1.0, %v6974
        %v6976 = vrcp.pop %v6973
        %v6977 = vmul.f32 1.0, %v6976
        %v6978 = vadd.f32 %v6309, %v6936
        %v6979 = vadd.f32 %v6310, %v6937
        %v6980 = vadd.f32 %v6315, %v6940
        %v6981 = vadd.f32 %v6316, %v6941
        %v6982 = vmul.f32 %v6978, %v1293
        %v6983 = vmul.f32 %v6979, %v1294
        %v6984 = vmul.f32 %v6980, %v1295
        %v6985 = vmul.f32 %v6981, %v1296
        %v6986 = vadd.f32 %v6982, %v6983
        %v6987 = vadd.f32 %v6984, %v6985
        %6988 = vrot.lane.b32.xlu0 %v6986, 64
        %v6989 = vpop.permute.xlu0 %6988
        %6990 = vrot.lane.b32.xlu0 %v6987, 64
        %v6991 = vpop.permute.xlu0 %6990
        %v6992 = vadd.f32 %v6986, %v6989
        %v6993 = vadd.f32 %v6987, %v6991
        %6994 = vrot.lane.b32.xlu0 %v6992, 32
        %v6995 = vpop.permute.xlu0 %6994
        %6996 = vrot.lane.b32.xlu0 %v6993, 32
        %v6997 = vpop.permute.xlu0 %6996
        %v6998 = vadd.f32 %v6992, %v6995
        %v6999 = vadd.f32 %v6993, %v6997
        %v7000 = vadd.f32 %v6998, %v1209
        %v7001 = vadd.f32 %v6999, %v1214
        %v7002 = vxor.u32 %v7000, 2147483648
        %v7003 = vxor.u32 %v7001, 2147483648
        %v7004 = vmul.f32 %v7002, 1.442695
        %v7005 = vpow.pop %v7004
        %v7006 = vmul.f32 %v7003, 1.442695
        %v7007 = vpow.pop %v7006
        %v7008 = vadd.f32 %v7005, 1.0
        %v7009 = vadd.f32 %v7007, 1.0
        %v7010 = vrcp.pop %v7008
        %v7011 = vmul.f32 1.0, %v7010
        %v7012 = vrcp.pop %v7009
        %v7013 = vmul.f32 1.0, %v7012
        %v7014 = vmul.f32 %v6975, %v4336
        %v7015 = vmul.f32 %v6977, %v4337
        %7016 = vmatprep.subr.mxu0 0.0
        %7017 = vmatpush1.msra.mxu0 0.0
        %7018 = vmatprep.subr.mxu0 0.0
        %7019 = vmatpush1.msra.mxu0 0.0
        %7020 = vmatprep.subr.mxu0 0.0
        %7021 = vmatpush1.msra.mxu0 0.0
        %7022 = vmatprep.subr.mxu0 0.0
        %7023 = vmatpush1.msra.mxu0 0.0
        %7024 = vmatprep.subr.mxu0 0.0
        %7025 = vmatpush1.msra.mxu0 0.0
        %7026 = vmatprep.subr.mxu0 0.0
        %7027 = vmatpush1.msra.mxu0 0.0
        %7028 = vmatprep.subr.mxu0 0.0
        %7029 = vmatpush1.msra.mxu0 0.0
        %7030 = vmatprep.subr.mxu0 0.0
        %7031 = vmatpush1.msra.mxu0 0.0
        %7032 = vmatprep.subr.mxu0 0.0
        %7033 = vmatpush1.msra.mxu0 0.0
        %7034 = vmatprep.subr.mxu0 0.0
        %7035 = vmatpush1.msra.mxu0 0.0
        %7036 = vmatprep.subr.mxu0 0.0
        %7037 = vmatpush1.msra.mxu0 0.0
        %7038 = vmatprep.subr.mxu0 0.0
        %7039 = vmatpush1.msra.mxu0 0.0
        %7040 = vmatprep.subr.mxu0 0.0
        %7041 = vmatpush1.msra.mxu0 0.0
        %7042 = vmatprep.subr.mxu0 0.0
        %7043 = vmatpush1.msra.mxu0 0.0
        %7044 = vmatprep.subr.mxu0 0.0
        %7045 = vmatpush1.msra.mxu0 %v7015
        %7046 = vmatprep.subr.mxu0 0.0
        %7047 = vmatpush1.msra.mxu0 %v7014
        %7048 = vmatprep.subr.mxu0 0.0
        %7049 = vmatpush2.msra.mxu0 0.0
        %7050 = vmatprep.subr.mxu0 0.0
        %7051 = vmatpush2.msra.mxu0 0.0
        %7052 = vmatprep.subr.mxu0 0.0
        %7053 = vmatpush2.msra.mxu0 0.0
        %7054 = vmatprep.subr.mxu0 0.0
        %7055 = vmatpush2.msra.mxu0 0.0
        %7056 = vmatprep.subr.mxu0 0.0
        %7057 = vmatpush2.msra.mxu0 0.0
        %7058 = vmatprep.subr.mxu0 0.0
        %7059 = vmatpush2.msra.mxu0 0.0
        %7060 = vmatprep.subr.mxu0 0.0
        %7061 = vmatpush2.msra.mxu0 0.0
        %7062 = vmatprep.subr.mxu0 0.0
        %7063 = vmatpush2.msra.mxu0 0.0
        %7064 = vmatprep.subr.mxu0 0.0
        %7065 = vmatpush2.msra.mxu0 0.0
        %7066 = vmatprep.subr.mxu0 0.0
        %7067 = vmatpush2.msra.mxu0 0.0
        %7068 = vmatprep.subr.mxu0 0.0
        %7069 = vmatpush2.msra.mxu0 0.0
        %7070 = vmatprep.subr.mxu0 0.0
        %7071 = vmatpush2.msra.mxu0 0.0
        %7072 = vmatprep.subr.mxu0 0.0
        %7073 = vmatpush2.msra.mxu0 0.0
        %7074 = vmatprep.subr.mxu0 0.0
        %7075 = vmatpush2.msra.mxu0 0.0
        %7076 = vmatprep.subr.mxu0 0.0
        %7077 = vmatpush2.msra.mxu0 0.0
        %7078 = vmatprep.subr.mxu0 0.0
        %7079 = vmatpush2.msra.mxu0 0.0
        %7080 = vmatprep.mubr.f32.mxu0 0.0
        %7081 = vmatmul.mubr.f32.gmra.mxu0 %v753
        %v7082 = vpop.f32.mrf.mxu0
        %v7083 = vadd.f32 0.0, %v7082
        %v7084 = vpop.f32.mrf.mxu0
        %7085 = vmatprep.mubr.f32.mxu0 0.0
        %7086 = vmatmul.mubr.f32.gmra.mxu0 %v756
        %v7087 = vpop.f32.mrf.mxu0
        %v7088 = vadd.f32 0.0, %v7087
        %v7089 = vpop.f32.mrf.mxu0
        %7090 = vmatprep.mubr.f32.mxu0 0.0
        %7091 = vmatmul.mubr.f32.gmra.mxu0 %v1346
        %v7092 = vpop.f32.mrf.mxu0
        %v7093 = vadd.f32 0.0, %v7092
        %v7094 = vpop.f32.mrf.mxu0
        %7095 = vmatprep.mubr.f32.mxu0 0.0
        %7096 = vmatmul.mubr.f32.gmra.mxu0 %v1349
        %v7097 = vpop.f32.mrf.mxu0
        %v7098 = vadd.f32 0.0, %v7097
        %v7099 = vpop.f32.mrf.mxu0
        %7100 = vdwg.mxu0
        %v7101 = vld [vmem:[%s9] sm:$0xff]
        %v7102 = vld [vmem:[%s9 + $0x8] sm:$0xff]
        %v7103 = vld [vmem:[%s9 + $0x10] sm:$0xff]
        %v7104 = vld [vmem:[%s9 + $0x18] sm:$0xff]
        %v7105 = vld [vmem:[%s9 + $0x20] sm:$0xff]
        %v7106 = vld [vmem:[%s9 + $0x28] sm:$0xff]
        %v7107 = vld [vmem:[%s9 + $0x30] sm:$0xff]
        %v7108 = vld [vmem:[%s9 + $0x38] sm:$0xff]
        %s7109 = scalar_lea.vmem %s9, 64
        %v7110 = vld [vmem:[%s7109] sm:$0xff]
        %v7111 = vld [vmem:[%s7109 + $0x8] sm:$0xff]
        %v7112 = vld [vmem:[%s7109 + $0x10] sm:$0xff]
        %v7113 = vld [vmem:[%s7109 + $0x18] sm:$0xff]
        %v7114 = vld [vmem:[%s7109 + $0x20] sm:$0xff]
        %v7115 = vld [vmem:[%s7109 + $0x28] sm:$0xff]
        %v7116 = vld [vmem:[%s7109 + $0x30] sm:$0xff]
        %v7117 = vld [vmem:[%s7109 + $0x38] sm:$0xff]
        %v7119 = vsel %vm3991, %v7083, 0
        %v7122 = vsel %vm3991, %v7088, 0
        %7124 = vmatprep.subr.mxu0 0.0
        %7125 = vmatpush1.msra.mxu0 0.0
        %7126 = vmatprep.subr.mxu0 0.0
        %7127 = vmatpush1.msra.mxu0 0.0
        %7128 = vmatprep.subr.mxu0 0.0
        %7129 = vmatpush1.msra.mxu0 0.0
        %7130 = vmatprep.subr.mxu0 0.0
        %7131 = vmatpush1.msra.mxu0 0.0
        %7132 = vmatprep.subr.mxu0 0.0
        %7133 = vmatpush1.msra.mxu0 0.0
        %7134 = vmatprep.subr.mxu0 0.0
        %7135 = vmatpush1.msra.mxu0 0.0
        %7136 = vmatprep.subr.mxu0 0.0
        %7137 = vmatpush1.msra.mxu0 0.0
        %7138 = vmatprep.subr.mxu0 0.0
        %7139 = vmatpush1.msra.mxu0 0.0
        %7140 = vmatprep.subr.mxu0 0.0
        %7141 = vmatpush1.msra.mxu0 0.0
        %7142 = vmatprep.subr.mxu0 0.0
        %7143 = vmatpush1.msra.mxu0 0.0
        %7144 = vmatprep.subr.mxu0 0.0
        %7145 = vmatpush1.msra.mxu0 0.0
        %7146 = vmatprep.subr.mxu0 0.0
        %7147 = vmatpush1.msra.mxu0 0.0
        %7148 = vmatprep.subr.mxu0 %v7117
        %7149 = vmatpush1.msra.mxu0 %v7116
        %7150 = vmatprep.subr.mxu0 %v7115
        %7151 = vmatpush1.msra.mxu0 %v7114
        %7152 = vmatprep.subr.mxu0 %v7113
        %7153 = vmatpush1.msra.mxu0 %v7112
        %7154 = vmatprep.subr.mxu0 %v7111
        %7155 = vmatpush1.msra.mxu0 %v7110
        %7156 = vmatprep.subr.mxu0 0.0
        %7157 = vmatpush2.msra.mxu0 0.0
        %7158 = vmatprep.subr.mxu0 0.0
        %7159 = vmatpush2.msra.mxu0 0.0
        %7160 = vmatprep.subr.mxu0 0.0
        %7161 = vmatpush2.msra.mxu0 0.0
        %7162 = vmatprep.subr.mxu0 0.0
        %7163 = vmatpush2.msra.mxu0 0.0
        %7164 = vmatprep.subr.mxu0 0.0
        %7165 = vmatpush2.msra.mxu0 0.0
        %7166 = vmatprep.subr.mxu0 0.0
        %7167 = vmatpush2.msra.mxu0 0.0
        %7168 = vmatprep.subr.mxu0 0.0
        %7169 = vmatpush2.msra.mxu0 0.0
        %7170 = vmatprep.subr.mxu0 0.0
        %7171 = vmatpush2.msra.mxu0 0.0
        %7172 = vmatprep.subr.mxu0 0.0
        %7173 = vmatpush2.msra.mxu0 0.0
        %7174 = vmatprep.subr.mxu0 0.0
        %7175 = vmatpush2.msra.mxu0 0.0
        %7176 = vmatprep.subr.mxu0 0.0
        %7177 = vmatpush2.msra.mxu0 0.0
        %7178 = vmatprep.subr.mxu0 0.0
        %7179 = vmatpush2.msra.mxu0 0.0
        %7180 = vmatprep.subr.mxu0 0.0
        %7181 = vmatpush2.msra.mxu0 0.0
        %7182 = vmatprep.subr.mxu0 0.0
        %7183 = vmatpush2.msra.mxu0 0.0
        %7184 = vmatprep.subr.mxu0 0.0
        %7185 = vmatpush2.msra.mxu0 0.0
        %7186 = vmatprep.subr.mxu0 0.0
        %7187 = vmatpush2.msra.mxu0 0.0
        %7188 = vmatprep.mubr.f32.mxu0 0.0
        %7189 = vmatmul.mubr.f32.gmra.mxu0 %v7119
        %v7190 = vpop.f32.mrf.mxu0
        %v7191 = vadd.f32 0.0, %v7190
        %v7192 = vpop.f32.mrf.mxu0
        %v7193 = vadd.f32 0.0, %v7192
        %7194 = vmatprep.mubr.f32.mxu0 0.0
        %7195 = vmatmul.mubr.f32.gmra.mxu0 %v7122
        %v7196 = vpop.f32.mrf.mxu0
        %v7197 = vadd.f32 0.0, %v7196
        %v7198 = vpop.f32.mrf.mxu0
        %v7199 = vadd.f32 0.0, %v7198
        %7200 = vdwg.mxu0
        %v7202 = vsel %vm3991, %v7014, 0
        %v7205 = vsel %vm3991, %v7015, 0
        %7207 = vmatprep.subr.mxu0 0.0
        %7208 = vmatpush1.msra.mxu0 0.0
        %7209 = vmatprep.subr.mxu0 0.0
        %7210 = vmatpush1.msra.mxu0 0.0
        %7211 = vmatprep.subr.mxu0 0.0
        %7212 = vmatpush1.msra.mxu0 0.0
        %7213 = vmatprep.subr.mxu0 0.0
        %7214 = vmatpush1.msra.mxu0 0.0
        %7215 = vmatprep.subr.mxu0 0.0
        %7216 = vmatpush1.msra.mxu0 0.0
        %7217 = vmatprep.subr.mxu0 0.0
        %7218 = vmatpush1.msra.mxu0 0.0
        %7219 = vmatprep.subr.mxu0 0.0
        %7220 = vmatpush1.msra.mxu0 0.0
        %7221 = vmatprep.subr.mxu0 0.0
        %7222 = vmatpush1.msra.mxu0 0.0
        %7223 = vmatprep.subr.mxu0 0.0
        %7224 = vmatpush1.msra.mxu0 0.0
        %7225 = vmatprep.subr.mxu0 0.0
        %7226 = vmatpush1.msra.mxu0 0.0
        %7227 = vmatprep.subr.mxu0 0.0
        %7228 = vmatpush1.msra.mxu0 0.0
        %7229 = vmatprep.subr.mxu0 0.0
        %7230 = vmatpush1.msra.mxu0 0.0
        %7231 = vmatprep.subr.mxu0 %v7108
        %7232 = vmatpush1.msra.mxu0 %v7107
        %7233 = vmatprep.subr.mxu0 %v7106
        %7234 = vmatpush1.msra.mxu0 %v7105
        %7235 = vmatprep.subr.mxu0 %v7104
        %7236 = vmatpush1.msra.mxu0 %v7103
        %7237 = vmatprep.subr.mxu0 %v7102
        %7238 = vmatpush1.msra.mxu0 %v7101
        %7239 = vmatprep.subr.mxu0 0.0
        %7240 = vmatpush2.msra.mxu0 0.0
        %7241 = vmatprep.subr.mxu0 0.0
        %7242 = vmatpush2.msra.mxu0 0.0
        %7243 = vmatprep.subr.mxu0 0.0
        %7244 = vmatpush2.msra.mxu0 0.0
        %7245 = vmatprep.subr.mxu0 0.0
        %7246 = vmatpush2.msra.mxu0 0.0
        %7247 = vmatprep.subr.mxu0 0.0
        %7248 = vmatpush2.msra.mxu0 0.0
        %7249 = vmatprep.subr.mxu0 0.0
        %7250 = vmatpush2.msra.mxu0 0.0
        %7251 = vmatprep.subr.mxu0 0.0
        %7252 = vmatpush2.msra.mxu0 0.0
        %7253 = vmatprep.subr.mxu0 0.0
        %7254 = vmatpush2.msra.mxu0 0.0
        %7255 = vmatprep.subr.mxu0 0.0
        %7256 = vmatpush2.msra.mxu0 0.0
        %7257 = vmatprep.subr.mxu0 0.0
        %7258 = vmatpush2.msra.mxu0 0.0
        %7259 = vmatprep.subr.mxu0 0.0
        %7260 = vmatpush2.msra.mxu0 0.0
        %7261 = vmatprep.subr.mxu0 0.0
        %7262 = vmatpush2.msra.mxu0 0.0
        %7263 = vmatprep.subr.mxu0 0.0
        %7264 = vmatpush2.msra.mxu0 0.0
        %7265 = vmatprep.subr.mxu0 0.0
        %7266 = vmatpush2.msra.mxu0 0.0
        %7267 = vmatprep.subr.mxu0 0.0
        %7268 = vmatpush2.msra.mxu0 0.0
        %7269 = vmatprep.subr.mxu0 0.0
        %7270 = vmatpush2.msra.mxu0 0.0
        %7271 = vmatprep.mubr.f32.mxu0 0.0
        %7272 = vmatmul.mubr.f32.gmra.mxu0 %v7202
        %v7273 = vpop.f32.mrf.mxu0
        %v7274 = vadd.f32 %v7191, %v7273
        %v7275 = vpop.f32.mrf.mxu0
        %v7276 = vadd.f32 %v7193, %v7275
        %7277 = vmatprep.mubr.f32.mxu0 0.0
        %7278 = vmatmul.mubr.f32.gmra.mxu0 %v7205
        %v7279 = vpop.f32.mrf.mxu0
        %v7280 = vadd.f32 %v7197, %v7279
        %v7281 = vpop.f32.mrf.mxu0
        %v7282 = vadd.f32 %v7199, %v7281
        %7283 = vdwg.mxu0
        %s7284 = scalar_lea.vmem %s9, 128
        %v7285 = vld [vmem:[%s7284] sm:$0xff]
        %v7286 = vld [vmem:[%s7284 + $0x8] sm:$0xff]
        %v7287 = vld [vmem:[%s7284 + $0x10] sm:$0xff]
        %v7288 = vld [vmem:[%s7284 + $0x18] sm:$0xff]
        %v7289 = vld [vmem:[%s7284 + $0x20] sm:$0xff]
        %v7290 = vld [vmem:[%s7284 + $0x28] sm:$0xff]
        %v7291 = vld [vmem:[%s7284 + $0x30] sm:$0xff]
        %v7292 = vld [vmem:[%s7284 + $0x38] sm:$0xff]
        %v7294 = vsel %vm3991, %v7093, 0
        %v7297 = vsel %vm3991, %v7098, 0
        %7299 = vmatprep.subr.mxu0 0.0
        %7300 = vmatpush1.msra.mxu0 0.0
        %7301 = vmatprep.subr.mxu0 0.0
        %7302 = vmatpush1.msra.mxu0 0.0
        %7303 = vmatprep.subr.mxu0 0.0
        %7304 = vmatpush1.msra.mxu0 0.0
        %7305 = vmatprep.subr.mxu0 0.0
        %7306 = vmatpush1.msra.mxu0 0.0
        %7307 = vmatprep.subr.mxu0 0.0
        %7308 = vmatpush1.msra.mxu0 0.0
        %7309 = vmatprep.subr.mxu0 0.0
        %7310 = vmatpush1.msra.mxu0 0.0
        %7311 = vmatprep.subr.mxu0 0.0
        %7312 = vmatpush1.msra.mxu0 0.0
        %7313 = vmatprep.subr.mxu0 0.0
        %7314 = vmatpush1.msra.mxu0 0.0
        %7315 = vmatprep.subr.mxu0 0.0
        %7316 = vmatpush1.msra.mxu0 0.0
        %7317 = vmatprep.subr.mxu0 0.0
        %7318 = vmatpush1.msra.mxu0 0.0
        %7319 = vmatprep.subr.mxu0 0.0
        %7320 = vmatpush1.msra.mxu0 0.0
        %7321 = vmatprep.subr.mxu0 0.0
        %7322 = vmatpush1.msra.mxu0 0.0
        %7323 = vmatprep.subr.mxu0 %v7292
        %7324 = vmatpush1.msra.mxu0 %v7291
        %7325 = vmatprep.subr.mxu0 %v7290
        %7326 = vmatpush1.msra.mxu0 %v7289
        %7327 = vmatprep.subr.mxu0 %v7288
        %7328 = vmatpush1.msra.mxu0 %v7287
        %7329 = vmatprep.subr.mxu0 %v7286
        %7330 = vmatpush1.msra.mxu0 %v7285
        %7331 = vmatprep.subr.mxu0 0.0
        %7332 = vmatpush2.msra.mxu0 0.0
        %7333 = vmatprep.subr.mxu0 0.0
        %7334 = vmatpush2.msra.mxu0 0.0
        %7335 = vmatprep.subr.mxu0 0.0
        %7336 = vmatpush2.msra.mxu0 0.0
        %7337 = vmatprep.subr.mxu0 0.0
        %7338 = vmatpush2.msra.mxu0 0.0
        %7339 = vmatprep.subr.mxu0 0.0
        %7340 = vmatpush2.msra.mxu0 0.0
        %7341 = vmatprep.subr.mxu0 0.0
        %7342 = vmatpush2.msra.mxu0 0.0
        %7343 = vmatprep.subr.mxu0 0.0
        %7344 = vmatpush2.msra.mxu0 0.0
        %7345 = vmatprep.subr.mxu0 0.0
        %7346 = vmatpush2.msra.mxu0 0.0
        %7347 = vmatprep.subr.mxu0 0.0
        %7348 = vmatpush2.msra.mxu0 0.0
        %7349 = vmatprep.subr.mxu0 0.0
        %7350 = vmatpush2.msra.mxu0 0.0
        %7351 = vmatprep.subr.mxu0 0.0
        %7352 = vmatpush2.msra.mxu0 0.0
        %7353 = vmatprep.subr.mxu0 0.0
        %7354 = vmatpush2.msra.mxu0 0.0
        %7355 = vmatprep.subr.mxu0 0.0
        %7356 = vmatpush2.msra.mxu0 0.0
        %7357 = vmatprep.subr.mxu0 0.0
        %7358 = vmatpush2.msra.mxu0 0.0
        %7359 = vmatprep.subr.mxu0 0.0
        %7360 = vmatpush2.msra.mxu0 0.0
        %7361 = vmatprep.subr.mxu0 0.0
        %7362 = vmatpush2.msra.mxu0 0.0
        %7363 = vmatprep.mubr.f32.mxu0 0.0
        %7364 = vmatmul.mubr.f32.gmra.mxu0 %v7294
        %v7365 = vpop.f32.mrf.mxu0
        %v7366 = vadd.f32 0.0, %v7365
        %v7367 = vpop.f32.mrf.mxu0
        %v7368 = vadd.f32 0.0, %v7367
        %7369 = vmatprep.mubr.f32.mxu0 0.0
        %7370 = vmatmul.mubr.f32.gmra.mxu0 %v7297
        %v7371 = vpop.f32.mrf.mxu0
        %v7372 = vadd.f32 0.0, %v7371
        %v7373 = vpop.f32.mrf.mxu0
        %v7374 = vadd.f32 0.0, %v7373
        %7375 = vdwg.mxu0
        %v7376 = vadd.f32 %v7274, %v7366
        %v7377 = vadd.f32 %v7276, %v7368
        %v7378 = vadd.f32 %v7280, %v7372
        %v7379 = vadd.f32 %v7282, %v7374
        %v7380 = vadd.f32 %v6311, %v7376
        %v7381 = vadd.f32 %v6312, %v7377
        %v7382 = vadd.f32 %v6317, %v7378
        %v7383 = vadd.f32 %v6318, %v7379
        %v7384 = vmul.f32 %v7380, %v1293
        %v7385 = vmul.f32 %v7381, %v1294
        %v7386 = vmul.f32 %v7382, %v1295
        %v7387 = vmul.f32 %v7383, %v1296
        %v7388 = vadd.f32 %v7384, %v7385
        %v7389 = vadd.f32 %v7386, %v7387
        %7390 = vrot.lane.b32.xlu0 %v7388, 64
        %v7391 = vpop.permute.xlu0 %7390
        %7392 = vrot.lane.b32.xlu0 %v7389, 64
        %v7393 = vpop.permute.xlu0 %7392
        %v7394 = vadd.f32 %v7388, %v7391
        %v7395 = vadd.f32 %v7389, %v7393
        %7396 = vrot.lane.b32.xlu0 %v7394, 32
        %v7397 = vpop.permute.xlu0 %7396
        %7398 = vrot.lane.b32.xlu0 %v7395, 32
        %v7399 = vpop.permute.xlu0 %7398
        %v7400 = vadd.f32 %v7394, %v7397
        %v7401 = vadd.f32 %v7395, %v7399
        %v7402 = vadd.f32 %v7400, %v1285
        %v7403 = vadd.f32 %v7401, %v1290
        %v7404 = vtanh.pop %v7402
        %v7405 = vtanh.pop %v7403
        %v7406 = vmul.f32 %v7011, %v4336
        %v7407 = vmul.f32 %v7013, %v4337
        %v7408 = vsub.f32 1.0, %v7011
        %v7409 = vsub.f32 1.0, %v7013
        %v7410 = vmul.f32 %v7408, %v7404
        %v7411 = vmul.f32 %v7409, %v7405
        %v7412 = vadd.f32 %v7406, %v7410
        %v7413 = vadd.f32 %v7407, %v7411
        %s7414 = scalar_lea.vmem [#allocation5], %s4338
        %7415 = vst.msk [vmem:[%s7414] sm:$0xff] %vm3991, %v7412
        %7416 = vst.msk [vmem:[%s7414 + $0x8] sm:$0xff] %vm3991, %v7413
      $region105: #{astgcrn_forward.1} parent=99 // loop_footer
        %s4333 = sadd.s32 1, %s4329
      $region106: #{astgcrn_forward.1} parent=99 // loop_footer_branch
        %4328 = sbr.rel target = $region102
      $region107: #{astgcrn_forward.1} parent=99 // loop_exit
        _
      %v7417 = vld [vmem:[#allocation5] sm:$0xff]
      %v7418 = vld [vmem:[#allocation5 + $0x8] sm:$0xff]
      %v7419 = vld [vmem:[#allocation5 + $0x10] sm:$0xff]
      %v7420 = vld [vmem:[#allocation5 + $0x18] sm:$0xff]
      %v7421 = vld [vmem:[#allocation5 + $0x20] sm:$0xff]
      %v7422 = vld [vmem:[#allocation5 + $0x28] sm:$0xff]
      %v7423 = vld [vmem:[#allocation5 + $0x30] sm:$0xff]
      %v7424 = vld [vmem:[#allocation5 + $0x38] sm:$0xff]
      %v7425 = vld [vmem:[#allocation5 + $0x40] sm:$0xff]
      %v7426 = vld [vmem:[#allocation5 + $0x48] sm:$0xff]
      %v7427 = vld [vmem:[#allocation5 + $0x50] sm:$0xff]
      %v7428 = vld [vmem:[#allocation5 + $0x58] sm:$0xff]
      %v7429 = vld [vmem:[#allocation5 + $0x60] sm:$0xff]
      %v7430 = vld [vmem:[#allocation5 + $0x68] sm:$0xff]
      %v7431 = vld [vmem:[#allocation5 + $0x70] sm:$0xff]
      %v7432 = vld [vmem:[#allocation5 + $0x78] sm:$0xff]
      %v7433 = vmax.f32 %v7417, 0.0
      %v7434 = vmax.f32 %v7418, 0.0
      %v7435 = vmax.f32 %v7419, 0.0
      %v7436 = vmax.f32 %v7420, 0.0
      %v7437 = vmax.f32 %v7421, 0.0
      %v7438 = vmax.f32 %v7422, 0.0
      %v7439 = vmax.f32 %v7423, 0.0
      %v7440 = vmax.f32 %v7424, 0.0
      %v7441 = vmax.f32 %v7425, 0.0
      %v7442 = vmax.f32 %v7426, 0.0
      %v7443 = vmax.f32 %v7427, 0.0
      %v7444 = vmax.f32 %v7428, 0.0
      %v7445 = vmax.f32 %v7429, 0.0
      %v7446 = vmax.f32 %v7430, 0.0
      %v7447 = vmax.f32 %v7431, 0.0
      %v7448 = vmax.f32 %v7432, 0.0
      %v7449 = vld [vmem:[%s16] sm:$0xff]
      %v7450 = vld [vmem:[%s16 + $0x8] sm:$0xff]
      %v7451 = vld [vmem:[%s16 + $0x10] sm:$0xff]
      %v7452 = vld [vmem:[%s16 + $0x18] sm:$0xff]
      %v7453 = vld [vmem:[%s16 + $0x20] sm:$0xff]
      %v7454 = vld [vmem:[%s16 + $0x28] sm:$0xff]
      %v7455 = vld [vmem:[%s16 + $0x30] sm:$0xff]
      %v7456 = vld [vmem:[%s16 + $0x38] sm:$0xff]
      %v7457 = vld [vmem:[%s16 + $0x40] sm:$0xff]
      %v7458 = vld [vmem:[%s16 + $0x48] sm:$0xff]
      %v7459 = vld [vmem:[%s16 + $0x50] sm:$0xff]
      %v7460 = vld [vmem:[%s16 + $0x58] sm:$0xff]
      %v7461 = vld [vmem:[%s16 + $0x60] sm:$0xff]
      %v7462 = vld [vmem:[%s16 + $0x68] sm:$0xff]
      %v7463 = vld [vmem:[%s16 + $0x70] sm:$0xff]
      %v7464 = vld [vmem:[%s16 + $0x78] sm:$0xff]
      %v7465 = vld [vmem:[%s17] sm:$0xf]
      %v7467 = vlaneseq
      %v7468 = vshrl.u32 %v7467, 7
      %v7469 = vsub.s32 0, %v7468
      %v7470 = vrot.slane %v7465, %v7469
      %v7471 = vlaneseq
      %v7472 = vshrl.u32 %v7471, 7
      %v7473 = vsub.s32 1, %v7472
      %v7474 = vrot.slane %v7465, %v7473
      %v7475 = vlaneseq
      %v7476 = vshrl.u32 %v7475, 7
      %v7477 = vsub.s32 2, %v7476
      %v7478 = vrot.slane %v7465, %v7477
      %v7479 = vlaneseq
      %v7480 = vshrl.u32 %v7479, 7
      %v7481 = vsub.s32 3, %v7480
      %v7482 = vrot.slane %v7465, %v7481
      %v7488 = vsel %vm3991, %v7433, 0
      %v7491 = vsel %vm3991, %v7434, 0
      %v7494 = vsel %vm3991, %v7435, 0
      %v7497 = vsel %vm3991, %v7436, 0
      %v7500 = vsel %vm3991, %v7437, 0
      %v7503 = vsel %vm3991, %v7438, 0
      %v7506 = vsel %vm3991, %v7439, 0
      %v7509 = vsel %vm3991, %v7440, 0
      %v7512 = vsel %vm3991, %v7441, 0
      %v7515 = vsel %vm3991, %v7442, 0
      %v7518 = vsel %vm3991, %v7443, 0
      %v7521 = vsel %vm3991, %v7444, 0
      %v7524 = vsel %vm3991, %v7445, 0
      %v7527 = vsel %vm3991, %v7446, 0
      %v7530 = vsel %vm3991, %v7447, 0
      %v7533 = vsel %vm3991, %v7448, 0
      %7535 = vmatprep.subr.mxu0 0.0
      %7536 = vmatpush1.msra.mxu0 0.0
      %7537 = vmatprep.subr.mxu0 0.0
      %7538 = vmatpush1.msra.mxu0 0.0
      %7539 = vmatprep.subr.mxu0 0.0
      %7540 = vmatpush1.msra.mxu0 0.0
      %7541 = vmatprep.subr.mxu0 0.0
      %7542 = vmatpush1.msra.mxu0 0.0
      %7543 = vmatprep.subr.mxu0 0.0
      %7544 = vmatpush1.msra.mxu0 0.0
      %7545 = vmatprep.subr.mxu0 0.0
      %7546 = vmatpush1.msra.mxu0 0.0
      %7547 = vmatprep.subr.mxu0 0.0
      %7548 = vmatpush1.msra.mxu0 0.0
      %7549 = vmatprep.subr.mxu0 0.0
      %7550 = vmatpush1.msra.mxu0 0.0
      %7551 = vmatprep.subr.mxu0 0.0
      %7552 = vmatpush1.msra.mxu0 0.0
      %7553 = vmatprep.subr.mxu0 0.0
      %7554 = vmatpush1.msra.mxu0 0.0
      %7555 = vmatprep.subr.mxu0 0.0
      %7556 = vmatpush1.msra.mxu0 0.0
      %7557 = vmatprep.subr.mxu0 0.0
      %7558 = vmatpush1.msra.mxu0 0.0
      %7559 = vmatprep.subr.mxu0 %v7462
      %7560 = vmatpush1.msra.mxu0 %v7461
      %7561 = vmatprep.subr.mxu0 %v7458
      %7562 = vmatpush1.msra.mxu0 %v7457
      %7563 = vmatprep.subr.mxu0 %v7454
      %7564 = vmatpush1.msra.mxu0 %v7453
      %7565 = vmatprep.subr.mxu0 %v7450
      %7566 = vmatpush1.msra.mxu0 %v7449
      %7567 = vmatprep.subr.mxu0 0.0
      %7568 = vmatpush2.msra.mxu0 0.0
      %7569 = vmatprep.subr.mxu0 0.0
      %7570 = vmatpush2.msra.mxu0 0.0
      %7571 = vmatprep.subr.mxu0 0.0
      %7572 = vmatpush2.msra.mxu0 0.0
      %7573 = vmatprep.subr.mxu0 0.0
      %7574 = vmatpush2.msra.mxu0 0.0
      %7575 = vmatprep.subr.mxu0 0.0
      %7576 = vmatpush2.msra.mxu0 0.0
      %7577 = vmatprep.subr.mxu0 0.0
      %7578 = vmatpush2.msra.mxu0 0.0
      %7579 = vmatprep.subr.mxu0 0.0
      %7580 = vmatpush2.msra.mxu0 0.0
      %7581 = vmatprep.subr.mxu0 0.0
      %7582 = vmatpush2.msra.mxu0 0.0
      %7583 = vmatprep.subr.mxu0 0.0
      %7584 = vmatpush2.msra.mxu0 0.0
      %7585 = vmatprep.subr.mxu0 0.0
      %7586 = vmatpush2.msra.mxu0 0.0
      %7587 = vmatprep.subr.mxu0 0.0
      %7588 = vmatpush2.msra.mxu0 0.0
      %7589 = vmatprep.subr.mxu0 0.0
      %7590 = vmatpush2.msra.mxu0 0.0
      %7591 = vmatprep.subr.mxu0 0.0
      %7592 = vmatpush2.msra.mxu0 0.0
      %7593 = vmatprep.subr.mxu0 0.0
      %7594 = vmatpush2.msra.mxu0 0.0
      %7595 = vmatprep.subr.mxu0 0.0
      %7596 = vmatpush2.msra.mxu0 0.0
      %7597 = vmatprep.subr.mxu0 0.0
      %7598 = vmatpush2.msra.mxu0 0.0
      %7599 = vmatprep.mubr.f32.mxu0 0.0
      %7600 = vmatmul.mubr.f32.gmra.mxu0 %v7488
      %v7601 = vpop.f32.mrf.mxu0
      %v7602 = vadd.f32 %v7470, %v7601
      %v7603 = vpop.f32.mrf.mxu0
      %v7604 = vadd.f32 %v7474, %v7603
      %7605 = vmatprep.mubr.f32.mxu0 0.0
      %7606 = vmatmul.mubr.f32.gmra.mxu0 %v7491
      %v7607 = vpop.f32.mrf.mxu0
      %v7608 = vadd.f32 %v7470, %v7607
      %v7609 = vpop.f32.mrf.mxu0
      %v7610 = vadd.f32 %v7474, %v7609
      %7611 = vmatprep.mubr.f32.mxu0 0.0
      %7612 = vmatmul.mubr.f32.gmra.mxu0 %v7494
      %v7613 = vpop.f32.mrf.mxu0
      %v7614 = vadd.f32 %v7470, %v7613
      %v7615 = vpop.f32.mrf.mxu0
      %v7616 = vadd.f32 %v7474, %v7615
      %7617 = vmatprep.mubr.f32.mxu0 0.0
      %7618 = vmatmul.mubr.f32.gmra.mxu0 %v7497
      %v7619 = vpop.f32.mrf.mxu0
      %v7620 = vadd.f32 %v7470, %v7619
      %v7621 = vpop.f32.mrf.mxu0
      %v7622 = vadd.f32 %v7474, %v7621
      %7623 = vmatprep.mubr.f32.mxu0 0.0
      %7624 = vmatmul.mubr.f32.gmra.mxu0 %v7500
      %v7625 = vpop.f32.mrf.mxu0
      %v7626 = vadd.f32 %v7470, %v7625
      %v7627 = vpop.f32.mrf.mxu0
      %v7628 = vadd.f32 %v7474, %v7627
      %7629 = vmatprep.mubr.f32.mxu0 0.0
      %7630 = vmatmul.mubr.f32.gmra.mxu0 %v7503
      %v7631 = vpop.f32.mrf.mxu0
      %v7632 = vadd.f32 %v7470, %v7631
      %v7633 = vpop.f32.mrf.mxu0
      %v7634 = vadd.f32 %v7474, %v7633
      %7635 = vmatprep.mubr.f32.mxu0 0.0
      %7636 = vmatmul.mubr.f32.gmra.mxu0 %v7506
      %v7637 = vpop.f32.mrf.mxu0
      %v7638 = vadd.f32 %v7470, %v7637
      %v7639 = vpop.f32.mrf.mxu0
      %v7640 = vadd.f32 %v7474, %v7639
      %7641 = vmatprep.mubr.f32.mxu0 0.0
      %7642 = vmatmul.mubr.f32.gmra.mxu0 %v7509
      %v7643 = vpop.f32.mrf.mxu0
      %v7644 = vadd.f32 %v7470, %v7643
      %v7645 = vpop.f32.mrf.mxu0
      %v7646 = vadd.f32 %v7474, %v7645
      %7647 = vmatprep.mubr.f32.mxu0 0.0
      %7648 = vmatmul.mubr.f32.gmra.mxu0 %v7512
      %v7649 = vpop.f32.mrf.mxu0
      %v7650 = vadd.f32 %v7470, %v7649
      %v7651 = vpop.f32.mrf.mxu0
      %v7652 = vadd.f32 %v7474, %v7651
      %7653 = vmatprep.mubr.f32.mxu0 0.0
      %7654 = vmatmul.mubr.f32.gmra.mxu0 %v7515
      %v7655 = vpop.f32.mrf.mxu0
      %v7656 = vadd.f32 %v7470, %v7655
      %v7657 = vpop.f32.mrf.mxu0
      %v7658 = vadd.f32 %v7474, %v7657
      %7659 = vmatprep.mubr.f32.mxu0 0.0
      %7660 = vmatmul.mubr.f32.gmra.mxu0 %v7518
      %v7661 = vpop.f32.mrf.mxu0
      %v7662 = vadd.f32 %v7470, %v7661
      %v7663 = vpop.f32.mrf.mxu0
      %v7664 = vadd.f32 %v7474, %v7663
      %7665 = vmatprep.mubr.f32.mxu0 0.0
      %7666 = vmatmul.mubr.f32.gmra.mxu0 %v7521
      %v7667 = vpop.f32.mrf.mxu0
      %v7668 = vadd.f32 %v7470, %v7667
      %v7669 = vpop.f32.mrf.mxu0
      %v7670 = vadd.f32 %v7474, %v7669
      %7671 = vmatprep.mubr.f32.mxu0 0.0
      %7672 = vmatmul.mubr.f32.gmra.mxu0 %v7524
      %v7673 = vpop.f32.mrf.mxu0
      %v7674 = vadd.f32 %v7470, %v7673
      %v7675 = vpop.f32.mrf.mxu0
      %v7676 = vadd.f32 %v7474, %v7675
      %7677 = vmatprep.mubr.f32.mxu0 0.0
      %7678 = vmatmul.mubr.f32.gmra.mxu0 %v7527
      %v7679 = vpop.f32.mrf.mxu0
      %v7680 = vadd.f32 %v7470, %v7679
      %v7681 = vpop.f32.mrf.mxu0
      %v7682 = vadd.f32 %v7474, %v7681
      %7683 = vmatprep.mubr.f32.mxu0 0.0
      %7684 = vmatmul.mubr.f32.gmra.mxu0 %v7530
      %v7685 = vpop.f32.mrf.mxu0
      %v7686 = vadd.f32 %v7470, %v7685
      %v7687 = vpop.f32.mrf.mxu0
      %v7688 = vadd.f32 %v7474, %v7687
      %7689 = vmatprep.mubr.f32.mxu0 0.0
      %7690 = vmatmul.mubr.f32.gmra.mxu0 %v7533
      %v7691 = vpop.f32.mrf.mxu0
      %v7692 = vadd.f32 %v7470, %v7691
      %v7693 = vpop.f32.mrf.mxu0
      %v7694 = vadd.f32 %v7474, %v7693
      %7695 = vdwg.mxu0
      %7696 = vmatprep.subr.mxu0 0.0
      %7697 = vmatpush1.msra.mxu0 0.0
      %7698 = vmatprep.subr.mxu0 0.0
      %7699 = vmatpush1.msra.mxu0 0.0
      %7700 = vmatprep.subr.mxu0 0.0
      %7701 = vmatpush1.msra.mxu0 0.0
      %7702 = vmatprep.subr.mxu0 0.0
      %7703 = vmatpush1.msra.mxu0 0.0
      %7704 = vmatprep.subr.mxu0 0.0
      %7705 = vmatpush1.msra.mxu0 0.0
      %7706 = vmatprep.subr.mxu0 0.0
      %7707 = vmatpush1.msra.mxu0 0.0
      %7708 = vmatprep.subr.mxu0 0.0
      %7709 = vmatpush1.msra.mxu0 0.0
      %7710 = vmatprep.subr.mxu0 0.0
      %7711 = vmatpush1.msra.mxu0 0.0
      %7712 = vmatprep.subr.mxu0 0.0
      %7713 = vmatpush1.msra.mxu0 0.0
      %7714 = vmatprep.subr.mxu0 0.0
      %7715 = vmatpush1.msra.mxu0 0.0
      %7716 = vmatprep.subr.mxu0 0.0
      %7717 = vmatpush1.msra.mxu0 0.0
      %7718 = vmatprep.subr.mxu0 0.0
      %7719 = vmatpush1.msra.mxu0 0.0
      %7720 = vmatprep.subr.mxu0 %v7464
      %7721 = vmatpush1.msra.mxu0 %v7463
      %7722 = vmatprep.subr.mxu0 %v7460
      %7723 = vmatpush1.msra.mxu0 %v7459
      %7724 = vmatprep.subr.mxu0 %v7456
      %7725 = vmatpush1.msra.mxu0 %v7455
      %7726 = vmatprep.subr.mxu0 %v7452
      %7727 = vmatpush1.msra.mxu0 %v7451
      %7728 = vmatprep.subr.mxu0 0.0
      %7729 = vmatpush2.msra.mxu0 0.0
      %7730 = vmatprep.subr.mxu0 0.0
      %7731 = vmatpush2.msra.mxu0 0.0
      %7732 = vmatprep.subr.mxu0 0.0
      %7733 = vmatpush2.msra.mxu0 0.0
      %7734 = vmatprep.subr.mxu0 0.0
      %7735 = vmatpush2.msra.mxu0 0.0
      %7736 = vmatprep.subr.mxu0 0.0
      %7737 = vmatpush2.msra.mxu0 0.0
      %7738 = vmatprep.subr.mxu0 0.0
      %7739 = vmatpush2.msra.mxu0 0.0
      %7740 = vmatprep.subr.mxu0 0.0
      %7741 = vmatpush2.msra.mxu0 0.0
      %7742 = vmatprep.subr.mxu0 0.0
      %7743 = vmatpush2.msra.mxu0 0.0
      %7744 = vmatprep.subr.mxu0 0.0
      %7745 = vmatpush2.msra.mxu0 0.0
      %7746 = vmatprep.subr.mxu0 0.0
      %7747 = vmatpush2.msra.mxu0 0.0
      %7748 = vmatprep.subr.mxu0 0.0
      %7749 = vmatpush2.msra.mxu0 0.0
      %7750 = vmatprep.subr.mxu0 0.0
      %7751 = vmatpush2.msra.mxu0 0.0
      %7752 = vmatprep.subr.mxu0 0.0
      %7753 = vmatpush2.msra.mxu0 0.0
      %7754 = vmatprep.subr.mxu0 0.0
      %7755 = vmatpush2.msra.mxu0 0.0
      %7756 = vmatprep.subr.mxu0 0.0
      %7757 = vmatpush2.msra.mxu0 0.0
      %7758 = vmatprep.subr.mxu0 0.0
      %7759 = vmatpush2.msra.mxu0 0.0
      %7760 = vmatprep.mubr.f32.mxu0 0.0
      %7761 = vmatmul.mubr.f32.gmra.mxu0 %v7488
      %v7762 = vpop.f32.mrf.mxu0
      %v7763 = vadd.f32 %v7478, %v7762
      %v7764 = vpop.f32.mrf.mxu0
      %v7765 = vadd.f32 %v7482, %v7764
      %7766 = vmatprep.mubr.f32.mxu0 0.0
      %7767 = vmatmul.mubr.f32.gmra.mxu0 %v7491
      %v7768 = vpop.f32.mrf.mxu0
      %v7769 = vadd.f32 %v7478, %v7768
      %v7770 = vpop.f32.mrf.mxu0
      %v7771 = vadd.f32 %v7482, %v7770
      %7772 = vmatprep.mubr.f32.mxu0 0.0
      %7773 = vmatmul.mubr.f32.gmra.mxu0 %v7494
      %v7774 = vpop.f32.mrf.mxu0
      %v7775 = vadd.f32 %v7478, %v7774
      %v7776 = vpop.f32.mrf.mxu0
      %v7777 = vadd.f32 %v7482, %v7776
      %7778 = vmatprep.mubr.f32.mxu0 0.0
      %7779 = vmatmul.mubr.f32.gmra.mxu0 %v7497
      %v7780 = vpop.f32.mrf.mxu0
      %v7781 = vadd.f32 %v7478, %v7780
      %v7782 = vpop.f32.mrf.mxu0
      %v7783 = vadd.f32 %v7482, %v7782
      %7784 = vmatprep.mubr.f32.mxu0 0.0
      %7785 = vmatmul.mubr.f32.gmra.mxu0 %v7500
      %v7786 = vpop.f32.mrf.mxu0
      %v7787 = vadd.f32 %v7478, %v7786
      %v7788 = vpop.f32.mrf.mxu0
      %v7789 = vadd.f32 %v7482, %v7788
      %7790 = vmatprep.mubr.f32.mxu0 0.0
      %7791 = vmatmul.mubr.f32.gmra.mxu0 %v7503
      %v7792 = vpop.f32.mrf.mxu0
      %v7793 = vadd.f32 %v7478, %v7792
      %v7794 = vpop.f32.mrf.mxu0
      %v7795 = vadd.f32 %v7482, %v7794
      %7796 = vmatprep.mubr.f32.mxu0 0.0
      %7797 = vmatmul.mubr.f32.gmra.mxu0 %v7506
      %v7798 = vpop.f32.mrf.mxu0
      %v7799 = vadd.f32 %v7478, %v7798
      %v7800 = vpop.f32.mrf.mxu0
      %v7801 = vadd.f32 %v7482, %v7800
      %7802 = vmatprep.mubr.f32.mxu0 0.0
      %7803 = vmatmul.mubr.f32.gmra.mxu0 %v7509
      %v7804 = vpop.f32.mrf.mxu0
      %v7805 = vadd.f32 %v7478, %v7804
      %v7806 = vpop.f32.mrf.mxu0
      %v7807 = vadd.f32 %v7482, %v7806
      %7808 = vmatprep.mubr.f32.mxu0 0.0
      %7809 = vmatmul.mubr.f32.gmra.mxu0 %v7512
      %v7810 = vpop.f32.mrf.mxu0
      %v7811 = vadd.f32 %v7478, %v7810
      %v7812 = vpop.f32.mrf.mxu0
      %v7813 = vadd.f32 %v7482, %v7812
      %7814 = vmatprep.mubr.f32.mxu0 0.0
      %7815 = vmatmul.mubr.f32.gmra.mxu0 %v7515
      %v7816 = vpop.f32.mrf.mxu0
      %v7817 = vadd.f32 %v7478, %v7816
      %v7818 = vpop.f32.mrf.mxu0
      %v7819 = vadd.f32 %v7482, %v7818
      %7820 = vmatprep.mubr.f32.mxu0 0.0
      %7821 = vmatmul.mubr.f32.gmra.mxu0 %v7518
      %v7822 = vpop.f32.mrf.mxu0
      %v7823 = vadd.f32 %v7478, %v7822
      %v7824 = vpop.f32.mrf.mxu0
      %v7825 = vadd.f32 %v7482, %v7824
      %7826 = vmatprep.mubr.f32.mxu0 0.0
      %7827 = vmatmul.mubr.f32.gmra.mxu0 %v7521
      %v7828 = vpop.f32.mrf.mxu0
      %v7829 = vadd.f32 %v7478, %v7828
      %v7830 = vpop.f32.mrf.mxu0
      %v7831 = vadd.f32 %v7482, %v7830
      %7832 = vmatprep.mubr.f32.mxu0 0.0
      %7833 = vmatmul.mubr.f32.gmra.mxu0 %v7524
      %v7834 = vpop.f32.mrf.mxu0
      %v7835 = vadd.f32 %v7478, %v7834
      %v7836 = vpop.f32.mrf.mxu0
      %v7837 = vadd.f32 %v7482, %v7836
      %7838 = vmatprep.mubr.f32.mxu0 0.0
      %7839 = vmatmul.mubr.f32.gmra.mxu0 %v7527
      %v7840 = vpop.f32.mrf.mxu0
      %v7841 = vadd.f32 %v7478, %v7840
      %v7842 = vpop.f32.mrf.mxu0
      %v7843 = vadd.f32 %v7482, %v7842
      %7844 = vmatprep.mubr.f32.mxu0 0.0
      %7845 = vmatmul.mubr.f32.gmra.mxu0 %v7530
      %v7846 = vpop.f32.mrf.mxu0
      %v7847 = vadd.f32 %v7478, %v7846
      %v7848 = vpop.f32.mrf.mxu0
      %v7849 = vadd.f32 %v7482, %v7848
      %7850 = vmatprep.mubr.f32.mxu0 0.0
      %7851 = vmatmul.mubr.f32.gmra.mxu0 %v7533
      %v7852 = vpop.f32.mrf.mxu0
      %v7853 = vadd.f32 %v7478, %v7852
      %v7854 = vpop.f32.mrf.mxu0
      %v7855 = vadd.f32 %v7482, %v7854
      %7856 = vdwg.mxu0
      %v7857 = vmax.f32 %v7602, 0.0
      %v7858 = vmax.f32 %v7604, 0.0
      %v7859 = vmax.f32 %v7763, 0.0
      %v7860 = vmax.f32 %v7765, 0.0
      %v7861 = vmax.f32 %v7608, 0.0
      %v7862 = vmax.f32 %v7610, 0.0
      %v7863 = vmax.f32 %v7769, 0.0
      %v7864 = vmax.f32 %v7771, 0.0
      %v7865 = vmax.f32 %v7614, 0.0
      %v7866 = vmax.f32 %v7616, 0.0
      %v7867 = vmax.f32 %v7775, 0.0
      %v7868 = vmax.f32 %v7777, 0.0
      %v7869 = vmax.f32 %v7620, 0.0
      %v7870 = vmax.f32 %v7622, 0.0
      %v7871 = vmax.f32 %v7781, 0.0
      %v7872 = vmax.f32 %v7783, 0.0
      %v7873 = vmax.f32 %v7626, 0.0
      %v7874 = vmax.f32 %v7628, 0.0
      %v7875 = vmax.f32 %v7787, 0.0
      %v7876 = vmax.f32 %v7789, 0.0
      %v7877 = vmax.f32 %v7632, 0.0
      %v7878 = vmax.f32 %v7634, 0.0
      %v7879 = vmax.f32 %v7793, 0.0
      %v7880 = vmax.f32 %v7795, 0.0
      %v7881 = vmax.f32 %v7638, 0.0
      %v7882 = vmax.f32 %v7640, 0.0
      %v7883 = vmax.f32 %v7799, 0.0
      %v7884 = vmax.f32 %v7801, 0.0
      %v7885 = vmax.f32 %v7644, 0.0
      %v7886 = vmax.f32 %v7646, 0.0
      %v7887 = vmax.f32 %v7805, 0.0
      %v7888 = vmax.f32 %v7807, 0.0
      %v7889 = vmax.f32 %v7650, 0.0
      %v7890 = vmax.f32 %v7652, 0.0
      %v7891 = vmax.f32 %v7811, 0.0
      %v7892 = vmax.f32 %v7813, 0.0
      %v7893 = vmax.f32 %v7656, 0.0
      %v7894 = vmax.f32 %v7658, 0.0
      %v7895 = vmax.f32 %v7817, 0.0
      %v7896 = vmax.f32 %v7819, 0.0
      %v7897 = vmax.f32 %v7662, 0.0
      %v7898 = vmax.f32 %v7664, 0.0
      %v7899 = vmax.f32 %v7823, 0.0
      %v7900 = vmax.f32 %v7825, 0.0
      %v7901 = vmax.f32 %v7668, 0.0
      %v7902 = vmax.f32 %v7670, 0.0
      %v7903 = vmax.f32 %v7829, 0.0
      %v7904 = vmax.f32 %v7831, 0.0
      %v7905 = vmax.f32 %v7674, 0.0
      %v7906 = vmax.f32 %v7676, 0.0
      %v7907 = vmax.f32 %v7835, 0.0
      %v7908 = vmax.f32 %v7837, 0.0
      %v7909 = vmax.f32 %v7680, 0.0
      %v7910 = vmax.f32 %v7682, 0.0
      %v7911 = vmax.f32 %v7841, 0.0
      %v7912 = vmax.f32 %v7843, 0.0
      %v7913 = vmax.f32 %v7686, 0.0
      %v7914 = vmax.f32 %v7688, 0.0
      %v7915 = vmax.f32 %v7847, 0.0
      %v7916 = vmax.f32 %v7849, 0.0
      %v7917 = vmax.f32 %v7692, 0.0
      %v7918 = vmax.f32 %v7694, 0.0
      %v7919 = vmax.f32 %v7853, 0.0
      %v7920 = vmax.f32 %v7855, 0.0
      %v7921 = vld [vmem:[%s18] sm:$0xf]
      %v7923 = vlaneseq
      %v7924 = vshrl.u32 %v7923, 7
      %v7925 = vsub.s32 0, %v7924
      %v7926 = vrot.slane %v7921, %v7925
      %v7927 = vlaneseq
      %v7928 = vshrl.u32 %v7927, 7
      %v7929 = vsub.s32 1, %v7928
      %v7930 = vrot.slane %v7921, %v7929
      %v7931 = vlaneseq
      %v7932 = vshrl.u32 %v7931, 7
      %v7933 = vsub.s32 2, %v7932
      %v7934 = vrot.slane %v7921, %v7933
      %v7935 = vlaneseq
      %v7936 = vshrl.u32 %v7935, 7
      %v7937 = vsub.s32 3, %v7936
      %v7938 = vrot.slane %v7921, %v7937
      %v7943 = vmul.f32 %v7857, %v7926
      %v7944 = vmul.f32 %v7858, %v7930
      %v7945 = vmul.f32 %v7859, %v7934
      %v7946 = vmul.f32 %v7860, %v7938
      %v7947 = vmul.f32 %v7861, %v7926
      %v7948 = vmul.f32 %v7862, %v7930
      %v7949 = vmul.f32 %v7863, %v7934
      %v7950 = vmul.f32 %v7864, %v7938
      %v7951 = vmul.f32 %v7865, %v7926
      %v7952 = vmul.f32 %v7866, %v7930
      %v7953 = vmul.f32 %v7867, %v7934
      %v7954 = vmul.f32 %v7868, %v7938
      %v7955 = vmul.f32 %v7869, %v7926
      %v7956 = vmul.f32 %v7870, %v7930
      %v7957 = vmul.f32 %v7871, %v7934
      %v7958 = vmul.f32 %v7872, %v7938
      %v7959 = vmul.f32 %v7873, %v7926
      %v7960 = vmul.f32 %v7874, %v7930
      %v7961 = vmul.f32 %v7875, %v7934
      %v7962 = vmul.f32 %v7876, %v7938
      %v7963 = vmul.f32 %v7877, %v7926
      %v7964 = vmul.f32 %v7878, %v7930
      %v7965 = vmul.f32 %v7879, %v7934
      %v7966 = vmul.f32 %v7880, %v7938
      %v7967 = vmul.f32 %v7881, %v7926
      %v7968 = vmul.f32 %v7882, %v7930
      %v7969 = vmul.f32 %v7883, %v7934
      %v7970 = vmul.f32 %v7884, %v7938
      %v7971 = vmul.f32 %v7885, %v7926
      %v7972 = vmul.f32 %v7886, %v7930
      %v7973 = vmul.f32 %v7887, %v7934
      %v7974 = vmul.f32 %v7888, %v7938
      %v7975 = vmul.f32 %v7889, %v7926
      %v7976 = vmul.f32 %v7890, %v7930
      %v7977 = vmul.f32 %v7891, %v7934
      %v7978 = vmul.f32 %v7892, %v7938
      %v7979 = vmul.f32 %v7893, %v7926
      %v7980 = vmul.f32 %v7894, %v7930
      %v7981 = vmul.f32 %v7895, %v7934
      %v7982 = vmul.f32 %v7896, %v7938
      %v7983 = vmul.f32 %v7897, %v7926
      %v7984 = vmul.f32 %v7898, %v7930
      %v7985 = vmul.f32 %v7899, %v7934
      %v7986 = vmul.f32 %v7900, %v7938
      %v7987 = vmul.f32 %v7901, %v7926
      %v7988 = vmul.f32 %v7902, %v7930
      %v7989 = vmul.f32 %v7903, %v7934
      %v7990 = vmul.f32 %v7904, %v7938
      %v7991 = vmul.f32 %v7905, %v7926
      %v7992 = vmul.f32 %v7906, %v7930
      %v7993 = vmul.f32 %v7907, %v7934
      %v7994 = vmul.f32 %v7908, %v7938
      %v7995 = vmul.f32 %v7909, %v7926
      %v7996 = vmul.f32 %v7910, %v7930
      %v7997 = vmul.f32 %v7911, %v7934
      %v7998 = vmul.f32 %v7912, %v7938
      %v7999 = vmul.f32 %v7913, %v7926
      %v8000 = vmul.f32 %v7914, %v7930
      %v8001 = vmul.f32 %v7915, %v7934
      %v8002 = vmul.f32 %v7916, %v7938
      %v8003 = vmul.f32 %v7917, %v7926
      %v8004 = vmul.f32 %v7918, %v7930
      %v8005 = vmul.f32 %v7919, %v7934
      %v8006 = vmul.f32 %v7920, %v7938
      %v8007 = vadd.f32 %v7943, %v7944
      %v8008 = vadd.f32 %v8007, %v7945
      %v8009 = vadd.f32 %v8008, %v7946
      %8010 = vadd.xlane.f32.xlu0 %v8009
      %v8011 = vpop.xlane.xlu0 %8010
      %v8012 = vadd.f32 %v7947, %v7948
      %v8013 = vadd.f32 %v8012, %v7949
      %v8014 = vadd.f32 %v8013, %v7950
      %8015 = vadd.xlane.f32.xlu0 %v8014
      %v8016 = vpop.xlane.xlu0 %8015
      %v8017 = vadd.f32 %v7951, %v7952
      %v8018 = vadd.f32 %v8017, %v7953
      %v8019 = vadd.f32 %v8018, %v7954
      %8020 = vadd.xlane.f32.xlu0 %v8019
      %v8021 = vpop.xlane.xlu0 %8020
      %v8022 = vadd.f32 %v7955, %v7956
      %v8023 = vadd.f32 %v8022, %v7957
      %v8024 = vadd.f32 %v8023, %v7958
      %8025 = vadd.xlane.f32.xlu0 %v8024
      %v8026 = vpop.xlane.xlu0 %8025
      %v8027 = vadd.f32 %v7959, %v7960
      %v8028 = vadd.f32 %v8027, %v7961
      %v8029 = vadd.f32 %v8028, %v7962
      %8030 = vadd.xlane.f32.xlu0 %v8029
      %v8031 = vpop.xlane.xlu0 %8030
      %v8032 = vadd.f32 %v7963, %v7964
      %v8033 = vadd.f32 %v8032, %v7965
      %v8034 = vadd.f32 %v8033, %v7966
      %8035 = vadd.xlane.f32.xlu0 %v8034
      %v8036 = vpop.xlane.xlu0 %8035
      %v8037 = vadd.f32 %v7967, %v7968
      %v8038 = vadd.f32 %v8037, %v7969
      %v8039 = vadd.f32 %v8038, %v7970
      %8040 = vadd.xlane.f32.xlu0 %v8039
      %v8041 = vpop.xlane.xlu0 %8040
      %v8042 = vadd.f32 %v7971, %v7972
      %v8043 = vadd.f32 %v8042, %v7973
      %v8044 = vadd.f32 %v8043, %v7974
      %8045 = vadd.xlane.f32.xlu0 %v8044
      %v8046 = vpop.xlane.xlu0 %8045
      %v8047 = vadd.f32 %v7975, %v7976
      %v8048 = vadd.f32 %v8047, %v7977
      %v8049 = vadd.f32 %v8048, %v7978
      %8050 = vadd.xlane.f32.xlu0 %v8049
      %v8051 = vpop.xlane.xlu0 %8050
      %v8052 = vadd.f32 %v7979, %v7980
      %v8053 = vadd.f32 %v8052, %v7981
      %v8054 = vadd.f32 %v8053, %v7982
      %8055 = vadd.xlane.f32.xlu0 %v8054
      %v8056 = vpop.xlane.xlu0 %8055
      %v8057 = vadd.f32 %v7983, %v7984
      %v8058 = vadd.f32 %v8057, %v7985
      %v8059 = vadd.f32 %v8058, %v7986
      %8060 = vadd.xlane.f32.xlu0 %v8059
      %v8061 = vpop.xlane.xlu0 %8060
      %v8062 = vadd.f32 %v7987, %v7988
      %v8063 = vadd.f32 %v8062, %v7989
      %v8064 = vadd.f32 %v8063, %v7990
      %8065 = vadd.xlane.f32.xlu0 %v8064
      %v8066 = vpop.xlane.xlu0 %8065
      %v8067 = vadd.f32 %v7991, %v7992
      %v8068 = vadd.f32 %v8067, %v7993
      %v8069 = vadd.f32 %v8068, %v7994
      %8070 = vadd.xlane.f32.xlu0 %v8069
      %v8071 = vpop.xlane.xlu0 %8070
      %v8072 = vadd.f32 %v7995, %v7996
      %v8073 = vadd.f32 %v8072, %v7997
      %v8074 = vadd.f32 %v8073, %v7998
      %8075 = vadd.xlane.f32.xlu0 %v8074
      %v8076 = vpop.xlane.xlu0 %8075
      %v8077 = vadd.f32 %v7999, %v8000
      %v8078 = vadd.f32 %v8077, %v8001
      %v8079 = vadd.f32 %v8078, %v8002
      %8080 = vadd.xlane.f32.xlu0 %v8079
      %v8081 = vpop.xlane.xlu0 %8080
      %v8082 = vadd.f32 %v8003, %v8004
      %v8083 = vadd.f32 %v8082, %v8005
      %v8084 = vadd.f32 %v8083, %v8006
      %8085 = vadd.xlane.f32.xlu0 %v8084
      %v8086 = vpop.xlane.xlu0 %8085
      %v8087 = vld [vmem:[#allocation6] sm:$0x1]
      %v8089 = vlaneseq
      %v8090 = vshrl.u32 %v8089, 7
      %v8091 = vsub.s32 0, %v8090
      %v8092 = vrot.slane %v8087, %v8091
      %v8094 = vadd.f32 %v8011, %v8092
      %v8095 = vadd.f32 %v8016, %v8092
      %v8096 = vadd.f32 %v8021, %v8092
      %v8097 = vadd.f32 %v8026, %v8092
      %v8098 = vadd.f32 %v8031, %v8092
      %v8099 = vadd.f32 %v8036, %v8092
      %v8100 = vadd.f32 %v8041, %v8092
      %v8101 = vadd.f32 %v8046, %v8092
      %v8102 = vadd.f32 %v8051, %v8092
      %v8103 = vadd.f32 %v8056, %v8092
      %v8104 = vadd.f32 %v8061, %v8092
      %v8105 = vadd.f32 %v8066, %v8092
      %v8106 = vadd.f32 %v8071, %v8092
      %v8107 = vadd.f32 %v8076, %v8092
      %v8108 = vadd.f32 %v8081, %v8092
      %v8109 = vadd.f32 %v8086, %v8092
      %vm8110 = vcmask 7168
      %8111 = vst.msk [vmem:[%s631] sm:$0xff] %vm8110, %v8094
      %8112 = vst.msk [vmem:[%s631 + $0x8] sm:$0xff] %vm8110, %v8095
      %8113 = vst.msk [vmem:[%s631 + $0x10] sm:$0xff] %vm8110, %v8096
      %8114 = vst.msk [vmem:[%s631 + $0x18] sm:$0xff] %vm8110, %v8097
      %8115 = vst.msk [vmem:[%s631 + $0x20] sm:$0xff] %vm8110, %v8098
      %8116 = vst.msk [vmem:[%s631 + $0x28] sm:$0xff] %vm8110, %v8099
      %8117 = vst.msk [vmem:[%s631 + $0x30] sm:$0xff] %vm8110, %v8100
      %8118 = vst.msk [vmem:[%s631 + $0x38] sm:$0xff] %vm8110, %v8101
      %8119 = vst.msk [vmem:[%s631 + $0x40] sm:$0xff] %vm8110, %v8102
      %8120 = vst.msk [vmem:[%s631 + $0x48] sm:$0xff] %vm8110, %v8103
      %8121 = vst.msk [vmem:[%s631 + $0x50] sm:$0xff] %vm8110, %v8104
      %8122 = vst.msk [vmem:[%s631 + $0x58] sm:$0xff] %vm8110, %v8105
      %8123 = vst.msk [vmem:[%s631 + $0x60] sm:$0xff] %vm8110, %v8106
      %8124 = vst.msk [vmem:[%s631 + $0x68] sm:$0xff] %vm8110, %v8107
      %8125 = vst.msk [vmem:[%s631 + $0x70] sm:$0xff] %vm8110, %v8108
      %8126 = vst.msk [vmem:[%s631 + $0x78] sm:$0xff] %vm8110, %v8109
      %p8127 = scmp.lt.s32.totalorder %s33, 1
      %s8128 = scalar_select %p8127, %s33, 1
      %s8129 = smul.addr %s8128, 16
      %s8130 = smul.addr %s8129, 8
      %s8131 = scalar_lea.vmem %s20, %s8130
      // Predicated region
      $region108: #{astgcrn_forward.1} parent=99 // pred_check
        %p8132 = pneg %p476
      $region109: #{astgcrn_forward.1} parent=99 // pred_check_branch
        %8134 = sbr.rel (%p8132) target = $region111
      $region110: #{astgcrn_forward.1} parent=99 // pred_region
        _
      $region111: #{astgcrn_forward.1} parent=99 // pred_fallthru
        _
    $region100: #{astgcrn_forward.1} parent=5 // pred_fallthru
      _
    %p8135 = scmp.le.s32.totalorder 2, %s28
    // Predicated region
    $region112: #{astgcrn_forward.1} parent=5 // pred_check
      %p8136 = pneg %p8135
    $region113: #{astgcrn_forward.1} parent=5 // pred_check_branch
      %8138 = sbr.rel (%p8136) target = $region115
    $region114: #{astgcrn_forward.1} parent=5 // pred_region
      %s8139 = ssub.s32 %s28, 2
      // Predicated region
      $region116: #{astgcrn_forward.1} parent=114 // pred_check
        %p8140 = pneg %p482
      $region117: #{astgcrn_forward.1} parent=114 // pred_check_branch
        %8142 = sbr.rel (%p8140) target = $region119
      $region118: #{astgcrn_forward.1} parent=114 // pred_region
        %p8143 = scmp.lt.s32.totalorder %s34, 1
        %s8144 = scalar_select %p8143, %s34, 1
        %s8145 = smul.addr %s8144, 16
        %s8146 = smul.addr %s8145, 8
        %s8147 = scalar_lea.vmem %s20, %s8146
      $region119: #{astgcrn_forward.1} parent=114 // pred_fallthru
        _
    $region115: #{astgcrn_forward.1} parent=5 // pred_fallthru
      _
  $region6: #{astgcrn_forward.1} parent=0 // loop_footer
    %s32 = sadd.s32 1, %s28
  $region7: #{astgcrn_forward.1} parent=0 // loop_footer_branch
    %27 = sbr.rel target = $region3
  $region8: #{astgcrn_forward.1} parent=0 // loop_exit
    _

</llo_original>
